<compile_context>
chip_gen: v6e
topology: v6e:2x2x1
jax: 0.10.0
libtpu: 0.0.40
codegen_flags: <defaults>
</compile_context>

<pallas_src>
import functools

import numpy as np
import jax
import jax.numpy as jnp
from jax.experimental import pallas as pl
from jax.experimental.pallas import tpu as pltpu


# --------------------------------------------------------------------------- helpers
def _vmem_limit_bytes():
    """Scoped-VMEM limit derived from the device (v5e/v6e: 128 MiB, v7x: 64 MiB)."""
    try:
        phys = int(pltpu.get_tpu_info().vmem_capacity_bytes)
    except Exception:
        phys = 64 * 1024 * 1024
    return (phys * 3) // 4


def _pick_row_tile(ho, per_row_bytes, fixed_bytes=0, need_even=False):
    """Largest divisor of `ho` whose per-step working set fits half the budget.

    Tiles smaller than the full extent must be multiples of 16 (bf16 sublane
    tiling); upsample tiles must be even.
    """
    budget = max(_vmem_limit_bytes() // 2 - fixed_bytes, per_row_bytes)
    max_rows = max(1, budget // max(per_row_bytes, 1))
    cands = [d for d in range(1, ho + 1)
             if ho % d == 0
             and (d == ho or d % 16 == 0)
             and (not need_even or d % 2 == 0)]
    fits = [d for d in cands if d <= max_rows]
    return max(fits) if fits else min(cands)


def _banded_weights(w, w_src, *, stride=1, up=1):
    """Fold the horizontal 3-taps (and stride / nearest-2x upsample) of a 3x3
    conv into per-dy banded matrices.

    w: (3, 3, Cin, Cout) HWIO.  Returns (3, w_src*Cin, Wo*Cout) bf16 with
    band[dy, xs*Cin+ci, X*Cout+co] = w[dy, dx, ci, co] for every tap dx whose
    source column maps to xs; taps falling outside the image contribute
    nothing, which is exactly zero padding.
    """
    _, _, cin, cout = w.shape
    w_up = up * w_src
    wo = w_up // stride
    sel = np.zeros((3, w_src, wo), np.float32)
    cols = np.arange(wo)
    for dx in range(3):
        xu = stride * cols + dx - 1
        valid = (xu >= 0) & (xu < w_up)
        xs = np.clip(xu, 0, w_up - 1) // up
        sel[dx, xs[valid], cols[valid]] = 1.0
    sel = jnp.asarray(sel)                                     # (3[dx], w_src, wo)
    band = jnp.einsum('dsx,ydio->ysixo', sel, w.astype(jnp.float32))
    return band.reshape(3, w_src * cin, wo * cout).astype(jnp.bfloat16)


def _gather_row_windows(act, src_rows, row_step, n_tiles):
    """act (N, Hs, wc) -> (N, n_tiles, src_rows, wc): overlapping row windows of
    the 1-row zero-padded activation (BlockSpec-pipelined => overlapped DMA)."""
    n, _, wc = act.shape
    pad = jnp.zeros((n, 1, wc), act.dtype)
    padded = jnp.concatenate([pad, act, pad], axis=1)
    wins = [padded[:, i * row_step: i * row_step + src_rows] for i in range(n_tiles)]
    return jnp.stack(wins, axis=1)


def _gather_stride2_windows(act, th, n_tiles):
    """act (N, Hs, wc) -> (N, n_tiles, 3, th, wc): for the stride-2 conv the
    three dy row-sets (source rows 2*(r*th+y)+dy-1, zero outside) are split in
    XLA so the kernel only does contiguous loads."""
    n, _, wc = act.shape
    pad = jnp.zeros((n, 1, wc), act.dtype)
    padded = jnp.concatenate([pad, act, pad], axis=1)          # row i = src row i-1
    tiles = []
    for r in range(n_tiles):
        dys = [padded[:, 2 * r * th + dy: 2 * r * th + dy + 2 * th: 2]
               for dy in range(3)]
        tiles.append(jnp.stack(dys, axis=1))                   # (N, 3, th, wc)
    return jnp.stack(tiles, axis=1)                            # (N, n_tiles, 3, th, wc)


# --------------------------------------------------------------------------- conv kernel
def _conv_kernel(*refs, mode, relu, want_stats, fuse_bn, th, src_rows,
                 row_step, valid_h, wc_out):
    """One (image, row-tile) step of the banded-GEMM conv.

    Inputs : window (bf16, lane-dense), banded weights (3, wc_in, wc_out) bf16,
             bias (1, wc_out) f32, [scale/shift (1, wc_in) f32 when fuse_bn].
    Outputs: o (1, th, wc_out) lane-dense; [stats (1, 1, 2, wc_out) f32].
    """
    it = iter(refs)
    x_ref = next(it)
    w_ref = next(it)
    b_ref = next(it)
    sc_ref = next(it) if fuse_bn else None
    sh_ref = next(it) if fuse_bn else None
    o_ref = next(it)
    st_ref = next(it) if want_stats else None

    acc = b_ref[...]                                   # (1, wc_out) f32

    if mode == "s2":
        # Window pre-split by dy in XLA: x_ref block is (1, 1, 3, th, wc_in).
        for dy in range(3):
            acc = acc + jnp.dot(x_ref[0, 0, dy], w_ref[dy],
                                preferred_element_type=jnp.float32)
    else:
        xw = x_ref[0, 0]                               # (src_rows, wc_in) bf16
        if fuse_bn:
            # Producer's BatchNorm + ReLU fused into this conv's input path.
            v = xw.astype(jnp.float32) * sc_ref[...] + sh_ref[...]
            v = jnp.maximum(v, 0.0)
            # Conv zero-padding applies AFTER norm+act: re-zero halo rows that
            # fall outside the source image.
            row = jax.lax.broadcasted_iota(jnp.int32, (src_rows, 1), 0)
            src_row = pl.program_id(1) * row_step + row - 1
            v = jnp.where((src_row >= 0) & (src_row < valid_h), v, 0.0)
            xw = v.astype(jnp.bfloat16)
        if mode == "up":
            # Fused nearest-2x row upsample (columns are folded into the band).
            half = src_rows - 2                        # = th // 2
            xw = jnp.concatenate(
                [xw[0:1], jnp.repeat(xw[1:1 + half], 2, axis=0),
                 xw[1 + half:2 + half]], axis=0)       # (th + 2, wc_in)
        for dy in range(3):
            acc = acc + jnp.dot(xw[dy:dy + th], w_ref[dy],
                                preferred_element_type=jnp.float32)

    if want_stats:
        # Lane-dense per-tile partials for the exact two-phase BatchNorm.
        s = jnp.sum(acc, axis=0, keepdims=True)
        q = jnp.sum(acc * acc, axis=0, keepdims=True)
        st_ref[...] = jnp.concatenate([s, q], axis=0).reshape(1, 1, 2, wc_out)

    if relu:
        acc = jnp.maximum(acc, 0.0)

    o_ref[...] = acc.astype(o_ref.dtype).reshape(1, th, wc_out)


def conv3x3(x, w, b, *, stride=1, upsample=False, relu=False, want_stats=False,
            fuse_scale=None, fuse_shift=None, out_dtype=jnp.bfloat16):
    """3x3 'same' conv (+bias) as a row-tiled banded-GEMM Pallas kernel.

    Optional: output ReLU, fused nearest-2x pre-upsample, BN stat partials,
    and a fused input-side BatchNorm+ReLU (fuse_scale/fuse_shift, per-channel).

    x: (N, H, W, Cin); w: (3, 3, Cin, Cout) HWIO; b: (Cout,)
    Returns y (N, Ho, Wo, Cout) [, stats (N, n_tiles, 2, Wo*Cout)].
    """
    assert not (want_stats and relu), "BN stats must be pre-activation"
    assert not (stride == 2 and upsample)
    fuse_bn = fuse_scale is not None
    N, H, W, Cin = x.shape
    Cout = w.shape[-1]

    if upsample:
        mode, up, s = "up", 2, 1
        Ho, Wo = 2 * H, 2 * W
    elif stride == 2:
        mode, up, s = "s2", 1, 2
        assert H % 2 == 0 and W % 2 == 0
        Ho, Wo = H // 2, W // 2
    else:
        mode, up, s = "s1", 1, 1
        Ho, Wo = H, W
    assert not fuse_bn or mode == "s1"

    wc_in = W * Cin
    wc_out = Wo * Cout
    x3 = x.astype(jnp.bfloat16).reshape(N, H, wc_in)

    wband = _banded_weights(w, W, stride=s, up=up)             # (3, wc_in, wc_out)
    brow = jnp.tile(b.astype(jnp.float32), Wo).reshape(1, wc_out)

    # ---- row tile selection (conservative VMEM estimate, lane-dense bf16) ----
    if mode == "s1":
        rows_per_out, extra = 1.0, 0
    elif mode == "s2":
        rows_per_out, extra = 3.0, 0
    else:
        rows_per_out, extra = 0.5, 2 * wc_in * 2               # row-doubled temp
    per_row = int(2 * rows_per_out * wc_in * 2                 # dbl-buffered window
                  + 2 * wc_out * 2                             # dbl-buffered output
                  + wc_out * 4                                 # f32 accumulator
                  + (wc_in * 8 if fuse_bn else 0)              # f32 affine temps
                  + extra)
    fixed = 3 * wc_in * wc_out * 2 + 8 * wc_out * 4 + 8 * wc_in * 4
    th = _pick_row_tile(Ho, per_row, fixed, need_even=upsample)
    n_tiles = Ho // th

    if mode == "s1":
        src_rows, row_step = th + 2, th
    elif mode == "s2":
        src_rows, row_step = 2 * th + 2, 2 * th
    else:
        src_rows, row_step = th // 2 + 2, th // 2

    if mode == "s2":
        wins = _gather_stride2_windows(x3, th, n_tiles)
        x_spec = pl.BlockSpec((1, 1, 3, th, wc_in), lambda n, r: (n, r, 0, 0, 0))
    else:
        wins = _gather_row_windows(x3, src_rows, row_step, n_tiles)
        x_spec = pl.BlockSpec((1, 1, src_rows, wc_in), lambda n, r: (n, r, 0, 0))

    in_arrays = [wins, wband, brow]
    in_specs = [x_spec,
                pl.BlockSpec((3, wc_in, wc_out), lambda n, r: (0, 0, 0)),
                pl.BlockSpec((1, wc_out), lambda n, r: (0, 0))]
    if fuse_bn:
        sc = jnp.tile(fuse_scale.astype(jnp.float32), W).reshape(1, wc_in)
        sh = jnp.tile(fuse_shift.astype(jnp.float32), W).reshape(1, wc_in)
        in_arrays += [sc, sh]
        in_specs += [pl.BlockSpec((1, wc_in), lambda n, r: (0, 0))] * 2

    out_shapes = [jax.ShapeDtypeStruct((N, Ho, wc_out), out_dtype)]
    out_specs = [pl.BlockSpec((1, th, wc_out), lambda n, r: (n, r, 0))]
    if want_stats:
        out_shapes.append(jax.ShapeDtypeStruct((N, n_tiles, 2, wc_out), jnp.float32))
        out_specs.append(pl.BlockSpec((1, 1, 2, wc_out), lambda n, r: (n, r, 0, 0)))

    kern = functools.partial(
        _conv_kernel, mode=mode, relu=relu, want_stats=want_stats,
        fuse_bn=fuse_bn, th=th, src_rows=src_rows, row_step=row_step,
        valid_h=H, wc_out=wc_out)

    flops = 2 * N * Ho * 3 * wc_in * wc_out
    bytes_accessed = int(wins.size * 2 + wband.size * 2 + N * Ho * wc_out * 2
                         + (N * n_tiles * 2 * wc_out * 4 if want_stats else 0))

    outs = pl.pallas_call(
        kern,
        grid=(N, n_tiles),
        in_specs=in_specs,
        out_specs=out_specs,
        out_shape=out_shapes,
        compiler_params=pltpu.CompilerParams(
            dimension_semantics=("parallel", "parallel"),
            vmem_limit_bytes=_vmem_limit_bytes()),
        cost_estimate=pl.CostEstimate(flops=flops, transcendentals=0,
                                      bytes_accessed=bytes_accessed),
    )(*in_arrays)

    y = outs[0].reshape(N, Ho, Wo, Cout)
    if want_stats:
        return y, outs[1]
    return y


# --------------------------------------------------------------------------- BatchNorm
def _bn_scale_shift(stats, wo, cout, gamma, beta, count, eps=1e-5):
    """Phase-2 of the exact two-phase BN: fold lane-dense per-tile (sum, sumsq)
    partials into per-channel scale/shift (training-mode batch statistics)."""
    t = jnp.sum(stats, axis=(0, 1)).reshape(2, wo, cout).sum(axis=1)   # (2, C)
    mean = t[0] / count
    var = jnp.maximum(t[1] / count - mean * mean, 0.0)                 # biased var
    inv = jax.lax.rsqrt(var + eps)
    scale = gamma.astype(jnp.float32) * inv
    shift = beta.astype(jnp.float32) - mean * scale
    return scale, shift


def _bn_res_kernel(y_ref, sc_ref, sh_ref, r_ref, o_ref, *, res_scale):
    v = y_ref[...].astype(jnp.float32) * sc_ref[...] + sh_ref[...]
    o_ref[...] = (r_ref[...].astype(jnp.float32) + res_scale * v).astype(o_ref.dtype)


def bn_residual(y, stats, gamma, beta, residual, *, res_scale=1.0, eps=1e-5,
                out_dtype=jnp.bfloat16):
    """BatchNorm (exact batch stats) + fused residual add, lane-dense row-tiled."""
    N, Ho, Wo, C = y.shape
    scale, shift = _bn_scale_shift(stats, Wo, C, gamma, beta, float(N * Ho * Wo), eps)
    wc = Wo * C
    sc = jnp.tile(scale, Wo).reshape(1, wc)
    sh = jnp.tile(shift, Wo).reshape(1, wc)
    y3 = y.reshape(N, Ho, wc)
    r3 = residual.astype(jnp.bfloat16).reshape(N, Ho, wc)

    th = _pick_row_tile(Ho, 6 * wc * 2 + 2 * wc * 4, 2 * wc * 4)
    n_tiles = Ho // th

    out = pl.pallas_call(
        functools.partial(_bn_res_kernel, res_scale=float(res_scale)),
        grid=(N, n_tiles),
        in_specs=[pl.BlockSpec((1, th, wc), lambda n, r: (n, r, 0)),
                  pl.BlockSpec((1, wc), lambda n, r: (0, 0)),
                  pl.BlockSpec((1, wc), lambda n, r: (0, 0)),
                  pl.BlockSpec((1, th, wc), lambda n, r: (n, r, 0))],
        out_specs=pl.BlockSpec((1, th, wc), lambda n, r: (n, r, 0)),
        out_shape=jax.ShapeDtypeStruct((N, Ho, wc), out_dtype),
        compiler_params=pltpu.CompilerParams(
            dimension_semantics=("parallel", "parallel"),
            vmem_limit_bytes=_vmem_limit_bytes()),
        cost_estimate=pl.CostEstimate(flops=4 * N * Ho * wc, transcendentals=0,
                                      bytes_accessed=3 * N * Ho * wc * 2),
    )(y3, sc, sh, r3)
    return out.reshape(N, Ho, Wo, C)


# --------------------------------------------------------------------------- params
def init_adaresnet_params(key, in_nc, out_nc, nf, nb):
    """Deterministic synthetic parameters (shapes follow AdaResNet.__init__)."""
    def cw(k, cin, cout, scale=0.05):
        kw, kb = jax.random.split(k)
        return (scale * jax.random.normal(kw, (3, 3, cin, cout), jnp.float32),
                scale * jax.random.normal(kb, (cout,), jnp.float32))

    keys = iter(jax.random.split(key, 5 + 2 * nb))
    p = {}
    p['fea'] = cw(next(keys), in_nc, nf)
    p['blocks'] = []
    for _ in range(nb):
        w0, b0 = cw(next(keys), nf, nf)
        w1, b1 = cw(next(keys), nf, nf)
        p['blocks'].append(dict(
            w0=w0, b0=b0, g0=jnp.ones((nf,), jnp.float32), be0=jnp.zeros((nf,), jnp.float32),
            w1=w1, b1=b1, g1=jnp.ones((nf,), jnp.float32), be1=jnp.zeros((nf,), jnp.float32)))
    wl, bl = cw(next(keys), nf, nf)
    p['lr'] = dict(w=wl, b=bl, g=jnp.ones((nf,), jnp.float32),
                   be=jnp.zeros((nf,), jnp.float32))
    p['up'] = cw(next(keys), nf, nf)
    p['hr0'] = cw(next(keys), nf, nf)
    p['hr1'] = cw(next(keys), nf, out_nc)
    return p


# --------------------------------------------------------------------------- forward
def adaresnet_forward(params, x_nchw, res_scale=1.0):
    x = jnp.transpose(x_nchw, (0, 2, 3, 1))               # NCHW -> NHWC

    # fea_conv: 3x3 stride-2, no norm, no act
    w, b = params['fea']
    fea = conv3x3(x, w, b, stride=2)

    # ShortcutBlock( nb * ResNetBlock -> LR_conv(+BN) ) + skip
    h = fea
    N, Hf, Wf, C = fea.shape
    cnt = float(N * Hf * Wf)
    for blk in params['blocks']:
        y0, st0 = conv3x3(h, blk['w0'], blk['b0'], want_stats=True)
        sc0, sh0 = _bn_scale_shift(st0, Wf, C, blk['g0'], blk['be0'], cnt)
        # BN0 + ReLU are fused into conv1's input path (no extra HBM pass).
        y1, st1 = conv3x3(y0, blk['w1'], blk['b1'], want_stats=True,
                          fuse_scale=sc0, fuse_shift=sh0)
        h = bn_residual(y1, st1, blk['g1'], blk['be1'], h, res_scale=res_scale)

    lr = params['lr']
    yl, stl = conv3x3(h, lr['w'], lr['b'], want_stats=True)
    h = bn_residual(yl, stl, lr['g'], lr['be'], fea, res_scale=1.0)

    # upconv block: fused nearest-2x upsample + conv + ReLU
    w, b = params['up']
    h = conv3x3(h, w, b, upsample=True, relu=True)

    # HR_conv0 (+ReLU), HR_conv1 (no act)
    w, b = params['hr0']
    h = conv3x3(h, w, b, relu=True)
    w, b = params['hr1']
    h = conv3x3(h, w, b)

    return jnp.transpose(h.astype(jnp.float32), (0, 3, 1, 2))   # back to NCHW


# --------------------------------------------------------------------------- main
if __name__ == "__main__":
    key = jax.random.PRNGKey(0)
    kx, kp = jax.random.split(key)

    N, in_nc, out_nc, nf, nb = 2, 3, 3, 32, 2
    H = W = 16

    x = jax.random.normal(kx, (N, in_nc, H, W), jnp.float32)
    params = init_adaresnet_params(kp, in_nc, out_nc, nf, nb)

    fwd = jax.jit(adaresnet_forward)
    y = fwd(params, x)
    jax.block_until_ready(y)

    assert y.shape == (N, out_nc, H, W), y.shape
    assert bool(jnp.all(jnp.isfinite(y)))
    print("KERNEL_OK")
</pallas_src>

<mosaic_0001>
module attributes {stable_mosaic.version = 11 : i64} {
  func.func @_conv_kernel(%arg0: i32, %arg1: i32, %arg2: memref<1x1x3x8x48xbf16, #tpu.memory_space<vmem>>, %arg3: memref<3x48x256xbf16, #tpu.memory_space<vmem>>, %arg4: memref<1x256xf32, #tpu.memory_space<vmem>>, %arg5: memref<1x8x256xbf16, #tpu.memory_space<vmem>>) attributes {dimension_semantics = [#tpu.dimension_semantics<parallel>, #tpu.dimension_semantics<parallel>], iteration_bounds = array<i64: 2, 1>, scalar_prefetch = 0 : i64, scratch_operands = 0 : i64, tpu.core_type = #tpu.core_type<tc>, window_params = [{transform_indices = @transform_0, window_bounds = array<i64: 1, 1, 3, 8, 48>}, {pipeline_mode = #tpu.pipeline_mode<synchronous>, transform_indices = @transform_1, window_bounds = array<i64: 3, 48, 256>}, {pipeline_mode = #tpu.pipeline_mode<synchronous>, transform_indices = @transform_2, window_bounds = array<i64: 1, 256>}, {transform_indices = @transform_3, window_bounds = array<i64: 1, 8, 256>}]} {
    %c0 = arith.constant 0 : index
    %c0_0 = arith.constant 0 : index
    %0 = vector.load %arg4[%c0, %c0_0] : memref<1x256xf32, #tpu.memory_space<vmem>>, vector<1x256xf32>
    %c0_1 = arith.constant 0 : index
    %c0_2 = arith.constant 0 : index
    %c0_3 = arith.constant 0 : index
    %c0_4 = arith.constant 0 : index
    %c0_5 = arith.constant 0 : index
    %1 = vector.load %arg2[%c0_1, %c0_2, %c0_3, %c0_4, %c0_5] : memref<1x1x3x8x48xbf16, #tpu.memory_space<vmem>>, vector<1x1x1x8x48xbf16>
    %2 = vector.shape_cast %1 : vector<1x1x1x8x48xbf16> to vector<8x48xbf16>
    %c0_6 = arith.constant 0 : index
    %c0_7 = arith.constant 0 : index
    %c0_8 = arith.constant 0 : index
    %3 = vector.load %arg3[%c0_6, %c0_7, %c0_8] : memref<3x48x256xbf16, #tpu.memory_space<vmem>>, vector<1x48x256xbf16>
    %4 = vector.shape_cast %3 : vector<1x48x256xbf16> to vector<48x256xbf16>
    %cst = arith.constant dense<0.000000e+00> : vector<8x256xf32>
    %5 = tpu.matmul %2, %4, %cst {dimension_numbers = #tpu.dot_dimension_numbers<[1], [0], [0], [1], [0, 0, 1, 1], [], []>} : vector<8x48xbf16>, vector<48x256xbf16>, vector<8x256xf32> -> vector<8x256xf32>
    %6 = vector.broadcast %0 : vector<1x256xf32> to vector<8x256xf32>
    %7 = arith.addf %6, %5 : vector<8x256xf32>
    %c0_9 = arith.constant 0 : index
    %c0_10 = arith.constant 0 : index
    %c1 = arith.constant 1 : index
    %c0_11 = arith.constant 0 : index
    %c0_12 = arith.constant 0 : index
    %8 = vector.load %arg2[%c0_9, %c0_10, %c1, %c0_11, %c0_12] : memref<1x1x3x8x48xbf16, #tpu.memory_space<vmem>>, vector<1x1x1x8x48xbf16>
    %9 = vector.shape_cast %8 : vector<1x1x1x8x48xbf16> to vector<8x48xbf16>
    %c1_13 = arith.constant 1 : index
    %c0_14 = arith.constant 0 : index
    %c0_15 = arith.constant 0 : index
    %10 = vector.load %arg3[%c1_13, %c0_14, %c0_15] : memref<3x48x256xbf16, #tpu.memory_space<vmem>>, vector<1x48x256xbf16>
    %11 = vector.shape_cast %10 : vector<1x48x256xbf16> to vector<48x256xbf16>
    %cst_16 = arith.constant dense<0.000000e+00> : vector<8x256xf32>
    %12 = tpu.matmul %9, %11, %cst_16 {dimension_numbers = #tpu.dot_dimension_numbers<[1], [0], [0], [1], [0, 0, 1, 1], [], []>} : vector<8x48xbf16>, vector<48x256xbf16>, vector<8x256xf32> -> vector<8x256xf32>
    %13 = arith.addf %7, %12 : vector<8x256xf32>
    %c0_17 = arith.constant 0 : index
    %c0_18 = arith.constant 0 : index
    %c2 = arith.constant 2 : index
    %c0_19 = arith.constant 0 : index
    %c0_20 = arith.constant 0 : index
    %14 = vector.load %arg2[%c0_17, %c0_18, %c2, %c0_19, %c0_20] : memref<1x1x3x8x48xbf16, #tpu.memory_space<vmem>>, vector<1x1x1x8x48xbf16>
    %15 = vector.shape_cast %14 : vector<1x1x1x8x48xbf16> to vector<8x48xbf16>
    %c2_21 = arith.constant 2 : index
    %c0_22 = arith.constant 0 : index
    %c0_23 = arith.constant 0 : index
    %16 = vector.load %arg3[%c2_21, %c0_22, %c0_23] : memref<3x48x256xbf16, #tpu.memory_space<vmem>>, vector<1x48x256xbf16>
    %17 = vector.shape_cast %16 : vector<1x48x256xbf16> to vector<48x256xbf16>
    %cst_24 = arith.constant dense<0.000000e+00> : vector<8x256xf32>
    %18 = tpu.matmul %15, %17, %cst_24 {dimension_numbers = #tpu.dot_dimension_numbers<[1], [0], [0], [1], [0, 0, 1, 1], [], []>} : vector<8x48xbf16>, vector<48x256xbf16>, vector<8x256xf32> -> vector<8x256xf32>
    %19 = arith.addf %13, %18 : vector<8x256xf32>
    %20 = arith.truncf %19 : vector<8x256xf32> to vector<8x256xbf16>
    %21 = vector.shape_cast %20 : vector<8x256xbf16> to vector<1x8x256xbf16>
    %c0_25 = arith.constant 0 : index
    %c0_26 = arith.constant 0 : index
    %c0_27 = arith.constant 0 : index
    %22 = vector.load %arg5[%c0_25, %c0_26, %c0_27] : memref<1x8x256xbf16, #tpu.memory_space<vmem>>, vector<1x8x256xbf16>
    tpu.vector_store %arg5[%c0_25, %c0_26, %c0_27], %21 {strides = array<i32>} : memref<1x8x256xbf16, #tpu.memory_space<vmem>>, vector<1x8x256xbf16>,
    return
  }
  func.func @transform_0(%arg0: i32, %arg1: i32) -> (i32, i32, i32, i32, i32) {
    %c0_i32 = arith.constant 0 : i32
    %c0_i32_0 = arith.constant 0 : i32
    %c0_i32_1 = arith.constant 0 : i32
    %c0_i32_2 = arith.constant 0 : i32
    return %arg0, %arg1, %c0_i32, %c0_i32_0, %c0_i32_1 : i32, i32, i32, i32, i32
  }
  func.func @transform_1(%arg0: i32, %arg1: i32) -> (i32, i32, i32) {
    %c0_i32 = arith.constant 0 : i32
    %c0_i32_0 = arith.constant 0 : i32
    %c0_i32_1 = arith.constant 0 : i32
    %c0_i32_2 = arith.constant 0 : i32
    return %c0_i32, %c0_i32_0, %c0_i32_1 : i32, i32, i32
  }
  func.func @transform_2(%arg0: i32, %arg1: i32) -> (i32, i32) {
    %c0_i32 = arith.constant 0 : i32
    %c0_i32_0 = arith.constant 0 : i32
    %c0_i32_1 = arith.constant 0 : i32
    return %c0_i32, %c0_i32_0 : i32, i32
  }
  func.func @transform_3(%arg0: i32, %arg1: i32) -> (i32, i32, i32) {
    %c0_i32 = arith.constant 0 : i32
    %c0_i32_0 = arith.constant 0 : i32
    return %arg0, %arg1, %c0_i32 : i32, i32, i32
  }
}

module attributes {stable_mosaic.version = 11 : i64} {
  func.func @_conv_kernel(%arg0: i32, %arg1: i32, %arg2: memref<1x1x10x256xbf16, #tpu.memory_space<vmem>>, %arg3: memref<3x256x256xbf16, #tpu.memory_space<vmem>>, %arg4: memref<1x256xf32, #tpu.memory_space<vmem>>, %arg5: memref<1x8x256xbf16, #tpu.memory_space<vmem>>, %arg6: memref<1x1x2x256xf32, #tpu.memory_space<vmem>>) attributes {dimension_semantics = [#tpu.dimension_semantics<parallel>, #tpu.dimension_semantics<parallel>], iteration_bounds = array<i64: 2, 1>, scalar_prefetch = 0 : i64, scratch_operands = 0 : i64, tpu.core_type = #tpu.core_type<tc>, window_params = [{transform_indices = @transform_0, window_bounds = array<i64: 1, 1, 10, 256>}, {pipeline_mode = #tpu.pipeline_mode<synchronous>, transform_indices = @transform_1, window_bounds = array<i64: 3, 256, 256>}, {pipeline_mode = #tpu.pipeline_mode<synchronous>, transform_indices = @transform_2, window_bounds = array<i64: 1, 256>}, {transform_indices = @transform_3, window_bounds = array<i64: 1, 8, 256>}, {transform_indices = @transform_4, window_bounds = array<i64: 1, 1, 2, 256>}]} {
    %c0 = arith.constant 0 : index
    %c0_0 = arith.constant 0 : index
    %0 = vector.load %arg4[%c0, %c0_0] : memref<1x256xf32, #tpu.memory_space<vmem>>, vector<1x256xf32>
    %c0_1 = arith.constant 0 : index
    %c0_2 = arith.constant 0 : index
    %c0_3 = arith.constant 0 : index
    %c0_4 = arith.constant 0 : index
    %1 = vector.load %arg2[%c0_1, %c0_2, %c0_3, %c0_4] : memref<1x1x10x256xbf16, #tpu.memory_space<vmem>>, vector<1x1x10x256xbf16>
    %2 = vector.shape_cast %1 : vector<1x1x10x256xbf16> to vector<10x256xbf16>
    %3 = vector.extract_strided_slice %2 {offsets = [0, 0], sizes = [8, 256], strides = [1, 1]} : vector<10x256xbf16> to vector<8x256xbf16>
    %c0_5 = arith.constant 0 : index
    %c0_6 = arith.constant 0 : index
    %c0_7 = arith.constant 0 : index
    %4 = vector.load %arg3[%c0_5, %c0_6, %c0_7] : memref<3x256x256xbf16, #tpu.memory_space<vmem>>, vector<1x256x256xbf16>
    %5 = vector.shape_cast %4 : vector<1x256x256xbf16> to vector<256x256xbf16>
    %cst = arith.constant dense<0.000000e+00> : vector<8x256xf32>
    %6 = tpu.matmul %3, %5, %cst {dimension_numbers = #tpu.dot_dimension_numbers<[1], [0], [0], [1], [0, 0, 1, 1], [], []>} : vector<8x256xbf16>, vector<256x256xbf16>, vector<8x256xf32> -> vector<8x256xf32>
    %7 = vector.broadcast %0 : vector<1x256xf32> to vector<8x256xf32>
    %8 = arith.addf %7, %6 : vector<8x256xf32>
    %9 = vector.extract_strided_slice %2 {offsets = [1, 0], sizes = [8, 256], strides = [1, 1]} : vector<10x256xbf16> to vector<8x256xbf16>
    %c1 = arith.constant 1 : index
    %c0_8 = arith.constant 0 : index
    %c0_9 = arith.constant 0 : index
    %10 = vector.load %arg3[%c1, %c0_8, %c0_9] : memref<3x256x256xbf16, #tpu.memory_space<vmem>>, vector<1x256x256xbf16>
    %11 = vector.shape_cast %10 : vector<1x256x256xbf16> to vector<256x256xbf16>
    %cst_10 = arith.constant dense<0.000000e+00> : vector<8x256xf32>
    %12 = tpu.matmul %9, %11, %cst_10 {dimension_numbers = #tpu.dot_dimension_numbers<[1], [0], [0], [1], [0, 0, 1, 1], [], []>} : vector<8x256xbf16>, vector<256x256xbf16>, vector<8x256xf32> -> vector<8x256xf32>
    %13 = arith.addf %8, %12 : vector<8x256xf32>
    %14 = vector.extract_strided_slice %2 {offsets = [2, 0], sizes = [8, 256], strides = [1, 1]} : vector<10x256xbf16> to vector<8x256xbf16>
    %c2 = arith.constant 2 : index
    %c0_11 = arith.constant 0 : index
    %c0_12 = arith.constant 0 : index
    %15 = vector.load %arg3[%c2, %c0_11, %c0_12] : memref<3x256x256xbf16, #tpu.memory_space<vmem>>, vector<1x256x256xbf16>
    %16 = vector.shape_cast %15 : vector<1x256x256xbf16> to vector<256x256xbf16>
    %cst_13 = arith.constant dense<0.000000e+00> : vector<8x256xf32>
    %17 = tpu.matmul %14, %16, %cst_13 {dimension_numbers = #tpu.dot_dimension_numbers<[1], [0], [0], [1], [0, 0, 1, 1], [], []>} : vector<8x256xbf16>, vector<256x256xbf16>, vector<8x256xf32> -> vector<8x256xf32>
    %18 = arith.addf %13, %17 : vector<8x256xf32>
    %cst_14 = arith.constant dense<0.000000e+00> : vector<256xf32>
    %19 = vector.multi_reduction <add>, %18, %cst_14 [0] : vector<8x256xf32> to vector<256xf32>
    %20 = vector.shape_cast %19 : vector<256xf32> to vector<1x256xf32>
    %21 = arith.mulf %18, %18 : vector<8x256xf32>
    %cst_15 = arith.constant dense<0.000000e+00> : vector<256xf32>
    %22 = vector.multi_reduction <add>, %21, %cst_15 [0] : vector<8x256xf32> to vector<256xf32>
    %23 = vector.shape_cast %22 : vector<256xf32> to vector<1x256xf32>
    %24 = tpu.concatenate %20, %23 in 0 : vector<1x256xf32>, vector<1x256xf32> -> vector<2x256xf32>
    %25 = vector.shape_cast %24 : vector<2x256xf32> to vector<1x1x2x256xf32>
    %c0_16 = arith.constant 0 : index
    %c0_17 = arith.constant 0 : index
    %c0_18 = arith.constant 0 : index
    %c0_19 = arith.constant 0 : index
    %26 = vector.load %arg6[%c0_16, %c0_17, %c0_18, %c0_19] : memref<1x1x2x256xf32, #tpu.memory_space<vmem>>, vector<1x1x2x256xf32>
    tpu.vector_store %arg6[%c0_16, %c0_17, %c0_18, %c0_19], %25 {strides = array<i32>} : memref<1x1x2x256xf32, #tpu.memory_space<vmem>>, vector<1x1x2x256xf32>,
    %27 = arith.truncf %18 : vector<8x256xf32> to vector<8x256xbf16>
    %28 = vector.shape_cast %27 : vector<8x256xbf16> to vector<1x8x256xbf16>
    %c0_20 = arith.constant 0 : index
    %c0_21 = arith.constant 0 : index
    %c0_22 = arith.constant 0 : index
    %29 = vector.load %arg5[%c0_20, %c0_21, %c0_22] : memref<1x8x256xbf16, #tpu.memory_space<vmem>>, vector<1x8x256xbf16>
    tpu.vector_store %arg5[%c0_20, %c0_21, %c0_22], %28 {strides = array<i32>} : memref<1x8x256xbf16, #tpu.memory_space<vmem>>, vector<1x8x256xbf16>,
    return
  }
  func.func @transform_0(%arg0: i32, %arg1: i32) -> (i32, i32, i32, i32) {
    %c0_i32 = arith.constant 0 : i32
    %c0_i32_0 = arith.constant 0 : i32
    %c0_i32_1 = arith.constant 0 : i32
    return %arg0, %arg1, %c0_i32, %c0_i32_0 : i32, i32, i32, i32
  }
  func.func @transform_1(%arg0: i32, %arg1: i32) -> (i32, i32, i32) {
    %c0_i32 = arith.constant 0 : i32
    %c0_i32_0 = arith.constant 0 : i32
    %c0_i32_1 = arith.constant 0 : i32
    %c0_i32_2 = arith.constant 0 : i32
    return %c0_i32, %c0_i32_0, %c0_i32_1 : i32, i32, i32
  }
  func.func @transform_2(%arg0: i32, %arg1: i32) -> (i32, i32) {
    %c0_i32 = arith.constant 0 : i32
    %c0_i32_0 = arith.constant 0 : i32
    %c0_i32_1 = arith.constant 0 : i32
    return %c0_i32, %c0_i32_0 : i32, i32
  }
  func.func @transform_3(%arg0: i32, %arg1: i32) -> (i32, i32, i32) {
    %c0_i32 = arith.constant 0 : i32
    %c0_i32_0 = arith.constant 0 : i32
    return %arg0, %arg1, %c0_i32 : i32, i32, i32
  }
  func.func @transform_4(%arg0: i32, %arg1: i32) -> (i32, i32, i32, i32) {
    %c0_i32 = arith.constant 0 : i32
    %c0_i32_0 = arith.constant 0 : i32
    %c0_i32_1 = arith.constant 0 : i32
    return %arg0, %arg1, %c0_i32, %c0_i32_0 : i32, i32, i32, i32
  }
}

module attributes {stable_mosaic.version = 11 : i64} {
  func.func @_bn_res_kernel(%arg0: i32, %arg1: i32, %arg2: memref<1x8x256xbf16, #tpu.memory_space<vmem>>, %arg3: memref<1x256xf32, #tpu.memory_space<vmem>>, %arg4: memref<1x256xf32, #tpu.memory_space<vmem>>, %arg5: memref<1x8x256xbf16, #tpu.memory_space<vmem>>, %arg6: memref<1x8x256xbf16, #tpu.memory_space<vmem>>) attributes {dimension_semantics = [#tpu.dimension_semantics<parallel>, #tpu.dimension_semantics<parallel>], iteration_bounds = array<i64: 2, 1>, scalar_prefetch = 0 : i64, scratch_operands = 0 : i64, tpu.core_type = #tpu.core_type<tc>, window_params = [{transform_indices = @transform_0, window_bounds = array<i64: 1, 8, 256>}, {pipeline_mode = #tpu.pipeline_mode<synchronous>, transform_indices = @transform_1, window_bounds = array<i64: 1, 256>}, {pipeline_mode = #tpu.pipeline_mode<synchronous>, transform_indices = @transform_2, window_bounds = array<i64: 1, 256>}, {transform_indices = @transform_3, window_bounds = array<i64: 1, 8, 256>}, {transform_indices = @transform_4, window_bounds = array<i64: 1, 8, 256>}]} {
    %c0 = arith.constant 0 : index
    %c0_0 = arith.constant 0 : index
    %c0_1 = arith.constant 0 : index
    %0 = vector.load %arg2[%c0, %c0_0, %c0_1] : memref<1x8x256xbf16, #tpu.memory_space<vmem>>, vector<1x8x256xbf16>
    %1 = arith.extf %0 : vector<1x8x256xbf16> to vector<1x8x256xf32>
    %c0_2 = arith.constant 0 : index
    %c0_3 = arith.constant 0 : index
    %2 = vector.load %arg3[%c0_2, %c0_3] : memref<1x256xf32, #tpu.memory_space<vmem>>, vector<1x256xf32>
    %3 = vector.shape_cast %2 : vector<1x256xf32> to vector<1x1x256xf32>
    %4 = vector.broadcast %3 : vector<1x1x256xf32> to vector<1x8x256xf32>
    %5 = arith.mulf %1, %4 : vector<1x8x256xf32>
    %c0_4 = arith.constant 0 : index
    %c0_5 = arith.constant 0 : index
    %6 = vector.load %arg4[%c0_4, %c0_5] : memref<1x256xf32, #tpu.memory_space<vmem>>, vector<1x256xf32>
    %7 = vector.shape_cast %6 : vector<1x256xf32> to vector<1x1x256xf32>
    %8 = vector.broadcast %7 : vector<1x1x256xf32> to vector<1x8x256xf32>
    %9 = arith.addf %5, %8 : vector<1x8x256xf32>
    %c0_6 = arith.constant 0 : index
    %c0_7 = arith.constant 0 : index
    %c0_8 = arith.constant 0 : index
    %10 = vector.load %arg5[%c0_6, %c0_7, %c0_8] : memref<1x8x256xbf16, #tpu.memory_space<vmem>>, vector<1x8x256xbf16>
    %11 = arith.extf %10 : vector<1x8x256xbf16> to vector<1x8x256xf32>
    %cst = arith.constant 1.000000e+00 : f32
    %12 = vector.broadcast %cst : f32 to vector<1x8x256xf32>
    %13 = arith.mulf %12, %9 : vector<1x8x256xf32>
    %14 = arith.addf %11, %13 : vector<1x8x256xf32>
    %15 = arith.truncf %14 : vector<1x8x256xf32> to vector<1x8x256xbf16>
    %c0_9 = arith.constant 0 : index
    %c0_10 = arith.constant 0 : index
    %c0_11 = arith.constant 0 : index
    %16 = vector.load %arg6[%c0_9, %c0_10, %c0_11] : memref<1x8x256xbf16, #tpu.memory_space<vmem>>, vector<1x8x256xbf16>
    tpu.vector_store %arg6[%c0_9, %c0_10, %c0_11], %15 {strides = array<i32>} : memref<1x8x256xbf16, #tpu.memory_space<vmem>>, vector<1x8x256xbf16>,
    return
  }
  func.func @transform_0(%arg0: i32, %arg1: i32) -> (i32, i32, i32) {
    %c0_i32 = arith.constant 0 : i32
    %c0_i32_0 = arith.constant 0 : i32
    return %arg0, %arg1, %c0_i32 : i32, i32, i32
  }
  func.func @transform_1(%arg0: i32, %arg1: i32) -> (i32, i32) {
    %c0_i32 = arith.constant 0 : i32
    %c0_i32_0 = arith.constant 0 : i32
    %c0_i32_1 = arith.constant 0 : i32
    return %c0_i32, %c0_i32_0 : i32, i32
  }
  func.func @transform_2(%arg0: i32, %arg1: i32) -> (i32, i32) {
    %c0_i32 = arith.constant 0 : i32
    %c0_i32_0 = arith.constant 0 : i32
    %c0_i32_1 = arith.constant 0 : i32
    return %c0_i32, %c0_i32_0 : i32, i32
  }
  func.func @transform_3(%arg0: i32, %arg1: i32) -> (i32, i32, i32) {
    %c0_i32 = arith.constant 0 : i32
    %c0_i32_0 = arith.constant 0 : i32
    return %arg0, %arg1, %c0_i32 : i32, i32, i32
  }
  func.func @transform_4(%arg0: i32, %arg1: i32) -> (i32, i32, i32) {
    %c0_i32 = arith.constant 0 : i32
    %c0_i32_0 = arith.constant 0 : i32
    return %arg0, %arg1, %c0_i32 : i32, i32, i32
  }
}

module attributes {stable_mosaic.version = 11 : i64} {
  func.func @_conv_kernel(%arg0: i32, %arg1: i32, %arg2: memref<1x1x10x256xbf16, #tpu.memory_space<vmem>>, %arg3: memref<3x256x256xbf16, #tpu.memory_space<vmem>>, %arg4: memref<1x256xf32, #tpu.memory_space<vmem>>, %arg5: memref<1x256xf32, #tpu.memory_space<vmem>>, %arg6: memref<1x256xf32, #tpu.memory_space<vmem>>, %arg7: memref<1x8x256xbf16, #tpu.memory_space<vmem>>, %arg8: memref<1x1x2x256xf32, #tpu.memory_space<vmem>>) attributes {dimension_semantics = [#tpu.dimension_semantics<parallel>, #tpu.dimension_semantics<parallel>], iteration_bounds = array<i64: 2, 1>, scalar_prefetch = 0 : i64, scratch_operands = 0 : i64, tpu.core_type = #tpu.core_type<tc>, window_params = [{transform_indices = @transform_0, window_bounds = array<i64: 1, 1, 10, 256>}, {pipeline_mode = #tpu.pipeline_mode<synchronous>, transform_indices = @transform_1, window_bounds = array<i64: 3, 256, 256>}, {pipeline_mode = #tpu.pipeline_mode<synchronous>, transform_indices = @transform_2, window_bounds = array<i64: 1, 256>}, {pipeline_mode = #tpu.pipeline_mode<synchronous>, transform_indices = @transform_3, window_bounds = array<i64: 1, 256>}, {pipeline_mode = #tpu.pipeline_mode<synchronous>, transform_indices = @transform_4, window_bounds = array<i64: 1, 256>}, {transform_indices = @transform_5, window_bounds = array<i64: 1, 8, 256>}, {transform_indices = @transform_6, window_bounds = array<i64: 1, 1, 2, 256>}]} {
    %c0 = arith.constant 0 : index
    %c0_0 = arith.constant 0 : index
    %0 = vector.load %arg4[%c0, %c0_0] : memref<1x256xf32, #tpu.memory_space<vmem>>, vector<1x256xf32>
    %c0_1 = arith.constant 0 : index
    %c0_2 = arith.constant 0 : index
    %c0_3 = arith.constant 0 : index
    %c0_4 = arith.constant 0 : index
    %1 = vector.load %arg2[%c0_1, %c0_2, %c0_3, %c0_4] : memref<1x1x10x256xbf16, #tpu.memory_space<vmem>>, vector<1x1x10x256xbf16>
    %2 = vector.shape_cast %1 : vector<1x1x10x256xbf16> to vector<10x256xbf16>
    %3 = arith.extf %2 : vector<10x256xbf16> to vector<10x256xf32>
    %c0_5 = arith.constant 0 : index
    %c0_6 = arith.constant 0 : index
    %4 = vector.load %arg5[%c0_5, %c0_6] : memref<1x256xf32, #tpu.memory_space<vmem>>, vector<1x256xf32>
    %5 = vector.broadcast %4 : vector<1x256xf32> to vector<10x256xf32>
    %6 = arith.mulf %3, %5 : vector<10x256xf32>
    %c0_7 = arith.constant 0 : index
    %c0_8 = arith.constant 0 : index
    %7 = vector.load %arg6[%c0_7, %c0_8] : memref<1x256xf32, #tpu.memory_space<vmem>>, vector<1x256xf32>
    %8 = vector.broadcast %7 : vector<1x256xf32> to vector<10x256xf32>
    %9 = arith.addf %6, %8 : vector<10x256xf32>
    %cst = arith.constant 0.000000e+00 : f32
    %10 = vector.broadcast %cst : f32 to vector<10x256xf32>
    %11 = arith.maximumf %9, %10 : vector<10x256xf32>
    %12 = tpu.iota {dimensions = array<i32: 0>} : vector<10x1xi32>
    %c8_i32 = arith.constant 8 : i32
    %13 = arith.muli %arg1, %c8_i32 : i32
    %14 = vector.broadcast %13 : i32 to vector<10x1xi32>
    %15 = arith.addi %14, %12 : vector<10x1xi32>
    %c1_i32 = arith.constant 1 : i32
    %16 = vector.broadcast %c1_i32 : i32 to vector<10x1xi32>
    %17 = arith.subi %15, %16 : vector<10x1xi32>
    %c0_i32 = arith.constant 0 : i32
    %18 = vector.broadcast %c0_i32 : i32 to vector<10x1xi32>
    %19 = arith.cmpi sge, %17, %18 : vector<10x1xi32>
    %c8_i32_9 = arith.constant 8 : i32
    %20 = vector.broadcast %c8_i32_9 : i32 to vector<10x1xi32>
    %21 = arith.cmpi slt, %17, %20 : vector<10x1xi32>
    %22 = arith.andi %19, %21 : vector<10x1xi1>
    %cst_10 = arith.constant 0.000000e+00 : f32
    %23 = vector.shape_cast %22 : vector<10x1xi1> to vector<10x1xi1>
    %24 = vector.broadcast %23 : vector<10x1xi1> to vector<10x256xi1>
    %25 = vector.broadcast %cst_10 : f32 to vector<10x256xf32>
    %26 = arith.select %24, %11, %25 : vector<10x256xi1>, vector<10x256xf32>
    %27 = arith.truncf %26 : vector<10x256xf32> to vector<10x256xbf16>
    %28 = vector.extract_strided_slice %27 {offsets = [0, 0], sizes = [8, 256], strides = [1, 1]} : vector<10x256xbf16> to vector<8x256xbf16>
    %c0_11 = arith.constant 0 : index
    %c0_12 = arith.constant 0 : index
    %c0_13 = arith.constant 0 : index
    %29 = vector.load %arg3[%c0_11, %c0_12, %c0_13] : memref<3x256x256xbf16, #tpu.memory_space<vmem>>, vector<1x256x256xbf16>
    %30 = vector.shape_cast %29 : vector<1x256x256xbf16> to vector<256x256xbf16>
    %cst_14 = arith.constant dense<0.000000e+00> : vector<8x256xf32>
    %31 = tpu.matmul %28, %30, %cst_14 {dimension_numbers = #tpu.dot_dimension_numbers<[1], [0], [0], [1], [0, 0, 1, 1], [], []>} : vector<8x256xbf16>, vector<256x256xbf16>, vector<8x256xf32> -> vector<8x256xf32>
    %32 = vector.broadcast %0 : vector<1x256xf32> to vector<8x256xf32>
    %33 = arith.addf %32, %31 : vector<8x256xf32>
    %34 = vector.extract_strided_slice %27 {offsets = [1, 0], sizes = [8, 256], strides = [1, 1]} : vector<10x256xbf16> to vector<8x256xbf16>
    %c1 = arith.constant 1 : index
    %c0_15 = arith.constant 0 : index
    %c0_16 = arith.constant 0 : index
    %35 = vector.load %arg3[%c1, %c0_15, %c0_16] : memref<3x256x256xbf16, #tpu.memory_space<vmem>>, vector<1x256x256xbf16>
    %36 = vector.shape_cast %35 : vector<1x256x256xbf16> to vector<256x256xbf16>
    %cst_17 = arith.constant dense<0.000000e+00> : vector<8x256xf32>
    %37 = tpu.matmul %34, %36, %cst_17 {dimension_numbers = #tpu.dot_dimension_numbers<[1], [0], [0], [1], [0, 0, 1, 1], [], []>} : vector<8x256xbf16>, vector<256x256xbf16>, vector<8x256xf32> -> vector<8x256xf32>
    %38 = arith.addf %33, %37 : vector<8x256xf32>
    %39 = vector.extract_strided_slice %27 {offsets = [2, 0], sizes = [8, 256], strides = [1, 1]} : vector<10x256xbf16> to vector<8x256xbf16>
    %c2 = arith.constant 2 : index
    %c0_18 = arith.constant 0 : index
    %c0_19 = arith.constant 0 : index
    %40 = vector.load %arg3[%c2, %c0_18, %c0_19] : memref<3x256x256xbf16, #tpu.memory_space<vmem>>, vector<1x256x256xbf16>
    %41 = vector.shape_cast %40 : vector<1x256x256xbf16> to vector<256x256xbf16>
    %cst_20 = arith.constant dense<0.000000e+00> : vector<8x256xf32>
    %42 = tpu.matmul %39, %41, %cst_20 {dimension_numbers = #tpu.dot_dimension_numbers<[1], [0], [0], [1], [0, 0, 1, 1], [], []>} : vector<8x256xbf16>, vector<256x256xbf16>, vector<8x256xf32> -> vector<8x256xf32>
    %43 = arith.addf %38, %42 : vector<8x256xf32>
    %cst_21 = arith.constant dense<0.000000e+00> : vector<256xf32>
    %44 = vector.multi_reduction <add>, %43, %cst_21 [0] : vector<8x256xf32> to vector<256xf32>
    %45 = vector.shape_cast %44 : vector<256xf32> to vector<1x256xf32>
    %46 = arith.mulf %43, %43 : vector<8x256xf32>
    %cst_22 = arith.constant dense<0.000000e+00> : vector<256xf32>
    %47 = vector.multi_reduction <add>, %46, %cst_22 [0] : vector<8x256xf32> to vector<256xf32>
    %48 = vector.shape_cast %47 : vector<256xf32> to vector<1x256xf32>
    %49 = tpu.concatenate %45, %48 in 0 : vector<1x256xf32>, vector<1x256xf32> -> vector<2x256xf32>
    %50 = vector.shape_cast %49 : vector<2x256xf32> to vector<1x1x2x256xf32>
    %c0_23 = arith.constant 0 : index
    %c0_24 = arith.constant 0 : index
    %c0_25 = arith.constant 0 : index
    %c0_26 = arith.constant 0 : index
    %51 = vector.load %arg8[%c0_23, %c0_24, %c0_25, %c0_26] : memref<1x1x2x256xf32, #tpu.memory_space<vmem>>, vector<1x1x2x256xf32>
    tpu.vector_store %arg8[%c0_23, %c0_24, %c0_25, %c0_26], %50 {strides = array<i32>} : memref<1x1x2x256xf32, #tpu.memory_space<vmem>>, vector<1x1x2x256xf32>,
    %52 = arith.truncf %43 : vector<8x256xf32> to vector<8x256xbf16>
    %53 = vector.shape_cast %52 : vector<8x256xbf16> to vector<1x8x256xbf16>
    %c0_27 = arith.constant 0 : index
    %c0_28 = arith.constant 0 : index
    %c0_29 = arith.constant 0 : index
    %54 = vector.load %arg7[%c0_27, %c0_28, %c0_29] : memref<1x8x256xbf16, #tpu.memory_space<vmem>>, vector<1x8x256xbf16>
    tpu.vector_store %arg7[%c0_27, %c0_28, %c0_29], %53 {strides = array<i32>} : memref<1x8x256xbf16, #tpu.memory_space<vmem>>, vector<1x8x256xbf16>,
    return
  }
  func.func @transform_0(%arg0: i32, %arg1: i32) -> (i32, i32, i32, i32) {
    %c0_i32 = arith.constant 0 : i32
    %c0_i32_0 = arith.constant 0 : i32
    %c0_i32_1 = arith.constant 0 : i32
    return %arg0, %arg1, %c0_i32, %c0_i32_0 : i32, i32, i32, i32
  }
  func.func @transform_1(%arg0: i32, %arg1: i32) -> (i32, i32, i32) {
    %c0_i32 = arith.constant 0 : i32
    %c0_i32_0 = arith.constant 0 : i32
    %c0_i32_1 = arith.constant 0 : i32
    %c0_i32_2 = arith.constant 0 : i32
    return %c0_i32, %c0_i32_0, %c0_i32_1 : i32, i32, i32
  }
  func.func @transform_2(%arg0: i32, %arg1: i32) -> (i32, i32) {
    %c0_i32 = arith.constant 0 : i32
    %c0_i32_0 = arith.constant 0 : i32
    %c0_i32_1 = arith.constant 0 : i32
    return %c0_i32, %c0_i32_0 : i32, i32
  }
  func.func @transform_3(%arg0: i32, %arg1: i32) -> (i32, i32) {
    %c0_i32 = arith.constant 0 : i32
    %c0_i32_0 = arith.constant 0 : i32
    %c0_i32_1 = arith.constant 0 : i32
    return %c0_i32, %c0_i32_0 : i32, i32
  }
  func.func @transform_4(%arg0: i32, %arg1: i32) -> (i32, i32) {
    %c0_i32 = arith.constant 0 : i32
    %c0_i32_0 = arith.constant 0 : i32
    %c0_i32_1 = arith.constant 0 : i32
    return %c0_i32, %c0_i32_0 : i32, i32
  }
  func.func @transform_5(%arg0: i32, %arg1: i32) -> (i32, i32, i32) {
    %c0_i32 = arith.constant 0 : i32
    %c0_i32_0 = arith.constant 0 : i32
    return %arg0, %arg1, %c0_i32 : i32, i32, i32
  }
  func.func @transform_6(%arg0: i32, %arg1: i32) -> (i32, i32, i32, i32) {
    %c0_i32 = arith.constant 0 : i32
    %c0_i32_0 = arith.constant 0 : i32
    %c0_i32_1 = arith.constant 0 : i32
    return %arg0, %arg1, %c0_i32, %c0_i32_0 : i32, i32, i32, i32
  }
}

module attributes {stable_mosaic.version = 11 : i64} {
  func.func @_conv_kernel(%arg0: i32, %arg1: i32, %arg2: memref<1x1x10x256xbf16, #tpu.memory_space<vmem>>, %arg3: memref<3x256x512xbf16, #tpu.memory_space<vmem>>, %arg4: memref<1x512xf32, #tpu.memory_space<vmem>>, %arg5: memref<1x16x512xbf16, #tpu.memory_space<vmem>>) attributes {dimension_semantics = [#tpu.dimension_semantics<parallel>, #tpu.dimension_semantics<parallel>], iteration_bounds = array<i64: 2, 1>, scalar_prefetch = 0 : i64, scratch_operands = 0 : i64, tpu.core_type = #tpu.core_type<tc>, window_params = [{transform_indices = @transform_0, window_bounds = array<i64: 1, 1, 10, 256>}, {pipeline_mode = #tpu.pipeline_mode<synchronous>, transform_indices = @transform_1, window_bounds = array<i64: 3, 256, 512>}, {pipeline_mode = #tpu.pipeline_mode<synchronous>, transform_indices = @transform_2, window_bounds = array<i64: 1, 512>}, {transform_indices = @transform_3, window_bounds = array<i64: 1, 16, 512>}]} {
    %c0 = arith.constant 0 : index
    %c0_0 = arith.constant 0 : index
    %0 = vector.load %arg4[%c0, %c0_0] : memref<1x512xf32, #tpu.memory_space<vmem>>, vector<1x512xf32>
    %c0_1 = arith.constant 0 : index
    %c0_2 = arith.constant 0 : index
    %c0_3 = arith.constant 0 : index
    %c0_4 = arith.constant 0 : index
    %1 = vector.load %arg2[%c0_1, %c0_2, %c0_3, %c0_4] : memref<1x1x10x256xbf16, #tpu.memory_space<vmem>>, vector<1x1x10x256xbf16>
    %2 = vector.shape_cast %1 : vector<1x1x10x256xbf16> to vector<10x256xbf16>
    %3 = vector.extract_strided_slice %2 {offsets = [0, 0], sizes = [1, 256], strides = [1, 1]} : vector<10x256xbf16> to vector<1x256xbf16>
    %4 = vector.extract_strided_slice %2 {offsets = [1, 0], sizes = [8, 256], strides = [1, 1]} : vector<10x256xbf16> to vector<8x256xbf16>
    %5 = vector.shape_cast %4 : vector<8x256xbf16> to vector<8x1x256xbf16>
    %6 = vector.broadcast %5 : vector<8x1x256xbf16> to vector<8x2x256xbf16>
    %7 = vector.shape_cast %6 : vector<8x2x256xbf16> to vector<16x256xbf16>
    %8 = vector.extract_strided_slice %2 {offsets = [9, 0], sizes = [1, 256], strides = [1, 1]} : vector<10x256xbf16> to vector<1x256xbf16>
    %9 = tpu.concatenate %3, %7, %8 in 0 : vector<1x256xbf16>, vector<16x256xbf16>, vector<1x256xbf16> -> vector<18x256xbf16>
    %10 = vector.extract_strided_slice %9 {offsets = [0, 0], sizes = [16, 256], strides = [1, 1]} : vector<18x256xbf16> to vector<16x256xbf16>
    %c0_5 = arith.constant 0 : index
    %c0_6 = arith.constant 0 : index
    %c0_7 = arith.constant 0 : index
    %11 = vector.load %arg3[%c0_5, %c0_6, %c0_7] : memref<3x256x512xbf16, #tpu.memory_space<vmem>>, vector<1x256x512xbf16>
    %12 = vector.shape_cast %11 : vector<1x256x512xbf16> to vector<256x512xbf16>
    %cst = arith.constant dense<0.000000e+00> : vector<16x512xf32>
    %13 = tpu.matmul %10, %12, %cst {dimension_numbers = #tpu.dot_dimension_numbers<[1], [0], [0], [1], [0, 0, 1, 1], [], []>} : vector<16x256xbf16>, vector<256x512xbf16>, vector<16x512xf32> -> vector<16x512xf32>
    %14 = vector.broadcast %0 : vector<1x512xf32> to vector<16x512xf32>
    %15 = arith.addf %14, %13 : vector<16x512xf32>
    %16 = vector.extract_strided_slice %9 {offsets = [1, 0], sizes = [16, 256], strides = [1, 1]} : vector<18x256xbf16> to vector<16x256xbf16>
    %c1 = arith.constant 1 : index
    %c0_8 = arith.constant 0 : index
    %c0_9 = arith.constant 0 : index
    %17 = vector.load %arg3[%c1, %c0_8, %c0_9] : memref<3x256x512xbf16, #tpu.memory_space<vmem>>, vector<1x256x512xbf16>
    %18 = vector.shape_cast %17 : vector<1x256x512xbf16> to vector<256x512xbf16>
    %cst_10 = arith.constant dense<0.000000e+00> : vector<16x512xf32>
    %19 = tpu.matmul %16, %18, %cst_10 {dimension_numbers = #tpu.dot_dimension_numbers<[1], [0], [0], [1], [0, 0, 1, 1], [], []>} : vector<16x256xbf16>, vector<256x512xbf16>, vector<16x512xf32> -> vector<16x512xf32>
    %20 = arith.addf %15, %19 : vector<16x512xf32>
    %21 = vector.extract_strided_slice %9 {offsets = [2, 0], sizes = [16, 256], strides = [1, 1]} : vector<18x256xbf16> to vector<16x256xbf16>
    %c2 = arith.constant 2 : index
    %c0_11 = arith.constant 0 : index
    %c0_12 = arith.constant 0 : index
    %22 = vector.load %arg3[%c2, %c0_11, %c0_12] : memref<3x256x512xbf16, #tpu.memory_space<vmem>>, vector<1x256x512xbf16>
    %23 = vector.shape_cast %22 : vector<1x256x512xbf16> to vector<256x512xbf16>
    %cst_13 = arith.constant dense<0.000000e+00> : vector<16x512xf32>
    %24 = tpu.matmul %21, %23, %cst_13 {dimension_numbers = #tpu.dot_dimension_numbers<[1], [0], [0], [1], [0, 0, 1, 1], [], []>} : vector<16x256xbf16>, vector<256x512xbf16>, vector<16x512xf32> -> vector<16x512xf32>
    %25 = arith.addf %20, %24 : vector<16x512xf32>
    %cst_14 = arith.constant 0.000000e+00 : f32
    %26 = vector.broadcast %cst_14 : f32 to vector<16x512xf32>
    %27 = arith.maximumf %25, %26 : vector<16x512xf32>
    %28 = arith.truncf %27 : vector<16x512xf32> to vector<16x512xbf16>
    %29 = vector.shape_cast %28 : vector<16x512xbf16> to vector<1x16x512xbf16>
    %c0_15 = arith.constant 0 : index
    %c0_16 = arith.constant 0 : index
    %c0_17 = arith.constant 0 : index
    %30 = vector.load %arg5[%c0_15, %c0_16, %c0_17] : memref<1x16x512xbf16, #tpu.memory_space<vmem>>, vector<1x16x512xbf16>
    tpu.vector_store %arg5[%c0_15, %c0_16, %c0_17], %29 {strides = array<i32>} : memref<1x16x512xbf16, #tpu.memory_space<vmem>>, vector<1x16x512xbf16>,
    return
  }
  func.func @transform_0(%arg0: i32, %arg1: i32) -> (i32, i32, i32, i32) {
    %c0_i32 = arith.constant 0 : i32
    %c0_i32_0 = arith.constant 0 : i32
    %c0_i32_1 = arith.constant 0 : i32
    return %arg0, %arg1, %c0_i32, %c0_i32_0 : i32, i32, i32, i32
  }
  func.func @transform_1(%arg0: i32, %arg1: i32) -> (i32, i32, i32) {
    %c0_i32 = arith.constant 0 : i32
    %c0_i32_0 = arith.constant 0 : i32
    %c0_i32_1 = arith.constant 0 : i32
    %c0_i32_2 = arith.constant 0 : i32
    return %c0_i32, %c0_i32_0, %c0_i32_1 : i32, i32, i32
  }
  func.func @transform_2(%arg0: i32, %arg1: i32) -> (i32, i32) {
    %c0_i32 = arith.constant 0 : i32
    %c0_i32_0 = arith.constant 0 : i32
    %c0_i32_1 = arith.constant 0 : i32
    return %c0_i32, %c0_i32_0 : i32, i32
  }
  func.func @transform_3(%arg0: i32, %arg1: i32) -> (i32, i32, i32) {
    %c0_i32 = arith.constant 0 : i32
    %c0_i32_0 = arith.constant 0 : i32
    return %arg0, %arg1, %c0_i32 : i32, i32, i32
  }
}

module attributes {stable_mosaic.version = 11 : i64} {
  func.func @_conv_kernel(%arg0: i32, %arg1: i32, %arg2: memref<1x1x18x512xbf16, #tpu.memory_space<vmem>>, %arg3: memref<3x512x512xbf16, #tpu.memory_space<vmem>>, %arg4: memref<1x512xf32, #tpu.memory_space<vmem>>, %arg5: memref<1x16x512xbf16, #tpu.memory_space<vmem>>) attributes {dimension_semantics = [#tpu.dimension_semantics<parallel>, #tpu.dimension_semantics<parallel>], iteration_bounds = array<i64: 2, 1>, scalar_prefetch = 0 : i64, scratch_operands = 0 : i64, tpu.core_type = #tpu.core_type<tc>, window_params = [{transform_indices = @transform_0, window_bounds = array<i64: 1, 1, 18, 512>}, {pipeline_mode = #tpu.pipeline_mode<synchronous>, transform_indices = @transform_1, window_bounds = array<i64: 3, 512, 512>}, {pipeline_mode = #tpu.pipeline_mode<synchronous>, transform_indices = @transform_2, window_bounds = array<i64: 1, 512>}, {transform_indices = @transform_3, window_bounds = array<i64: 1, 16, 512>}]} {
    %c0 = arith.constant 0 : index
    %c0_0 = arith.constant 0 : index
    %0 = vector.load %arg4[%c0, %c0_0] : memref<1x512xf32, #tpu.memory_space<vmem>>, vector<1x512xf32>
    %c0_1 = arith.constant 0 : index
    %c0_2 = arith.constant 0 : index
    %c0_3 = arith.constant 0 : index
    %c0_4 = arith.constant 0 : index
    %1 = vector.load %arg2[%c0_1, %c0_2, %c0_3, %c0_4] : memref<1x1x18x512xbf16, #tpu.memory_space<vmem>>, vector<1x1x18x512xbf16>
    %2 = vector.shape_cast %1 : vector<1x1x18x512xbf16> to vector<18x512xbf16>
    %3 = vector.extract_strided_slice %2 {offsets = [0, 0], sizes = [16, 512], strides = [1, 1]} : vector<18x512xbf16> to vector<16x512xbf16>
    %c0_5 = arith.constant 0 : index
    %c0_6 = arith.constant 0 : index
    %c0_7 = arith.constant 0 : index
    %4 = vector.load %arg3[%c0_5, %c0_6, %c0_7] : memref<3x512x512xbf16, #tpu.memory_space<vmem>>, vector<1x512x512xbf16>
    %5 = vector.shape_cast %4 : vector<1x512x512xbf16> to vector<512x512xbf16>
    %cst = arith.constant dense<0.000000e+00> : vector<16x512xf32>
    %6 = tpu.matmul %3, %5, %cst {dimension_numbers = #tpu.dot_dimension_numbers<[1], [0], [0], [1], [0, 0, 1, 1], [], []>} : vector<16x512xbf16>, vector<512x512xbf16>, vector<16x512xf32> -> vector<16x512xf32>
    %7 = vector.broadcast %0 : vector<1x512xf32> to vector<16x512xf32>
    %8 = arith.addf %7, %6 : vector<16x512xf32>
    %9 = vector.extract_strided_slice %2 {offsets = [1, 0], sizes = [16, 512], strides = [1, 1]} : vector<18x512xbf16> to vector<16x512xbf16>
    %c1 = arith.constant 1 : index
    %c0_8 = arith.constant 0 : index
    %c0_9 = arith.constant 0 : index
    %10 = vector.load %arg3[%c1, %c0_8, %c0_9] : memref<3x512x512xbf16, #tpu.memory_space<vmem>>, vector<1x512x512xbf16>
    %11 = vector.shape_cast %10 : vector<1x512x512xbf16> to vector<512x512xbf16>
    %cst_10 = arith.constant dense<0.000000e+00> : vector<16x512xf32>
    %12 = tpu.matmul %9, %11, %cst_10 {dimension_numbers = #tpu.dot_dimension_numbers<[1], [0], [0], [1], [0, 0, 1, 1], [], []>} : vector<16x512xbf16>, vector<512x512xbf16>, vector<16x512xf32> -> vector<16x512xf32>
    %13 = arith.addf %8, %12 : vector<16x512xf32>
    %14 = vector.extract_strided_slice %2 {offsets = [2, 0], sizes = [16, 512], strides = [1, 1]} : vector<18x512xbf16> to vector<16x512xbf16>
    %c2 = arith.constant 2 : index
    %c0_11 = arith.constant 0 : index
    %c0_12 = arith.constant 0 : index
    %15 = vector.load %arg3[%c2, %c0_11, %c0_12] : memref<3x512x512xbf16, #tpu.memory_space<vmem>>, vector<1x512x512xbf16>
    %16 = vector.shape_cast %15 : vector<1x512x512xbf16> to vector<512x512xbf16>
    %cst_13 = arith.constant dense<0.000000e+00> : vector<16x512xf32>
    %17 = tpu.matmul %14, %16, %cst_13 {dimension_numbers = #tpu.dot_dimension_numbers<[1], [0], [0], [1], [0, 0, 1, 1], [], []>} : vector<16x512xbf16>, vector<512x512xbf16>, vector<16x512xf32> -> vector<16x512xf32>
    %18 = arith.addf %13, %17 : vector<16x512xf32>
    %cst_14 = arith.constant 0.000000e+00 : f32
    %19 = vector.broadcast %cst_14 : f32 to vector<16x512xf32>
    %20 = arith.maximumf %18, %19 : vector<16x512xf32>
    %21 = arith.truncf %20 : vector<16x512xf32> to vector<16x512xbf16>
    %22 = vector.shape_cast %21 : vector<16x512xbf16> to vector<1x16x512xbf16>
    %c0_15 = arith.constant 0 : index
    %c0_16 = arith.constant 0 : index
    %c0_17 = arith.constant 0 : index
    %23 = vector.load %arg5[%c0_15, %c0_16, %c0_17] : memref<1x16x512xbf16, #tpu.memory_space<vmem>>, vector<1x16x512xbf16>
    tpu.vector_store %arg5[%c0_15, %c0_16, %c0_17], %22 {strides = array<i32>} : memref<1x16x512xbf16, #tpu.memory_space<vmem>>, vector<1x16x512xbf16>,
    return
  }
  func.func @transform_0(%arg0: i32, %arg1: i32) -> (i32, i32, i32, i32) {
    %c0_i32 = arith.constant 0 : i32
    %c0_i32_0 = arith.constant 0 : i32
    %c0_i32_1 = arith.constant 0 : i32
    return %arg0, %arg1, %c0_i32, %c0_i32_0 : i32, i32, i32, i32
  }
  func.func @transform_1(%arg0: i32, %arg1: i32) -> (i32, i32, i32) {
    %c0_i32 = arith.constant 0 : i32
    %c0_i32_0 = arith.constant 0 : i32
    %c0_i32_1 = arith.constant 0 : i32
    %c0_i32_2 = arith.constant 0 : i32
    return %c0_i32, %c0_i32_0, %c0_i32_1 : i32, i32, i32
  }
  func.func @transform_2(%arg0: i32, %arg1: i32) -> (i32, i32) {
    %c0_i32 = arith.constant 0 : i32
    %c0_i32_0 = arith.constant 0 : i32
    %c0_i32_1 = arith.constant 0 : i32
    return %c0_i32, %c0_i32_0 : i32, i32
  }
  func.func @transform_3(%arg0: i32, %arg1: i32) -> (i32, i32, i32) {
    %c0_i32 = arith.constant 0 : i32
    %c0_i32_0 = arith.constant 0 : i32
    return %arg0, %arg1, %c0_i32 : i32, i32, i32
  }
}

module attributes {stable_mosaic.version = 11 : i64} {
  func.func @_conv_kernel(%arg0: i32, %arg1: i32, %arg2: memref<1x1x18x512xbf16, #tpu.memory_space<vmem>>, %arg3: memref<3x512x48xbf16, #tpu.memory_space<vmem>>, %arg4: memref<1x48xf32, #tpu.memory_space<vmem>>, %arg5: memref<1x16x48xbf16, #tpu.memory_space<vmem>>) attributes {dimension_semantics = [#tpu.dimension_semantics<parallel>, #tpu.dimension_semantics<parallel>], iteration_bounds = array<i64: 2, 1>, scalar_prefetch = 0 : i64, scratch_operands = 0 : i64, tpu.core_type = #tpu.core_type<tc>, window_params = [{transform_indices = @transform_0, window_bounds = array<i64: 1, 1, 18, 512>}, {pipeline_mode = #tpu.pipeline_mode<synchronous>, transform_indices = @transform_1, window_bounds = array<i64: 3, 512, 48>}, {pipeline_mode = #tpu.pipeline_mode<synchronous>, transform_indices = @transform_2, window_bounds = array<i64: 1, 48>}, {transform_indices = @transform_3, window_bounds = array<i64: 1, 16, 48>}]} {
    %c0 = arith.constant 0 : index
    %c0_0 = arith.constant 0 : index
    %0 = vector.load %arg4[%c0, %c0_0] : memref<1x48xf32, #tpu.memory_space<vmem>>, vector<1x48xf32>
    %c0_1 = arith.constant 0 : index
    %c0_2 = arith.constant 0 : index
    %c0_3 = arith.constant 0 : index
    %c0_4 = arith.constant 0 : index
    %1 = vector.load %arg2[%c0_1, %c0_2, %c0_3, %c0_4] : memref<1x1x18x512xbf16, #tpu.memory_space<vmem>>, vector<1x1x18x512xbf16>
    %2 = vector.shape_cast %1 : vector<1x1x18x512xbf16> to vector<18x512xbf16>
    %3 = vector.extract_strided_slice %2 {offsets = [0, 0], sizes = [16, 512], strides = [1, 1]} : vector<18x512xbf16> to vector<16x512xbf16>
    %c0_5 = arith.constant 0 : index
    %c0_6 = arith.constant 0 : index
    %c0_7 = arith.constant 0 : index
    %4 = vector.load %arg3[%c0_5, %c0_6, %c0_7] : memref<3x512x48xbf16, #tpu.memory_space<vmem>>, vector<1x512x48xbf16>
    %5 = vector.shape_cast %4 : vector<1x512x48xbf16> to vector<512x48xbf16>
    %cst = arith.constant dense<0.000000e+00> : vector<16x48xf32>
    %6 = tpu.matmul %3, %5, %cst {dimension_numbers = #tpu.dot_dimension_numbers<[1], [0], [0], [1], [0, 0, 1, 1], [], []>} : vector<16x512xbf16>, vector<512x48xbf16>, vector<16x48xf32> -> vector<16x48xf32>
    %7 = vector.broadcast %0 : vector<1x48xf32> to vector<16x48xf32>
    %8 = arith.addf %7, %6 : vector<16x48xf32>
    %9 = vector.extract_strided_slice %2 {offsets = [1, 0], sizes = [16, 512], strides = [1, 1]} : vector<18x512xbf16> to vector<16x512xbf16>
    %c1 = arith.constant 1 : index
    %c0_8 = arith.constant 0 : index
    %c0_9 = arith.constant 0 : index
    %10 = vector.load %arg3[%c1, %c0_8, %c0_9] : memref<3x512x48xbf16, #tpu.memory_space<vmem>>, vector<1x512x48xbf16>
    %11 = vector.shape_cast %10 : vector<1x512x48xbf16> to vector<512x48xbf16>
    %cst_10 = arith.constant dense<0.000000e+00> : vector<16x48xf32>
    %12 = tpu.matmul %9, %11, %cst_10 {dimension_numbers = #tpu.dot_dimension_numbers<[1], [0], [0], [1], [0, 0, 1, 1], [], []>} : vector<16x512xbf16>, vector<512x48xbf16>, vector<16x48xf32> -> vector<16x48xf32>
    %13 = arith.addf %8, %12 : vector<16x48xf32>
    %14 = vector.extract_strided_slice %2 {offsets = [2, 0], sizes = [16, 512], strides = [1, 1]} : vector<18x512xbf16> to vector<16x512xbf16>
    %c2 = arith.constant 2 : index
    %c0_11 = arith.constant 0 : index
    %c0_12 = arith.constant 0 : index
    %15 = vector.load %arg3[%c2, %c0_11, %c0_12] : memref<3x512x48xbf16, #tpu.memory_space<vmem>>, vector<1x512x48xbf16>
    %16 = vector.shape_cast %15 : vector<1x512x48xbf16> to vector<512x48xbf16>
    %cst_13 = arith.constant dense<0.000000e+00> : vector<16x48xf32>
    %17 = tpu.matmul %14, %16, %cst_13 {dimension_numbers = #tpu.dot_dimension_numbers<[1], [0], [0], [1], [0, 0, 1, 1], [], []>} : vector<16x512xbf16>, vector<512x48xbf16>, vector<16x48xf32> -> vector<16x48xf32>
    %18 = arith.addf %13, %17 : vector<16x48xf32>
    %19 = arith.truncf %18 : vector<16x48xf32> to vector<16x48xbf16>
    %20 = vector.shape_cast %19 : vector<16x48xbf16> to vector<1x16x48xbf16>
    %c0_14 = arith.constant 0 : index
    %c0_15 = arith.constant 0 : index
    %c0_16 = arith.constant 0 : index
    %21 = vector.load %arg5[%c0_14, %c0_15, %c0_16] : memref<1x16x48xbf16, #tpu.memory_space<vmem>>, vector<1x16x48xbf16>
    tpu.vector_store %arg5[%c0_14, %c0_15, %c0_16], %20 {strides = array<i32>} : memref<1x16x48xbf16, #tpu.memory_space<vmem>>, vector<1x16x48xbf16>,
    return
  }
  func.func @transform_0(%arg0: i32, %arg1: i32) -> (i32, i32, i32, i32) {
    %c0_i32 = arith.constant 0 : i32
    %c0_i32_0 = arith.constant 0 : i32
    %c0_i32_1 = arith.constant 0 : i32
    return %arg0, %arg1, %c0_i32, %c0_i32_0 : i32, i32, i32, i32
  }
  func.func @transform_1(%arg0: i32, %arg1: i32) -> (i32, i32, i32) {
    %c0_i32 = arith.constant 0 : i32
    %c0_i32_0 = arith.constant 0 : i32
    %c0_i32_1 = arith.constant 0 : i32
    %c0_i32_2 = arith.constant 0 : i32
    return %c0_i32, %c0_i32_0, %c0_i32_1 : i32, i32, i32
  }
  func.func @transform_2(%arg0: i32, %arg1: i32) -> (i32, i32) {
    %c0_i32 = arith.constant 0 : i32
    %c0_i32_0 = arith.constant 0 : i32
    %c0_i32_1 = arith.constant 0 : i32
    return %c0_i32, %c0_i32_0 : i32, i32
  }
  func.func @transform_3(%arg0: i32, %arg1: i32) -> (i32, i32, i32) {
    %c0_i32 = arith.constant 0 : i32
    %c0_i32_0 = arith.constant 0 : i32
    return %arg0, %arg1, %c0_i32 : i32, i32, i32
  }
}

</mosaic_0001>

<llo_original>
// kernel: tile.98
$region0: #{tile.98}
  #allocation2 [shape = 's32[1]{0}', space=sflag, size = 0x4, scoped, tag = 'scoped memory for tile.98']
  %s0 = inlined_call_operand.hbm [shape: f32[32], index: 0, kind: input, shape index: {}]
  %s1 = inlined_call_operand.vmem [shape: f32[8,32], index: 1, kind: output, shape index: {}]
  $region1: #{tile.98} parent=0
    #allocation0 [shape = 'u8[512]{0}', space=vmem, size = 0x400, scoped, tag = 'operand span for operand 0']
    #allocation1 [shape = 's32[1]{0}', space=sflag, size = 0x4, scoped, tag = 'scoped memory for tile.98']
    %2 = vsyncpa [#allocation1], 0
    // Predicated region
    $region2: #{tile.98} parent=1 // pred_check
      _
    $region3: #{tile.98} parent=1 // pred_check_branch
      %4 = sbr.rel (0) target = $region5
    $region4: #{tile.98} parent=1 // pred_region
      %s6 = ssub.s32 16, 16
      %7 = vsyncadd [#allocation1], %s6
      %s9 = sshll.u32 [#allocation0], 4
      %s10 = int_to_ptr.vmem [resolvable:$true] %s9
      %12 = dma.hbm_to_vmem [thread:$0]  %s0, 16, %s10, [#allocation1]
    $region5: #{tile.98} parent=1 // pred_fallthru
      _
    // Predicated region
    $region6: #{tile.98} parent=1 // pred_check
      _
    $region7: #{tile.98} parent=1 // pred_check_branch
      %14 = sbr.rel (0) target = $region9
    $region8: #{tile.98} parent=1 // pred_region
      %15 = dma.done [#allocation1], 16
    $region9: #{tile.98} parent=1 // pred_fallthru
      _
    %v16 = vld [vmem:[#allocation0] ss:$0 sm:$0xff]
    %17 = vst [vmem:[%s1] sm:$0xff] %v16
    %18 = vsyncpa [#allocation1], 1

// kernel: tile.99
$region0: #{tile.99}
  %s0 = inlined_call_operand.vmem [shape: f32[8,32], index: 0, kind: input, shape index: {}]
  %s1 = inlined_call_operand.vmem [shape: f32[1,256], index: 1, kind: output, shape index: {}]
  $region1: #{tile.99} parent=0
    #allocation0 [shape = 'u8[8192]{0}', space=vmem, size = 0x2000, scoped, tag = 'scoped mem for output reshape']
    %s2 = smov 3
    %v3 = vld [vmem:[%s0] ss:$4 sm:%s2]
    %vm4 = vcmask 261120
    %5 = vst.msk [vmem:[#allocation0] ss:$8 sm:$0x3] %vm4, %v3
    %s6 = scalar_lea.vmem %s0, 3
    %s7 = smov 3
    %v8 = vld [vmem:[%s6] ss:$4 sm:%s7]
    %9 = vrot.lane.b32.xlu0 %v8, 96
    %v10 = vpop.permute.xlu0 %9
    %vm11 = vcmask 1048320
    %12 = vst.msk [vmem:[#allocation0] ss:$8 sm:$0x3] %vm11, %v10
    %s13 = scalar_lea.vmem %s0, 2
    %s14 = smov 3
    %v15 = vld [vmem:[%s13] ss:$4 sm:%s14]
    %16 = vrot.lane.b32.xlu0 %v15, 64
    %v17 = vpop.permute.xlu0 %16
    %vm18 = vcmask 785920
    %19 = vst.msk [vmem:[#allocation0] ss:$8 sm:$0x3] %vm18, %v17
    %s20 = scalar_lea.vmem %s0, 1
    %s21 = smov 3
    %v22 = vld [vmem:[%s20] ss:$4 sm:%s21]
    %23 = vrot.lane.b32.xlu0 %v22, 32
    %v24 = vpop.permute.xlu0 %23
    %vm25 = vcmask 523520
    %26 = vst.msk [vmem:[#allocation0] ss:$8 sm:$0x3] %vm25, %v24
    %s28 = sshll.u32 1, 1
    %s29 = ssub.s32 %s28, 1
    %v31 = vld [vmem:[#allocation0] sm:%s29]
    %s32 = sshll.u32 1, 1
    %s33 = ssub.s32 %s32, 1
    %34 = vst [vmem:[%s1] sm:%s33] %v31
    %s35 = scalar_lea.vmem [#allocation0], 8
    %v36 = vld [vmem:[%s35] sm:%s29]
    %s37 = sshll.u32 1, 1
    %s38 = ssub.s32 %s37, 1
    %s39 = scalar_lea.vmem %s1, 1
    %40 = vst [vmem:[%s39] sm:%s38] %v36

// kernel: adaresnet_forward.12
$region0: #{adaresnet_forward.12}
  #allocation0 [shape = 'u32[]', space=smem, size = 0x4, offset = 0x4, fixed_abs, tag = 'smem constant byte address 0x4 - core index']
  #allocation1 [shape = 'u32[144,128]{1,0:T(1,128)}', space=vmem, size = 0x12000, scoped, tag = 'internal scratch']
  %s0 = inlined_call_operand.vmem [shape: bf16[2,1,3,8,48], index: 0, kind: input, shape index: {}]
  %s1 = inlined_call_operand.vmem [shape: bf16[3,48,256], index: 1, kind: input, shape index: {}]
  %s2 = inlined_call_operand.vmem [shape: f32[1,256], index: 2, kind: input, shape index: {}]
  %s3 = inlined_call_operand.vmem [shape: bf16[2,8,256], index: 3, kind: output, shape index: {}]
  %s4 = sld [smem:[#allocation0]]
  $region45: #{adaresnet_forward.12} parent=0
    _
  %s6 = ssub.s32 1, %s4
  %s7 = scalar_select 0, %s6, %s4
  loop: start=0, step=1, limit=4
  $region2: #{adaresnet_forward.12} parent=0 // loop_pre_header
    _
  $region3: #{adaresnet_forward.12} parent=0 // loop_header
    %s9 = sphi 0, %s13
    %p10 = scmp.ge.s32.totalorder %s9, 4
    %s16 = sphi 0, %s28
    %s17 = sphi 0, %s24
    %s18 = sphi 0, %s16
    %s19 = sphi 0, %s17
    %s20 = sphi 0, %s18
    %s21 = sphi 0, %s19
    %s33 = sphi 0, %s35
    %s36 = sphi 0, %s33
    %s37 = sphi 0, %s36
    %s53 = sphi 0, %s37
    %s57 = sphi 0, %s57
    %s59 = sphi 0, %s57
    %s60 = sphi 0, %s59
    %s74 = sphi 0, %s60
    %s78 = sphi 0, %s78
    %s80 = sphi 0, %s78
    %s81 = sphi 0, %s80
    %s95 = sphi 0, %s81
    %s103 = sphi 0, %s105
    %s106 = sphi 0, %s103
    %s107 = sphi 0, %s106
    %s123 = sphi 0, %s107
  $region4: #{adaresnet_forward.12} parent=0 // loop_header_branch
    %12 = sbr.rel (%p10) target = $region8
  $region5: #{adaresnet_forward.12} parent=0 // loop_body
    %s14 = ssub.s32 %s9, 1
    %s15 = ssub.s32 %s9, 2
    %s22 = sadd.s32 1, %s17
    %p23 = scmp.ge.s32.totalorder %s22, 1
    %s24 = scalar_select %p23, 0, %s22
    %s25 = sadd.s32 1, %s16
    %s26 = scalar_select %p23, %s25, %s16
    %p27 = scmp.ge.s32.totalorder %s26, 2
    %s28 = scalar_select %p27, 0, %s26
    %s29 = ssub.s32 %s16, %s28
    %s30 = ssub.s32 %s17, %s24
    %s31 = sor.u32 %s29, %s30
    %p32 = scmp.eq.s32.totalorder %s31, 0
    %s34 = sadd.s32 %s33, 1
    %s35 = scalar_select %p32, %s33, %s34
    %p38 = pneg %p32
    %p39 = scmp.eq.s32.totalorder %s9, 1
    %p40 = por %p38, %p39
    %p41 = scmp.ne.s32.totalorder %s33, %s36
    %p42 = scmp.eq.s32.totalorder %s9, 0
    %p43 = por %p41, %p42
    %p44 = scmp.ne.s32.totalorder %s33, %s36
    %p45 = scmp.eq.s32.totalorder %s14, 1
    %p46 = por %p44, %p45
    %p47 = scmp.ne.s32.totalorder %s36, %s37
    %p48 = scmp.eq.s32.totalorder %s14, 0
    %p49 = por %p47, %p48
    %p50 = scmp.ne.s32.totalorder %s36, %s37
    %p51 = scmp.eq.s32.totalorder %s15, 1
    %p52 = por %p50, %p51
    %p54 = scmp.ne.s32.totalorder %s37, %s53
    %p55 = scmp.eq.s32.totalorder %s15, 0
    %p56 = por %p54, %p55
    %s58 = sadd.s32 %s57, 1
    %p61 = scmp.eq.s32.totalorder %s9, 1
    %p62 = scmp.ne.s32.totalorder %s57, %s59
    %p63 = scmp.eq.s32.totalorder %s9, 0
    %p64 = por %p62, %p63
    %p65 = scmp.ne.s32.totalorder %s57, %s59
    %p66 = scmp.eq.s32.totalorder %s14, 1
    %p67 = por %p65, %p66
    %p68 = scmp.ne.s32.totalorder %s59, %s60
    %p69 = scmp.eq.s32.totalorder %s14, 0
    %p70 = por %p68, %p69
    %p71 = scmp.ne.s32.totalorder %s59, %s60
    %p72 = scmp.eq.s32.totalorder %s15, 1
    %p73 = por %p71, %p72
    %p75 = scmp.ne.s32.totalorder %s60, %s74
    %p76 = scmp.eq.s32.totalorder %s15, 0
    %p77 = por %p75, %p76
    %s79 = sadd.s32 %s78, 1
    %p82 = scmp.eq.s32.totalorder %s9, 1
    %p83 = scmp.ne.s32.totalorder %s78, %s80
    %p84 = scmp.eq.s32.totalorder %s9, 0
    %p85 = por %p83, %p84
    %p86 = scmp.ne.s32.totalorder %s78, %s80
    %p87 = scmp.eq.s32.totalorder %s14, 1
    %p88 = por %p86, %p87
    %p89 = scmp.ne.s32.totalorder %s80, %s81
    %p90 = scmp.eq.s32.totalorder %s14, 0
    %p91 = por %p89, %p90
    %p92 = scmp.ne.s32.totalorder %s80, %s81
    %p93 = scmp.eq.s32.totalorder %s15, 1
    %p94 = por %p92, %p93
    %p96 = scmp.ne.s32.totalorder %s81, %s95
    %p97 = scmp.eq.s32.totalorder %s15, 0
    %p98 = por %p96, %p97
    %s99 = ssub.s32 %s16, %s28
    %s100 = ssub.s32 %s17, %s24
    %s101 = sor.u32 %s99, %s100
    %p102 = scmp.eq.s32.totalorder %s101, 0
    %s104 = sadd.s32 %s103, 1
    %s105 = scalar_select %p102, %s103, %s104
    %p108 = pneg %p102
    %p109 = scmp.eq.s32.totalorder %s9, 1
    %p110 = por %p108, %p109
    %p111 = scmp.ne.s32.totalorder %s103, %s106
    %p112 = scmp.eq.s32.totalorder %s9, 0
    %p113 = por %p111, %p112
    %p114 = scmp.ne.s32.totalorder %s103, %s106
    %p115 = scmp.eq.s32.totalorder %s14, 1
    %p116 = por %p114, %p115
    %p117 = scmp.ne.s32.totalorder %s106, %s107
    %p118 = scmp.eq.s32.totalorder %s14, 0
    %p119 = por %p117, %p118
    %p120 = scmp.ne.s32.totalorder %s106, %s107
    %p121 = scmp.eq.s32.totalorder %s15, 1
    %p122 = por %p120, %p121
    %p124 = scmp.ne.s32.totalorder %s107, %s123
    %p125 = scmp.eq.s32.totalorder %s15, 0
    %p126 = por %p124, %p125
    %p127 = scmp.le.s32.totalorder 1, %s9
    %p128 = scmp.lt.s32.totalorder %s9, 3
    %p129 = pnand %p127, %p128
    %p130 = pneg %p129
    // Predicated region
    $region9: #{adaresnet_forward.12} parent=5 // pred_check
      _
    $region10: #{adaresnet_forward.12} parent=5 // pred_check_branch
      %132 = sbr.rel (%p129) target = $region12
    $region11: #{adaresnet_forward.12} parent=5 // pred_region
      %s133 = ssub.s32 %s9, 1
      // Predicated region
      $region13: #{adaresnet_forward.12} parent=11 // pred_check
        %p134 = pneg %p70
      $region14: #{adaresnet_forward.12} parent=11 // pred_check_branch
        %136 = sbr.rel (%p134) target = $region16
      $region15: #{adaresnet_forward.12} parent=11 // pred_region
        _
      $region16: #{adaresnet_forward.12} parent=11 // pred_fallthru
        _
      // Predicated region
      $region17: #{adaresnet_forward.12} parent=11 // pred_check
        %p137 = pneg %p91
      $region18: #{adaresnet_forward.12} parent=11 // pred_check_branch
        %139 = sbr.rel (%p137) target = $region20
      $region19: #{adaresnet_forward.12} parent=11 // pred_region
        _
      $region20: #{adaresnet_forward.12} parent=11 // pred_fallthru
        _
    $region12: #{adaresnet_forward.12} parent=5 // pred_fallthru
      _
    %p140 = scmp.lt.s32.totalorder %s9, 2
    // Predicated region
    $region21: #{adaresnet_forward.12} parent=5 // pred_check
      %p141 = pneg %p140
    $region22: #{adaresnet_forward.12} parent=5 // pred_check_branch
      %143 = sbr.rel (%p141) target = $region24
    $region23: #{adaresnet_forward.12} parent=5 // pred_region
      // Predicated region
      $region25: #{adaresnet_forward.12} parent=23 // pred_check
        %p144 = pneg %p43
      $region26: #{adaresnet_forward.12} parent=23 // pred_check_branch
        %146 = sbr.rel (%p144) target = $region28
      $region27: #{adaresnet_forward.12} parent=23 // pred_region
        %p147 = scmp.lt.s32.totalorder %s16, 1
        %s148 = scalar_select %p147, %s16, 1
        %p149 = scmp.lt.s32.totalorder %s17, 0
        %s150 = scalar_select %p149, %s17, 0
        %s151 = smul.addr %s150, 3
        %s152 = smul.addr %s148, 3
        %s153 = sadd.s32 %s151, %s152
        %s154 = smul.addr %s153, 4
        %s155 = scalar_lea.vmem %s0, %s154
      $region28: #{adaresnet_forward.12} parent=23 // pred_fallthru
        _
    $region24: #{adaresnet_forward.12} parent=5 // pred_fallthru
      _
    %p156 = scmp.le.s32.totalorder 1, %s9
    %p157 = scmp.lt.s32.totalorder %s9, 3
    %p158 = pnand %p156, %p157
    %p159 = pneg %p158
    // Predicated region
    $region29: #{adaresnet_forward.12} parent=5 // pred_check
      _
    $region30: #{adaresnet_forward.12} parent=5 // pred_check_branch
      %161 = sbr.rel (%p158) target = $region32
    $region31: #{adaresnet_forward.12} parent=5 // pred_region
      %s162 = ssub.s32 %s9, 1
      %p163 = scmp.lt.s32.totalorder %s18, 1
      %s164 = scalar_select %p163, %s18, 1
      %p165 = scmp.lt.s32.totalorder %s19, 0
      %s166 = scalar_select %p165, %s19, 0
      %s167 = smul.addr %s166, 3
      %s168 = smul.addr %s164, 3
      %s169 = sadd.s32 %s167, %s168
      %s170 = smul.addr %s169, 4
      %s171 = scalar_lea.vmem %s0, %s170
      %p172 = pneg %p49
      %p173 = pneg %p46
      %p174 = pneg %p70
      %p175 = pneg %p67
      %p176 = pneg %p91
      %p177 = pneg %p88
      %p178 = pneg %p119
      %p179 = pneg %p116
      %p180 = scmp.lt.s32.totalorder %s18, 1
      %s181 = scalar_select %p180, %s18, 1
      %p182 = scmp.lt.s32.totalorder %s19, 0
      %s183 = scalar_select %p182, %s19, 0
      %s184 = smul.addr %s183, 2
      %s185 = smul.addr %s181, 2
      %s186 = sadd.s32 %s184, %s185
      %s187 = smul.addr %s186, 4
      %s188 = scalar_lea.vmem %s3, %s187
      %p189 = scmp.lt.s32.totalorder %s18, 1
      %s190 = scalar_select %p189, %s18, 1
      %p191 = scmp.lt.s32.totalorder %s19, 0
      %s192 = scalar_select %p191, %s19, 0
      %s193 = smul.addr %s192, 3
      %s194 = smul.addr %s190, 3
      %s195 = sadd.s32 %s193, %s194
      %s196 = smul.addr %s195, 4
      %s197 = scalar_lea.vmem %s0, %s196
      %p198 = scmp.lt.s32.totalorder %s18, 1
      %s199 = scalar_select %p198, %s18, 1
      %p200 = scmp.lt.s32.totalorder %s19, 0
      %s201 = scalar_select %p200, %s19, 0
      %s202 = smul.addr %s201, 2
      %s203 = smul.addr %s199, 2
      %s204 = sadd.s32 %s202, %s203
      %s205 = smul.addr %s204, 4
      %s206 = scalar_lea.vmem %s3, %s205
      %v208 = vld [vmem:[%s2] sm:$0x3]
      %v209 = vld [vmem:[%s197] sm:$0xf]
      %v210 = vld [vmem:[%s1] sm:$0xff]
      %v211 = vld [vmem:[%s1 + $0x8] sm:$0xff]
      %v212 = vld [vmem:[%s1 + $0x10] sm:$0xff]
      %v213 = vld [vmem:[%s1 + $0x18] sm:$0xff]
      %v214 = vld [vmem:[%s1 + $0x20] sm:$0xff]
      %v215 = vld [vmem:[%s1 + $0x28] sm:$0xff]
      %v222 = vunpack.c.l.b16 %v210
      %v223 = vunpack.c.h.b16 %v210
      %v224 = vunpack.c.l.b16 %v211
      %v225 = vunpack.c.h.b16 %v211
      %v226 = vunpack.c.l.b16 %v212
      %v227 = vunpack.c.h.b16 %v212
      %v228 = vunpack.c.l.b16 %v213
      %v229 = vunpack.c.h.b16 %v213
      %v230 = vunpack.c.l.b16 %v214
      %v231 = vunpack.c.h.b16 %v214
      %v232 = vunpack.c.l.b16 %v215
      %v233 = vunpack.c.h.b16 %v215
      %v234 = vpack.c.b16 %v224, %v222
      %v235 = vpack.c.b16 %v225, %v223
      %v236 = vpack.c.b16 %v228, %v226
      %v237 = vpack.c.b16 %v229, %v227
      %v238 = vpack.c.b16 %v232, %v230
      %v239 = vpack.c.b16 %v233, %v231
      %vm246 = vcmask 392192
      %v248 = vsel %vm246, %v209, 0
      %250 = vmatprep.subr.bf16.mxu0 0
      %251 = vmatpush1.bf16.msra.mxu0 0
      %252 = vmatprep.subr.bf16.mxu0 0
      %253 = vmatpush1.bf16.msra.mxu0 0
      %254 = vmatprep.subr.bf16.mxu0 0
      %255 = vmatpush1.bf16.msra.mxu0 0
      %256 = vmatprep.subr.bf16.mxu0 0
      %257 = vmatpush1.bf16.msra.mxu0 0
      %258 = vmatprep.subr.bf16.mxu0 0
      %259 = vmatpush1.bf16.msra.mxu0 0
      %260 = vmatprep.subr.bf16.mxu0 %v239
      %261 = vmatpush1.bf16.msra.mxu0 %v238
      %262 = vmatprep.subr.bf16.mxu0 %v237
      %263 = vmatpush1.bf16.msra.mxu0 %v236
      %264 = vmatprep.subr.bf16.mxu0 %v235
      %265 = vmatpush1.bf16.msra.mxu0 %v234
      %266 = vmatprep.subr.bf16.mxu0 0
      %267 = vmatpush2.bf16.msra.mxu0 0
      %268 = vmatprep.subr.bf16.mxu0 0
      %269 = vmatpush2.bf16.msra.mxu0 0
      %270 = vmatprep.subr.bf16.mxu0 0
      %271 = vmatpush2.bf16.msra.mxu0 0
      %272 = vmatprep.subr.bf16.mxu0 0
      %273 = vmatpush2.bf16.msra.mxu0 0
      %274 = vmatprep.subr.bf16.mxu0 0
      %275 = vmatpush2.bf16.msra.mxu0 0
      %276 = vmatprep.subr.bf16.mxu0 0
      %277 = vmatpush2.bf16.msra.mxu0 0
      %278 = vmatprep.subr.bf16.mxu0 0
      %279 = vmatpush2.bf16.msra.mxu0 0
      %280 = vmatprep.subr.bf16.mxu0 0
      %281 = vmatpush2.bf16.msra.mxu0 0
      %282 = vmatprep.mubr.bf16.mxu0 0
      %283 = vmatmul.mubr.bf16.gmra.mxu0 %v248
      %v284 = vpop.f32.mrf.mxu0
      %v285 = vadd.f32 0.0, %v284
      %v286 = vpop.f32.mrf.mxu0
      %v287 = vadd.f32 0.0, %v286
      %v288 = vpop.f32.mrf.mxu0
      %v289 = vpop.f32.mrf.mxu0
      %290 = vdwg.mxu0
      %v292 = vlaneseq
      %v293 = vshrl.u32 %v292, 7
      %v294 = vsub.s32 0, %v293
      %v295 = vrot.slane %v208, %v294
      %v296 = vlaneseq
      %v297 = vshrl.u32 %v296, 7
      %v298 = vsub.s32 1, %v297
      %v299 = vrot.slane %v208, %v298
      %v302 = vadd.f32 %v295, %v285
      %v303 = vadd.f32 %v299, %v287
      %s304 = scalar_lea.vmem %s197, 4
      %v305 = vld [vmem:[%s304] sm:$0xf]
      %s306 = scalar_lea.vmem %s1, 48
      %v307 = vld [vmem:[%s306] sm:$0xff]
      %v308 = vld [vmem:[%s306 + $0x8] sm:$0xff]
      %v309 = vld [vmem:[%s306 + $0x10] sm:$0xff]
      %v310 = vld [vmem:[%s306 + $0x18] sm:$0xff]
      %v311 = vld [vmem:[%s306 + $0x20] sm:$0xff]
      %v312 = vld [vmem:[%s306 + $0x28] sm:$0xff]
      %v319 = vunpack.c.l.b16 %v307
      %v320 = vunpack.c.h.b16 %v307
      %v321 = vunpack.c.l.b16 %v308
      %v322 = vunpack.c.h.b16 %v308
      %v323 = vunpack.c.l.b16 %v309
      %v324 = vunpack.c.h.b16 %v309
      %v325 = vunpack.c.l.b16 %v310
      %v326 = vunpack.c.h.b16 %v310
      %v327 = vunpack.c.l.b16 %v311
      %v328 = vunpack.c.h.b16 %v311
      %v329 = vunpack.c.l.b16 %v312
      %v330 = vunpack.c.h.b16 %v312
      %v331 = vpack.c.b16 %v321, %v319
      %v332 = vpack.c.b16 %v322, %v320
      %v333 = vpack.c.b16 %v325, %v323
      %v334 = vpack.c.b16 %v326, %v324
      %v335 = vpack.c.b16 %v329, %v327
      %v336 = vpack.c.b16 %v330, %v328
      %v344 = vsel %vm246, %v305, 0
      %346 = vmatprep.subr.bf16.mxu0 0
      %347 = vmatpush1.bf16.msra.mxu0 0
      %348 = vmatprep.subr.bf16.mxu0 0
      %349 = vmatpush1.bf16.msra.mxu0 0
      %350 = vmatprep.subr.bf16.mxu0 0
      %351 = vmatpush1.bf16.msra.mxu0 0
      %352 = vmatprep.subr.bf16.mxu0 0
      %353 = vmatpush1.bf16.msra.mxu0 0
      %354 = vmatprep.subr.bf16.mxu0 0
      %355 = vmatpush1.bf16.msra.mxu0 0
      %356 = vmatprep.subr.bf16.mxu0 %v336
      %357 = vmatpush1.bf16.msra.mxu0 %v335
      %358 = vmatprep.subr.bf16.mxu0 %v334
      %359 = vmatpush1.bf16.msra.mxu0 %v333
      %360 = vmatprep.subr.bf16.mxu0 %v332
      %361 = vmatpush1.bf16.msra.mxu0 %v331
      %362 = vmatprep.subr.bf16.mxu0 0
      %363 = vmatpush2.bf16.msra.mxu0 0
      %364 = vmatprep.subr.bf16.mxu0 0
      %365 = vmatpush2.bf16.msra.mxu0 0
      %366 = vmatprep.subr.bf16.mxu0 0
      %367 = vmatpush2.bf16.msra.mxu0 0
      %368 = vmatprep.subr.bf16.mxu0 0
      %369 = vmatpush2.bf16.msra.mxu0 0
      %370 = vmatprep.subr.bf16.mxu0 0
      %371 = vmatpush2.bf16.msra.mxu0 0
      %372 = vmatprep.subr.bf16.mxu0 0
      %373 = vmatpush2.bf16.msra.mxu0 0
      %374 = vmatprep.subr.bf16.mxu0 0
      %375 = vmatpush2.bf16.msra.mxu0 0
      %376 = vmatprep.subr.bf16.mxu0 0
      %377 = vmatpush2.bf16.msra.mxu0 0
      %378 = vmatprep.mubr.bf16.mxu0 0
      %379 = vmatmul.mubr.bf16.gmra.mxu0 %v344
      %v380 = vpop.f32.mrf.mxu0
      %v381 = vadd.f32 0.0, %v380
      %v382 = vpop.f32.mrf.mxu0
      %v383 = vadd.f32 0.0, %v382
      %v384 = vpop.f32.mrf.mxu0
      %v385 = vpop.f32.mrf.mxu0
      %386 = vdwg.mxu0
      %v387 = vadd.f32 %v302, %v381
      %v388 = vadd.f32 %v303, %v383
      %s389 = scalar_lea.vmem %s197, 8
      %v390 = vld [vmem:[%s389] sm:$0xf]
      %s391 = scalar_lea.vmem %s1, 96
      %v392 = vld [vmem:[%s391] sm:$0xff]
      %v393 = vld [vmem:[%s391 + $0x8] sm:$0xff]
      %v394 = vld [vmem:[%s391 + $0x10] sm:$0xff]
      %v395 = vld [vmem:[%s391 + $0x18] sm:$0xff]
      %v396 = vld [vmem:[%s391 + $0x20] sm:$0xff]
      %v397 = vld [vmem:[%s391 + $0x28] sm:$0xff]
      %v404 = vunpack.c.l.b16 %v392
      %v405 = vunpack.c.h.b16 %v392
      %v406 = vunpack.c.l.b16 %v393
      %v407 = vunpack.c.h.b16 %v393
      %v408 = vunpack.c.l.b16 %v394
      %v409 = vunpack.c.h.b16 %v394
      %v410 = vunpack.c.l.b16 %v395
      %v411 = vunpack.c.h.b16 %v395
      %v412 = vunpack.c.l.b16 %v396
      %v413 = vunpack.c.h.b16 %v396
      %v414 = vunpack.c.l.b16 %v397
      %v415 = vunpack.c.h.b16 %v397
      %v416 = vpack.c.b16 %v406, %v404
      %v417 = vpack.c.b16 %v407, %v405
      %v418 = vpack.c.b16 %v410, %v408
      %v419 = vpack.c.b16 %v411, %v409
      %v420 = vpack.c.b16 %v414, %v412
      %v421 = vpack.c.b16 %v415, %v413
      %v429 = vsel %vm246, %v390, 0
      %431 = vmatprep.subr.bf16.mxu0 0
      %432 = vmatpush1.bf16.msra.mxu0 0
      %433 = vmatprep.subr.bf16.mxu0 0
      %434 = vmatpush1.bf16.msra.mxu0 0
      %435 = vmatprep.subr.bf16.mxu0 0
      %436 = vmatpush1.bf16.msra.mxu0 0
      %437 = vmatprep.subr.bf16.mxu0 0
      %438 = vmatpush1.bf16.msra.mxu0 0
      %439 = vmatprep.subr.bf16.mxu0 0
      %440 = vmatpush1.bf16.msra.mxu0 0
      %441 = vmatprep.subr.bf16.mxu0 %v421
      %442 = vmatpush1.bf16.msra.mxu0 %v420
      %443 = vmatprep.subr.bf16.mxu0 %v419
      %444 = vmatpush1.bf16.msra.mxu0 %v418
      %445 = vmatprep.subr.bf16.mxu0 %v417
      %446 = vmatpush1.bf16.msra.mxu0 %v416
      %447 = vmatprep.subr.bf16.mxu0 0
      %448 = vmatpush2.bf16.msra.mxu0 0
      %449 = vmatprep.subr.bf16.mxu0 0
      %450 = vmatpush2.bf16.msra.mxu0 0
      %451 = vmatprep.subr.bf16.mxu0 0
      %452 = vmatpush2.bf16.msra.mxu0 0
      %453 = vmatprep.subr.bf16.mxu0 0
      %454 = vmatpush2.bf16.msra.mxu0 0
      %455 = vmatprep.subr.bf16.mxu0 0
      %456 = vmatpush2.bf16.msra.mxu0 0
      %457 = vmatprep.subr.bf16.mxu0 0
      %458 = vmatpush2.bf16.msra.mxu0 0
      %459 = vmatprep.subr.bf16.mxu0 0
      %460 = vmatpush2.bf16.msra.mxu0 0
      %461 = vmatprep.subr.bf16.mxu0 0
      %462 = vmatpush2.bf16.msra.mxu0 0
      %463 = vmatprep.mubr.bf16.mxu0 0
      %464 = vmatmul.mubr.bf16.gmra.mxu0 %v429
      %v465 = vpop.f32.mrf.mxu0
      %v466 = vadd.f32 0.0, %v465
      %v467 = vpop.f32.mrf.mxu0
      %v468 = vadd.f32 0.0, %v467
      %v469 = vpop.f32.mrf.mxu0
      %v470 = vpop.f32.mrf.mxu0
      %471 = vdwg.mxu0
      %v472 = vadd.f32 %v387, %v466
      %v473 = vadd.f32 %v388, %v468
      %v474 = vpack.c.bf16 %v472, %v472
      %v475 = vpack.c.bf16 %v473, %v473
      %v478 = vunpack.c.l.b16 %v474
      %v479 = vunpack.c.l.b16 %v475
      %v480 = vpack.c.b16 %v479, %v478
      %482 = vst [vmem:[%s206] sm:$0xff] %v480
      %p483 = scmp.lt.s32.totalorder %s18, 1
      %s484 = scalar_select %p483, %s18, 1
      %p485 = scmp.lt.s32.totalorder %s19, 0
      %s486 = scalar_select %p485, %s19, 0
      %s487 = smul.addr %s486, 2
      %s488 = smul.addr %s484, 2
      %s489 = sadd.s32 %s487, %s488
      %s490 = smul.addr %s489, 4
      %s491 = scalar_lea.vmem %s3, %s490
      // Predicated region
      $region33: #{adaresnet_forward.12} parent=31 // pred_check
        %p492 = pneg %p116
      $region34: #{adaresnet_forward.12} parent=31 // pred_check_branch
        %494 = sbr.rel (%p492) target = $region36
      $region35: #{adaresnet_forward.12} parent=31 // pred_region
        _
      $region36: #{adaresnet_forward.12} parent=31 // pred_fallthru
        _
    $region32: #{adaresnet_forward.12} parent=5 // pred_fallthru
      _
    %p495 = scmp.le.s32.totalorder 2, %s9
    // Predicated region
    $region37: #{adaresnet_forward.12} parent=5 // pred_check
      %p496 = pneg %p495
    $region38: #{adaresnet_forward.12} parent=5 // pred_check_branch
      %498 = sbr.rel (%p496) target = $region40
    $region39: #{adaresnet_forward.12} parent=5 // pred_region
      %s499 = ssub.s32 %s9, 2
      // Predicated region
      $region41: #{adaresnet_forward.12} parent=39 // pred_check
        %p500 = pneg %p122
      $region42: #{adaresnet_forward.12} parent=39 // pred_check_branch
        %502 = sbr.rel (%p500) target = $region44
      $region43: #{adaresnet_forward.12} parent=39 // pred_region
        %p503 = scmp.lt.s32.totalorder %s20, 1
        %s504 = scalar_select %p503, %s20, 1
        %p505 = scmp.lt.s32.totalorder %s21, 0
        %s506 = scalar_select %p505, %s21, 0
        %s507 = smul.addr %s506, 2
        %s508 = smul.addr %s504, 2
        %s509 = sadd.s32 %s507, %s508
        %s510 = smul.addr %s509, 4
        %s511 = scalar_lea.vmem %s3, %s510
      $region44: #{adaresnet_forward.12} parent=39 // pred_fallthru
        _
    $region40: #{adaresnet_forward.12} parent=5 // pred_fallthru
      _
  $region6: #{adaresnet_forward.12} parent=0 // loop_footer
    %s13 = sadd.s32 1, %s9
  $region7: #{adaresnet_forward.12} parent=0 // loop_footer_branch
    %8 = sbr.rel target = $region3
  $region8: #{adaresnet_forward.12} parent=0 // loop_exit
    _

// kernel: tile.103
$region0: #{tile.103}
  #allocation0 [shape = 's32[1]{0}', space=sflag, size = 0x4, scoped, tag = 'scoped memory for tile.103']
  %s0 = inlined_call_operand.vmem [shape: f32[32], index: 0, kind: input, shape index: {}]
  %s1 = inlined_call_operand.vmem [shape: f32[8,32], index: 1, kind: output, shape index: {}]
  // Predicated region
  $region2: #{tile.103} parent=0 // pred_check
    _
  $region3: #{tile.103} parent=0 // pred_check_branch
    %3 = sbr.rel (0) target = $region5
  $region4: #{tile.103} parent=0 // pred_region
    _
  $region5: #{tile.103} parent=0 // pred_fallthru
    _
  %v4 = vld [vmem:[%s0] ss:$0 sm:$0xff]
  %5 = vst [vmem:[%s1] sm:$0xff] %v4

// kernel: adaresnet_forward.13
$region0: #{adaresnet_forward.13}
  #allocation0 [shape = 'u32[]', space=smem, size = 0x4, offset = 0x4, fixed_abs, tag = 'smem constant byte address 0x4 - core index']
  #allocation1 [shape = 'u32[144,128]{1,0:T(1,128)}', space=vmem, size = 0x12000, scoped, tag = 'internal scratch']
  %s0 = inlined_call_operand.vmem [shape: bf16[2,1,10,256], index: 0, kind: input, shape index: {}]
  %s1 = inlined_call_operand.vmem [shape: bf16[3,256,256], index: 1, kind: input, shape index: {}]
  %s2 = inlined_call_operand.vmem [shape: f32[1,256], index: 2, kind: input, shape index: {}]
  %s3 = inlined_call_operand.vmem [shape: bf16[2,8,256], index: 3, kind: output, shape index: {0}]
  %s4 = inlined_call_operand.vmem [shape: f32[2,1,2,256], index: 4, kind: output, shape index: {1}]
  %5 = xla_tuple %s3, %s4
  %s6 = sld [smem:[#allocation0]]
  $region53: #{adaresnet_forward.13} parent=0
    _
  %s8 = ssub.s32 1, %s6
  %s9 = scalar_select 0, %s8, %s6
  loop: start=0, step=1, limit=4
  $region2: #{adaresnet_forward.13} parent=0 // loop_pre_header
    _
  $region3: #{adaresnet_forward.13} parent=0 // loop_header
    %s11 = sphi 0, %s15
    %p12 = scmp.ge.s32.totalorder %s11, 4
    %s18 = sphi 0, %s30
    %s19 = sphi 0, %s26
    %s20 = sphi 0, %s18
    %s21 = sphi 0, %s19
    %s22 = sphi 0, %s20
    %s23 = sphi 0, %s21
    %s35 = sphi 0, %s37
    %s38 = sphi 0, %s35
    %s39 = sphi 0, %s38
    %s55 = sphi 0, %s39
    %s59 = sphi 0, %s59
    %s61 = sphi 0, %s59
    %s62 = sphi 0, %s61
    %s76 = sphi 0, %s62
    %s80 = sphi 0, %s80
    %s82 = sphi 0, %s80
    %s83 = sphi 0, %s82
    %s97 = sphi 0, %s83
    %s105 = sphi 0, %s107
    %s108 = sphi 0, %s105
    %s109 = sphi 0, %s108
    %s125 = sphi 0, %s109
    %s133 = sphi 0, %s135
    %s136 = sphi 0, %s133
    %s137 = sphi 0, %s136
    %s153 = sphi 0, %s137
  $region4: #{adaresnet_forward.13} parent=0 // loop_header_branch
    %14 = sbr.rel (%p12) target = $region8
  $region5: #{adaresnet_forward.13} parent=0 // loop_body
    %s16 = ssub.s32 %s11, 1
    %s17 = ssub.s32 %s11, 2
    %s24 = sadd.s32 1, %s19
    %p25 = scmp.ge.s32.totalorder %s24, 1
    %s26 = scalar_select %p25, 0, %s24
    %s27 = sadd.s32 1, %s18
    %s28 = scalar_select %p25, %s27, %s18
    %p29 = scmp.ge.s32.totalorder %s28, 2
    %s30 = scalar_select %p29, 0, %s28
    %s31 = ssub.s32 %s18, %s30
    %s32 = ssub.s32 %s19, %s26
    %s33 = sor.u32 %s31, %s32
    %p34 = scmp.eq.s32.totalorder %s33, 0
    %s36 = sadd.s32 %s35, 1
    %s37 = scalar_select %p34, %s35, %s36
    %p40 = pneg %p34
    %p41 = scmp.eq.s32.totalorder %s11, 1
    %p42 = por %p40, %p41
    %p43 = scmp.ne.s32.totalorder %s35, %s38
    %p44 = scmp.eq.s32.totalorder %s11, 0
    %p45 = por %p43, %p44
    %p46 = scmp.ne.s32.totalorder %s35, %s38
    %p47 = scmp.eq.s32.totalorder %s16, 1
    %p48 = por %p46, %p47
    %p49 = scmp.ne.s32.totalorder %s38, %s39
    %p50 = scmp.eq.s32.totalorder %s16, 0
    %p51 = por %p49, %p50
    %p52 = scmp.ne.s32.totalorder %s38, %s39
    %p53 = scmp.eq.s32.totalorder %s17, 1
    %p54 = por %p52, %p53
    %p56 = scmp.ne.s32.totalorder %s39, %s55
    %p57 = scmp.eq.s32.totalorder %s17, 0
    %p58 = por %p56, %p57
    %s60 = sadd.s32 %s59, 1
    %p63 = scmp.eq.s32.totalorder %s11, 1
    %p64 = scmp.ne.s32.totalorder %s59, %s61
    %p65 = scmp.eq.s32.totalorder %s11, 0
    %p66 = por %p64, %p65
    %p67 = scmp.ne.s32.totalorder %s59, %s61
    %p68 = scmp.eq.s32.totalorder %s16, 1
    %p69 = por %p67, %p68
    %p70 = scmp.ne.s32.totalorder %s61, %s62
    %p71 = scmp.eq.s32.totalorder %s16, 0
    %p72 = por %p70, %p71
    %p73 = scmp.ne.s32.totalorder %s61, %s62
    %p74 = scmp.eq.s32.totalorder %s17, 1
    %p75 = por %p73, %p74
    %p77 = scmp.ne.s32.totalorder %s62, %s76
    %p78 = scmp.eq.s32.totalorder %s17, 0
    %p79 = por %p77, %p78
    %s81 = sadd.s32 %s80, 1
    %p84 = scmp.eq.s32.totalorder %s11, 1
    %p85 = scmp.ne.s32.totalorder %s80, %s82
    %p86 = scmp.eq.s32.totalorder %s11, 0
    %p87 = por %p85, %p86
    %p88 = scmp.ne.s32.totalorder %s80, %s82
    %p89 = scmp.eq.s32.totalorder %s16, 1
    %p90 = por %p88, %p89
    %p91 = scmp.ne.s32.totalorder %s82, %s83
    %p92 = scmp.eq.s32.totalorder %s16, 0
    %p93 = por %p91, %p92
    %p94 = scmp.ne.s32.totalorder %s82, %s83
    %p95 = scmp.eq.s32.totalorder %s17, 1
    %p96 = por %p94, %p95
    %p98 = scmp.ne.s32.totalorder %s83, %s97
    %p99 = scmp.eq.s32.totalorder %s17, 0
    %p100 = por %p98, %p99
    %s101 = ssub.s32 %s18, %s30
    %s102 = ssub.s32 %s19, %s26
    %s103 = sor.u32 %s101, %s102
    %p104 = scmp.eq.s32.totalorder %s103, 0
    %s106 = sadd.s32 %s105, 1
    %s107 = scalar_select %p104, %s105, %s106
    %p110 = pneg %p104
    %p111 = scmp.eq.s32.totalorder %s11, 1
    %p112 = por %p110, %p111
    %p113 = scmp.ne.s32.totalorder %s105, %s108
    %p114 = scmp.eq.s32.totalorder %s11, 0
    %p115 = por %p113, %p114
    %p116 = scmp.ne.s32.totalorder %s105, %s108
    %p117 = scmp.eq.s32.totalorder %s16, 1
    %p118 = por %p116, %p117
    %p119 = scmp.ne.s32.totalorder %s108, %s109
    %p120 = scmp.eq.s32.totalorder %s16, 0
    %p121 = por %p119, %p120
    %p122 = scmp.ne.s32.totalorder %s108, %s109
    %p123 = scmp.eq.s32.totalorder %s17, 1
    %p124 = por %p122, %p123
    %p126 = scmp.ne.s32.totalorder %s109, %s125
    %p127 = scmp.eq.s32.totalorder %s17, 0
    %p128 = por %p126, %p127
    %s129 = ssub.s32 %s18, %s30
    %s130 = ssub.s32 %s19, %s26
    %s131 = sor.u32 %s129, %s130
    %p132 = scmp.eq.s32.totalorder %s131, 0
    %s134 = sadd.s32 %s133, 1
    %s135 = scalar_select %p132, %s133, %s134
    %p138 = pneg %p132
    %p139 = scmp.eq.s32.totalorder %s11, 1
    %p140 = por %p138, %p139
    %p141 = scmp.ne.s32.totalorder %s133, %s136
    %p142 = scmp.eq.s32.totalorder %s11, 0
    %p143 = por %p141, %p142
    %p144 = scmp.ne.s32.totalorder %s133, %s136
    %p145 = scmp.eq.s32.totalorder %s16, 1
    %p146 = por %p144, %p145
    %p147 = scmp.ne.s32.totalorder %s136, %s137
    %p148 = scmp.eq.s32.totalorder %s16, 0
    %p149 = por %p147, %p148
    %p150 = scmp.ne.s32.totalorder %s136, %s137
    %p151 = scmp.eq.s32.totalorder %s17, 1
    %p152 = por %p150, %p151
    %p154 = scmp.ne.s32.totalorder %s137, %s153
    %p155 = scmp.eq.s32.totalorder %s17, 0
    %p156 = por %p154, %p155
    %p157 = scmp.le.s32.totalorder 1, %s11
    %p158 = scmp.lt.s32.totalorder %s11, 3
    %p159 = pnand %p157, %p158
    %p160 = pneg %p159
    // Predicated region
    $region9: #{adaresnet_forward.13} parent=5 // pred_check
      _
    $region10: #{adaresnet_forward.13} parent=5 // pred_check_branch
      %162 = sbr.rel (%p159) target = $region12
    $region11: #{adaresnet_forward.13} parent=5 // pred_region
      %s163 = ssub.s32 %s11, 1
      // Predicated region
      $region13: #{adaresnet_forward.13} parent=11 // pred_check
        %p164 = pneg %p72
      $region14: #{adaresnet_forward.13} parent=11 // pred_check_branch
        %166 = sbr.rel (%p164) target = $region16
      $region15: #{adaresnet_forward.13} parent=11 // pred_region
        _
      $region16: #{adaresnet_forward.13} parent=11 // pred_fallthru
        _
      // Predicated region
      $region17: #{adaresnet_forward.13} parent=11 // pred_check
        %p167 = pneg %p93
      $region18: #{adaresnet_forward.13} parent=11 // pred_check_branch
        %169 = sbr.rel (%p167) target = $region20
      $region19: #{adaresnet_forward.13} parent=11 // pred_region
        _
      $region20: #{adaresnet_forward.13} parent=11 // pred_fallthru
        _
    $region12: #{adaresnet_forward.13} parent=5 // pred_fallthru
      _
    %p170 = scmp.lt.s32.totalorder %s11, 2
    // Predicated region
    $region21: #{adaresnet_forward.13} parent=5 // pred_check
      %p171 = pneg %p170
    $region22: #{adaresnet_forward.13} parent=5 // pred_check_branch
      %173 = sbr.rel (%p171) target = $region24
    $region23: #{adaresnet_forward.13} parent=5 // pred_region
      // Predicated region
      $region25: #{adaresnet_forward.13} parent=23 // pred_check
        %p174 = pneg %p45
      $region26: #{adaresnet_forward.13} parent=23 // pred_check_branch
        %176 = sbr.rel (%p174) target = $region28
      $region27: #{adaresnet_forward.13} parent=23 // pred_region
        %p177 = scmp.lt.s32.totalorder %s18, 1
        %s178 = scalar_select %p177, %s18, 1
        %p179 = scmp.lt.s32.totalorder %s19, 0
        %s180 = scalar_select %p179, %s19, 0
        %s181 = smul.addr %s180, 4
        %s182 = smul.addr %s178, 4
        %s183 = sadd.s32 %s181, %s182
        %s184 = smul.addr %s183, 4
        %s185 = scalar_lea.vmem %s0, %s184
      $region28: #{adaresnet_forward.13} parent=23 // pred_fallthru
        _
    $region24: #{adaresnet_forward.13} parent=5 // pred_fallthru
      _
    %p186 = scmp.le.s32.totalorder 1, %s11
    %p187 = scmp.lt.s32.totalorder %s11, 3
    %p188 = pnand %p186, %p187
    %p189 = pneg %p188
    // Predicated region
    $region29: #{adaresnet_forward.13} parent=5 // pred_check
      _
    $region30: #{adaresnet_forward.13} parent=5 // pred_check_branch
      %191 = sbr.rel (%p188) target = $region32
    $region31: #{adaresnet_forward.13} parent=5 // pred_region
      %s192 = ssub.s32 %s11, 1
      %p193 = scmp.lt.s32.totalorder %s20, 1
      %s194 = scalar_select %p193, %s20, 1
      %p195 = scmp.lt.s32.totalorder %s21, 0
      %s196 = scalar_select %p195, %s21, 0
      %s197 = smul.addr %s196, 4
      %s198 = smul.addr %s194, 4
      %s199 = sadd.s32 %s197, %s198
      %s200 = smul.addr %s199, 4
      %s201 = scalar_lea.vmem %s0, %s200
      %p202 = pneg %p51
      %p203 = pneg %p48
      %p204 = pneg %p72
      %p205 = pneg %p69
      %p206 = pneg %p93
      %p207 = pneg %p90
      %p208 = pneg %p121
      %p209 = pneg %p118
      %p210 = scmp.lt.s32.totalorder %s20, 1
      %s211 = scalar_select %p210, %s20, 1
      %p212 = scmp.lt.s32.totalorder %s21, 0
      %s213 = scalar_select %p212, %s21, 0
      %s214 = smul.addr %s213, 2
      %s215 = smul.addr %s211, 2
      %s216 = sadd.s32 %s214, %s215
      %s217 = smul.addr %s216, 4
      %s218 = scalar_lea.vmem %s3, %s217
      %p219 = pneg %p149
      %p220 = pneg %p146
      %p221 = scmp.lt.s32.totalorder %s20, 1
      %s222 = scalar_select %p221, %s20, 1
      %p223 = scmp.lt.s32.totalorder %s21, 0
      %s224 = scalar_select %p223, %s21, 0
      %s225 = smul.addr %s224, 2
      %s226 = smul.addr %s222, 2
      %s227 = sadd.s32 %s225, %s226
      %s228 = smul.addr %s227, 2
      %s229 = scalar_lea.vmem %s4, %s228
      %p230 = scmp.lt.s32.totalorder %s20, 1
      %s231 = scalar_select %p230, %s20, 1
      %p232 = scmp.lt.s32.totalorder %s21, 0
      %s233 = scalar_select %p232, %s21, 0
      %s234 = smul.addr %s233, 4
      %s235 = smul.addr %s231, 4
      %s236 = sadd.s32 %s234, %s235
      %s237 = smul.addr %s236, 4
      %s238 = scalar_lea.vmem %s0, %s237
      %p239 = scmp.lt.s32.totalorder %s20, 1
      %s240 = scalar_select %p239, %s20, 1
      %p241 = scmp.lt.s32.totalorder %s21, 0
      %s242 = scalar_select %p241, %s21, 0
      %s243 = smul.addr %s242, 2
      %s244 = smul.addr %s240, 2
      %s245 = sadd.s32 %s243, %s244
      %s246 = smul.addr %s245, 4
      %s247 = scalar_lea.vmem %s3, %s246
      %p248 = scmp.lt.s32.totalorder %s20, 1
      %s249 = scalar_select %p248, %s20, 1
      %p250 = scmp.lt.s32.totalorder %s21, 0
      %s251 = scalar_select %p250, %s21, 0
      %s252 = smul.addr %s251, 2
      %s253 = smul.addr %s249, 2
      %s254 = sadd.s32 %s252, %s253
      %s255 = smul.addr %s254, 2
      %s256 = scalar_lea.vmem %s4, %s255
      %v257 = vld [vmem:[%s2] sm:$0x3]
      %v258 = vld [vmem:[%s238] sm:$0xff]
      %v259 = vld [vmem:[%s238 + $0x8] sm:$0x11]
      %v260 = vld [vmem:[%s1] sm:$0xff]
      %v261 = vld [vmem:[%s1 + $0x8] sm:$0xff]
      %v262 = vld [vmem:[%s1 + $0x10] sm:$0xff]
      %v263 = vld [vmem:[%s1 + $0x18] sm:$0xff]
      %v264 = vld [vmem:[%s1 + $0x20] sm:$0xff]
      %v265 = vld [vmem:[%s1 + $0x28] sm:$0xff]
      %v266 = vld [vmem:[%s1 + $0x30] sm:$0xff]
      %v267 = vld [vmem:[%s1 + $0x38] sm:$0xff]
      %v268 = vld [vmem:[%s1 + $0x40] sm:$0xff]
      %v269 = vld [vmem:[%s1 + $0x48] sm:$0xff]
      %v270 = vld [vmem:[%s1 + $0x50] sm:$0xff]
      %v271 = vld [vmem:[%s1 + $0x58] sm:$0xff]
      %v272 = vld [vmem:[%s1 + $0x60] sm:$0xff]
      %v273 = vld [vmem:[%s1 + $0x68] sm:$0xff]
      %v274 = vld [vmem:[%s1 + $0x70] sm:$0xff]
      %v275 = vld [vmem:[%s1 + $0x78] sm:$0xff]
      %v276 = vld [vmem:[%s1 + $0x80] sm:$0xff]
      %v277 = vld [vmem:[%s1 + $0x88] sm:$0xff]
      %v278 = vld [vmem:[%s1 + $0x90] sm:$0xff]
      %v279 = vld [vmem:[%s1 + $0x98] sm:$0xff]
      %v280 = vld [vmem:[%s1 + $0xa0] sm:$0xff]
      %v281 = vld [vmem:[%s1 + $0xa8] sm:$0xff]
      %v282 = vld [vmem:[%s1 + $0xb0] sm:$0xff]
      %v283 = vld [vmem:[%s1 + $0xb8] sm:$0xff]
      %v284 = vld [vmem:[%s1 + $0xc0] sm:$0xff]
      %v285 = vld [vmem:[%s1 + $0xc8] sm:$0xff]
      %v286 = vld [vmem:[%s1 + $0xd0] sm:$0xff]
      %v287 = vld [vmem:[%s1 + $0xd8] sm:$0xff]
      %v288 = vld [vmem:[%s1 + $0xe0] sm:$0xff]
      %v289 = vld [vmem:[%s1 + $0xe8] sm:$0xff]
      %v290 = vld [vmem:[%s1 + $0xf0] sm:$0xff]
      %v291 = vld [vmem:[%s1 + $0xf8] sm:$0xff]
      %v293 = vunpack.c.l.b16 %v258
      %v294 = vunpack.c.h.b16 %v258
      %v295 = vpack.c.b16 %v293, %v293
      %v296 = vpack.c.b16 %v294, %v294
      %v331 = vunpack.c.l.b16 %v260
      %v332 = vunpack.c.h.b16 %v260
      %v333 = vunpack.c.l.b16 %v261
      %v334 = vunpack.c.h.b16 %v261
      %v335 = vunpack.c.l.b16 %v262
      %v336 = vunpack.c.h.b16 %v262
      %v337 = vunpack.c.l.b16 %v263
      %v338 = vunpack.c.h.b16 %v263
      %v339 = vunpack.c.l.b16 %v264
      %v340 = vunpack.c.h.b16 %v264
      %v341 = vunpack.c.l.b16 %v265
      %v342 = vunpack.c.h.b16 %v265
      %v343 = vunpack.c.l.b16 %v266
      %v344 = vunpack.c.h.b16 %v266
      %v345 = vunpack.c.l.b16 %v267
      %v346 = vunpack.c.h.b16 %v267
      %v347 = vunpack.c.l.b16 %v268
      %v348 = vunpack.c.h.b16 %v268
      %v349 = vunpack.c.l.b16 %v269
      %v350 = vunpack.c.h.b16 %v269
      %v351 = vunpack.c.l.b16 %v270
      %v352 = vunpack.c.h.b16 %v270
      %v353 = vunpack.c.l.b16 %v271
      %v354 = vunpack.c.h.b16 %v271
      %v355 = vunpack.c.l.b16 %v272
      %v356 = vunpack.c.h.b16 %v272
      %v357 = vunpack.c.l.b16 %v273
      %v358 = vunpack.c.h.b16 %v273
      %v359 = vunpack.c.l.b16 %v274
      %v360 = vunpack.c.h.b16 %v274
      %v361 = vunpack.c.l.b16 %v275
      %v362 = vunpack.c.h.b16 %v275
      %v363 = vunpack.c.l.b16 %v276
      %v364 = vunpack.c.h.b16 %v276
      %v365 = vunpack.c.l.b16 %v277
      %v366 = vunpack.c.h.b16 %v277
      %v367 = vunpack.c.l.b16 %v278
      %v368 = vunpack.c.h.b16 %v278
      %v369 = vunpack.c.l.b16 %v279
      %v370 = vunpack.c.h.b16 %v279
      %v371 = vunpack.c.l.b16 %v280
      %v372 = vunpack.c.h.b16 %v280
      %v373 = vunpack.c.l.b16 %v281
      %v374 = vunpack.c.h.b16 %v281
      %v375 = vunpack.c.l.b16 %v282
      %v376 = vunpack.c.h.b16 %v282
      %v377 = vunpack.c.l.b16 %v283
      %v378 = vunpack.c.h.b16 %v283
      %v379 = vunpack.c.l.b16 %v284
      %v380 = vunpack.c.h.b16 %v284
      %v381 = vunpack.c.l.b16 %v285
      %v382 = vunpack.c.h.b16 %v285
      %v383 = vunpack.c.l.b16 %v286
      %v384 = vunpack.c.h.b16 %v286
      %v385 = vunpack.c.l.b16 %v287
      %v386 = vunpack.c.h.b16 %v287
      %v387 = vunpack.c.l.b16 %v288
      %v388 = vunpack.c.h.b16 %v288
      %v389 = vunpack.c.l.b16 %v289
      %v390 = vunpack.c.h.b16 %v289
      %v391 = vunpack.c.l.b16 %v290
      %v392 = vunpack.c.h.b16 %v290
      %v393 = vunpack.c.l.b16 %v291
      %v394 = vunpack.c.h.b16 %v291
      %v395 = vpack.c.b16 %v333, %v331
      %v396 = vpack.c.b16 %v334, %v332
      %v397 = vpack.c.b16 %v337, %v335
      %v398 = vpack.c.b16 %v338, %v336
      %v399 = vpack.c.b16 %v341, %v339
      %v400 = vpack.c.b16 %v342, %v340
      %v401 = vpack.c.b16 %v345, %v343
      %v402 = vpack.c.b16 %v346, %v344
      %v403 = vpack.c.b16 %v349, %v347
      %v404 = vpack.c.b16 %v350, %v348
      %v405 = vpack.c.b16 %v353, %v351
      %v406 = vpack.c.b16 %v354, %v352
      %v407 = vpack.c.b16 %v357, %v355
      %v408 = vpack.c.b16 %v358, %v356
      %v409 = vpack.c.b16 %v361, %v359
      %v410 = vpack.c.b16 %v362, %v360
      %v411 = vpack.c.b16 %v365, %v363
      %v412 = vpack.c.b16 %v366, %v364
      %v413 = vpack.c.b16 %v369, %v367
      %v414 = vpack.c.b16 %v370, %v368
      %v415 = vpack.c.b16 %v373, %v371
      %v416 = vpack.c.b16 %v374, %v372
      %v417 = vpack.c.b16 %v377, %v375
      %v418 = vpack.c.b16 %v378, %v376
      %v419 = vpack.c.b16 %v381, %v379
      %v420 = vpack.c.b16 %v382, %v380
      %v421 = vpack.c.b16 %v385, %v383
      %v422 = vpack.c.b16 %v386, %v384
      %v423 = vpack.c.b16 %v389, %v387
      %v424 = vpack.c.b16 %v390, %v388
      %v425 = vpack.c.b16 %v393, %v391
      %v426 = vpack.c.b16 %v394, %v392
      %459 = vmatprep.subr.bf16.mxu0 %v410
      %460 = vmatpush1.bf16.msra.mxu0 %v409
      %461 = vmatprep.subr.bf16.mxu0 %v408
      %462 = vmatpush1.bf16.msra.mxu0 %v407
      %463 = vmatprep.subr.bf16.mxu0 %v406
      %464 = vmatpush1.bf16.msra.mxu0 %v405
      %465 = vmatprep.subr.bf16.mxu0 %v404
      %466 = vmatpush1.bf16.msra.mxu0 %v403
      %467 = vmatprep.subr.bf16.mxu0 %v402
      %468 = vmatpush1.bf16.msra.mxu0 %v401
      %469 = vmatprep.subr.bf16.mxu0 %v400
      %470 = vmatpush1.bf16.msra.mxu0 %v399
      %471 = vmatprep.subr.bf16.mxu0 %v398
      %472 = vmatpush1.bf16.msra.mxu0 %v397
      %473 = vmatprep.subr.bf16.mxu0 %v396
      %474 = vmatpush1.bf16.msra.mxu0 %v395
      %475 = vmatprep.subr.bf16.mxu0 %v426
      %476 = vmatpush2.bf16.msra.mxu0 %v425
      %477 = vmatprep.subr.bf16.mxu0 %v424
      %478 = vmatpush2.bf16.msra.mxu0 %v423
      %479 = vmatprep.subr.bf16.mxu0 %v422
      %480 = vmatpush2.bf16.msra.mxu0 %v421
      %481 = vmatprep.subr.bf16.mxu0 %v420
      %482 = vmatpush2.bf16.msra.mxu0 %v419
      %483 = vmatprep.subr.bf16.mxu0 %v418
      %484 = vmatpush2.bf16.msra.mxu0 %v417
      %485 = vmatprep.subr.bf16.mxu0 %v416
      %486 = vmatpush2.bf16.msra.mxu0 %v415
      %487 = vmatprep.subr.bf16.mxu0 %v414
      %488 = vmatpush2.bf16.msra.mxu0 %v413
      %489 = vmatprep.subr.bf16.mxu0 %v412
      %490 = vmatpush2.bf16.msra.mxu0 %v411
      %491 = vmatprep.mubr.bf16.mxu0 %v296
      %492 = vmatmul.mubr.bf16.gmra.mxu0 %v295
      %v493 = vpop.f32.mrf.mxu0
      %v494 = vadd.f32 0.0, %v493
      %v495 = vpop.f32.mrf.mxu0
      %v496 = vadd.f32 0.0, %v495
      %v497 = vpop.f32.mrf.mxu0
      %v498 = vpop.f32.mrf.mxu0
      %499 = vdwg.mxu0
      %v501 = vlaneseq
      %v502 = vshrl.u32 %v501, 7
      %v503 = vsub.s32 0, %v502
      %v504 = vrot.slane %v257, %v503
      %v505 = vlaneseq
      %v506 = vshrl.u32 %v505, 7
      %v507 = vsub.s32 1, %v506
      %v508 = vrot.slane %v257, %v507
      %v511 = vadd.f32 %v504, %v494
      %v512 = vadd.f32 %v508, %v496
      %s513 = scalar_lea.vmem %s1, 256
      %v514 = vld [vmem:[%s513] sm:$0xff]
      %v515 = vld [vmem:[%s513 + $0x8] sm:$0xff]
      %v516 = vld [vmem:[%s513 + $0x10] sm:$0xff]
      %v517 = vld [vmem:[%s513 + $0x18] sm:$0xff]
      %v518 = vld [vmem:[%s513 + $0x20] sm:$0xff]
      %v519 = vld [vmem:[%s513 + $0x28] sm:$0xff]
      %v520 = vld [vmem:[%s513 + $0x30] sm:$0xff]
      %v521 = vld [vmem:[%s513 + $0x38] sm:$0xff]
      %v522 = vld [vmem:[%s513 + $0x40] sm:$0xff]
      %v523 = vld [vmem:[%s513 + $0x48] sm:$0xff]
      %v524 = vld [vmem:[%s513 + $0x50] sm:$0xff]
      %v525 = vld [vmem:[%s513 + $0x58] sm:$0xff]
      %v526 = vld [vmem:[%s513 + $0x60] sm:$0xff]
      %v527 = vld [vmem:[%s513 + $0x68] sm:$0xff]
      %v528 = vld [vmem:[%s513 + $0x70] sm:$0xff]
      %v529 = vld [vmem:[%s513 + $0x78] sm:$0xff]
      %v530 = vld [vmem:[%s513 + $0x80] sm:$0xff]
      %v531 = vld [vmem:[%s513 + $0x88] sm:$0xff]
      %v532 = vld [vmem:[%s513 + $0x90] sm:$0xff]
      %v533 = vld [vmem:[%s513 + $0x98] sm:$0xff]
      %v534 = vld [vmem:[%s513 + $0xa0] sm:$0xff]
      %v535 = vld [vmem:[%s513 + $0xa8] sm:$0xff]
      %v536 = vld [vmem:[%s513 + $0xb0] sm:$0xff]
      %v537 = vld [vmem:[%s513 + $0xb8] sm:$0xff]
      %v538 = vld [vmem:[%s513 + $0xc0] sm:$0xff]
      %v539 = vld [vmem:[%s513 + $0xc8] sm:$0xff]
      %v540 = vld [vmem:[%s513 + $0xd0] sm:$0xff]
      %v541 = vld [vmem:[%s513 + $0xd8] sm:$0xff]
      %v542 = vld [vmem:[%s513 + $0xe0] sm:$0xff]
      %v543 = vld [vmem:[%s513 + $0xe8] sm:$0xff]
      %v544 = vld [vmem:[%s513 + $0xf0] sm:$0xff]
      %v545 = vld [vmem:[%s513 + $0xf8] sm:$0xff]
      %v547 = vunpack.c.l.b16 %v259
      %v548 = vunpack.c.h.b16 %v259
      %v549 = vpack.c.b16 %v547, %v293
      %v550 = vpack.c.b16 %v548, %v294
      %v552 = vshrl.u32 %v549, 16
      %v554 = vshll.u32 %v549, 16
      %v556 = vrot.slane %v554, 1
      %v557 = vor.u32 %v552, %v556
      %v559 = vshrl.u32 %v550, 16
      %v561 = vshll.u32 %v550, 16
      %v563 = vrot.slane %v561, 1
      %v564 = vor.u32 %v559, %v563
      %v599 = vunpack.c.l.b16 %v514
      %v600 = vunpack.c.h.b16 %v514
      %v601 = vunpack.c.l.b16 %v515
      %v602 = vunpack.c.h.b16 %v515
      %v603 = vunpack.c.l.b16 %v516
      %v604 = vunpack.c.h.b16 %v516
      %v605 = vunpack.c.l.b16 %v517
      %v606 = vunpack.c.h.b16 %v517
      %v607 = vunpack.c.l.b16 %v518
      %v608 = vunpack.c.h.b16 %v518
      %v609 = vunpack.c.l.b16 %v519
      %v610 = vunpack.c.h.b16 %v519
      %v611 = vunpack.c.l.b16 %v520
      %v612 = vunpack.c.h.b16 %v520
      %v613 = vunpack.c.l.b16 %v521
      %v614 = vunpack.c.h.b16 %v521
      %v615 = vunpack.c.l.b16 %v522
      %v616 = vunpack.c.h.b16 %v522
      %v617 = vunpack.c.l.b16 %v523
      %v618 = vunpack.c.h.b16 %v523
      %v619 = vunpack.c.l.b16 %v524
      %v620 = vunpack.c.h.b16 %v524
      %v621 = vunpack.c.l.b16 %v525
      %v622 = vunpack.c.h.b16 %v525
      %v623 = vunpack.c.l.b16 %v526
      %v624 = vunpack.c.h.b16 %v526
      %v625 = vunpack.c.l.b16 %v527
      %v626 = vunpack.c.h.b16 %v527
      %v627 = vunpack.c.l.b16 %v528
      %v628 = vunpack.c.h.b16 %v528
      %v629 = vunpack.c.l.b16 %v529
      %v630 = vunpack.c.h.b16 %v529
      %v631 = vunpack.c.l.b16 %v530
      %v632 = vunpack.c.h.b16 %v530
      %v633 = vunpack.c.l.b16 %v531
      %v634 = vunpack.c.h.b16 %v531
      %v635 = vunpack.c.l.b16 %v532
      %v636 = vunpack.c.h.b16 %v532
      %v637 = vunpack.c.l.b16 %v533
      %v638 = vunpack.c.h.b16 %v533
      %v639 = vunpack.c.l.b16 %v534
      %v640 = vunpack.c.h.b16 %v534
      %v641 = vunpack.c.l.b16 %v535
      %v642 = vunpack.c.h.b16 %v535
      %v643 = vunpack.c.l.b16 %v536
      %v644 = vunpack.c.h.b16 %v536
      %v645 = vunpack.c.l.b16 %v537
      %v646 = vunpack.c.h.b16 %v537
      %v647 = vunpack.c.l.b16 %v538
      %v648 = vunpack.c.h.b16 %v538
      %v649 = vunpack.c.l.b16 %v539
      %v650 = vunpack.c.h.b16 %v539
      %v651 = vunpack.c.l.b16 %v540
      %v652 = vunpack.c.h.b16 %v540
      %v653 = vunpack.c.l.b16 %v541
      %v654 = vunpack.c.h.b16 %v541
      %v655 = vunpack.c.l.b16 %v542
      %v656 = vunpack.c.h.b16 %v542
      %v657 = vunpack.c.l.b16 %v543
      %v658 = vunpack.c.h.b16 %v543
      %v659 = vunpack.c.l.b16 %v544
      %v660 = vunpack.c.h.b16 %v544
      %v661 = vunpack.c.l.b16 %v545
      %v662 = vunpack.c.h.b16 %v545
      %v663 = vpack.c.b16 %v601, %v599
      %v664 = vpack.c.b16 %v602, %v600
      %v665 = vpack.c.b16 %v605, %v603
      %v666 = vpack.c.b16 %v606, %v604
      %v667 = vpack.c.b16 %v609, %v607
      %v668 = vpack.c.b16 %v610, %v608
      %v669 = vpack.c.b16 %v613, %v611
      %v670 = vpack.c.b16 %v614, %v612
      %v671 = vpack.c.b16 %v617, %v615
      %v672 = vpack.c.b16 %v618, %v616
      %v673 = vpack.c.b16 %v621, %v619
      %v674 = vpack.c.b16 %v622, %v620
      %v675 = vpack.c.b16 %v625, %v623
      %v676 = vpack.c.b16 %v626, %v624
      %v677 = vpack.c.b16 %v629, %v627
      %v678 = vpack.c.b16 %v630, %v628
      %v679 = vpack.c.b16 %v633, %v631
      %v680 = vpack.c.b16 %v634, %v632
      %v681 = vpack.c.b16 %v637, %v635
      %v682 = vpack.c.b16 %v638, %v636
      %v683 = vpack.c.b16 %v641, %v639
      %v684 = vpack.c.b16 %v642, %v640
      %v685 = vpack.c.b16 %v645, %v643
      %v686 = vpack.c.b16 %v646, %v644
      %v687 = vpack.c.b16 %v649, %v647
      %v688 = vpack.c.b16 %v650, %v648
      %v689 = vpack.c.b16 %v653, %v651
      %v690 = vpack.c.b16 %v654, %v652
      %v691 = vpack.c.b16 %v657, %v655
      %v692 = vpack.c.b16 %v658, %v656
      %v693 = vpack.c.b16 %v661, %v659
      %v694 = vpack.c.b16 %v662, %v660
      %727 = vmatprep.subr.bf16.mxu0 %v678
      %728 = vmatpush1.bf16.msra.mxu0 %v677
      %729 = vmatprep.subr.bf16.mxu0 %v676
      %730 = vmatpush1.bf16.msra.mxu0 %v675
      %731 = vmatprep.subr.bf16.mxu0 %v674
      %732 = vmatpush1.bf16.msra.mxu0 %v673
      %733 = vmatprep.subr.bf16.mxu0 %v672
      %734 = vmatpush1.bf16.msra.mxu0 %v671
      %735 = vmatprep.subr.bf16.mxu0 %v670
      %736 = vmatpush1.bf16.msra.mxu0 %v669
      %737 = vmatprep.subr.bf16.mxu0 %v668
      %738 = vmatpush1.bf16.msra.mxu0 %v667
      %739 = vmatprep.subr.bf16.mxu0 %v666
      %740 = vmatpush1.bf16.msra.mxu0 %v665
      %741 = vmatprep.subr.bf16.mxu0 %v664
      %742 = vmatpush1.bf16.msra.mxu0 %v663
      %743 = vmatprep.subr.bf16.mxu0 %v694
      %744 = vmatpush2.bf16.msra.mxu0 %v693
      %745 = vmatprep.subr.bf16.mxu0 %v692
      %746 = vmatpush2.bf16.msra.mxu0 %v691
      %747 = vmatprep.subr.bf16.mxu0 %v690
      %748 = vmatpush2.bf16.msra.mxu0 %v689
      %749 = vmatprep.subr.bf16.mxu0 %v688
      %750 = vmatpush2.bf16.msra.mxu0 %v687
      %751 = vmatprep.subr.bf16.mxu0 %v686
      %752 = vmatpush2.bf16.msra.mxu0 %v685
      %753 = vmatprep.subr.bf16.mxu0 %v684
      %754 = vmatpush2.bf16.msra.mxu0 %v683
      %755 = vmatprep.subr.bf16.mxu0 %v682
      %756 = vmatpush2.bf16.msra.mxu0 %v681
      %757 = vmatprep.subr.bf16.mxu0 %v680
      %758 = vmatpush2.bf16.msra.mxu0 %v679
      %759 = vmatprep.mubr.bf16.mxu0 %v564
      %760 = vmatmul.mubr.bf16.gmra.mxu0 %v557
      %v761 = vpop.f32.mrf.mxu0
      %v762 = vadd.f32 0.0, %v761
      %v763 = vpop.f32.mrf.mxu0
      %v764 = vadd.f32 0.0, %v763
      %v765 = vpop.f32.mrf.mxu0
      %v766 = vpop.f32.mrf.mxu0
      %767 = vdwg.mxu0
      %v768 = vadd.f32 %v511, %v762
      %v769 = vadd.f32 %v512, %v764
      %s770 = scalar_lea.vmem %s1, 512
      %v771 = vld [vmem:[%s770] sm:$0xff]
      %v772 = vld [vmem:[%s770 + $0x8] sm:$0xff]
      %v773 = vld [vmem:[%s770 + $0x10] sm:$0xff]
      %v774 = vld [vmem:[%s770 + $0x18] sm:$0xff]
      %v775 = vld [vmem:[%s770 + $0x20] sm:$0xff]
      %v776 = vld [vmem:[%s770 + $0x28] sm:$0xff]
      %v777 = vld [vmem:[%s770 + $0x30] sm:$0xff]
      %v778 = vld [vmem:[%s770 + $0x38] sm:$0xff]
      %v779 = vld [vmem:[%s770 + $0x40] sm:$0xff]
      %v780 = vld [vmem:[%s770 + $0x48] sm:$0xff]
      %v781 = vld [vmem:[%s770 + $0x50] sm:$0xff]
      %v782 = vld [vmem:[%s770 + $0x58] sm:$0xff]
      %v783 = vld [vmem:[%s770 + $0x60] sm:$0xff]
      %v784 = vld [vmem:[%s770 + $0x68] sm:$0xff]
      %v785 = vld [vmem:[%s770 + $0x70] sm:$0xff]
      %v786 = vld [vmem:[%s770 + $0x78] sm:$0xff]
      %v787 = vld [vmem:[%s770 + $0x80] sm:$0xff]
      %v788 = vld [vmem:[%s770 + $0x88] sm:$0xff]
      %v789 = vld [vmem:[%s770 + $0x90] sm:$0xff]
      %v790 = vld [vmem:[%s770 + $0x98] sm:$0xff]
      %v791 = vld [vmem:[%s770 + $0xa0] sm:$0xff]
      %v792 = vld [vmem:[%s770 + $0xa8] sm:$0xff]
      %v793 = vld [vmem:[%s770 + $0xb0] sm:$0xff]
      %v794 = vld [vmem:[%s770 + $0xb8] sm:$0xff]
      %v795 = vld [vmem:[%s770 + $0xc0] sm:$0xff]
      %v796 = vld [vmem:[%s770 + $0xc8] sm:$0xff]
      %v797 = vld [vmem:[%s770 + $0xd0] sm:$0xff]
      %v798 = vld [vmem:[%s770 + $0xd8] sm:$0xff]
      %v799 = vld [vmem:[%s770 + $0xe0] sm:$0xff]
      %v800 = vld [vmem:[%s770 + $0xe8] sm:$0xff]
      %v801 = vld [vmem:[%s770 + $0xf0] sm:$0xff]
      %v802 = vld [vmem:[%s770 + $0xf8] sm:$0xff]
      %v803 = vrot.slane %v549, 1
      %v804 = vrot.slane %v550, 1
      %v839 = vunpack.c.l.b16 %v771
      %v840 = vunpack.c.h.b16 %v771
      %v841 = vunpack.c.l.b16 %v772
      %v842 = vunpack.c.h.b16 %v772
      %v843 = vunpack.c.l.b16 %v773
      %v844 = vunpack.c.h.b16 %v773
      %v845 = vunpack.c.l.b16 %v774
      %v846 = vunpack.c.h.b16 %v774
      %v847 = vunpack.c.l.b16 %v775
      %v848 = vunpack.c.h.b16 %v775
      %v849 = vunpack.c.l.b16 %v776
      %v850 = vunpack.c.h.b16 %v776
      %v851 = vunpack.c.l.b16 %v777
      %v852 = vunpack.c.h.b16 %v777
      %v853 = vunpack.c.l.b16 %v778
      %v854 = vunpack.c.h.b16 %v778
      %v855 = vunpack.c.l.b16 %v779
      %v856 = vunpack.c.h.b16 %v779
      %v857 = vunpack.c.l.b16 %v780
      %v858 = vunpack.c.h.b16 %v780
      %v859 = vunpack.c.l.b16 %v781
      %v860 = vunpack.c.h.b16 %v781
      %v861 = vunpack.c.l.b16 %v782
      %v862 = vunpack.c.h.b16 %v782
      %v863 = vunpack.c.l.b16 %v783
      %v864 = vunpack.c.h.b16 %v783
      %v865 = vunpack.c.l.b16 %v784
      %v866 = vunpack.c.h.b16 %v784
      %v867 = vunpack.c.l.b16 %v785
      %v868 = vunpack.c.h.b16 %v785
      %v869 = vunpack.c.l.b16 %v786
      %v870 = vunpack.c.h.b16 %v786
      %v871 = vunpack.c.l.b16 %v787
      %v872 = vunpack.c.h.b16 %v787
      %v873 = vunpack.c.l.b16 %v788
      %v874 = vunpack.c.h.b16 %v788
      %v875 = vunpack.c.l.b16 %v789
      %v876 = vunpack.c.h.b16 %v789
      %v877 = vunpack.c.l.b16 %v790
      %v878 = vunpack.c.h.b16 %v790
      %v879 = vunpack.c.l.b16 %v791
      %v880 = vunpack.c.h.b16 %v791
      %v881 = vunpack.c.l.b16 %v792
      %v882 = vunpack.c.h.b16 %v792
      %v883 = vunpack.c.l.b16 %v793
      %v884 = vunpack.c.h.b16 %v793
      %v885 = vunpack.c.l.b16 %v794
      %v886 = vunpack.c.h.b16 %v794
      %v887 = vunpack.c.l.b16 %v795
      %v888 = vunpack.c.h.b16 %v795
      %v889 = vunpack.c.l.b16 %v796
      %v890 = vunpack.c.h.b16 %v796
      %v891 = vunpack.c.l.b16 %v797
      %v892 = vunpack.c.h.b16 %v797
      %v893 = vunpack.c.l.b16 %v798
      %v894 = vunpack.c.h.b16 %v798
      %v895 = vunpack.c.l.b16 %v799
      %v896 = vunpack.c.h.b16 %v799
      %v897 = vunpack.c.l.b16 %v800
      %v898 = vunpack.c.h.b16 %v800
      %v899 = vunpack.c.l.b16 %v801
      %v900 = vunpack.c.h.b16 %v801
      %v901 = vunpack.c.l.b16 %v802
      %v902 = vunpack.c.h.b16 %v802
      %v903 = vpack.c.b16 %v841, %v839
      %v904 = vpack.c.b16 %v842, %v840
      %v905 = vpack.c.b16 %v845, %v843
      %v906 = vpack.c.b16 %v846, %v844
      %v907 = vpack.c.b16 %v849, %v847
      %v908 = vpack.c.b16 %v850, %v848
      %v909 = vpack.c.b16 %v853, %v851
      %v910 = vpack.c.b16 %v854, %v852
      %v911 = vpack.c.b16 %v857, %v855
      %v912 = vpack.c.b16 %v858, %v856
      %v913 = vpack.c.b16 %v861, %v859
      %v914 = vpack.c.b16 %v862, %v860
      %v915 = vpack.c.b16 %v865, %v863
      %v916 = vpack.c.b16 %v866, %v864
      %v917 = vpack.c.b16 %v869, %v867
      %v918 = vpack.c.b16 %v870, %v868
      %v919 = vpack.c.b16 %v873, %v871
      %v920 = vpack.c.b16 %v874, %v872
      %v921 = vpack.c.b16 %v877, %v875
      %v922 = vpack.c.b16 %v878, %v876
      %v923 = vpack.c.b16 %v881, %v879
      %v924 = vpack.c.b16 %v882, %v880
      %v925 = vpack.c.b16 %v885, %v883
      %v926 = vpack.c.b16 %v886, %v884
      %v927 = vpack.c.b16 %v889, %v887
      %v928 = vpack.c.b16 %v890, %v888
      %v929 = vpack.c.b16 %v893, %v891
      %v930 = vpack.c.b16 %v894, %v892
      %v931 = vpack.c.b16 %v897, %v895
      %v932 = vpack.c.b16 %v898, %v896
      %v933 = vpack.c.b16 %v901, %v899
      %v934 = vpack.c.b16 %v902, %v900
      %967 = vmatprep.subr.bf16.mxu0 %v918
      %968 = vmatpush1.bf16.msra.mxu0 %v917
      %969 = vmatprep.subr.bf16.mxu0 %v916
      %970 = vmatpush1.bf16.msra.mxu0 %v915
      %971 = vmatprep.subr.bf16.mxu0 %v914
      %972 = vmatpush1.bf16.msra.mxu0 %v913
      %973 = vmatprep.subr.bf16.mxu0 %v912
      %974 = vmatpush1.bf16.msra.mxu0 %v911
      %975 = vmatprep.subr.bf16.mxu0 %v910
      %976 = vmatpush1.bf16.msra.mxu0 %v909
      %977 = vmatprep.subr.bf16.mxu0 %v908
      %978 = vmatpush1.bf16.msra.mxu0 %v907
      %979 = vmatprep.subr.bf16.mxu0 %v906
      %980 = vmatpush1.bf16.msra.mxu0 %v905
      %981 = vmatprep.subr.bf16.mxu0 %v904
      %982 = vmatpush1.bf16.msra.mxu0 %v903
      %983 = vmatprep.subr.bf16.mxu0 %v934
      %984 = vmatpush2.bf16.msra.mxu0 %v933
      %985 = vmatprep.subr.bf16.mxu0 %v932
      %986 = vmatpush2.bf16.msra.mxu0 %v931
      %987 = vmatprep.subr.bf16.mxu0 %v930
      %988 = vmatpush2.bf16.msra.mxu0 %v929
      %989 = vmatprep.subr.bf16.mxu0 %v928
      %990 = vmatpush2.bf16.msra.mxu0 %v927
      %991 = vmatprep.subr.bf16.mxu0 %v926
      %992 = vmatpush2.bf16.msra.mxu0 %v925
      %993 = vmatprep.subr.bf16.mxu0 %v924
      %994 = vmatpush2.bf16.msra.mxu0 %v923
      %995 = vmatprep.subr.bf16.mxu0 %v922
      %996 = vmatpush2.bf16.msra.mxu0 %v921
      %997 = vmatprep.subr.bf16.mxu0 %v920
      %998 = vmatpush2.bf16.msra.mxu0 %v919
      %999 = vmatprep.mubr.bf16.mxu0 %v804
      %1000 = vmatmul.mubr.bf16.gmra.mxu0 %v803
      %v1001 = vpop.f32.mrf.mxu0
      %v1002 = vadd.f32 0.0, %v1001
      %v1003 = vpop.f32.mrf.mxu0
      %v1004 = vadd.f32 0.0, %v1003
      %v1005 = vpop.f32.mrf.mxu0
      %v1006 = vpop.f32.mrf.mxu0
      %1007 = vdwg.mxu0
      %v1008 = vadd.f32 %v768, %v1002
      %v1009 = vadd.f32 %v769, %v1004
      %v1010 = vrot.slane %v1008, 4
      %v1011 = vadd.f32 %v1008, %v1010
      %v1012 = vrot.slane %v1011, 2
      %v1013 = vadd.f32 %v1011, %v1012
      %v1014 = vrot.slane %v1013, 1
      %v1015 = vadd.f32 %v1013, %v1014
      %v1016 = vrot.slane %v1009, 4
      %v1017 = vadd.f32 %v1009, %v1016
      %v1018 = vrot.slane %v1017, 2
      %v1019 = vadd.f32 %v1017, %v1018
      %v1020 = vrot.slane %v1019, 1
      %v1021 = vadd.f32 %v1019, %v1020
      %v1022 = vmul.f32 %v1008, %v1008
      %v1023 = vmul.f32 %v1009, %v1009
      %v1024 = vrot.slane %v1022, 4
      %v1025 = vadd.f32 %v1022, %v1024
      %v1026 = vrot.slane %v1025, 2
      %v1027 = vadd.f32 %v1025, %v1026
      %v1028 = vrot.slane %v1027, 1
      %v1029 = vadd.f32 %v1027, %v1028
      %v1030 = vrot.slane %v1023, 4
      %v1031 = vadd.f32 %v1023, %v1030
      %v1032 = vrot.slane %v1031, 2
      %v1033 = vadd.f32 %v1031, %v1032
      %v1034 = vrot.slane %v1033, 1
      %v1035 = vadd.f32 %v1033, %v1034
      %vm1036 = vcmask 1040384
      %v1037 = vsel %vm1036, %v1015, %v1029
      %v1038 = vsel %vm1036, %v1021, %v1035
      %v1041 = vcombine.low %v1037, %v1038
      %v1043 = vunpack.c.l.s4 1983009808
      %v1044 = vunpack.c.0.s8 %v1043
      %v1045 = vlaneseq
      %v1046 = vshrl.u32 %v1045, 7
      %v1047 = vsub.s32 %v1044, %v1046
      %v1048 = vrot.slane %v1041, %v1047
      %1050 = vst [vmem:[%s256] sm:$0xf] %v1048
      %v1051 = vpack.c.bf16 %v1008, %v1008
      %v1052 = vpack.c.bf16 %v1009, %v1009
      %v1055 = vunpack.c.l.b16 %v1051
      %v1056 = vunpack.c.l.b16 %v1052
      %v1057 = vpack.c.b16 %v1056, %v1055
      %1059 = vst [vmem:[%s247] sm:$0xff] %v1057
      %p1060 = scmp.lt.s32.totalorder %s20, 1
      %s1061 = scalar_select %p1060, %s20, 1
      %p1062 = scmp.lt.s32.totalorder %s21, 0
      %s1063 = scalar_select %p1062, %s21, 0
      %s1064 = smul.addr %s1063, 2
      %s1065 = smul.addr %s1061, 2
      %s1066 = sadd.s32 %s1064, %s1065
      %s1067 = smul.addr %s1066, 4
      %s1068 = scalar_lea.vmem %s3, %s1067
      %p1069 = scmp.lt.s32.totalorder %s20, 1
      %s1070 = scalar_select %p1069, %s20, 1
      %p1071 = scmp.lt.s32.totalorder %s21, 0
      %s1072 = scalar_select %p1071, %s21, 0
      %s1073 = smul.addr %s1072, 2
      %s1074 = smul.addr %s1070, 2
      %s1075 = sadd.s32 %s1073, %s1074
      %s1076 = smul.addr %s1075, 2
      %s1077 = scalar_lea.vmem %s4, %s1076
      // Predicated region
      $region33: #{adaresnet_forward.13} parent=31 // pred_check
        %p1078 = pneg %p118
      $region34: #{adaresnet_forward.13} parent=31 // pred_check_branch
        %1080 = sbr.rel (%p1078) target = $region36
      $region35: #{adaresnet_forward.13} parent=31 // pred_region
        _
      $region36: #{adaresnet_forward.13} parent=31 // pred_fallthru
        _
      // Predicated region
      $region37: #{adaresnet_forward.13} parent=31 // pred_check
        %p1081 = pneg %p146
      $region38: #{adaresnet_forward.13} parent=31 // pred_check_branch
        %1083 = sbr.rel (%p1081) target = $region40
      $region39: #{adaresnet_forward.13} parent=31 // pred_region
        _
      $region40: #{adaresnet_forward.13} parent=31 // pred_fallthru
        _
    $region32: #{adaresnet_forward.13} parent=5 // pred_fallthru
      _
    %p1084 = scmp.le.s32.totalorder 2, %s11
    // Predicated region
    $region41: #{adaresnet_forward.13} parent=5 // pred_check
      %p1085 = pneg %p1084
    $region42: #{adaresnet_forward.13} parent=5 // pred_check_branch
      %1087 = sbr.rel (%p1085) target = $region44
    $region43: #{adaresnet_forward.13} parent=5 // pred_region
      %s1088 = ssub.s32 %s11, 2
      // Predicated region
      $region45: #{adaresnet_forward.13} parent=43 // pred_check
        %p1089 = pneg %p124
      $region46: #{adaresnet_forward.13} parent=43 // pred_check_branch
        %1091 = sbr.rel (%p1089) target = $region48
      $region47: #{adaresnet_forward.13} parent=43 // pred_region
        %p1092 = scmp.lt.s32.totalorder %s22, 1
        %s1093 = scalar_select %p1092, %s22, 1
        %p1094 = scmp.lt.s32.totalorder %s23, 0
        %s1095 = scalar_select %p1094, %s23, 0
        %s1096 = smul.addr %s1095, 2
        %s1097 = smul.addr %s1093, 2
        %s1098 = sadd.s32 %s1096, %s1097
        %s1099 = smul.addr %s1098, 4
        %s1100 = scalar_lea.vmem %s3, %s1099
      $region48: #{adaresnet_forward.13} parent=43 // pred_fallthru
        _
      // Predicated region
      $region49: #{adaresnet_forward.13} parent=43 // pred_check
        %p1101 = pneg %p152
      $region50: #{adaresnet_forward.13} parent=43 // pred_check_branch
        %1103 = sbr.rel (%p1101) target = $region52
      $region51: #{adaresnet_forward.13} parent=43 // pred_region
        %p1104 = scmp.lt.s32.totalorder %s22, 1
        %s1105 = scalar_select %p1104, %s22, 1
        %p1106 = scmp.lt.s32.totalorder %s23, 0
        %s1107 = scalar_select %p1106, %s23, 0
        %s1108 = smul.addr %s1107, 2
        %s1109 = smul.addr %s1105, 2
        %s1110 = sadd.s32 %s1108, %s1109
        %s1111 = smul.addr %s1110, 2
        %s1112 = scalar_lea.vmem %s4, %s1111
      $region52: #{adaresnet_forward.13} parent=43 // pred_fallthru
        _
    $region44: #{adaresnet_forward.13} parent=5 // pred_fallthru
      _
  $region6: #{adaresnet_forward.13} parent=0 // loop_footer
    %s15 = sadd.s32 1, %s11
  $region7: #{adaresnet_forward.13} parent=0 // loop_footer_branch
    %10 = sbr.rel target = $region3
  $region8: #{adaresnet_forward.13} parent=0 // loop_exit
    _

// kernel: adaresnet_forward.15
$region0: #{adaresnet_forward.15}
  #allocation0 [shape = 'u32[]', space=smem, size = 0x4, offset = 0x4, fixed_abs, tag = 'smem constant byte address 0x4 - core index']
  #allocation1 [shape = 'u32[144,128]{1,0:T(1,128)}', space=vmem, size = 0x12000, scoped, tag = 'internal scratch']
  %s0 = inlined_call_operand.vmem [shape: bf16[2,8,256], index: 0, kind: input, shape index: {}]
  %s1 = inlined_call_operand.vmem [shape: f32[1,256], index: 1, kind: input, shape index: {}]
  %s2 = inlined_call_operand.vmem [shape: f32[1,256], index: 2, kind: input, shape index: {}]
  %s3 = inlined_call_operand.vmem [shape: bf16[2,8,256], index: 3, kind: input, shape index: {}]
  %s4 = inlined_call_operand.vmem [shape: bf16[2,8,256], index: 4, kind: output, shape index: {}]
  %s5 = sld [smem:[#allocation0]]
  $region49: #{adaresnet_forward.15} parent=0
    _
  %s7 = ssub.s32 1, %s5
  %s8 = scalar_select 0, %s7, %s5
  loop: start=0, step=1, limit=4
  $region2: #{adaresnet_forward.15} parent=0 // loop_pre_header
    _
  $region3: #{adaresnet_forward.15} parent=0 // loop_header
    %s10 = sphi 0, %s14
    %p11 = scmp.ge.s32.totalorder %s10, 4
    %s17 = sphi 0, %s29
    %s18 = sphi 0, %s25
    %s19 = sphi 0, %s17
    %s20 = sphi 0, %s18
    %s21 = sphi 0, %s19
    %s22 = sphi 0, %s20
    %s34 = sphi 0, %s36
    %s37 = sphi 0, %s34
    %s38 = sphi 0, %s37
    %s54 = sphi 0, %s38
    %s58 = sphi 0, %s58
    %s60 = sphi 0, %s58
    %s61 = sphi 0, %s60
    %s75 = sphi 0, %s61
    %s79 = sphi 0, %s79
    %s81 = sphi 0, %s79
    %s82 = sphi 0, %s81
    %s96 = sphi 0, %s82
    %s104 = sphi 0, %s106
    %s107 = sphi 0, %s104
    %s108 = sphi 0, %s107
    %s124 = sphi 0, %s108
    %s132 = sphi 0, %s134
    %s135 = sphi 0, %s132
    %s136 = sphi 0, %s135
    %s152 = sphi 0, %s136
  $region4: #{adaresnet_forward.15} parent=0 // loop_header_branch
    %13 = sbr.rel (%p11) target = $region8
  $region5: #{adaresnet_forward.15} parent=0 // loop_body
    %s15 = ssub.s32 %s10, 1
    %s16 = ssub.s32 %s10, 2
    %s23 = sadd.s32 1, %s18
    %p24 = scmp.ge.s32.totalorder %s23, 1
    %s25 = scalar_select %p24, 0, %s23
    %s26 = sadd.s32 1, %s17
    %s27 = scalar_select %p24, %s26, %s17
    %p28 = scmp.ge.s32.totalorder %s27, 2
    %s29 = scalar_select %p28, 0, %s27
    %s30 = ssub.s32 %s17, %s29
    %s31 = ssub.s32 %s18, %s25
    %s32 = sor.u32 %s30, %s31
    %p33 = scmp.eq.s32.totalorder %s32, 0
    %s35 = sadd.s32 %s34, 1
    %s36 = scalar_select %p33, %s34, %s35
    %p39 = pneg %p33
    %p40 = scmp.eq.s32.totalorder %s10, 1
    %p41 = por %p39, %p40
    %p42 = scmp.ne.s32.totalorder %s34, %s37
    %p43 = scmp.eq.s32.totalorder %s10, 0
    %p44 = por %p42, %p43
    %p45 = scmp.ne.s32.totalorder %s34, %s37
    %p46 = scmp.eq.s32.totalorder %s15, 1
    %p47 = por %p45, %p46
    %p48 = scmp.ne.s32.totalorder %s37, %s38
    %p49 = scmp.eq.s32.totalorder %s15, 0
    %p50 = por %p48, %p49
    %p51 = scmp.ne.s32.totalorder %s37, %s38
    %p52 = scmp.eq.s32.totalorder %s16, 1
    %p53 = por %p51, %p52
    %p55 = scmp.ne.s32.totalorder %s38, %s54
    %p56 = scmp.eq.s32.totalorder %s16, 0
    %p57 = por %p55, %p56
    %s59 = sadd.s32 %s58, 1
    %p62 = scmp.eq.s32.totalorder %s10, 1
    %p63 = scmp.ne.s32.totalorder %s58, %s60
    %p64 = scmp.eq.s32.totalorder %s10, 0
    %p65 = por %p63, %p64
    %p66 = scmp.ne.s32.totalorder %s58, %s60
    %p67 = scmp.eq.s32.totalorder %s15, 1
    %p68 = por %p66, %p67
    %p69 = scmp.ne.s32.totalorder %s60, %s61
    %p70 = scmp.eq.s32.totalorder %s15, 0
    %p71 = por %p69, %p70
    %p72 = scmp.ne.s32.totalorder %s60, %s61
    %p73 = scmp.eq.s32.totalorder %s16, 1
    %p74 = por %p72, %p73
    %p76 = scmp.ne.s32.totalorder %s61, %s75
    %p77 = scmp.eq.s32.totalorder %s16, 0
    %p78 = por %p76, %p77
    %s80 = sadd.s32 %s79, 1
    %p83 = scmp.eq.s32.totalorder %s10, 1
    %p84 = scmp.ne.s32.totalorder %s79, %s81
    %p85 = scmp.eq.s32.totalorder %s10, 0
    %p86 = por %p84, %p85
    %p87 = scmp.ne.s32.totalorder %s79, %s81
    %p88 = scmp.eq.s32.totalorder %s15, 1
    %p89 = por %p87, %p88
    %p90 = scmp.ne.s32.totalorder %s81, %s82
    %p91 = scmp.eq.s32.totalorder %s15, 0
    %p92 = por %p90, %p91
    %p93 = scmp.ne.s32.totalorder %s81, %s82
    %p94 = scmp.eq.s32.totalorder %s16, 1
    %p95 = por %p93, %p94
    %p97 = scmp.ne.s32.totalorder %s82, %s96
    %p98 = scmp.eq.s32.totalorder %s16, 0
    %p99 = por %p97, %p98
    %s100 = ssub.s32 %s17, %s29
    %s101 = ssub.s32 %s18, %s25
    %s102 = sor.u32 %s100, %s101
    %p103 = scmp.eq.s32.totalorder %s102, 0
    %s105 = sadd.s32 %s104, 1
    %s106 = scalar_select %p103, %s104, %s105
    %p109 = pneg %p103
    %p110 = scmp.eq.s32.totalorder %s10, 1
    %p111 = por %p109, %p110
    %p112 = scmp.ne.s32.totalorder %s104, %s107
    %p113 = scmp.eq.s32.totalorder %s10, 0
    %p114 = por %p112, %p113
    %p115 = scmp.ne.s32.totalorder %s104, %s107
    %p116 = scmp.eq.s32.totalorder %s15, 1
    %p117 = por %p115, %p116
    %p118 = scmp.ne.s32.totalorder %s107, %s108
    %p119 = scmp.eq.s32.totalorder %s15, 0
    %p120 = por %p118, %p119
    %p121 = scmp.ne.s32.totalorder %s107, %s108
    %p122 = scmp.eq.s32.totalorder %s16, 1
    %p123 = por %p121, %p122
    %p125 = scmp.ne.s32.totalorder %s108, %s124
    %p126 = scmp.eq.s32.totalorder %s16, 0
    %p127 = por %p125, %p126
    %s128 = ssub.s32 %s17, %s29
    %s129 = ssub.s32 %s18, %s25
    %s130 = sor.u32 %s128, %s129
    %p131 = scmp.eq.s32.totalorder %s130, 0
    %s133 = sadd.s32 %s132, 1
    %s134 = scalar_select %p131, %s132, %s133
    %p137 = pneg %p131
    %p138 = scmp.eq.s32.totalorder %s10, 1
    %p139 = por %p137, %p138
    %p140 = scmp.ne.s32.totalorder %s132, %s135
    %p141 = scmp.eq.s32.totalorder %s10, 0
    %p142 = por %p140, %p141
    %p143 = scmp.ne.s32.totalorder %s132, %s135
    %p144 = scmp.eq.s32.totalorder %s15, 1
    %p145 = por %p143, %p144
    %p146 = scmp.ne.s32.totalorder %s135, %s136
    %p147 = scmp.eq.s32.totalorder %s15, 0
    %p148 = por %p146, %p147
    %p149 = scmp.ne.s32.totalorder %s135, %s136
    %p150 = scmp.eq.s32.totalorder %s16, 1
    %p151 = por %p149, %p150
    %p153 = scmp.ne.s32.totalorder %s136, %s152
    %p154 = scmp.eq.s32.totalorder %s16, 0
    %p155 = por %p153, %p154
    %p156 = scmp.le.s32.totalorder 1, %s10
    %p157 = scmp.lt.s32.totalorder %s10, 3
    %p158 = pnand %p156, %p157
    %p159 = pneg %p158
    // Predicated region
    $region9: #{adaresnet_forward.15} parent=5 // pred_check
      _
    $region10: #{adaresnet_forward.15} parent=5 // pred_check_branch
      %161 = sbr.rel (%p158) target = $region12
    $region11: #{adaresnet_forward.15} parent=5 // pred_region
      %s162 = ssub.s32 %s10, 1
      // Predicated region
      $region13: #{adaresnet_forward.15} parent=11 // pred_check
        %p163 = pneg %p71
      $region14: #{adaresnet_forward.15} parent=11 // pred_check_branch
        %165 = sbr.rel (%p163) target = $region16
      $region15: #{adaresnet_forward.15} parent=11 // pred_region
        _
      $region16: #{adaresnet_forward.15} parent=11 // pred_fallthru
        _
      // Predicated region
      $region17: #{adaresnet_forward.15} parent=11 // pred_check
        %p166 = pneg %p92
      $region18: #{adaresnet_forward.15} parent=11 // pred_check_branch
        %168 = sbr.rel (%p166) target = $region20
      $region19: #{adaresnet_forward.15} parent=11 // pred_region
        _
      $region20: #{adaresnet_forward.15} parent=11 // pred_fallthru
        _
    $region12: #{adaresnet_forward.15} parent=5 // pred_fallthru
      _
    %p169 = scmp.lt.s32.totalorder %s10, 2
    // Predicated region
    $region21: #{adaresnet_forward.15} parent=5 // pred_check
      %p170 = pneg %p169
    $region22: #{adaresnet_forward.15} parent=5 // pred_check_branch
      %172 = sbr.rel (%p170) target = $region24
    $region23: #{adaresnet_forward.15} parent=5 // pred_region
      // Predicated region
      $region25: #{adaresnet_forward.15} parent=23 // pred_check
        %p173 = pneg %p44
      $region26: #{adaresnet_forward.15} parent=23 // pred_check_branch
        %175 = sbr.rel (%p173) target = $region28
      $region27: #{adaresnet_forward.15} parent=23 // pred_region
        %p176 = scmp.lt.s32.totalorder %s17, 1
        %s177 = scalar_select %p176, %s17, 1
        %p178 = scmp.lt.s32.totalorder %s18, 0
        %s179 = scalar_select %p178, %s18, 0
        %s180 = smul.addr %s179, 2
        %s181 = smul.addr %s177, 2
        %s182 = sadd.s32 %s180, %s181
        %s183 = smul.addr %s182, 4
        %s184 = scalar_lea.vmem %s0, %s183
      $region28: #{adaresnet_forward.15} parent=23 // pred_fallthru
        _
      // Predicated region
      $region29: #{adaresnet_forward.15} parent=23 // pred_check
        %p185 = pneg %p114
      $region30: #{adaresnet_forward.15} parent=23 // pred_check_branch
        %187 = sbr.rel (%p185) target = $region32
      $region31: #{adaresnet_forward.15} parent=23 // pred_region
        %p188 = scmp.lt.s32.totalorder %s17, 1
        %s189 = scalar_select %p188, %s17, 1
        %p190 = scmp.lt.s32.totalorder %s18, 0
        %s191 = scalar_select %p190, %s18, 0
        %s192 = smul.addr %s191, 2
        %s193 = smul.addr %s189, 2
        %s194 = sadd.s32 %s192, %s193
        %s195 = smul.addr %s194, 4
        %s196 = scalar_lea.vmem %s3, %s195
      $region32: #{adaresnet_forward.15} parent=23 // pred_fallthru
        _
    $region24: #{adaresnet_forward.15} parent=5 // pred_fallthru
      _
    %p197 = scmp.le.s32.totalorder 1, %s10
    %p198 = scmp.lt.s32.totalorder %s10, 3
    %p199 = pnand %p197, %p198
    %p200 = pneg %p199
    // Predicated region
    $region33: #{adaresnet_forward.15} parent=5 // pred_check
      _
    $region34: #{adaresnet_forward.15} parent=5 // pred_check_branch
      %202 = sbr.rel (%p199) target = $region36
    $region35: #{adaresnet_forward.15} parent=5 // pred_region
      %s203 = ssub.s32 %s10, 1
      %p204 = scmp.lt.s32.totalorder %s19, 1
      %s205 = scalar_select %p204, %s19, 1
      %p206 = scmp.lt.s32.totalorder %s20, 0
      %s207 = scalar_select %p206, %s20, 0
      %s208 = smul.addr %s207, 2
      %s209 = smul.addr %s205, 2
      %s210 = sadd.s32 %s208, %s209
      %s211 = smul.addr %s210, 4
      %s212 = scalar_lea.vmem %s0, %s211
      %p213 = pneg %p50
      %p214 = pneg %p47
      %p215 = pneg %p71
      %p216 = pneg %p68
      %p217 = pneg %p92
      %p218 = pneg %p89
      %p219 = scmp.lt.s32.totalorder %s19, 1
      %s220 = scalar_select %p219, %s19, 1
      %p221 = scmp.lt.s32.totalorder %s20, 0
      %s222 = scalar_select %p221, %s20, 0
      %s223 = smul.addr %s222, 2
      %s224 = smul.addr %s220, 2
      %s225 = sadd.s32 %s223, %s224
      %s226 = smul.addr %s225, 4
      %s227 = scalar_lea.vmem %s3, %s226
      %p228 = pneg %p120
      %p229 = pneg %p117
      %p230 = pneg %p148
      %p231 = pneg %p145
      %p232 = scmp.lt.s32.totalorder %s19, 1
      %s233 = scalar_select %p232, %s19, 1
      %p234 = scmp.lt.s32.totalorder %s20, 0
      %s235 = scalar_select %p234, %s20, 0
      %s236 = smul.addr %s235, 2
      %s237 = smul.addr %s233, 2
      %s238 = sadd.s32 %s236, %s237
      %s239 = smul.addr %s238, 4
      %s240 = scalar_lea.vmem %s4, %s239
      %p241 = scmp.lt.s32.totalorder %s19, 1
      %s242 = scalar_select %p241, %s19, 1
      %p243 = scmp.lt.s32.totalorder %s20, 0
      %s244 = scalar_select %p243, %s20, 0
      %s245 = smul.addr %s244, 2
      %s246 = smul.addr %s242, 2
      %s247 = sadd.s32 %s245, %s246
      %s248 = smul.addr %s247, 4
      %s249 = scalar_lea.vmem %s0, %s248
      %p250 = scmp.lt.s32.totalorder %s19, 1
      %s251 = scalar_select %p250, %s19, 1
      %p252 = scmp.lt.s32.totalorder %s20, 0
      %s253 = scalar_select %p252, %s20, 0
      %s254 = smul.addr %s253, 2
      %s255 = smul.addr %s251, 2
      %s256 = sadd.s32 %s254, %s255
      %s257 = smul.addr %s256, 4
      %s258 = scalar_lea.vmem %s3, %s257
      %p259 = scmp.lt.s32.totalorder %s19, 1
      %s260 = scalar_select %p259, %s19, 1
      %p261 = scmp.lt.s32.totalorder %s20, 0
      %s262 = scalar_select %p261, %s20, 0
      %s263 = smul.addr %s262, 2
      %s264 = smul.addr %s260, 2
      %s265 = sadd.s32 %s263, %s264
      %s266 = smul.addr %s265, 4
      %s267 = scalar_lea.vmem %s4, %s266
      %v268 = vld [vmem:[%s249] sm:$0xff]
      %v269 = vunpack.c.l.bf16 %v268
      %v270 = vunpack.c.h.bf16 %v268
      %v271 = vld [vmem:[%s1] sm:$0x3]
      %v273 = vlaneseq
      %v274 = vshrl.u32 %v273, 7
      %v275 = vsub.s32 0, %v274
      %v276 = vrot.slane %v271, %v275
      %v277 = vlaneseq
      %v278 = vshrl.u32 %v277, 7
      %v279 = vsub.s32 1, %v278
      %v280 = vrot.slane %v271, %v279
      %v283 = vmul.f32 %v269, %v276
      %v284 = vmul.f32 %v270, %v280
      %v285 = vld [vmem:[%s2] sm:$0x3]
      %v287 = vlaneseq
      %v288 = vshrl.u32 %v287, 7
      %v289 = vsub.s32 0, %v288
      %v290 = vrot.slane %v285, %v289
      %v291 = vlaneseq
      %v292 = vshrl.u32 %v291, 7
      %v293 = vsub.s32 1, %v292
      %v294 = vrot.slane %v285, %v293
      %v297 = vadd.f32 %v283, %v290
      %v298 = vadd.f32 %v284, %v294
      %v299 = vld [vmem:[%s258] sm:$0xff]
      %v300 = vunpack.c.l.bf16 %v299
      %v301 = vunpack.c.h.bf16 %v299
      %v302 = vadd.f32 %v300, %v297
      %v303 = vadd.f32 %v301, %v298
      %v304 = vpack.c.bf16 %v302, %v302
      %v305 = vpack.c.bf16 %v303, %v303
      %v308 = vunpack.c.l.b16 %v304
      %v309 = vunpack.c.l.b16 %v305
      %v310 = vpack.c.b16 %v309, %v308
      %312 = vst [vmem:[%s267] sm:$0xff] %v310
      %p313 = scmp.lt.s32.totalorder %s19, 1
      %s314 = scalar_select %p313, %s19, 1
      %p315 = scmp.lt.s32.totalorder %s20, 0
      %s316 = scalar_select %p315, %s20, 0
      %s317 = smul.addr %s316, 2
      %s318 = smul.addr %s314, 2
      %s319 = sadd.s32 %s317, %s318
      %s320 = smul.addr %s319, 4
      %s321 = scalar_lea.vmem %s4, %s320
      // Predicated region
      $region37: #{adaresnet_forward.15} parent=35 // pred_check
        %p322 = pneg %p145
      $region38: #{adaresnet_forward.15} parent=35 // pred_check_branch
        %324 = sbr.rel (%p322) target = $region40
      $region39: #{adaresnet_forward.15} parent=35 // pred_region
        _
      $region40: #{adaresnet_forward.15} parent=35 // pred_fallthru
        _
    $region36: #{adaresnet_forward.15} parent=5 // pred_fallthru
      _
    %p325 = scmp.le.s32.totalorder 2, %s10
    // Predicated region
    $region41: #{adaresnet_forward.15} parent=5 // pred_check
      %p326 = pneg %p325
    $region42: #{adaresnet_forward.15} parent=5 // pred_check_branch
      %328 = sbr.rel (%p326) target = $region44
    $region43: #{adaresnet_forward.15} parent=5 // pred_region
      %s329 = ssub.s32 %s10, 2
      // Predicated region
      $region45: #{adaresnet_forward.15} parent=43 // pred_check
        %p330 = pneg %p151
      $region46: #{adaresnet_forward.15} parent=43 // pred_check_branch
        %332 = sbr.rel (%p330) target = $region48
      $region47: #{adaresnet_forward.15} parent=43 // pred_region
        %p333 = scmp.lt.s32.totalorder %s21, 1
        %s334 = scalar_select %p333, %s21, 1
        %p335 = scmp.lt.s32.totalorder %s22, 0
        %s336 = scalar_select %p335, %s22, 0
        %s337 = smul.addr %s336, 2
        %s338 = smul.addr %s334, 2
        %s339 = sadd.s32 %s337, %s338
        %s340 = smul.addr %s339, 4
        %s341 = scalar_lea.vmem %s4, %s340
      $region48: #{adaresnet_forward.15} parent=43 // pred_fallthru
        _
    $region44: #{adaresnet_forward.15} parent=5 // pred_fallthru
      _
  $region6: #{adaresnet_forward.15} parent=0 // loop_footer
    %s14 = sadd.s32 1, %s10
  $region7: #{adaresnet_forward.15} parent=0 // loop_footer_branch
    %9 = sbr.rel target = $region3
  $region8: #{adaresnet_forward.15} parent=0 // loop_exit
    _

// kernel: adaresnet_forward.14
$region0: #{adaresnet_forward.14}
  #allocation0 [shape = 'u32[]', space=smem, size = 0x4, offset = 0x4, fixed_abs, tag = 'smem constant byte address 0x4 - core index']
  #allocation1 [shape = 'u32[144,128]{1,0:T(1,128)}', space=vmem, size = 0x12000, scoped, tag = 'internal scratch']
  %s0 = inlined_call_operand.vmem [shape: bf16[2,1,10,256], index: 0, kind: input, shape index: {}]
  %s1 = inlined_call_operand.vmem [shape: bf16[3,256,256], index: 1, kind: input, shape index: {}]
  %s2 = inlined_call_operand.vmem [shape: f32[1,256], index: 2, kind: input, shape index: {}]
  %s3 = inlined_call_operand.vmem [shape: f32[1,256], index: 3, kind: input, shape index: {}]
  %s4 = inlined_call_operand.vmem [shape: f32[1,256], index: 4, kind: input, shape index: {}]
  %s5 = inlined_call_operand.vmem [shape: bf16[2,8,256], index: 5, kind: output, shape index: {0}]
  %s6 = inlined_call_operand.vmem [shape: f32[2,1,2,256], index: 6, kind: output, shape index: {1}]
  %7 = xla_tuple %s5, %s6
  %s8 = sld [smem:[#allocation0]]
  $region61: #{adaresnet_forward.14} parent=0
    _
  %s10 = ssub.s32 1, %s8
  %s11 = scalar_select 0, %s10, %s8
  loop: start=0, step=1, limit=4
  $region2: #{adaresnet_forward.14} parent=0 // loop_pre_header
    _
  $region3: #{adaresnet_forward.14} parent=0 // loop_header
    %s13 = sphi 0, %s17
    %p14 = scmp.ge.s32.totalorder %s13, 4
    %s20 = sphi 0, %s32
    %s21 = sphi 0, %s28
    %s22 = sphi 0, %s20
    %s23 = sphi 0, %s21
    %s24 = sphi 0, %s22
    %s25 = sphi 0, %s23
    %s37 = sphi 0, %s39
    %s40 = sphi 0, %s37
    %s41 = sphi 0, %s40
    %s57 = sphi 0, %s41
    %s61 = sphi 0, %s61
    %s63 = sphi 0, %s61
    %s64 = sphi 0, %s63
    %s78 = sphi 0, %s64
    %s82 = sphi 0, %s82
    %s84 = sphi 0, %s82
    %s85 = sphi 0, %s84
    %s99 = sphi 0, %s85
    %s103 = sphi 0, %s103
    %s105 = sphi 0, %s103
    %s106 = sphi 0, %s105
    %s120 = sphi 0, %s106
    %s124 = sphi 0, %s124
    %s126 = sphi 0, %s124
    %s127 = sphi 0, %s126
    %s141 = sphi 0, %s127
    %s149 = sphi 0, %s151
    %s152 = sphi 0, %s149
    %s153 = sphi 0, %s152
    %s169 = sphi 0, %s153
    %s177 = sphi 0, %s179
    %s180 = sphi 0, %s177
    %s181 = sphi 0, %s180
    %s197 = sphi 0, %s181
  $region4: #{adaresnet_forward.14} parent=0 // loop_header_branch
    %16 = sbr.rel (%p14) target = $region8
  $region5: #{adaresnet_forward.14} parent=0 // loop_body
    %s18 = ssub.s32 %s13, 1
    %s19 = ssub.s32 %s13, 2
    %s26 = sadd.s32 1, %s21
    %p27 = scmp.ge.s32.totalorder %s26, 1
    %s28 = scalar_select %p27, 0, %s26
    %s29 = sadd.s32 1, %s20
    %s30 = scalar_select %p27, %s29, %s20
    %p31 = scmp.ge.s32.totalorder %s30, 2
    %s32 = scalar_select %p31, 0, %s30
    %s33 = ssub.s32 %s20, %s32
    %s34 = ssub.s32 %s21, %s28
    %s35 = sor.u32 %s33, %s34
    %p36 = scmp.eq.s32.totalorder %s35, 0
    %s38 = sadd.s32 %s37, 1
    %s39 = scalar_select %p36, %s37, %s38
    %p42 = pneg %p36
    %p43 = scmp.eq.s32.totalorder %s13, 1
    %p44 = por %p42, %p43
    %p45 = scmp.ne.s32.totalorder %s37, %s40
    %p46 = scmp.eq.s32.totalorder %s13, 0
    %p47 = por %p45, %p46
    %p48 = scmp.ne.s32.totalorder %s37, %s40
    %p49 = scmp.eq.s32.totalorder %s18, 1
    %p50 = por %p48, %p49
    %p51 = scmp.ne.s32.totalorder %s40, %s41
    %p52 = scmp.eq.s32.totalorder %s18, 0
    %p53 = por %p51, %p52
    %p54 = scmp.ne.s32.totalorder %s40, %s41
    %p55 = scmp.eq.s32.totalorder %s19, 1
    %p56 = por %p54, %p55
    %p58 = scmp.ne.s32.totalorder %s41, %s57
    %p59 = scmp.eq.s32.totalorder %s19, 0
    %p60 = por %p58, %p59
    %s62 = sadd.s32 %s61, 1
    %p65 = scmp.eq.s32.totalorder %s13, 1
    %p66 = scmp.ne.s32.totalorder %s61, %s63
    %p67 = scmp.eq.s32.totalorder %s13, 0
    %p68 = por %p66, %p67
    %p69 = scmp.ne.s32.totalorder %s61, %s63
    %p70 = scmp.eq.s32.totalorder %s18, 1
    %p71 = por %p69, %p70
    %p72 = scmp.ne.s32.totalorder %s63, %s64
    %p73 = scmp.eq.s32.totalorder %s18, 0
    %p74 = por %p72, %p73
    %p75 = scmp.ne.s32.totalorder %s63, %s64
    %p76 = scmp.eq.s32.totalorder %s19, 1
    %p77 = por %p75, %p76
    %p79 = scmp.ne.s32.totalorder %s64, %s78
    %p80 = scmp.eq.s32.totalorder %s19, 0
    %p81 = por %p79, %p80
    %s83 = sadd.s32 %s82, 1
    %p86 = scmp.eq.s32.totalorder %s13, 1
    %p87 = scmp.ne.s32.totalorder %s82, %s84
    %p88 = scmp.eq.s32.totalorder %s13, 0
    %p89 = por %p87, %p88
    %p90 = scmp.ne.s32.totalorder %s82, %s84
    %p91 = scmp.eq.s32.totalorder %s18, 1
    %p92 = por %p90, %p91
    %p93 = scmp.ne.s32.totalorder %s84, %s85
    %p94 = scmp.eq.s32.totalorder %s18, 0
    %p95 = por %p93, %p94
    %p96 = scmp.ne.s32.totalorder %s84, %s85
    %p97 = scmp.eq.s32.totalorder %s19, 1
    %p98 = por %p96, %p97
    %p100 = scmp.ne.s32.totalorder %s85, %s99
    %p101 = scmp.eq.s32.totalorder %s19, 0
    %p102 = por %p100, %p101
    %s104 = sadd.s32 %s103, 1
    %p107 = scmp.eq.s32.totalorder %s13, 1
    %p108 = scmp.ne.s32.totalorder %s103, %s105
    %p109 = scmp.eq.s32.totalorder %s13, 0
    %p110 = por %p108, %p109
    %p111 = scmp.ne.s32.totalorder %s103, %s105
    %p112 = scmp.eq.s32.totalorder %s18, 1
    %p113 = por %p111, %p112
    %p114 = scmp.ne.s32.totalorder %s105, %s106
    %p115 = scmp.eq.s32.totalorder %s18, 0
    %p116 = por %p114, %p115
    %p117 = scmp.ne.s32.totalorder %s105, %s106
    %p118 = scmp.eq.s32.totalorder %s19, 1
    %p119 = por %p117, %p118
    %p121 = scmp.ne.s32.totalorder %s106, %s120
    %p122 = scmp.eq.s32.totalorder %s19, 0
    %p123 = por %p121, %p122
    %s125 = sadd.s32 %s124, 1
    %p128 = scmp.eq.s32.totalorder %s13, 1
    %p129 = scmp.ne.s32.totalorder %s124, %s126
    %p130 = scmp.eq.s32.totalorder %s13, 0
    %p131 = por %p129, %p130
    %p132 = scmp.ne.s32.totalorder %s124, %s126
    %p133 = scmp.eq.s32.totalorder %s18, 1
    %p134 = por %p132, %p133
    %p135 = scmp.ne.s32.totalorder %s126, %s127
    %p136 = scmp.eq.s32.totalorder %s18, 0
    %p137 = por %p135, %p136
    %p138 = scmp.ne.s32.totalorder %s126, %s127
    %p139 = scmp.eq.s32.totalorder %s19, 1
    %p140 = por %p138, %p139
    %p142 = scmp.ne.s32.totalorder %s127, %s141
    %p143 = scmp.eq.s32.totalorder %s19, 0
    %p144 = por %p142, %p143
    %s145 = ssub.s32 %s20, %s32
    %s146 = ssub.s32 %s21, %s28
    %s147 = sor.u32 %s145, %s146
    %p148 = scmp.eq.s32.totalorder %s147, 0
    %s150 = sadd.s32 %s149, 1
    %s151 = scalar_select %p148, %s149, %s150
    %p154 = pneg %p148
    %p155 = scmp.eq.s32.totalorder %s13, 1
    %p156 = por %p154, %p155
    %p157 = scmp.ne.s32.totalorder %s149, %s152
    %p158 = scmp.eq.s32.totalorder %s13, 0
    %p159 = por %p157, %p158
    %p160 = scmp.ne.s32.totalorder %s149, %s152
    %p161 = scmp.eq.s32.totalorder %s18, 1
    %p162 = por %p160, %p161
    %p163 = scmp.ne.s32.totalorder %s152, %s153
    %p164 = scmp.eq.s32.totalorder %s18, 0
    %p165 = por %p163, %p164
    %p166 = scmp.ne.s32.totalorder %s152, %s153
    %p167 = scmp.eq.s32.totalorder %s19, 1
    %p168 = por %p166, %p167
    %p170 = scmp.ne.s32.totalorder %s153, %s169
    %p171 = scmp.eq.s32.totalorder %s19, 0
    %p172 = por %p170, %p171
    %s173 = ssub.s32 %s20, %s32
    %s174 = ssub.s32 %s21, %s28
    %s175 = sor.u32 %s173, %s174
    %p176 = scmp.eq.s32.totalorder %s175, 0
    %s178 = sadd.s32 %s177, 1
    %s179 = scalar_select %p176, %s177, %s178
    %p182 = pneg %p176
    %p183 = scmp.eq.s32.totalorder %s13, 1
    %p184 = por %p182, %p183
    %p185 = scmp.ne.s32.totalorder %s177, %s180
    %p186 = scmp.eq.s32.totalorder %s13, 0
    %p187 = por %p185, %p186
    %p188 = scmp.ne.s32.totalorder %s177, %s180
    %p189 = scmp.eq.s32.totalorder %s18, 1
    %p190 = por %p188, %p189
    %p191 = scmp.ne.s32.totalorder %s180, %s181
    %p192 = scmp.eq.s32.totalorder %s18, 0
    %p193 = por %p191, %p192
    %p194 = scmp.ne.s32.totalorder %s180, %s181
    %p195 = scmp.eq.s32.totalorder %s19, 1
    %p196 = por %p194, %p195
    %p198 = scmp.ne.s32.totalorder %s181, %s197
    %p199 = scmp.eq.s32.totalorder %s19, 0
    %p200 = por %p198, %p199
    %p201 = scmp.le.s32.totalorder 1, %s13
    %p202 = scmp.lt.s32.totalorder %s13, 3
    %p203 = pnand %p201, %p202
    %p204 = pneg %p203
    // Predicated region
    $region9: #{adaresnet_forward.14} parent=5 // pred_check
      _
    $region10: #{adaresnet_forward.14} parent=5 // pred_check_branch
      %206 = sbr.rel (%p203) target = $region12
    $region11: #{adaresnet_forward.14} parent=5 // pred_region
      %s207 = ssub.s32 %s13, 1
      // Predicated region
      $region13: #{adaresnet_forward.14} parent=11 // pred_check
        %p208 = pneg %p74
      $region14: #{adaresnet_forward.14} parent=11 // pred_check_branch
        %210 = sbr.rel (%p208) target = $region16
      $region15: #{adaresnet_forward.14} parent=11 // pred_region
        _
      $region16: #{adaresnet_forward.14} parent=11 // pred_fallthru
        _
      // Predicated region
      $region17: #{adaresnet_forward.14} parent=11 // pred_check
        %p211 = pneg %p95
      $region18: #{adaresnet_forward.14} parent=11 // pred_check_branch
        %213 = sbr.rel (%p211) target = $region20
      $region19: #{adaresnet_forward.14} parent=11 // pred_region
        _
      $region20: #{adaresnet_forward.14} parent=11 // pred_fallthru
        _
      // Predicated region
      $region21: #{adaresnet_forward.14} parent=11 // pred_check
        %p214 = pneg %p116
      $region22: #{adaresnet_forward.14} parent=11 // pred_check_branch
        %216 = sbr.rel (%p214) target = $region24
      $region23: #{adaresnet_forward.14} parent=11 // pred_region
        _
      $region24: #{adaresnet_forward.14} parent=11 // pred_fallthru
        _
      // Predicated region
      $region25: #{adaresnet_forward.14} parent=11 // pred_check
        %p217 = pneg %p137
      $region26: #{adaresnet_forward.14} parent=11 // pred_check_branch
        %219 = sbr.rel (%p217) target = $region28
      $region27: #{adaresnet_forward.14} parent=11 // pred_region
        _
      $region28: #{adaresnet_forward.14} parent=11 // pred_fallthru
        _
    $region12: #{adaresnet_forward.14} parent=5 // pred_fallthru
      _
    %p220 = scmp.lt.s32.totalorder %s13, 2
    // Predicated region
    $region29: #{adaresnet_forward.14} parent=5 // pred_check
      %p221 = pneg %p220
    $region30: #{adaresnet_forward.14} parent=5 // pred_check_branch
      %223 = sbr.rel (%p221) target = $region32
    $region31: #{adaresnet_forward.14} parent=5 // pred_region
      // Predicated region
      $region33: #{adaresnet_forward.14} parent=31 // pred_check
        %p224 = pneg %p47
      $region34: #{adaresnet_forward.14} parent=31 // pred_check_branch
        %226 = sbr.rel (%p224) target = $region36
      $region35: #{adaresnet_forward.14} parent=31 // pred_region
        %p227 = scmp.lt.s32.totalorder %s20, 1
        %s228 = scalar_select %p227, %s20, 1
        %p229 = scmp.lt.s32.totalorder %s21, 0
        %s230 = scalar_select %p229, %s21, 0
        %s231 = smul.addr %s230, 4
        %s232 = smul.addr %s228, 4
        %s233 = sadd.s32 %s231, %s232
        %s234 = smul.addr %s233, 4
        %s235 = scalar_lea.vmem %s0, %s234
      $region36: #{adaresnet_forward.14} parent=31 // pred_fallthru
        _
    $region32: #{adaresnet_forward.14} parent=5 // pred_fallthru
      _
    %p236 = scmp.le.s32.totalorder 1, %s13
    %p237 = scmp.lt.s32.totalorder %s13, 3
    %p238 = pnand %p236, %p237
    %p239 = pneg %p238
    // Predicated region
    $region37: #{adaresnet_forward.14} parent=5 // pred_check
      _
    $region38: #{adaresnet_forward.14} parent=5 // pred_check_branch
      %241 = sbr.rel (%p238) target = $region40
    $region39: #{adaresnet_forward.14} parent=5 // pred_region
      %s242 = ssub.s32 %s13, 1
      %p243 = scmp.lt.s32.totalorder %s22, 1
      %s244 = scalar_select %p243, %s22, 1
      %p245 = scmp.lt.s32.totalorder %s23, 0
      %s246 = scalar_select %p245, %s23, 0
      %s247 = smul.addr %s246, 4
      %s248 = smul.addr %s244, 4
      %s249 = sadd.s32 %s247, %s248
      %s250 = smul.addr %s249, 4
      %s251 = scalar_lea.vmem %s0, %s250
      %p252 = pneg %p53
      %p253 = pneg %p50
      %p254 = pneg %p74
      %p255 = pneg %p71
      %p256 = pneg %p95
      %p257 = pneg %p92
      %p258 = pneg %p116
      %p259 = pneg %p113
      %p260 = pneg %p137
      %p261 = pneg %p134
      %p262 = pneg %p165
      %p263 = pneg %p162
      %p264 = scmp.lt.s32.totalorder %s22, 1
      %s265 = scalar_select %p264, %s22, 1
      %p266 = scmp.lt.s32.totalorder %s23, 0
      %s267 = scalar_select %p266, %s23, 0
      %s268 = smul.addr %s267, 2
      %s269 = smul.addr %s265, 2
      %s270 = sadd.s32 %s268, %s269
      %s271 = smul.addr %s270, 4
      %s272 = scalar_lea.vmem %s5, %s271
      %p273 = pneg %p193
      %p274 = pneg %p190
      %p275 = scmp.lt.s32.totalorder %s22, 1
      %s276 = scalar_select %p275, %s22, 1
      %p277 = scmp.lt.s32.totalorder %s23, 0
      %s278 = scalar_select %p277, %s23, 0
      %s279 = smul.addr %s278, 2
      %s280 = smul.addr %s276, 2
      %s281 = sadd.s32 %s279, %s280
      %s282 = smul.addr %s281, 2
      %s283 = scalar_lea.vmem %s6, %s282
      %p284 = scmp.lt.s32.totalorder %s22, 1
      %s285 = scalar_select %p284, %s22, 1
      %p286 = scmp.lt.s32.totalorder %s23, 0
      %s287 = scalar_select %p286, %s23, 0
      %s288 = smul.addr %s287, 4
      %s289 = smul.addr %s285, 4
      %s290 = sadd.s32 %s288, %s289
      %s291 = smul.addr %s290, 4
      %s292 = scalar_lea.vmem %s0, %s291
      %p293 = scmp.lt.s32.totalorder %s22, 1
      %s294 = scalar_select %p293, %s22, 1
      %p295 = scmp.lt.s32.totalorder %s23, 0
      %s296 = scalar_select %p295, %s23, 0
      %s297 = smul.addr %s296, 2
      %s298 = smul.addr %s294, 2
      %s299 = sadd.s32 %s297, %s298
      %s300 = smul.addr %s299, 4
      %s301 = scalar_lea.vmem %s5, %s300
      %p302 = scmp.lt.s32.totalorder %s22, 1
      %s303 = scalar_select %p302, %s22, 1
      %p304 = scmp.lt.s32.totalorder %s23, 0
      %s305 = scalar_select %p304, %s23, 0
      %s306 = smul.addr %s305, 2
      %s307 = smul.addr %s303, 2
      %s308 = sadd.s32 %s306, %s307
      %s309 = smul.addr %s308, 2
      %s310 = scalar_lea.vmem %s6, %s309
      %v311 = vld [vmem:[%s2] sm:$0x3]
      %v312 = vld [vmem:[%s292] sm:$0xff]
      %v313 = vld [vmem:[%s292 + $0x8] sm:$0x11]
      %v314 = vunpack.c.l.bf16 %v312
      %v315 = vunpack.c.h.bf16 %v312
      %v316 = vunpack.c.l.bf16 %v313
      %v317 = vunpack.c.h.bf16 %v313
      %v318 = vld [vmem:[%s3] sm:$0x3]
      %v320 = vlaneseq
      %v321 = vshrl.u32 %v320, 7
      %v322 = vsub.s32 0, %v321
      %v323 = vrot.slane %v318, %v322
      %v324 = vlaneseq
      %v325 = vshrl.u32 %v324, 7
      %v326 = vsub.s32 1, %v325
      %v327 = vrot.slane %v318, %v326
      %v330 = vmul.f32 %v314, %v323
      %v331 = vmul.f32 %v315, %v327
      %v332 = vmul.f32 %v316, %v323
      %v333 = vmul.f32 %v317, %v327
      %v334 = vld [vmem:[%s4] sm:$0x3]
      %v336 = vlaneseq
      %v337 = vshrl.u32 %v336, 7
      %v338 = vsub.s32 0, %v337
      %v339 = vrot.slane %v334, %v338
      %v340 = vlaneseq
      %v341 = vshrl.u32 %v340, 7
      %v342 = vsub.s32 1, %v341
      %v343 = vrot.slane %v334, %v342
      %v346 = vadd.f32 %v330, %v339
      %v347 = vadd.f32 %v331, %v343
      %v348 = vadd.f32 %v332, %v339
      %v349 = vadd.f32 %v333, %v343
      %v350 = vmax.f32 %v346, 0.0
      %v351 = vmax.f32 %v347, 0.0
      %v352 = vmax.f32 %v348, 0.0
      %v353 = vmax.f32 %v349, 0.0
      %v354 = vlaneseq
      %v355 = vshrl.u32 %v354, 7
      %v356 = vadd.s32 %v355, 8
      %s357 = smul.u32 %s23, 8
      %v358 = vstv %s357
      %v359 = vadd.s32 %v358, %v355
      %v360 = vadd.s32 %v358, %v356
      %v361 = vsub.s32 %v359, 1
      %v362 = vsub.s32 %v360, 1
      %vm363 = vcmp.ge.s32.totalorder %v361, 0
      %vm364 = vcmp.ge.s32.totalorder %v362, 0
      %vm365 = vcmp.lt.s32.totalorder %v361, 8
      %vm366 = vcmp.lt.s32.totalorder %v362, 8
      %vm367 = vmand %vm363, %vm365
      %vm368 = vmand %vm364, %vm366
      %v369 = vsel %vm367, 1, 0
      %v370 = vsel %vm368, 1, 0
      %vm371 = vcmp.eq.s32.totalorder %v369, 1
      %vm372 = vcmp.eq.s32.totalorder %v370, 1
      %v373 = vsel %vm371, %v350, 0.0
      %v374 = vsel %vm371, %v351, 0.0
      %v375 = vsel %vm372, %v352, 0.0
      %v376 = vsel %vm372, %v353, 0.0
      %v377 = vpack.c.bf16 %v375, %v373
      %v378 = vpack.c.bf16 %v376, %v374
      %v379 = vld [vmem:[%s1] sm:$0xff]
      %v380 = vld [vmem:[%s1 + $0x8] sm:$0xff]
      %v381 = vld [vmem:[%s1 + $0x10] sm:$0xff]
      %v382 = vld [vmem:[%s1 + $0x18] sm:$0xff]
      %v383 = vld [vmem:[%s1 + $0x20] sm:$0xff]
      %v384 = vld [vmem:[%s1 + $0x28] sm:$0xff]
      %v385 = vld [vmem:[%s1 + $0x30] sm:$0xff]
      %v386 = vld [vmem:[%s1 + $0x38] sm:$0xff]
      %v387 = vld [vmem:[%s1 + $0x40] sm:$0xff]
      %v388 = vld [vmem:[%s1 + $0x48] sm:$0xff]
      %v389 = vld [vmem:[%s1 + $0x50] sm:$0xff]
      %v390 = vld [vmem:[%s1 + $0x58] sm:$0xff]
      %v391 = vld [vmem:[%s1 + $0x60] sm:$0xff]
      %v392 = vld [vmem:[%s1 + $0x68] sm:$0xff]
      %v393 = vld [vmem:[%s1 + $0x70] sm:$0xff]
      %v394 = vld [vmem:[%s1 + $0x78] sm:$0xff]
      %v395 = vld [vmem:[%s1 + $0x80] sm:$0xff]
      %v396 = vld [vmem:[%s1 + $0x88] sm:$0xff]
      %v397 = vld [vmem:[%s1 + $0x90] sm:$0xff]
      %v398 = vld [vmem:[%s1 + $0x98] sm:$0xff]
      %v399 = vld [vmem:[%s1 + $0xa0] sm:$0xff]
      %v400 = vld [vmem:[%s1 + $0xa8] sm:$0xff]
      %v401 = vld [vmem:[%s1 + $0xb0] sm:$0xff]
      %v402 = vld [vmem:[%s1 + $0xb8] sm:$0xff]
      %v403 = vld [vmem:[%s1 + $0xc0] sm:$0xff]
      %v404 = vld [vmem:[%s1 + $0xc8] sm:$0xff]
      %v405 = vld [vmem:[%s1 + $0xd0] sm:$0xff]
      %v406 = vld [vmem:[%s1 + $0xd8] sm:$0xff]
      %v407 = vld [vmem:[%s1 + $0xe0] sm:$0xff]
      %v408 = vld [vmem:[%s1 + $0xe8] sm:$0xff]
      %v409 = vld [vmem:[%s1 + $0xf0] sm:$0xff]
      %v410 = vld [vmem:[%s1 + $0xf8] sm:$0xff]
      %v443 = vunpack.c.l.b16 %v379
      %v444 = vunpack.c.h.b16 %v379
      %v445 = vunpack.c.l.b16 %v380
      %v446 = vunpack.c.h.b16 %v380
      %v447 = vunpack.c.l.b16 %v381
      %v448 = vunpack.c.h.b16 %v381
      %v449 = vunpack.c.l.b16 %v382
      %v450 = vunpack.c.h.b16 %v382
      %v451 = vunpack.c.l.b16 %v383
      %v452 = vunpack.c.h.b16 %v383
      %v453 = vunpack.c.l.b16 %v384
      %v454 = vunpack.c.h.b16 %v384
      %v455 = vunpack.c.l.b16 %v385
      %v456 = vunpack.c.h.b16 %v385
      %v457 = vunpack.c.l.b16 %v386
      %v458 = vunpack.c.h.b16 %v386
      %v459 = vunpack.c.l.b16 %v387
      %v460 = vunpack.c.h.b16 %v387
      %v461 = vunpack.c.l.b16 %v388
      %v462 = vunpack.c.h.b16 %v388
      %v463 = vunpack.c.l.b16 %v389
      %v464 = vunpack.c.h.b16 %v389
      %v465 = vunpack.c.l.b16 %v390
      %v466 = vunpack.c.h.b16 %v390
      %v467 = vunpack.c.l.b16 %v391
      %v468 = vunpack.c.h.b16 %v391
      %v469 = vunpack.c.l.b16 %v392
      %v470 = vunpack.c.h.b16 %v392
      %v471 = vunpack.c.l.b16 %v393
      %v472 = vunpack.c.h.b16 %v393
      %v473 = vunpack.c.l.b16 %v394
      %v474 = vunpack.c.h.b16 %v394
      %v475 = vunpack.c.l.b16 %v395
      %v476 = vunpack.c.h.b16 %v395
      %v477 = vunpack.c.l.b16 %v396
      %v478 = vunpack.c.h.b16 %v396
      %v479 = vunpack.c.l.b16 %v397
      %v480 = vunpack.c.h.b16 %v397
      %v481 = vunpack.c.l.b16 %v398
      %v482 = vunpack.c.h.b16 %v398
      %v483 = vunpack.c.l.b16 %v399
      %v484 = vunpack.c.h.b16 %v399
      %v485 = vunpack.c.l.b16 %v400
      %v486 = vunpack.c.h.b16 %v400
      %v487 = vunpack.c.l.b16 %v401
      %v488 = vunpack.c.h.b16 %v401
      %v489 = vunpack.c.l.b16 %v402
      %v490 = vunpack.c.h.b16 %v402
      %v491 = vunpack.c.l.b16 %v403
      %v492 = vunpack.c.h.b16 %v403
      %v493 = vunpack.c.l.b16 %v404
      %v494 = vunpack.c.h.b16 %v404
      %v495 = vunpack.c.l.b16 %v405
      %v496 = vunpack.c.h.b16 %v405
      %v497 = vunpack.c.l.b16 %v406
      %v498 = vunpack.c.h.b16 %v406
      %v499 = vunpack.c.l.b16 %v407
      %v500 = vunpack.c.h.b16 %v407
      %v501 = vunpack.c.l.b16 %v408
      %v502 = vunpack.c.h.b16 %v408
      %v503 = vunpack.c.l.b16 %v409
      %v504 = vunpack.c.h.b16 %v409
      %v505 = vunpack.c.l.b16 %v410
      %v506 = vunpack.c.h.b16 %v410
      %v507 = vpack.c.b16 %v445, %v443
      %v508 = vpack.c.b16 %v446, %v444
      %v509 = vpack.c.b16 %v449, %v447
      %v510 = vpack.c.b16 %v450, %v448
      %v511 = vpack.c.b16 %v453, %v451
      %v512 = vpack.c.b16 %v454, %v452
      %v513 = vpack.c.b16 %v457, %v455
      %v514 = vpack.c.b16 %v458, %v456
      %v515 = vpack.c.b16 %v461, %v459
      %v516 = vpack.c.b16 %v462, %v460
      %v517 = vpack.c.b16 %v465, %v463
      %v518 = vpack.c.b16 %v466, %v464
      %v519 = vpack.c.b16 %v469, %v467
      %v520 = vpack.c.b16 %v470, %v468
      %v521 = vpack.c.b16 %v473, %v471
      %v522 = vpack.c.b16 %v474, %v472
      %v523 = vpack.c.b16 %v477, %v475
      %v524 = vpack.c.b16 %v478, %v476
      %v525 = vpack.c.b16 %v481, %v479
      %v526 = vpack.c.b16 %v482, %v480
      %v527 = vpack.c.b16 %v485, %v483
      %v528 = vpack.c.b16 %v486, %v484
      %v529 = vpack.c.b16 %v489, %v487
      %v530 = vpack.c.b16 %v490, %v488
      %v531 = vpack.c.b16 %v493, %v491
      %v532 = vpack.c.b16 %v494, %v492
      %v533 = vpack.c.b16 %v497, %v495
      %v534 = vpack.c.b16 %v498, %v496
      %v535 = vpack.c.b16 %v501, %v499
      %v536 = vpack.c.b16 %v502, %v500
      %v537 = vpack.c.b16 %v505, %v503
      %v538 = vpack.c.b16 %v506, %v504
      %571 = vmatprep.subr.bf16.mxu0 %v522
      %572 = vmatpush1.bf16.msra.mxu0 %v521
      %573 = vmatprep.subr.bf16.mxu0 %v520
      %574 = vmatpush1.bf16.msra.mxu0 %v519
      %575 = vmatprep.subr.bf16.mxu0 %v518
      %576 = vmatpush1.bf16.msra.mxu0 %v517
      %577 = vmatprep.subr.bf16.mxu0 %v516
      %578 = vmatpush1.bf16.msra.mxu0 %v515
      %579 = vmatprep.subr.bf16.mxu0 %v514
      %580 = vmatpush1.bf16.msra.mxu0 %v513
      %581 = vmatprep.subr.bf16.mxu0 %v512
      %582 = vmatpush1.bf16.msra.mxu0 %v511
      %583 = vmatprep.subr.bf16.mxu0 %v510
      %584 = vmatpush1.bf16.msra.mxu0 %v509
      %585 = vmatprep.subr.bf16.mxu0 %v508
      %586 = vmatpush1.bf16.msra.mxu0 %v507
      %587 = vmatprep.subr.bf16.mxu0 %v538
      %588 = vmatpush2.bf16.msra.mxu0 %v537
      %589 = vmatprep.subr.bf16.mxu0 %v536
      %590 = vmatpush2.bf16.msra.mxu0 %v535
      %591 = vmatprep.subr.bf16.mxu0 %v534
      %592 = vmatpush2.bf16.msra.mxu0 %v533
      %593 = vmatprep.subr.bf16.mxu0 %v532
      %594 = vmatpush2.bf16.msra.mxu0 %v531
      %595 = vmatprep.subr.bf16.mxu0 %v530
      %596 = vmatpush2.bf16.msra.mxu0 %v529
      %597 = vmatprep.subr.bf16.mxu0 %v528
      %598 = vmatpush2.bf16.msra.mxu0 %v527
      %599 = vmatprep.subr.bf16.mxu0 %v526
      %600 = vmatpush2.bf16.msra.mxu0 %v525
      %601 = vmatprep.subr.bf16.mxu0 %v524
      %602 = vmatpush2.bf16.msra.mxu0 %v523
      %603 = vmatprep.mubr.bf16.mxu0 %v378
      %604 = vmatmul.mubr.bf16.gmra.mxu0 %v377
      %v605 = vpop.f32.mrf.mxu0
      %v606 = vadd.f32 0.0, %v605
      %v607 = vpop.f32.mrf.mxu0
      %v608 = vadd.f32 0.0, %v607
      %v609 = vpop.f32.mrf.mxu0
      %v610 = vpop.f32.mrf.mxu0
      %611 = vdwg.mxu0
      %v613 = vlaneseq
      %v614 = vshrl.u32 %v613, 7
      %v615 = vsub.s32 0, %v614
      %v616 = vrot.slane %v311, %v615
      %v617 = vlaneseq
      %v618 = vshrl.u32 %v617, 7
      %v619 = vsub.s32 1, %v618
      %v620 = vrot.slane %v311, %v619
      %v623 = vadd.f32 %v616, %v606
      %v624 = vadd.f32 %v620, %v608
      %s625 = scalar_lea.vmem %s1, 256
      %v626 = vld [vmem:[%s625] sm:$0xff]
      %v627 = vld [vmem:[%s625 + $0x8] sm:$0xff]
      %v628 = vld [vmem:[%s625 + $0x10] sm:$0xff]
      %v629 = vld [vmem:[%s625 + $0x18] sm:$0xff]
      %v630 = vld [vmem:[%s625 + $0x20] sm:$0xff]
      %v631 = vld [vmem:[%s625 + $0x28] sm:$0xff]
      %v632 = vld [vmem:[%s625 + $0x30] sm:$0xff]
      %v633 = vld [vmem:[%s625 + $0x38] sm:$0xff]
      %v634 = vld [vmem:[%s625 + $0x40] sm:$0xff]
      %v635 = vld [vmem:[%s625 + $0x48] sm:$0xff]
      %v636 = vld [vmem:[%s625 + $0x50] sm:$0xff]
      %v637 = vld [vmem:[%s625 + $0x58] sm:$0xff]
      %v638 = vld [vmem:[%s625 + $0x60] sm:$0xff]
      %v639 = vld [vmem:[%s625 + $0x68] sm:$0xff]
      %v640 = vld [vmem:[%s625 + $0x70] sm:$0xff]
      %v641 = vld [vmem:[%s625 + $0x78] sm:$0xff]
      %v642 = vld [vmem:[%s625 + $0x80] sm:$0xff]
      %v643 = vld [vmem:[%s625 + $0x88] sm:$0xff]
      %v644 = vld [vmem:[%s625 + $0x90] sm:$0xff]
      %v645 = vld [vmem:[%s625 + $0x98] sm:$0xff]
      %v646 = vld [vmem:[%s625 + $0xa0] sm:$0xff]
      %v647 = vld [vmem:[%s625 + $0xa8] sm:$0xff]
      %v648 = vld [vmem:[%s625 + $0xb0] sm:$0xff]
      %v649 = vld [vmem:[%s625 + $0xb8] sm:$0xff]
      %v650 = vld [vmem:[%s625 + $0xc0] sm:$0xff]
      %v651 = vld [vmem:[%s625 + $0xc8] sm:$0xff]
      %v652 = vld [vmem:[%s625 + $0xd0] sm:$0xff]
      %v653 = vld [vmem:[%s625 + $0xd8] sm:$0xff]
      %v654 = vld [vmem:[%s625 + $0xe0] sm:$0xff]
      %v655 = vld [vmem:[%s625 + $0xe8] sm:$0xff]
      %v656 = vld [vmem:[%s625 + $0xf0] sm:$0xff]
      %v657 = vld [vmem:[%s625 + $0xf8] sm:$0xff]
      %v659 = vshrl.u32 %v377, 16
      %v661 = vshll.u32 %v377, 16
      %v663 = vrot.slane %v661, 1
      %v664 = vor.u32 %v659, %v663
      %v666 = vshrl.u32 %v378, 16
      %v668 = vshll.u32 %v378, 16
      %v670 = vrot.slane %v668, 1
      %v671 = vor.u32 %v666, %v670
      %v706 = vunpack.c.l.b16 %v626
      %v707 = vunpack.c.h.b16 %v626
      %v708 = vunpack.c.l.b16 %v627
      %v709 = vunpack.c.h.b16 %v627
      %v710 = vunpack.c.l.b16 %v628
      %v711 = vunpack.c.h.b16 %v628
      %v712 = vunpack.c.l.b16 %v629
      %v713 = vunpack.c.h.b16 %v629
      %v714 = vunpack.c.l.b16 %v630
      %v715 = vunpack.c.h.b16 %v630
      %v716 = vunpack.c.l.b16 %v631
      %v717 = vunpack.c.h.b16 %v631
      %v718 = vunpack.c.l.b16 %v632
      %v719 = vunpack.c.h.b16 %v632
      %v720 = vunpack.c.l.b16 %v633
      %v721 = vunpack.c.h.b16 %v633
      %v722 = vunpack.c.l.b16 %v634
      %v723 = vunpack.c.h.b16 %v634
      %v724 = vunpack.c.l.b16 %v635
      %v725 = vunpack.c.h.b16 %v635
      %v726 = vunpack.c.l.b16 %v636
      %v727 = vunpack.c.h.b16 %v636
      %v728 = vunpack.c.l.b16 %v637
      %v729 = vunpack.c.h.b16 %v637
      %v730 = vunpack.c.l.b16 %v638
      %v731 = vunpack.c.h.b16 %v638
      %v732 = vunpack.c.l.b16 %v639
      %v733 = vunpack.c.h.b16 %v639
      %v734 = vunpack.c.l.b16 %v640
      %v735 = vunpack.c.h.b16 %v640
      %v736 = vunpack.c.l.b16 %v641
      %v737 = vunpack.c.h.b16 %v641
      %v738 = vunpack.c.l.b16 %v642
      %v739 = vunpack.c.h.b16 %v642
      %v740 = vunpack.c.l.b16 %v643
      %v741 = vunpack.c.h.b16 %v643
      %v742 = vunpack.c.l.b16 %v644
      %v743 = vunpack.c.h.b16 %v644
      %v744 = vunpack.c.l.b16 %v645
      %v745 = vunpack.c.h.b16 %v645
      %v746 = vunpack.c.l.b16 %v646
      %v747 = vunpack.c.h.b16 %v646
      %v748 = vunpack.c.l.b16 %v647
      %v749 = vunpack.c.h.b16 %v647
      %v750 = vunpack.c.l.b16 %v648
      %v751 = vunpack.c.h.b16 %v648
      %v752 = vunpack.c.l.b16 %v649
      %v753 = vunpack.c.h.b16 %v649
      %v754 = vunpack.c.l.b16 %v650
      %v755 = vunpack.c.h.b16 %v650
      %v756 = vunpack.c.l.b16 %v651
      %v757 = vunpack.c.h.b16 %v651
      %v758 = vunpack.c.l.b16 %v652
      %v759 = vunpack.c.h.b16 %v652
      %v760 = vunpack.c.l.b16 %v653
      %v761 = vunpack.c.h.b16 %v653
      %v762 = vunpack.c.l.b16 %v654
      %v763 = vunpack.c.h.b16 %v654
      %v764 = vunpack.c.l.b16 %v655
      %v765 = vunpack.c.h.b16 %v655
      %v766 = vunpack.c.l.b16 %v656
      %v767 = vunpack.c.h.b16 %v656
      %v768 = vunpack.c.l.b16 %v657
      %v769 = vunpack.c.h.b16 %v657
      %v770 = vpack.c.b16 %v708, %v706
      %v771 = vpack.c.b16 %v709, %v707
      %v772 = vpack.c.b16 %v712, %v710
      %v773 = vpack.c.b16 %v713, %v711
      %v774 = vpack.c.b16 %v716, %v714
      %v775 = vpack.c.b16 %v717, %v715
      %v776 = vpack.c.b16 %v720, %v718
      %v777 = vpack.c.b16 %v721, %v719
      %v778 = vpack.c.b16 %v724, %v722
      %v779 = vpack.c.b16 %v725, %v723
      %v780 = vpack.c.b16 %v728, %v726
      %v781 = vpack.c.b16 %v729, %v727
      %v782 = vpack.c.b16 %v732, %v730
      %v783 = vpack.c.b16 %v733, %v731
      %v784 = vpack.c.b16 %v736, %v734
      %v785 = vpack.c.b16 %v737, %v735
      %v786 = vpack.c.b16 %v740, %v738
      %v787 = vpack.c.b16 %v741, %v739
      %v788 = vpack.c.b16 %v744, %v742
      %v789 = vpack.c.b16 %v745, %v743
      %v790 = vpack.c.b16 %v748, %v746
      %v791 = vpack.c.b16 %v749, %v747
      %v792 = vpack.c.b16 %v752, %v750
      %v793 = vpack.c.b16 %v753, %v751
      %v794 = vpack.c.b16 %v756, %v754
      %v795 = vpack.c.b16 %v757, %v755
      %v796 = vpack.c.b16 %v760, %v758
      %v797 = vpack.c.b16 %v761, %v759
      %v798 = vpack.c.b16 %v764, %v762
      %v799 = vpack.c.b16 %v765, %v763
      %v800 = vpack.c.b16 %v768, %v766
      %v801 = vpack.c.b16 %v769, %v767
      %834 = vmatprep.subr.bf16.mxu0 %v785
      %835 = vmatpush1.bf16.msra.mxu0 %v784
      %836 = vmatprep.subr.bf16.mxu0 %v783
      %837 = vmatpush1.bf16.msra.mxu0 %v782
      %838 = vmatprep.subr.bf16.mxu0 %v781
      %839 = vmatpush1.bf16.msra.mxu0 %v780
      %840 = vmatprep.subr.bf16.mxu0 %v779
      %841 = vmatpush1.bf16.msra.mxu0 %v778
      %842 = vmatprep.subr.bf16.mxu0 %v777
      %843 = vmatpush1.bf16.msra.mxu0 %v776
      %844 = vmatprep.subr.bf16.mxu0 %v775
      %845 = vmatpush1.bf16.msra.mxu0 %v774
      %846 = vmatprep.subr.bf16.mxu0 %v773
      %847 = vmatpush1.bf16.msra.mxu0 %v772
      %848 = vmatprep.subr.bf16.mxu0 %v771
      %849 = vmatpush1.bf16.msra.mxu0 %v770
      %850 = vmatprep.subr.bf16.mxu0 %v801
      %851 = vmatpush2.bf16.msra.mxu0 %v800
      %852 = vmatprep.subr.bf16.mxu0 %v799
      %853 = vmatpush2.bf16.msra.mxu0 %v798
      %854 = vmatprep.subr.bf16.mxu0 %v797
      %855 = vmatpush2.bf16.msra.mxu0 %v796
      %856 = vmatprep.subr.bf16.mxu0 %v795
      %857 = vmatpush2.bf16.msra.mxu0 %v794
      %858 = vmatprep.subr.bf16.mxu0 %v793
      %859 = vmatpush2.bf16.msra.mxu0 %v792
      %860 = vmatprep.subr.bf16.mxu0 %v791
      %861 = vmatpush2.bf16.msra.mxu0 %v790
      %862 = vmatprep.subr.bf16.mxu0 %v789
      %863 = vmatpush2.bf16.msra.mxu0 %v788
      %864 = vmatprep.subr.bf16.mxu0 %v787
      %865 = vmatpush2.bf16.msra.mxu0 %v786
      %866 = vmatprep.mubr.bf16.mxu0 %v671
      %867 = vmatmul.mubr.bf16.gmra.mxu0 %v664
      %v868 = vpop.f32.mrf.mxu0
      %v869 = vadd.f32 0.0, %v868
      %v870 = vpop.f32.mrf.mxu0
      %v871 = vadd.f32 0.0, %v870
      %v872 = vpop.f32.mrf.mxu0
      %v873 = vpop.f32.mrf.mxu0
      %874 = vdwg.mxu0
      %v875 = vadd.f32 %v623, %v869
      %v876 = vadd.f32 %v624, %v871
      %s877 = scalar_lea.vmem %s1, 512
      %v878 = vld [vmem:[%s877] sm:$0xff]
      %v879 = vld [vmem:[%s877 + $0x8] sm:$0xff]
      %v880 = vld [vmem:[%s877 + $0x10] sm:$0xff]
      %v881 = vld [vmem:[%s877 + $0x18] sm:$0xff]
      %v882 = vld [vmem:[%s877 + $0x20] sm:$0xff]
      %v883 = vld [vmem:[%s877 + $0x28] sm:$0xff]
      %v884 = vld [vmem:[%s877 + $0x30] sm:$0xff]
      %v885 = vld [vmem:[%s877 + $0x38] sm:$0xff]
      %v886 = vld [vmem:[%s877 + $0x40] sm:$0xff]
      %v887 = vld [vmem:[%s877 + $0x48] sm:$0xff]
      %v888 = vld [vmem:[%s877 + $0x50] sm:$0xff]
      %v889 = vld [vmem:[%s877 + $0x58] sm:$0xff]
      %v890 = vld [vmem:[%s877 + $0x60] sm:$0xff]
      %v891 = vld [vmem:[%s877 + $0x68] sm:$0xff]
      %v892 = vld [vmem:[%s877 + $0x70] sm:$0xff]
      %v893 = vld [vmem:[%s877 + $0x78] sm:$0xff]
      %v894 = vld [vmem:[%s877 + $0x80] sm:$0xff]
      %v895 = vld [vmem:[%s877 + $0x88] sm:$0xff]
      %v896 = vld [vmem:[%s877 + $0x90] sm:$0xff]
      %v897 = vld [vmem:[%s877 + $0x98] sm:$0xff]
      %v898 = vld [vmem:[%s877 + $0xa0] sm:$0xff]
      %v899 = vld [vmem:[%s877 + $0xa8] sm:$0xff]
      %v900 = vld [vmem:[%s877 + $0xb0] sm:$0xff]
      %v901 = vld [vmem:[%s877 + $0xb8] sm:$0xff]
      %v902 = vld [vmem:[%s877 + $0xc0] sm:$0xff]
      %v903 = vld [vmem:[%s877 + $0xc8] sm:$0xff]
      %v904 = vld [vmem:[%s877 + $0xd0] sm:$0xff]
      %v905 = vld [vmem:[%s877 + $0xd8] sm:$0xff]
      %v906 = vld [vmem:[%s877 + $0xe0] sm:$0xff]
      %v907 = vld [vmem:[%s877 + $0xe8] sm:$0xff]
      %v908 = vld [vmem:[%s877 + $0xf0] sm:$0xff]
      %v909 = vld [vmem:[%s877 + $0xf8] sm:$0xff]
      %v912 = vrot.slane %v377, 1
      %v913 = vrot.slane %v378, 1
      %v948 = vunpack.c.l.b16 %v878
      %v949 = vunpack.c.h.b16 %v878
      %v950 = vunpack.c.l.b16 %v879
      %v951 = vunpack.c.h.b16 %v879
      %v952 = vunpack.c.l.b16 %v880
      %v953 = vunpack.c.h.b16 %v880
      %v954 = vunpack.c.l.b16 %v881
      %v955 = vunpack.c.h.b16 %v881
      %v956 = vunpack.c.l.b16 %v882
      %v957 = vunpack.c.h.b16 %v882
      %v958 = vunpack.c.l.b16 %v883
      %v959 = vunpack.c.h.b16 %v883
      %v960 = vunpack.c.l.b16 %v884
      %v961 = vunpack.c.h.b16 %v884
      %v962 = vunpack.c.l.b16 %v885
      %v963 = vunpack.c.h.b16 %v885
      %v964 = vunpack.c.l.b16 %v886
      %v965 = vunpack.c.h.b16 %v886
      %v966 = vunpack.c.l.b16 %v887
      %v967 = vunpack.c.h.b16 %v887
      %v968 = vunpack.c.l.b16 %v888
      %v969 = vunpack.c.h.b16 %v888
      %v970 = vunpack.c.l.b16 %v889
      %v971 = vunpack.c.h.b16 %v889
      %v972 = vunpack.c.l.b16 %v890
      %v973 = vunpack.c.h.b16 %v890
      %v974 = vunpack.c.l.b16 %v891
      %v975 = vunpack.c.h.b16 %v891
      %v976 = vunpack.c.l.b16 %v892
      %v977 = vunpack.c.h.b16 %v892
      %v978 = vunpack.c.l.b16 %v893
      %v979 = vunpack.c.h.b16 %v893
      %v980 = vunpack.c.l.b16 %v894
      %v981 = vunpack.c.h.b16 %v894
      %v982 = vunpack.c.l.b16 %v895
      %v983 = vunpack.c.h.b16 %v895
      %v984 = vunpack.c.l.b16 %v896
      %v985 = vunpack.c.h.b16 %v896
      %v986 = vunpack.c.l.b16 %v897
      %v987 = vunpack.c.h.b16 %v897
      %v988 = vunpack.c.l.b16 %v898
      %v989 = vunpack.c.h.b16 %v898
      %v990 = vunpack.c.l.b16 %v899
      %v991 = vunpack.c.h.b16 %v899
      %v992 = vunpack.c.l.b16 %v900
      %v993 = vunpack.c.h.b16 %v900
      %v994 = vunpack.c.l.b16 %v901
      %v995 = vunpack.c.h.b16 %v901
      %v996 = vunpack.c.l.b16 %v902
      %v997 = vunpack.c.h.b16 %v902
      %v998 = vunpack.c.l.b16 %v903
      %v999 = vunpack.c.h.b16 %v903
      %v1000 = vunpack.c.l.b16 %v904
      %v1001 = vunpack.c.h.b16 %v904
      %v1002 = vunpack.c.l.b16 %v905
      %v1003 = vunpack.c.h.b16 %v905
      %v1004 = vunpack.c.l.b16 %v906
      %v1005 = vunpack.c.h.b16 %v906
      %v1006 = vunpack.c.l.b16 %v907
      %v1007 = vunpack.c.h.b16 %v907
      %v1008 = vunpack.c.l.b16 %v908
      %v1009 = vunpack.c.h.b16 %v908
      %v1010 = vunpack.c.l.b16 %v909
      %v1011 = vunpack.c.h.b16 %v909
      %v1012 = vpack.c.b16 %v950, %v948
      %v1013 = vpack.c.b16 %v951, %v949
      %v1014 = vpack.c.b16 %v954, %v952
      %v1015 = vpack.c.b16 %v955, %v953
      %v1016 = vpack.c.b16 %v958, %v956
      %v1017 = vpack.c.b16 %v959, %v957
      %v1018 = vpack.c.b16 %v962, %v960
      %v1019 = vpack.c.b16 %v963, %v961
      %v1020 = vpack.c.b16 %v966, %v964
      %v1021 = vpack.c.b16 %v967, %v965
      %v1022 = vpack.c.b16 %v970, %v968
      %v1023 = vpack.c.b16 %v971, %v969
      %v1024 = vpack.c.b16 %v974, %v972
      %v1025 = vpack.c.b16 %v975, %v973
      %v1026 = vpack.c.b16 %v978, %v976
      %v1027 = vpack.c.b16 %v979, %v977
      %v1028 = vpack.c.b16 %v982, %v980
      %v1029 = vpack.c.b16 %v983, %v981
      %v1030 = vpack.c.b16 %v986, %v984
      %v1031 = vpack.c.b16 %v987, %v985
      %v1032 = vpack.c.b16 %v990, %v988
      %v1033 = vpack.c.b16 %v991, %v989
      %v1034 = vpack.c.b16 %v994, %v992
      %v1035 = vpack.c.b16 %v995, %v993
      %v1036 = vpack.c.b16 %v998, %v996
      %v1037 = vpack.c.b16 %v999, %v997
      %v1038 = vpack.c.b16 %v1002, %v1000
      %v1039 = vpack.c.b16 %v1003, %v1001
      %v1040 = vpack.c.b16 %v1006, %v1004
      %v1041 = vpack.c.b16 %v1007, %v1005
      %v1042 = vpack.c.b16 %v1010, %v1008
      %v1043 = vpack.c.b16 %v1011, %v1009
      %1076 = vmatprep.subr.bf16.mxu0 %v1027
      %1077 = vmatpush1.bf16.msra.mxu0 %v1026
      %1078 = vmatprep.subr.bf16.mxu0 %v1025
      %1079 = vmatpush1.bf16.msra.mxu0 %v1024
      %1080 = vmatprep.subr.bf16.mxu0 %v1023
      %1081 = vmatpush1.bf16.msra.mxu0 %v1022
      %1082 = vmatprep.subr.bf16.mxu0 %v1021
      %1083 = vmatpush1.bf16.msra.mxu0 %v1020
      %1084 = vmatprep.subr.bf16.mxu0 %v1019
      %1085 = vmatpush1.bf16.msra.mxu0 %v1018
      %1086 = vmatprep.subr.bf16.mxu0 %v1017
      %1087 = vmatpush1.bf16.msra.mxu0 %v1016
      %1088 = vmatprep.subr.bf16.mxu0 %v1015
      %1089 = vmatpush1.bf16.msra.mxu0 %v1014
      %1090 = vmatprep.subr.bf16.mxu0 %v1013
      %1091 = vmatpush1.bf16.msra.mxu0 %v1012
      %1092 = vmatprep.subr.bf16.mxu0 %v1043
      %1093 = vmatpush2.bf16.msra.mxu0 %v1042
      %1094 = vmatprep.subr.bf16.mxu0 %v1041
      %1095 = vmatpush2.bf16.msra.mxu0 %v1040
      %1096 = vmatprep.subr.bf16.mxu0 %v1039
      %1097 = vmatpush2.bf16.msra.mxu0 %v1038
      %1098 = vmatprep.subr.bf16.mxu0 %v1037
      %1099 = vmatpush2.bf16.msra.mxu0 %v1036
      %1100 = vmatprep.subr.bf16.mxu0 %v1035
      %1101 = vmatpush2.bf16.msra.mxu0 %v1034
      %1102 = vmatprep.subr.bf16.mxu0 %v1033
      %1103 = vmatpush2.bf16.msra.mxu0 %v1032
      %1104 = vmatprep.subr.bf16.mxu0 %v1031
      %1105 = vmatpush2.bf16.msra.mxu0 %v1030
      %1106 = vmatprep.subr.bf16.mxu0 %v1029
      %1107 = vmatpush2.bf16.msra.mxu0 %v1028
      %1108 = vmatprep.mubr.bf16.mxu0 %v913
      %1109 = vmatmul.mubr.bf16.gmra.mxu0 %v912
      %v1110 = vpop.f32.mrf.mxu0
      %v1111 = vadd.f32 0.0, %v1110
      %v1112 = vpop.f32.mrf.mxu0
      %v1113 = vadd.f32 0.0, %v1112
      %v1114 = vpop.f32.mrf.mxu0
      %v1115 = vpop.f32.mrf.mxu0
      %1116 = vdwg.mxu0
      %v1117 = vadd.f32 %v875, %v1111
      %v1118 = vadd.f32 %v876, %v1113
      %v1119 = vrot.slane %v1117, 4
      %v1120 = vadd.f32 %v1117, %v1119
      %v1121 = vrot.slane %v1120, 2
      %v1122 = vadd.f32 %v1120, %v1121
      %v1123 = vrot.slane %v1122, 1
      %v1124 = vadd.f32 %v1122, %v1123
      %v1125 = vrot.slane %v1118, 4
      %v1126 = vadd.f32 %v1118, %v1125
      %v1127 = vrot.slane %v1126, 2
      %v1128 = vadd.f32 %v1126, %v1127
      %v1129 = vrot.slane %v1128, 1
      %v1130 = vadd.f32 %v1128, %v1129
      %v1131 = vmul.f32 %v1117, %v1117
      %v1132 = vmul.f32 %v1118, %v1118
      %v1133 = vrot.slane %v1131, 4
      %v1134 = vadd.f32 %v1131, %v1133
      %v1135 = vrot.slane %v1134, 2
      %v1136 = vadd.f32 %v1134, %v1135
      %v1137 = vrot.slane %v1136, 1
      %v1138 = vadd.f32 %v1136, %v1137
      %v1139 = vrot.slane %v1132, 4
      %v1140 = vadd.f32 %v1132, %v1139
      %v1141 = vrot.slane %v1140, 2
      %v1142 = vadd.f32 %v1140, %v1141
      %v1143 = vrot.slane %v1142, 1
      %v1144 = vadd.f32 %v1142, %v1143
      %vm1145 = vcmask 1040384
      %v1146 = vsel %vm1145, %v1124, %v1138
      %v1147 = vsel %vm1145, %v1130, %v1144
      %v1150 = vcombine.low %v1146, %v1147
      %v1152 = vunpack.c.l.s4 1983009808
      %v1153 = vunpack.c.0.s8 %v1152
      %v1154 = vlaneseq
      %v1155 = vshrl.u32 %v1154, 7
      %v1156 = vsub.s32 %v1153, %v1155
      %v1157 = vrot.slane %v1150, %v1156
      %1159 = vst [vmem:[%s310] sm:$0xf] %v1157
      %v1160 = vpack.c.bf16 %v1117, %v1117
      %v1161 = vpack.c.bf16 %v1118, %v1118
      %v1164 = vunpack.c.l.b16 %v1160
      %v1165 = vunpack.c.l.b16 %v1161
      %v1166 = vpack.c.b16 %v1165, %v1164
      %1168 = vst [vmem:[%s301] sm:$0xff] %v1166
      %p1169 = scmp.lt.s32.totalorder %s22, 1
      %s1170 = scalar_select %p1169, %s22, 1
      %p1171 = scmp.lt.s32.totalorder %s23, 0
      %s1172 = scalar_select %p1171, %s23, 0
      %s1173 = smul.addr %s1172, 2
      %s1174 = smul.addr %s1170, 2
      %s1175 = sadd.s32 %s1173, %s1174
      %s1176 = smul.addr %s1175, 4
      %s1177 = scalar_lea.vmem %s5, %s1176
      %p1178 = scmp.lt.s32.totalorder %s22, 1
      %s1179 = scalar_select %p1178, %s22, 1
      %p1180 = scmp.lt.s32.totalorder %s23, 0
      %s1181 = scalar_select %p1180, %s23, 0
      %s1182 = smul.addr %s1181, 2
      %s1183 = smul.addr %s1179, 2
      %s1184 = sadd.s32 %s1182, %s1183
      %s1185 = smul.addr %s1184, 2
      %s1186 = scalar_lea.vmem %s6, %s1185
      // Predicated region
      $region41: #{adaresnet_forward.14} parent=39 // pred_check
        %p1187 = pneg %p162
      $region42: #{adaresnet_forward.14} parent=39 // pred_check_branch
        %1189 = sbr.rel (%p1187) target = $region44
      $region43: #{adaresnet_forward.14} parent=39 // pred_region
        _
      $region44: #{adaresnet_forward.14} parent=39 // pred_fallthru
        _
      // Predicated region
      $region45: #{adaresnet_forward.14} parent=39 // pred_check
        %p1190 = pneg %p190
      $region46: #{adaresnet_forward.14} parent=39 // pred_check_branch
        %1192 = sbr.rel (%p1190) target = $region48
      $region47: #{adaresnet_forward.14} parent=39 // pred_region
        _
      $region48: #{adaresnet_forward.14} parent=39 // pred_fallthru
        _
    $region40: #{adaresnet_forward.14} parent=5 // pred_fallthru
      _
    %p1193 = scmp.le.s32.totalorder 2, %s13
    // Predicated region
    $region49: #{adaresnet_forward.14} parent=5 // pred_check
      %p1194 = pneg %p1193
    $region50: #{adaresnet_forward.14} parent=5 // pred_check_branch
      %1196 = sbr.rel (%p1194) target = $region52
    $region51: #{adaresnet_forward.14} parent=5 // pred_region
      %s1197 = ssub.s32 %s13, 2
      // Predicated region
      $region53: #{adaresnet_forward.14} parent=51 // pred_check
        %p1198 = pneg %p168
      $region54: #{adaresnet_forward.14} parent=51 // pred_check_branch
        %1200 = sbr.rel (%p1198) target = $region56
      $region55: #{adaresnet_forward.14} parent=51 // pred_region
        %p1201 = scmp.lt.s32.totalorder %s24, 1
        %s1202 = scalar_select %p1201, %s24, 1
        %p1203 = scmp.lt.s32.totalorder %s25, 0
        %s1204 = scalar_select %p1203, %s25, 0
        %s1205 = smul.addr %s1204, 2
        %s1206 = smul.addr %s1202, 2
        %s1207 = sadd.s32 %s1205, %s1206
        %s1208 = smul.addr %s1207, 4
        %s1209 = scalar_lea.vmem %s5, %s1208
      $region56: #{adaresnet_forward.14} parent=51 // pred_fallthru
        _
      // Predicated region
      $region57: #{adaresnet_forward.14} parent=51 // pred_check
        %p1210 = pneg %p196
      $region58: #{adaresnet_forward.14} parent=51 // pred_check_branch
        %1212 = sbr.rel (%p1210) target = $region60
      $region59: #{adaresnet_forward.14} parent=51 // pred_region
        %p1213 = scmp.lt.s32.totalorder %s24, 1
        %s1214 = scalar_select %p1213, %s24, 1
        %p1215 = scmp.lt.s32.totalorder %s25, 0
        %s1216 = scalar_select %p1215, %s25, 0
        %s1217 = smul.addr %s1216, 2
        %s1218 = smul.addr %s1214, 2
        %s1219 = sadd.s32 %s1217, %s1218
        %s1220 = smul.addr %s1219, 2
        %s1221 = scalar_lea.vmem %s6, %s1220
      $region60: #{adaresnet_forward.14} parent=51 // pred_fallthru
        _
    $region52: #{adaresnet_forward.14} parent=5 // pred_fallthru
      _
  $region6: #{adaresnet_forward.14} parent=0 // loop_footer
    %s17 = sadd.s32 1, %s13
  $region7: #{adaresnet_forward.14} parent=0 // loop_footer_branch
    %12 = sbr.rel target = $region3
  $region8: #{adaresnet_forward.14} parent=0 // loop_exit
    _

// kernel: tile.178
$region0: #{tile.178}
  #allocation0 [shape = 's32[1]{0}', space=sflag, size = 0x4, scoped, tag = 'scoped memory for tile.178']
  %s0 = inlined_call_operand.vmem [shape: f32[32], index: 0, kind: input, shape index: {}]
  %s1 = inlined_call_operand.vmem [shape: f32[16,32], index: 1, kind: output, shape index: {}]
  // Predicated region
  $region2: #{tile.178} parent=0 // pred_check
    _
  $region3: #{tile.178} parent=0 // pred_check_branch
    %3 = sbr.rel (0) target = $region5
  $region4: #{tile.178} parent=0 // pred_region
    _
  $region5: #{tile.178} parent=0 // pred_fallthru
    _
  %v4 = vld [vmem:[%s0] ss:$0 sm:$0xff]
  %5 = vst [vmem:[%s1] sm:$0xff] %v4
  %s6 = scalar_lea.vmem %s1, 8
  %7 = vst [vmem:[%s6] sm:$0xff] %v4

// kernel: tile.179
$region0: #{tile.179}
  %s0 = inlined_call_operand.vmem [shape: f32[16,32], index: 0, kind: input, shape index: {}]
  %s1 = inlined_call_operand.vmem [shape: f32[1,512], index: 1, kind: output, shape index: {}]
  $region1: #{tile.179} parent=0
    #allocation0 [shape = 'u8[16384]{0}', space=vmem, size = 0x4000, scoped, tag = 'scoped mem for output reshape']
    %v2 = vld [vmem:[%s0] ss:$4 sm:$0xf]
    %vm3 = vcmask 261120
    %4 = vst.msk [vmem:[#allocation0] ss:$8 sm:$0xf] %vm3, %v2
    %s5 = scalar_lea.vmem %s0, 3
    %v6 = vld [vmem:[%s5] ss:$4 sm:$0xf]
    %7 = vrot.lane.b32.xlu0 %v6, 96
    %v8 = vpop.permute.xlu0 %7
    %vm9 = vcmask 1048320
    %10 = vst.msk [vmem:[#allocation0] ss:$8 sm:$0xf] %vm9, %v8
    %s11 = scalar_lea.vmem %s0, 2
    %v12 = vld [vmem:[%s11] ss:$4 sm:$0xf]
    %13 = vrot.lane.b32.xlu0 %v12, 64
    %v14 = vpop.permute.xlu0 %13
    %vm15 = vcmask 785920
    %16 = vst.msk [vmem:[#allocation0] ss:$8 sm:$0xf] %vm15, %v14
    %s17 = scalar_lea.vmem %s0, 1
    %v18 = vld [vmem:[%s17] ss:$4 sm:$0xf]
    %19 = vrot.lane.b32.xlu0 %v18, 32
    %v20 = vpop.permute.xlu0 %19
    %vm21 = vcmask 523520
    %22 = vst.msk [vmem:[#allocation0] ss:$8 sm:$0xf] %vm21, %v20
    %s24 = sshll.u32 1, 1
    %s25 = ssub.s32 %s24, 1
    %v27 = vld [vmem:[#allocation0] sm:%s25]
    %s28 = sshll.u32 1, 1
    %s29 = ssub.s32 %s28, 1
    %30 = vst [vmem:[%s1] sm:%s29] %v27
    %s31 = scalar_lea.vmem [#allocation0], 8
    %v32 = vld [vmem:[%s31] sm:%s25]
    %s33 = sshll.u32 1, 1
    %s34 = ssub.s32 %s33, 1
    %s35 = scalar_lea.vmem %s1, 1
    %36 = vst [vmem:[%s35] sm:%s34] %v32
    %s37 = scalar_lea.vmem [#allocation0], 16
    %v38 = vld [vmem:[%s37] sm:%s25]
    %s39 = sshll.u32 1, 1
    %s40 = ssub.s32 %s39, 1
    %s41 = smul.addr 1, 2
    %s42 = scalar_lea.vmem %s1, %s41
    %43 = vst [vmem:[%s42] sm:%s40] %v38
    %s44 = scalar_lea.vmem [#allocation0], 24
    %v45 = vld [vmem:[%s44] sm:%s25]
    %s46 = sshll.u32 1, 1
    %s47 = ssub.s32 %s46, 1
    %s48 = smul.addr 1, 3
    %s49 = scalar_lea.vmem %s1, %s48
    %50 = vst [vmem:[%s49] sm:%s47] %v45

// kernel: adaresnet_forward.21
$region0: #{adaresnet_forward.21}
  #allocation0 [shape = 'u32[]', space=smem, size = 0x4, offset = 0x4, fixed_abs, tag = 'smem constant byte address 0x4 - core index']
  #allocation1 [shape = 'u32[144,128]{1,0:T(1,128)}', space=vmem, size = 0x12000, scoped, tag = 'internal scratch']
  %s0 = inlined_call_operand.vmem [shape: bf16[2,1,10,256], index: 0, kind: input, shape index: {}]
  %s1 = inlined_call_operand.vmem [shape: bf16[3,256,512], index: 1, kind: input, shape index: {}]
  %s2 = inlined_call_operand.vmem [shape: f32[1,512], index: 2, kind: input, shape index: {}]
  %s3 = inlined_call_operand.vmem [shape: bf16[2,16,512], index: 3, kind: output, shape index: {}]
  %s4 = sld [smem:[#allocation0]]
  $region45: #{adaresnet_forward.21} parent=0
    _
  %s6 = ssub.s32 1, %s4
  %s7 = scalar_select 0, %s6, %s4
  loop: start=0, step=1, limit=4
  $region2: #{adaresnet_forward.21} parent=0 // loop_pre_header
    _
  $region3: #{adaresnet_forward.21} parent=0 // loop_header
    %s9 = sphi 0, %s13
    %p10 = scmp.ge.s32.totalorder %s9, 4
    %s16 = sphi 0, %s28
    %s17 = sphi 0, %s24
    %s18 = sphi 0, %s16
    %s19 = sphi 0, %s17
    %s20 = sphi 0, %s18
    %s21 = sphi 0, %s19
    %s33 = sphi 0, %s35
    %s36 = sphi 0, %s33
    %s37 = sphi 0, %s36
    %s53 = sphi 0, %s37
    %s57 = sphi 0, %s57
    %s59 = sphi 0, %s57
    %s60 = sphi 0, %s59
    %s74 = sphi 0, %s60
    %s78 = sphi 0, %s78
    %s80 = sphi 0, %s78
    %s81 = sphi 0, %s80
    %s95 = sphi 0, %s81
    %s103 = sphi 0, %s105
    %s106 = sphi 0, %s103
    %s107 = sphi 0, %s106
    %s123 = sphi 0, %s107
  $region4: #{adaresnet_forward.21} parent=0 // loop_header_branch
    %12 = sbr.rel (%p10) target = $region8
  $region5: #{adaresnet_forward.21} parent=0 // loop_body
    %s14 = ssub.s32 %s9, 1
    %s15 = ssub.s32 %s9, 2
    %s22 = sadd.s32 1, %s17
    %p23 = scmp.ge.s32.totalorder %s22, 1
    %s24 = scalar_select %p23, 0, %s22
    %s25 = sadd.s32 1, %s16
    %s26 = scalar_select %p23, %s25, %s16
    %p27 = scmp.ge.s32.totalorder %s26, 2
    %s28 = scalar_select %p27, 0, %s26
    %s29 = ssub.s32 %s16, %s28
    %s30 = ssub.s32 %s17, %s24
    %s31 = sor.u32 %s29, %s30
    %p32 = scmp.eq.s32.totalorder %s31, 0
    %s34 = sadd.s32 %s33, 1
    %s35 = scalar_select %p32, %s33, %s34
    %p38 = pneg %p32
    %p39 = scmp.eq.s32.totalorder %s9, 1
    %p40 = por %p38, %p39
    %p41 = scmp.ne.s32.totalorder %s33, %s36
    %p42 = scmp.eq.s32.totalorder %s9, 0
    %p43 = por %p41, %p42
    %p44 = scmp.ne.s32.totalorder %s33, %s36
    %p45 = scmp.eq.s32.totalorder %s14, 1
    %p46 = por %p44, %p45
    %p47 = scmp.ne.s32.totalorder %s36, %s37
    %p48 = scmp.eq.s32.totalorder %s14, 0
    %p49 = por %p47, %p48
    %p50 = scmp.ne.s32.totalorder %s36, %s37
    %p51 = scmp.eq.s32.totalorder %s15, 1
    %p52 = por %p50, %p51
    %p54 = scmp.ne.s32.totalorder %s37, %s53
    %p55 = scmp.eq.s32.totalorder %s15, 0
    %p56 = por %p54, %p55
    %s58 = sadd.s32 %s57, 1
    %p61 = scmp.eq.s32.totalorder %s9, 1
    %p62 = scmp.ne.s32.totalorder %s57, %s59
    %p63 = scmp.eq.s32.totalorder %s9, 0
    %p64 = por %p62, %p63
    %p65 = scmp.ne.s32.totalorder %s57, %s59
    %p66 = scmp.eq.s32.totalorder %s14, 1
    %p67 = por %p65, %p66
    %p68 = scmp.ne.s32.totalorder %s59, %s60
    %p69 = scmp.eq.s32.totalorder %s14, 0
    %p70 = por %p68, %p69
    %p71 = scmp.ne.s32.totalorder %s59, %s60
    %p72 = scmp.eq.s32.totalorder %s15, 1
    %p73 = por %p71, %p72
    %p75 = scmp.ne.s32.totalorder %s60, %s74
    %p76 = scmp.eq.s32.totalorder %s15, 0
    %p77 = por %p75, %p76
    %s79 = sadd.s32 %s78, 1
    %p82 = scmp.eq.s32.totalorder %s9, 1
    %p83 = scmp.ne.s32.totalorder %s78, %s80
    %p84 = scmp.eq.s32.totalorder %s9, 0
    %p85 = por %p83, %p84
    %p86 = scmp.ne.s32.totalorder %s78, %s80
    %p87 = scmp.eq.s32.totalorder %s14, 1
    %p88 = por %p86, %p87
    %p89 = scmp.ne.s32.totalorder %s80, %s81
    %p90 = scmp.eq.s32.totalorder %s14, 0
    %p91 = por %p89, %p90
    %p92 = scmp.ne.s32.totalorder %s80, %s81
    %p93 = scmp.eq.s32.totalorder %s15, 1
    %p94 = por %p92, %p93
    %p96 = scmp.ne.s32.totalorder %s81, %s95
    %p97 = scmp.eq.s32.totalorder %s15, 0
    %p98 = por %p96, %p97
    %s99 = ssub.s32 %s16, %s28
    %s100 = ssub.s32 %s17, %s24
    %s101 = sor.u32 %s99, %s100
    %p102 = scmp.eq.s32.totalorder %s101, 0
    %s104 = sadd.s32 %s103, 1
    %s105 = scalar_select %p102, %s103, %s104
    %p108 = pneg %p102
    %p109 = scmp.eq.s32.totalorder %s9, 1
    %p110 = por %p108, %p109
    %p111 = scmp.ne.s32.totalorder %s103, %s106
    %p112 = scmp.eq.s32.totalorder %s9, 0
    %p113 = por %p111, %p112
    %p114 = scmp.ne.s32.totalorder %s103, %s106
    %p115 = scmp.eq.s32.totalorder %s14, 1
    %p116 = por %p114, %p115
    %p117 = scmp.ne.s32.totalorder %s106, %s107
    %p118 = scmp.eq.s32.totalorder %s14, 0
    %p119 = por %p117, %p118
    %p120 = scmp.ne.s32.totalorder %s106, %s107
    %p121 = scmp.eq.s32.totalorder %s15, 1
    %p122 = por %p120, %p121
    %p124 = scmp.ne.s32.totalorder %s107, %s123
    %p125 = scmp.eq.s32.totalorder %s15, 0
    %p126 = por %p124, %p125
    %p127 = scmp.le.s32.totalorder 1, %s9
    %p128 = scmp.lt.s32.totalorder %s9, 3
    %p129 = pnand %p127, %p128
    %p130 = pneg %p129
    // Predicated region
    $region9: #{adaresnet_forward.21} parent=5 // pred_check
      _
    $region10: #{adaresnet_forward.21} parent=5 // pred_check_branch
      %132 = sbr.rel (%p129) target = $region12
    $region11: #{adaresnet_forward.21} parent=5 // pred_region
      %s133 = ssub.s32 %s9, 1
      // Predicated region
      $region13: #{adaresnet_forward.21} parent=11 // pred_check
        %p134 = pneg %p70
      $region14: #{adaresnet_forward.21} parent=11 // pred_check_branch
        %136 = sbr.rel (%p134) target = $region16
      $region15: #{adaresnet_forward.21} parent=11 // pred_region
        _
      $region16: #{adaresnet_forward.21} parent=11 // pred_fallthru
        _
      // Predicated region
      $region17: #{adaresnet_forward.21} parent=11 // pred_check
        %p137 = pneg %p91
      $region18: #{adaresnet_forward.21} parent=11 // pred_check_branch
        %139 = sbr.rel (%p137) target = $region20
      $region19: #{adaresnet_forward.21} parent=11 // pred_region
        _
      $region20: #{adaresnet_forward.21} parent=11 // pred_fallthru
        _
    $region12: #{adaresnet_forward.21} parent=5 // pred_fallthru
      _
    %p140 = scmp.lt.s32.totalorder %s9, 2
    // Predicated region
    $region21: #{adaresnet_forward.21} parent=5 // pred_check
      %p141 = pneg %p140
    $region22: #{adaresnet_forward.21} parent=5 // pred_check_branch
      %143 = sbr.rel (%p141) target = $region24
    $region23: #{adaresnet_forward.21} parent=5 // pred_region
      // Predicated region
      $region25: #{adaresnet_forward.21} parent=23 // pred_check
        %p144 = pneg %p43
      $region26: #{adaresnet_forward.21} parent=23 // pred_check_branch
        %146 = sbr.rel (%p144) target = $region28
      $region27: #{adaresnet_forward.21} parent=23 // pred_region
        %p147 = scmp.lt.s32.totalorder %s16, 1
        %s148 = scalar_select %p147, %s16, 1
        %p149 = scmp.lt.s32.totalorder %s17, 0
        %s150 = scalar_select %p149, %s17, 0
        %s151 = smul.addr %s150, 4
        %s152 = smul.addr %s148, 4
        %s153 = sadd.s32 %s151, %s152
        %s154 = smul.addr %s153, 4
        %s155 = scalar_lea.vmem %s0, %s154
      $region28: #{adaresnet_forward.21} parent=23 // pred_fallthru
        _
    $region24: #{adaresnet_forward.21} parent=5 // pred_fallthru
      _
    %p156 = scmp.le.s32.totalorder 1, %s9
    %p157 = scmp.lt.s32.totalorder %s9, 3
    %p158 = pnand %p156, %p157
    %p159 = pneg %p158
    // Predicated region
    $region29: #{adaresnet_forward.21} parent=5 // pred_check
      _
    $region30: #{adaresnet_forward.21} parent=5 // pred_check_branch
      %161 = sbr.rel (%p158) target = $region32
    $region31: #{adaresnet_forward.21} parent=5 // pred_region
      %s162 = ssub.s32 %s9, 1
      %p163 = scmp.lt.s32.totalorder %s18, 1
      %s164 = scalar_select %p163, %s18, 1
      %p165 = scmp.lt.s32.totalorder %s19, 0
      %s166 = scalar_select %p165, %s19, 0
      %s167 = smul.addr %s166, 4
      %s168 = smul.addr %s164, 4
      %s169 = sadd.s32 %s167, %s168
      %s170 = smul.addr %s169, 4
      %s171 = scalar_lea.vmem %s0, %s170
      %p172 = pneg %p49
      %p173 = pneg %p46
      %p174 = pneg %p70
      %p175 = pneg %p67
      %p176 = pneg %p91
      %p177 = pneg %p88
      %p178 = pneg %p119
      %p179 = pneg %p116
      %s180 = smul.u32 2, %s19
      %p181 = scmp.lt.s32.totalorder %s18, 1
      %s182 = scalar_select %p181, %s18, 1
      %p183 = scmp.lt.s32.totalorder %s180, 1
      %s184 = scalar_select %p183, %s180, 1
      %s185 = smul.addr %s184, 4
      %s186 = smul.addr %s182, 8
      %s187 = sadd.s32 %s185, %s186
      %s188 = smul.addr %s187, 4
      %s189 = scalar_lea.vmem %s3, %s188
      %p190 = scmp.lt.s32.totalorder %s18, 1
      %s191 = scalar_select %p190, %s18, 1
      %p192 = scmp.lt.s32.totalorder %s19, 0
      %s193 = scalar_select %p192, %s19, 0
      %s194 = smul.addr %s193, 4
      %s195 = smul.addr %s191, 4
      %s196 = sadd.s32 %s194, %s195
      %s197 = smul.addr %s196, 4
      %s198 = scalar_lea.vmem %s0, %s197
      %s199 = smul.u32 2, %s19
      %p200 = scmp.lt.s32.totalorder %s18, 1
      %s201 = scalar_select %p200, %s18, 1
      %p202 = scmp.lt.s32.totalorder %s199, 1
      %s203 = scalar_select %p202, %s199, 1
      %s204 = smul.addr %s203, 4
      %s205 = smul.addr %s201, 8
      %s206 = sadd.s32 %s204, %s205
      %s207 = smul.addr %s206, 4
      %s208 = scalar_lea.vmem %s3, %s207
      %s209 = smul.u32 2, %s19
      %v210 = vld [vmem:[%s2] sm:$0xf]
      %v211 = vld [vmem:[%s198] sm:$0xff]
      %v212 = vld [vmem:[%s198 + $0x8] sm:$0x11]
      %v216 = vunpack.c.l.s4 1966171168
      %v217 = vunpack.c.0.s8 %v216
      %v218 = vlaneseq
      %v219 = vshrl.u32 %v218, 7
      %v220 = vsub.s32 %v217, %v219
      %v221 = vrot.slane %v211, %v220
      %v222 = vcombine.high %v221, %v221
      %v224 = vunpack.c.l.s4 1966171168
      %v225 = vunpack.c.0.s8 %v224
      %v226 = vlaneseq
      %v227 = vshrl.u32 %v226, 7
      %v228 = vsub.s32 %v225, %v227
      %v229 = vrot.slane %v221, %v228
      %v231 = vunpack.c.l.s4 1966171168
      %v232 = vunpack.c.0.s8 %v231
      %v233 = vlaneseq
      %v234 = vshrl.u32 %v233, 7
      %v235 = vsub.s32 %v232, %v234
      %v236 = vrot.slane %v222, %v235
      %v237 = vcombine.high %v229, %v229
      %v238 = vcombine.high %v236, %v236
      %v240 = vunpack.c.l.s4 1966171168
      %v241 = vunpack.c.0.s8 %v240
      %v242 = vlaneseq
      %v243 = vshrl.u32 %v242, 7
      %v244 = vsub.s32 %v241, %v243
      %v245 = vrot.slane %v212, %v244
      %v247 = vunpack.c.l.s4 1966171168
      %v248 = vunpack.c.0.s8 %v247
      %v249 = vlaneseq
      %v250 = vshrl.u32 %v249, 7
      %v251 = vsub.s32 %v248, %v250
      %v252 = vrot.slane %v245, %v251
      %v253 = vunpack.i.h.s16 %v229
      %v254 = vunpack.i.l.s16 %v236
      %v255 = vunpack.i.h.s16 %v236
      %v256 = vunpack.i.l.s16 %v237
      %v257 = vunpack.i.h.s16 %v237
      %v258 = vunpack.i.l.s16 %v238
      %v259 = vunpack.i.h.s16 %v238
      %v260 = vunpack.i.l.s16 %v252
      %v261 = vpack.i.b16 %v253, %v253
      %v262 = vpack.i.b16 %v254, %v254
      %v263 = vpack.i.b16 %v255, %v255
      %v264 = vpack.i.b16 %v256, %v256
      %v265 = vpack.i.b16 %v257, %v257
      %v266 = vpack.i.b16 %v258, %v258
      %v267 = vpack.i.b16 %v259, %v259
      %v268 = vpack.i.b16 %v260, %v260
      %v269 = vlaneseq
      %v270 = vshrl.u32 %v269, 7
      %v271 = vsub.s32 0, %v270
      %v272 = vrot.slane %v261, %v271
      %v273 = vlaneseq
      %v274 = vshrl.u32 %v273, 7
      %v275 = vsub.s32 1, %v274
      %v276 = vrot.slane %v261, %v275
      %v277 = vlaneseq
      %v278 = vshrl.u32 %v277, 7
      %v279 = vsub.s32 0, %v278
      %v280 = vrot.slane %v262, %v279
      %v281 = vlaneseq
      %v282 = vshrl.u32 %v281, 7
      %v283 = vsub.s32 1, %v282
      %v284 = vrot.slane %v262, %v283
      %v285 = vlaneseq
      %v286 = vshrl.u32 %v285, 7
      %v287 = vsub.s32 0, %v286
      %v288 = vrot.slane %v263, %v287
      %v289 = vlaneseq
      %v290 = vshrl.u32 %v289, 7
      %v291 = vsub.s32 1, %v290
      %v292 = vrot.slane %v263, %v291
      %v293 = vlaneseq
      %v294 = vshrl.u32 %v293, 7
      %v295 = vsub.s32 0, %v294
      %v296 = vrot.slane %v264, %v295
      %v297 = vlaneseq
      %v298 = vshrl.u32 %v297, 7
      %v299 = vsub.s32 1, %v298
      %v300 = vrot.slane %v264, %v299
      %v301 = vlaneseq
      %v302 = vshrl.u32 %v301, 7
      %v303 = vsub.s32 0, %v302
      %v304 = vrot.slane %v265, %v303
      %v305 = vlaneseq
      %v306 = vshrl.u32 %v305, 7
      %v307 = vsub.s32 1, %v306
      %v308 = vrot.slane %v265, %v307
      %v309 = vlaneseq
      %v310 = vshrl.u32 %v309, 7
      %v311 = vsub.s32 0, %v310
      %v312 = vrot.slane %v266, %v311
      %v313 = vlaneseq
      %v314 = vshrl.u32 %v313, 7
      %v315 = vsub.s32 1, %v314
      %v316 = vrot.slane %v266, %v315
      %v317 = vlaneseq
      %v318 = vshrl.u32 %v317, 7
      %v319 = vsub.s32 0, %v318
      %v320 = vrot.slane %v267, %v319
      %v321 = vlaneseq
      %v322 = vshrl.u32 %v321, 7
      %v323 = vsub.s32 1, %v322
      %v324 = vrot.slane %v267, %v323
      %v325 = vlaneseq
      %v326 = vshrl.u32 %v325, 7
      %v327 = vsub.s32 0, %v326
      %v328 = vrot.slane %v268, %v327
      %v329 = vlaneseq
      %v330 = vshrl.u32 %v329, 7
      %v331 = vsub.s32 1, %v330
      %v332 = vrot.slane %v268, %v331
      %v334 = vpack.i.b16 %v272, %v272
      %v336 = vlaneseq
      %v337 = vshrl.u32 %v336, 7
      %v338 = vsub.s32 0, %v337
      %v339 = vrot.slane %v334, %v338
      %v341 = vpack.i.b16 %v276, %v276
      %v343 = vlaneseq
      %v344 = vshrl.u32 %v343, 7
      %v345 = vsub.s32 0, %v344
      %v346 = vrot.slane %v341, %v345
      %v348 = vpack.i.b16 %v280, %v280
      %v350 = vlaneseq
      %v351 = vshrl.u32 %v350, 7
      %v352 = vsub.s32 0, %v351
      %v353 = vrot.slane %v348, %v352
      %v355 = vpack.i.b16 %v284, %v284
      %v357 = vlaneseq
      %v358 = vshrl.u32 %v357, 7
      %v359 = vsub.s32 0, %v358
      %v360 = vrot.slane %v355, %v359
      %v362 = vpack.i.b16 %v288, %v288
      %v364 = vlaneseq
      %v365 = vshrl.u32 %v364, 7
      %v366 = vsub.s32 0, %v365
      %v367 = vrot.slane %v362, %v366
      %v369 = vpack.i.b16 %v292, %v292
      %v371 = vlaneseq
      %v372 = vshrl.u32 %v371, 7
      %v373 = vsub.s32 0, %v372
      %v374 = vrot.slane %v369, %v373
      %v376 = vpack.i.b16 %v296, %v296
      %v378 = vlaneseq
      %v379 = vshrl.u32 %v378, 7
      %v380 = vsub.s32 0, %v379
      %v381 = vrot.slane %v376, %v380
      %v383 = vpack.i.b16 %v300, %v300
      %v385 = vlaneseq
      %v386 = vshrl.u32 %v385, 7
      %v387 = vsub.s32 0, %v386
      %v388 = vrot.slane %v383, %v387
      %v390 = vpack.i.b16 %v304, %v304
      %v392 = vlaneseq
      %v393 = vshrl.u32 %v392, 7
      %v394 = vsub.s32 0, %v393
      %v395 = vrot.slane %v390, %v394
      %v397 = vpack.i.b16 %v308, %v308
      %v399 = vlaneseq
      %v400 = vshrl.u32 %v399, 7
      %v401 = vsub.s32 0, %v400
      %v402 = vrot.slane %v397, %v401
      %v404 = vpack.i.b16 %v312, %v312
      %v406 = vlaneseq
      %v407 = vshrl.u32 %v406, 7
      %v408 = vsub.s32 0, %v407
      %v409 = vrot.slane %v404, %v408
      %v411 = vpack.i.b16 %v316, %v316
      %v413 = vlaneseq
      %v414 = vshrl.u32 %v413, 7
      %v415 = vsub.s32 0, %v414
      %v416 = vrot.slane %v411, %v415
      %v418 = vpack.i.b16 %v320, %v320
      %v420 = vlaneseq
      %v421 = vshrl.u32 %v420, 7
      %v422 = vsub.s32 0, %v421
      %v423 = vrot.slane %v418, %v422
      %v425 = vpack.i.b16 %v324, %v324
      %v427 = vlaneseq
      %v428 = vshrl.u32 %v427, 7
      %v429 = vsub.s32 0, %v428
      %v430 = vrot.slane %v425, %v429
      %v432 = vpack.i.b16 %v328, %v328
      %v434 = vlaneseq
      %v435 = vshrl.u32 %v434, 7
      %v436 = vsub.s32 0, %v435
      %v437 = vrot.slane %v432, %v436
      %v439 = vpack.i.b16 %v332, %v332
      %v441 = vlaneseq
      %v442 = vshrl.u32 %v441, 7
      %v443 = vsub.s32 0, %v442
      %v444 = vrot.slane %v439, %v443
      %v461 = vcombine.low %v339, %v346
      %v463 = vunpack.c.l.s4 1966171168
      %v464 = vunpack.c.0.s8 %v463
      %v465 = vlaneseq
      %v466 = vshrl.u32 %v465, 7
      %v467 = vsub.s32 %v464, %v466
      %v468 = vrot.slane %v461, %v467
      %v470 = vunpack.c.l.s4 1966171168
      %v471 = vunpack.c.0.s8 %v470
      %v472 = vlaneseq
      %v473 = vshrl.u32 %v472, 7
      %v474 = vsub.s32 %v471, %v473
      %v475 = vrot.slane %v468, %v474
      %v476 = vcombine.low %v353, %v360
      %v478 = vunpack.c.l.s4 1966171168
      %v479 = vunpack.c.0.s8 %v478
      %v480 = vlaneseq
      %v481 = vshrl.u32 %v480, 7
      %v482 = vsub.s32 %v479, %v481
      %v483 = vrot.slane %v476, %v482
      %v485 = vunpack.c.l.s4 1966171168
      %v486 = vunpack.c.0.s8 %v485
      %v487 = vlaneseq
      %v488 = vshrl.u32 %v487, 7
      %v489 = vsub.s32 %v486, %v488
      %v490 = vrot.slane %v483, %v489
      %v491 = vcombine.low %v367, %v374
      %v493 = vunpack.c.l.s4 1966171168
      %v494 = vunpack.c.0.s8 %v493
      %v495 = vlaneseq
      %v496 = vshrl.u32 %v495, 7
      %v497 = vsub.s32 %v494, %v496
      %v498 = vrot.slane %v491, %v497
      %v500 = vunpack.c.l.s4 1966171168
      %v501 = vunpack.c.0.s8 %v500
      %v502 = vlaneseq
      %v503 = vshrl.u32 %v502, 7
      %v504 = vsub.s32 %v501, %v503
      %v505 = vrot.slane %v498, %v504
      %v506 = vcombine.low %v381, %v388
      %v508 = vunpack.c.l.s4 1966171168
      %v509 = vunpack.c.0.s8 %v508
      %v510 = vlaneseq
      %v511 = vshrl.u32 %v510, 7
      %v512 = vsub.s32 %v509, %v511
      %v513 = vrot.slane %v506, %v512
      %v515 = vunpack.c.l.s4 1966171168
      %v516 = vunpack.c.0.s8 %v515
      %v517 = vlaneseq
      %v518 = vshrl.u32 %v517, 7
      %v519 = vsub.s32 %v516, %v518
      %v520 = vrot.slane %v513, %v519
      %v521 = vcombine.low %v395, %v402
      %v523 = vunpack.c.l.s4 1966171168
      %v524 = vunpack.c.0.s8 %v523
      %v525 = vlaneseq
      %v526 = vshrl.u32 %v525, 7
      %v527 = vsub.s32 %v524, %v526
      %v528 = vrot.slane %v521, %v527
      %v530 = vunpack.c.l.s4 1966171168
      %v531 = vunpack.c.0.s8 %v530
      %v532 = vlaneseq
      %v533 = vshrl.u32 %v532, 7
      %v534 = vsub.s32 %v531, %v533
      %v535 = vrot.slane %v528, %v534
      %v536 = vcombine.low %v409, %v416
      %v538 = vunpack.c.l.s4 1966171168
      %v539 = vunpack.c.0.s8 %v538
      %v540 = vlaneseq
      %v541 = vshrl.u32 %v540, 7
      %v542 = vsub.s32 %v539, %v541
      %v543 = vrot.slane %v536, %v542
      %v545 = vunpack.c.l.s4 1966171168
      %v546 = vunpack.c.0.s8 %v545
      %v547 = vlaneseq
      %v548 = vshrl.u32 %v547, 7
      %v549 = vsub.s32 %v546, %v548
      %v550 = vrot.slane %v543, %v549
      %v551 = vcombine.low %v423, %v430
      %v553 = vunpack.c.l.s4 1966171168
      %v554 = vunpack.c.0.s8 %v553
      %v555 = vlaneseq
      %v556 = vshrl.u32 %v555, 7
      %v557 = vsub.s32 %v554, %v556
      %v558 = vrot.slane %v551, %v557
      %v560 = vunpack.c.l.s4 1966171168
      %v561 = vunpack.c.0.s8 %v560
      %v562 = vlaneseq
      %v563 = vshrl.u32 %v562, 7
      %v564 = vsub.s32 %v561, %v563
      %v565 = vrot.slane %v558, %v564
      %v566 = vcombine.low %v437, %v444
      %v568 = vunpack.c.l.s4 1966171168
      %v569 = vunpack.c.0.s8 %v568
      %v570 = vlaneseq
      %v571 = vshrl.u32 %v570, 7
      %v572 = vsub.s32 %v569, %v571
      %v573 = vrot.slane %v566, %v572
      %v575 = vunpack.c.l.s4 1966171168
      %v576 = vunpack.c.0.s8 %v575
      %v577 = vlaneseq
      %v578 = vshrl.u32 %v577, 7
      %v579 = vsub.s32 %v576, %v578
      %v580 = vrot.slane %v573, %v579
      %v581 = vunpack.c.l.b16 %v211
      %v582 = vunpack.c.h.b16 %v211
      %v583 = vpack.c.b16 %v581, %v581
      %v584 = vpack.c.b16 %v582, %v582
      %v587 = vcombine.low %v475, %v490
      %v588 = vcombine.low %v505, %v520
      %v589 = vcombine.low %v535, %v550
      %v590 = vcombine.low %v565, %v580
      %v592 = vunpack.c.l.s4 1966171168
      %v593 = vunpack.c.0.s8 %v592
      %v594 = vlaneseq
      %v595 = vshrl.u32 %v594, 7
      %v596 = vsub.s32 %v593, %v595
      %v597 = vrot.slane %v587, %v596
      %v599 = vunpack.c.l.s4 1966171168
      %v600 = vunpack.c.0.s8 %v599
      %v601 = vlaneseq
      %v602 = vshrl.u32 %v601, 7
      %v603 = vsub.s32 %v600, %v602
      %v604 = vrot.slane %v588, %v603
      %v606 = vunpack.c.l.s4 1966171168
      %v607 = vunpack.c.0.s8 %v606
      %v608 = vlaneseq
      %v609 = vshrl.u32 %v608, 7
      %v610 = vsub.s32 %v607, %v609
      %v611 = vrot.slane %v589, %v610
      %v613 = vunpack.c.l.s4 1966171168
      %v614 = vunpack.c.0.s8 %v613
      %v615 = vlaneseq
      %v616 = vshrl.u32 %v615, 7
      %v617 = vsub.s32 %v614, %v616
      %v618 = vrot.slane %v590, %v617
      %v619 = vcombine.low %v597, %v604
      %v620 = vcombine.high %v597, %v604
      %v621 = vcombine.low %v611, %v618
      %v622 = vcombine.high %v611, %v618
      %v624 = vunpack.c.l.s4 1966171168
      %v625 = vunpack.c.0.s8 %v624
      %v626 = vlaneseq
      %v627 = vshrl.u32 %v626, 7
      %v628 = vsub.s32 %v625, %v627
      %v629 = vrot.slane %v619, %v628
      %v631 = vunpack.c.l.s4 1966171168
      %v632 = vunpack.c.0.s8 %v631
      %v633 = vlaneseq
      %v634 = vshrl.u32 %v633, 7
      %v635 = vsub.s32 %v632, %v634
      %v636 = vrot.slane %v620, %v635
      %v638 = vunpack.c.l.s4 1966171168
      %v639 = vunpack.c.0.s8 %v638
      %v640 = vlaneseq
      %v641 = vshrl.u32 %v640, 7
      %v642 = vsub.s32 %v639, %v641
      %v643 = vrot.slane %v621, %v642
      %v645 = vunpack.c.l.s4 1966171168
      %v646 = vunpack.c.0.s8 %v645
      %v647 = vlaneseq
      %v648 = vshrl.u32 %v647, 7
      %v649 = vsub.s32 %v646, %v648
      %v650 = vrot.slane %v622, %v649
      %v651 = vcombine.low %v629, %v643
      %v652 = vcombine.low %v636, %v650
      %v654 = vshrl.u32 %v651, 16
      %v656 = vrot.slane %v654, 7
      %v657 = vshll.u32 %v651, 16
      %v659 = vor.u32 %v656, %v657
      %v661 = vshrl.u32 %v652, 16
      %v663 = vrot.slane %v661, 7
      %v664 = vshll.u32 %v652, 16
      %v666 = vor.u32 %v663, %v664
      %v671 = vunpack.c.l.b16 %v212
      %v672 = vunpack.c.h.b16 %v212
      %v673 = vpack.c.b16 %v671, %v671
      %v674 = vpack.c.b16 %v672, %v672
      %vm677 = vcmask 1040384
      %vm678 = vsmask.f32 256
      %vm679 = vmand %vm677, %vm678
      %v680 = vsel %vm679, %v583, %v659
      %v681 = vsel %vm679, %v584, %v666
      %v682 = vsel %vm679, %v656, %v673
      %v683 = vsel %vm679, %v663, %v674
      %v684 = vld [vmem:[%s1] sm:$0xff]
      %v685 = vld [vmem:[%s1 + $0x8] sm:$0xff]
      %v686 = vld [vmem:[%s1 + $0x10] sm:$0xff]
      %v687 = vld [vmem:[%s1 + $0x18] sm:$0xff]
      %v688 = vld [vmem:[%s1 + $0x20] sm:$0xff]
      %v689 = vld [vmem:[%s1 + $0x28] sm:$0xff]
      %v690 = vld [vmem:[%s1 + $0x30] sm:$0xff]
      %v691 = vld [vmem:[%s1 + $0x38] sm:$0xff]
      %v692 = vld [vmem:[%s1 + $0x40] sm:$0xff]
      %v693 = vld [vmem:[%s1 + $0x48] sm:$0xff]
      %v694 = vld [vmem:[%s1 + $0x50] sm:$0xff]
      %v695 = vld [vmem:[%s1 + $0x58] sm:$0xff]
      %v696 = vld [vmem:[%s1 + $0x60] sm:$0xff]
      %v697 = vld [vmem:[%s1 + $0x68] sm:$0xff]
      %v698 = vld [vmem:[%s1 + $0x70] sm:$0xff]
      %v699 = vld [vmem:[%s1 + $0x78] sm:$0xff]
      %v700 = vld [vmem:[%s1 + $0x80] sm:$0xff]
      %v701 = vld [vmem:[%s1 + $0x88] sm:$0xff]
      %v702 = vld [vmem:[%s1 + $0x90] sm:$0xff]
      %v703 = vld [vmem:[%s1 + $0x98] sm:$0xff]
      %v704 = vld [vmem:[%s1 + $0xa0] sm:$0xff]
      %v705 = vld [vmem:[%s1 + $0xa8] sm:$0xff]
      %v706 = vld [vmem:[%s1 + $0xb0] sm:$0xff]
      %v707 = vld [vmem:[%s1 + $0xb8] sm:$0xff]
      %v708 = vld [vmem:[%s1 + $0xc0] sm:$0xff]
      %v709 = vld [vmem:[%s1 + $0xc8] sm:$0xff]
      %v710 = vld [vmem:[%s1 + $0xd0] sm:$0xff]
      %v711 = vld [vmem:[%s1 + $0xd8] sm:$0xff]
      %v712 = vld [vmem:[%s1 + $0xe0] sm:$0xff]
      %v713 = vld [vmem:[%s1 + $0xe8] sm:$0xff]
      %v714 = vld [vmem:[%s1 + $0xf0] sm:$0xff]
      %v715 = vld [vmem:[%s1 + $0xf8] sm:$0xff]
      %v716 = vld [vmem:[%s1 + $0x100] sm:$0xff]
      %v717 = vld [vmem:[%s1 + $0x108] sm:$0xff]
      %v718 = vld [vmem:[%s1 + $0x110] sm:$0xff]
      %v719 = vld [vmem:[%s1 + $0x118] sm:$0xff]
      %v720 = vld [vmem:[%s1 + $0x120] sm:$0xff]
      %v721 = vld [vmem:[%s1 + $0x128] sm:$0xff]
      %v722 = vld [vmem:[%s1 + $0x130] sm:$0xff]
      %v723 = vld [vmem:[%s1 + $0x138] sm:$0xff]
      %v724 = vld [vmem:[%s1 + $0x140] sm:$0xff]
      %v725 = vld [vmem:[%s1 + $0x148] sm:$0xff]
      %v726 = vld [vmem:[%s1 + $0x150] sm:$0xff]
      %v727 = vld [vmem:[%s1 + $0x158] sm:$0xff]
      %v728 = vld [vmem:[%s1 + $0x160] sm:$0xff]
      %v729 = vld [vmem:[%s1 + $0x168] sm:$0xff]
      %v730 = vld [vmem:[%s1 + $0x170] sm:$0xff]
      %v731 = vld [vmem:[%s1 + $0x178] sm:$0xff]
      %v732 = vld [vmem:[%s1 + $0x180] sm:$0xff]
      %v733 = vld [vmem:[%s1 + $0x188] sm:$0xff]
      %v734 = vld [vmem:[%s1 + $0x190] sm:$0xff]
      %v735 = vld [vmem:[%s1 + $0x198] sm:$0xff]
      %v736 = vld [vmem:[%s1 + $0x1a0] sm:$0xff]
      %v737 = vld [vmem:[%s1 + $0x1a8] sm:$0xff]
      %v738 = vld [vmem:[%s1 + $0x1b0] sm:$0xff]
      %v739 = vld [vmem:[%s1 + $0x1b8] sm:$0xff]
      %v740 = vld [vmem:[%s1 + $0x1c0] sm:$0xff]
      %v741 = vld [vmem:[%s1 + $0x1c8] sm:$0xff]
      %v742 = vld [vmem:[%s1 + $0x1d0] sm:$0xff]
      %v743 = vld [vmem:[%s1 + $0x1d8] sm:$0xff]
      %v744 = vld [vmem:[%s1 + $0x1e0] sm:$0xff]
      %v745 = vld [vmem:[%s1 + $0x1e8] sm:$0xff]
      %v746 = vld [vmem:[%s1 + $0x1f0] sm:$0xff]
      %v747 = vld [vmem:[%s1 + $0x1f8] sm:$0xff]
      %v812 = vunpack.c.l.b16 %v684
      %v813 = vunpack.c.h.b16 %v684
      %v814 = vunpack.c.l.b16 %v685
      %v815 = vunpack.c.h.b16 %v685
      %v816 = vunpack.c.l.b16 %v686
      %v817 = vunpack.c.h.b16 %v686
      %v818 = vunpack.c.l.b16 %v687
      %v819 = vunpack.c.h.b16 %v687
      %v820 = vunpack.c.l.b16 %v688
      %v821 = vunpack.c.h.b16 %v688
      %v822 = vunpack.c.l.b16 %v689
      %v823 = vunpack.c.h.b16 %v689
      %v824 = vunpack.c.l.b16 %v690
      %v825 = vunpack.c.h.b16 %v690
      %v826 = vunpack.c.l.b16 %v691
      %v827 = vunpack.c.h.b16 %v691
      %v828 = vunpack.c.l.b16 %v692
      %v829 = vunpack.c.h.b16 %v692
      %v830 = vunpack.c.l.b16 %v693
      %v831 = vunpack.c.h.b16 %v693
      %v832 = vunpack.c.l.b16 %v694
      %v833 = vunpack.c.h.b16 %v694
      %v834 = vunpack.c.l.b16 %v695
      %v835 = vunpack.c.h.b16 %v695
      %v836 = vunpack.c.l.b16 %v696
      %v837 = vunpack.c.h.b16 %v696
      %v838 = vunpack.c.l.b16 %v697
      %v839 = vunpack.c.h.b16 %v697
      %v840 = vunpack.c.l.b16 %v698
      %v841 = vunpack.c.h.b16 %v698
      %v842 = vunpack.c.l.b16 %v699
      %v843 = vunpack.c.h.b16 %v699
      %v844 = vunpack.c.l.b16 %v700
      %v845 = vunpack.c.h.b16 %v700
      %v846 = vunpack.c.l.b16 %v701
      %v847 = vunpack.c.h.b16 %v701
      %v848 = vunpack.c.l.b16 %v702
      %v849 = vunpack.c.h.b16 %v702
      %v850 = vunpack.c.l.b16 %v703
      %v851 = vunpack.c.h.b16 %v703
      %v852 = vunpack.c.l.b16 %v704
      %v853 = vunpack.c.h.b16 %v704
      %v854 = vunpack.c.l.b16 %v705
      %v855 = vunpack.c.h.b16 %v705
      %v856 = vunpack.c.l.b16 %v706
      %v857 = vunpack.c.h.b16 %v706
      %v858 = vunpack.c.l.b16 %v707
      %v859 = vunpack.c.h.b16 %v707
      %v860 = vunpack.c.l.b16 %v708
      %v861 = vunpack.c.h.b16 %v708
      %v862 = vunpack.c.l.b16 %v709
      %v863 = vunpack.c.h.b16 %v709
      %v864 = vunpack.c.l.b16 %v710
      %v865 = vunpack.c.h.b16 %v710
      %v866 = vunpack.c.l.b16 %v711
      %v867 = vunpack.c.h.b16 %v711
      %v868 = vunpack.c.l.b16 %v712
      %v869 = vunpack.c.h.b16 %v712
      %v870 = vunpack.c.l.b16 %v713
      %v871 = vunpack.c.h.b16 %v713
      %v872 = vunpack.c.l.b16 %v714
      %v873 = vunpack.c.h.b16 %v714
      %v874 = vunpack.c.l.b16 %v715
      %v875 = vunpack.c.h.b16 %v715
      %v876 = vunpack.c.l.b16 %v716
      %v877 = vunpack.c.h.b16 %v716
      %v878 = vunpack.c.l.b16 %v717
      %v879 = vunpack.c.h.b16 %v717
      %v880 = vunpack.c.l.b16 %v718
      %v881 = vunpack.c.h.b16 %v718
      %v882 = vunpack.c.l.b16 %v719
      %v883 = vunpack.c.h.b16 %v719
      %v884 = vunpack.c.l.b16 %v720
      %v885 = vunpack.c.h.b16 %v720
      %v886 = vunpack.c.l.b16 %v721
      %v887 = vunpack.c.h.b16 %v721
      %v888 = vunpack.c.l.b16 %v722
      %v889 = vunpack.c.h.b16 %v722
      %v890 = vunpack.c.l.b16 %v723
      %v891 = vunpack.c.h.b16 %v723
      %v892 = vunpack.c.l.b16 %v724
      %v893 = vunpack.c.h.b16 %v724
      %v894 = vunpack.c.l.b16 %v725
      %v895 = vunpack.c.h.b16 %v725
      %v896 = vunpack.c.l.b16 %v726
      %v897 = vunpack.c.h.b16 %v726
      %v898 = vunpack.c.l.b16 %v727
      %v899 = vunpack.c.h.b16 %v727
      %v900 = vunpack.c.l.b16 %v728
      %v901 = vunpack.c.h.b16 %v728
      %v902 = vunpack.c.l.b16 %v729
      %v903 = vunpack.c.h.b16 %v729
      %v904 = vunpack.c.l.b16 %v730
      %v905 = vunpack.c.h.b16 %v730
      %v906 = vunpack.c.l.b16 %v731
      %v907 = vunpack.c.h.b16 %v731
      %v908 = vunpack.c.l.b16 %v732
      %v909 = vunpack.c.h.b16 %v732
      %v910 = vunpack.c.l.b16 %v733
      %v911 = vunpack.c.h.b16 %v733
      %v912 = vunpack.c.l.b16 %v734
      %v913 = vunpack.c.h.b16 %v734
      %v914 = vunpack.c.l.b16 %v735
      %v915 = vunpack.c.h.b16 %v735
      %v916 = vunpack.c.l.b16 %v736
      %v917 = vunpack.c.h.b16 %v736
      %v918 = vunpack.c.l.b16 %v737
      %v919 = vunpack.c.h.b16 %v737
      %v920 = vunpack.c.l.b16 %v738
      %v921 = vunpack.c.h.b16 %v738
      %v922 = vunpack.c.l.b16 %v739
      %v923 = vunpack.c.h.b16 %v739
      %v924 = vunpack.c.l.b16 %v740
      %v925 = vunpack.c.h.b16 %v740
      %v926 = vunpack.c.l.b16 %v741
      %v927 = vunpack.c.h.b16 %v741
      %v928 = vunpack.c.l.b16 %v742
      %v929 = vunpack.c.h.b16 %v742
      %v930 = vunpack.c.l.b16 %v743
      %v931 = vunpack.c.h.b16 %v743
      %v932 = vunpack.c.l.b16 %v744
      %v933 = vunpack.c.h.b16 %v744
      %v934 = vunpack.c.l.b16 %v745
      %v935 = vunpack.c.h.b16 %v745
      %v936 = vunpack.c.l.b16 %v746
      %v937 = vunpack.c.h.b16 %v746
      %v938 = vunpack.c.l.b16 %v747
      %v939 = vunpack.c.h.b16 %v747
      %v940 = vpack.c.b16 %v816, %v812
      %v941 = vpack.c.b16 %v817, %v813
      %v942 = vpack.c.b16 %v818, %v814
      %v943 = vpack.c.b16 %v819, %v815
      %v944 = vpack.c.b16 %v824, %v820
      %v945 = vpack.c.b16 %v825, %v821
      %v946 = vpack.c.b16 %v826, %v822
      %v947 = vpack.c.b16 %v827, %v823
      %v948 = vpack.c.b16 %v832, %v828
      %v949 = vpack.c.b16 %v833, %v829
      %v950 = vpack.c.b16 %v834, %v830
      %v951 = vpack.c.b16 %v835, %v831
      %v952 = vpack.c.b16 %v840, %v836
      %v953 = vpack.c.b16 %v841, %v837
      %v954 = vpack.c.b16 %v842, %v838
      %v955 = vpack.c.b16 %v843, %v839
      %v956 = vpack.c.b16 %v848, %v844
      %v957 = vpack.c.b16 %v849, %v845
      %v958 = vpack.c.b16 %v850, %v846
      %v959 = vpack.c.b16 %v851, %v847
      %v960 = vpack.c.b16 %v856, %v852
      %v961 = vpack.c.b16 %v857, %v853
      %v962 = vpack.c.b16 %v858, %v854
      %v963 = vpack.c.b16 %v859, %v855
      %v964 = vpack.c.b16 %v864, %v860
      %v965 = vpack.c.b16 %v865, %v861
      %v966 = vpack.c.b16 %v866, %v862
      %v967 = vpack.c.b16 %v867, %v863
      %v968 = vpack.c.b16 %v872, %v868
      %v969 = vpack.c.b16 %v873, %v869
      %v970 = vpack.c.b16 %v874, %v870
      %v971 = vpack.c.b16 %v875, %v871
      %v972 = vpack.c.b16 %v880, %v876
      %v973 = vpack.c.b16 %v881, %v877
      %v974 = vpack.c.b16 %v882, %v878
      %v975 = vpack.c.b16 %v883, %v879
      %v976 = vpack.c.b16 %v888, %v884
      %v977 = vpack.c.b16 %v889, %v885
      %v978 = vpack.c.b16 %v890, %v886
      %v979 = vpack.c.b16 %v891, %v887
      %v980 = vpack.c.b16 %v896, %v892
      %v981 = vpack.c.b16 %v897, %v893
      %v982 = vpack.c.b16 %v898, %v894
      %v983 = vpack.c.b16 %v899, %v895
      %v984 = vpack.c.b16 %v904, %v900
      %v985 = vpack.c.b16 %v905, %v901
      %v986 = vpack.c.b16 %v906, %v902
      %v987 = vpack.c.b16 %v907, %v903
      %v988 = vpack.c.b16 %v912, %v908
      %v989 = vpack.c.b16 %v913, %v909
      %v990 = vpack.c.b16 %v914, %v910
      %v991 = vpack.c.b16 %v915, %v911
      %v992 = vpack.c.b16 %v920, %v916
      %v993 = vpack.c.b16 %v921, %v917
      %v994 = vpack.c.b16 %v922, %v918
      %v995 = vpack.c.b16 %v923, %v919
      %v996 = vpack.c.b16 %v928, %v924
      %v997 = vpack.c.b16 %v929, %v925
      %v998 = vpack.c.b16 %v930, %v926
      %v999 = vpack.c.b16 %v931, %v927
      %v1000 = vpack.c.b16 %v936, %v932
      %v1001 = vpack.c.b16 %v937, %v933
      %v1002 = vpack.c.b16 %v938, %v934
      %v1003 = vpack.c.b16 %v939, %v935
      %1068 = vmatprep.subr.bf16.mxu0 %v969
      %1069 = vmatpush1.bf16.msra.mxu0 %v968
      %1070 = vmatprep.subr.bf16.mxu0 %v965
      %1071 = vmatpush1.bf16.msra.mxu0 %v964
      %1072 = vmatprep.subr.bf16.mxu0 %v961
      %1073 = vmatpush1.bf16.msra.mxu0 %v960
      %1074 = vmatprep.subr.bf16.mxu0 %v957
      %1075 = vmatpush1.bf16.msra.mxu0 %v956
      %1076 = vmatprep.subr.bf16.mxu0 %v953
      %1077 = vmatpush1.bf16.msra.mxu0 %v952
      %1078 = vmatprep.subr.bf16.mxu0 %v949
      %1079 = vmatpush1.bf16.msra.mxu0 %v948
      %1080 = vmatprep.subr.bf16.mxu0 %v945
      %1081 = vmatpush1.bf16.msra.mxu0 %v944
      %1082 = vmatprep.subr.bf16.mxu0 %v941
      %1083 = vmatpush1.bf16.msra.mxu0 %v940
      %1084 = vmatprep.subr.bf16.mxu0 %v1001
      %1085 = vmatpush2.bf16.msra.mxu0 %v1000
      %1086 = vmatprep.subr.bf16.mxu0 %v997
      %1087 = vmatpush2.bf16.msra.mxu0 %v996
      %1088 = vmatprep.subr.bf16.mxu0 %v993
      %1089 = vmatpush2.bf16.msra.mxu0 %v992
      %1090 = vmatprep.subr.bf16.mxu0 %v989
      %1091 = vmatpush2.bf16.msra.mxu0 %v988
      %1092 = vmatprep.subr.bf16.mxu0 %v985
      %1093 = vmatpush2.bf16.msra.mxu0 %v984
      %1094 = vmatprep.subr.bf16.mxu0 %v981
      %1095 = vmatpush2.bf16.msra.mxu0 %v980
      %1096 = vmatprep.subr.bf16.mxu0 %v977
      %1097 = vmatpush2.bf16.msra.mxu0 %v976
      %1098 = vmatprep.subr.bf16.mxu0 %v973
      %1099 = vmatpush2.bf16.msra.mxu0 %v972
      %1100 = vmatprep.mubr.bf16.mxu0 %v681
      %1101 = vmatmul.mubr.bf16.gmra.mxu0 %v680
      %v1102 = vpop.f32.mrf.mxu0
      %v1103 = vadd.f32 0.0, %v1102
      %v1104 = vpop.f32.mrf.mxu0
      %v1105 = vadd.f32 0.0, %v1104
      %v1106 = vpop.f32.mrf.mxu0
      %v1107 = vadd.f32 0.0, %v1106
      %v1108 = vpop.f32.mrf.mxu0
      %v1109 = vadd.f32 0.0, %v1108
      %1110 = vdwg.mxu0
      %1111 = vmatprep.subr.bf16.mxu0 %v971
      %1112 = vmatpush1.bf16.msra.mxu0 %v970
      %1113 = vmatprep.subr.bf16.mxu0 %v967
      %1114 = vmatpush1.bf16.msra.mxu0 %v966
      %1115 = vmatprep.subr.bf16.mxu0 %v963
      %1116 = vmatpush1.bf16.msra.mxu0 %v962
      %1117 = vmatprep.subr.bf16.mxu0 %v959
      %1118 = vmatpush1.bf16.msra.mxu0 %v958
      %1119 = vmatprep.subr.bf16.mxu0 %v955
      %1120 = vmatpush1.bf16.msra.mxu0 %v954
      %1121 = vmatprep.subr.bf16.mxu0 %v951
      %1122 = vmatpush1.bf16.msra.mxu0 %v950
      %1123 = vmatprep.subr.bf16.mxu0 %v947
      %1124 = vmatpush1.bf16.msra.mxu0 %v946
      %1125 = vmatprep.subr.bf16.mxu0 %v943
      %1126 = vmatpush1.bf16.msra.mxu0 %v942
      %1127 = vmatprep.subr.bf16.mxu0 %v1003
      %1128 = vmatpush2.bf16.msra.mxu0 %v1002
      %1129 = vmatprep.subr.bf16.mxu0 %v999
      %1130 = vmatpush2.bf16.msra.mxu0 %v998
      %1131 = vmatprep.subr.bf16.mxu0 %v995
      %1132 = vmatpush2.bf16.msra.mxu0 %v994
      %1133 = vmatprep.subr.bf16.mxu0 %v991
      %1134 = vmatpush2.bf16.msra.mxu0 %v990
      %1135 = vmatprep.subr.bf16.mxu0 %v987
      %1136 = vmatpush2.bf16.msra.mxu0 %v986
      %1137 = vmatprep.subr.bf16.mxu0 %v983
      %1138 = vmatpush2.bf16.msra.mxu0 %v982
      %1139 = vmatprep.subr.bf16.mxu0 %v979
      %1140 = vmatpush2.bf16.msra.mxu0 %v978
      %1141 = vmatprep.subr.bf16.mxu0 %v975
      %1142 = vmatpush2.bf16.msra.mxu0 %v974
      %1143 = vmatprep.mubr.bf16.mxu0 %v681
      %1144 = vmatmul.mubr.bf16.gmra.mxu0 %v680
      %v1145 = vpop.f32.mrf.mxu0
      %v1146 = vadd.f32 0.0, %v1145
      %v1147 = vpop.f32.mrf.mxu0
      %v1148 = vadd.f32 0.0, %v1147
      %v1149 = vpop.f32.mrf.mxu0
      %v1150 = vadd.f32 0.0, %v1149
      %v1151 = vpop.f32.mrf.mxu0
      %v1152 = vadd.f32 0.0, %v1151
      %1153 = vdwg.mxu0
      %v1155 = vlaneseq
      %v1156 = vshrl.u32 %v1155, 7
      %v1157 = vsub.s32 0, %v1156
      %v1158 = vrot.slane %v210, %v1157
      %v1159 = vlaneseq
      %v1160 = vshrl.u32 %v1159, 7
      %v1161 = vsub.s32 1, %v1160
      %v1162 = vrot.slane %v210, %v1161
      %v1163 = vlaneseq
      %v1164 = vshrl.u32 %v1163, 7
      %v1165 = vsub.s32 2, %v1164
      %v1166 = vrot.slane %v210, %v1165
      %v1167 = vlaneseq
      %v1168 = vshrl.u32 %v1167, 7
      %v1169 = vsub.s32 3, %v1168
      %v1170 = vrot.slane %v210, %v1169
      %v1175 = vadd.f32 %v1158, %v1103
      %v1176 = vadd.f32 %v1162, %v1105
      %v1177 = vadd.f32 %v1166, %v1146
      %v1178 = vadd.f32 %v1170, %v1148
      %v1179 = vadd.f32 %v1158, %v1107
      %v1180 = vadd.f32 %v1162, %v1109
      %v1181 = vadd.f32 %v1166, %v1150
      %v1182 = vadd.f32 %v1170, %v1152
      %s1183 = scalar_lea.vmem %s1, 512
      %v1184 = vld [vmem:[%s1183] sm:$0xff]
      %v1185 = vld [vmem:[%s1183 + $0x8] sm:$0xff]
      %v1186 = vld [vmem:[%s1183 + $0x10] sm:$0xff]
      %v1187 = vld [vmem:[%s1183 + $0x18] sm:$0xff]
      %v1188 = vld [vmem:[%s1183 + $0x20] sm:$0xff]
      %v1189 = vld [vmem:[%s1183 + $0x28] sm:$0xff]
      %v1190 = vld [vmem:[%s1183 + $0x30] sm:$0xff]
      %v1191 = vld [vmem:[%s1183 + $0x38] sm:$0xff]
      %v1192 = vld [vmem:[%s1183 + $0x40] sm:$0xff]
      %v1193 = vld [vmem:[%s1183 + $0x48] sm:$0xff]
      %v1194 = vld [vmem:[%s1183 + $0x50] sm:$0xff]
      %v1195 = vld [vmem:[%s1183 + $0x58] sm:$0xff]
      %v1196 = vld [vmem:[%s1183 + $0x60] sm:$0xff]
      %v1197 = vld [vmem:[%s1183 + $0x68] sm:$0xff]
      %v1198 = vld [vmem:[%s1183 + $0x70] sm:$0xff]
      %v1199 = vld [vmem:[%s1183 + $0x78] sm:$0xff]
      %v1200 = vld [vmem:[%s1183 + $0x80] sm:$0xff]
      %v1201 = vld [vmem:[%s1183 + $0x88] sm:$0xff]
      %v1202 = vld [vmem:[%s1183 + $0x90] sm:$0xff]
      %v1203 = vld [vmem:[%s1183 + $0x98] sm:$0xff]
      %v1204 = vld [vmem:[%s1183 + $0xa0] sm:$0xff]
      %v1205 = vld [vmem:[%s1183 + $0xa8] sm:$0xff]
      %v1206 = vld [vmem:[%s1183 + $0xb0] sm:$0xff]
      %v1207 = vld [vmem:[%s1183 + $0xb8] sm:$0xff]
      %v1208 = vld [vmem:[%s1183 + $0xc0] sm:$0xff]
      %v1209 = vld [vmem:[%s1183 + $0xc8] sm:$0xff]
      %v1210 = vld [vmem:[%s1183 + $0xd0] sm:$0xff]
      %v1211 = vld [vmem:[%s1183 + $0xd8] sm:$0xff]
      %v1212 = vld [vmem:[%s1183 + $0xe0] sm:$0xff]
      %v1213 = vld [vmem:[%s1183 + $0xe8] sm:$0xff]
      %v1214 = vld [vmem:[%s1183 + $0xf0] sm:$0xff]
      %v1215 = vld [vmem:[%s1183 + $0xf8] sm:$0xff]
      %v1216 = vld [vmem:[%s1183 + $0x100] sm:$0xff]
      %v1217 = vld [vmem:[%s1183 + $0x108] sm:$0xff]
      %v1218 = vld [vmem:[%s1183 + $0x110] sm:$0xff]
      %v1219 = vld [vmem:[%s1183 + $0x118] sm:$0xff]
      %v1220 = vld [vmem:[%s1183 + $0x120] sm:$0xff]
      %v1221 = vld [vmem:[%s1183 + $0x128] sm:$0xff]
      %v1222 = vld [vmem:[%s1183 + $0x130] sm:$0xff]
      %v1223 = vld [vmem:[%s1183 + $0x138] sm:$0xff]
      %v1224 = vld [vmem:[%s1183 + $0x140] sm:$0xff]
      %v1225 = vld [vmem:[%s1183 + $0x148] sm:$0xff]
      %v1226 = vld [vmem:[%s1183 + $0x150] sm:$0xff]
      %v1227 = vld [vmem:[%s1183 + $0x158] sm:$0xff]
      %v1228 = vld [vmem:[%s1183 + $0x160] sm:$0xff]
      %v1229 = vld [vmem:[%s1183 + $0x168] sm:$0xff]
      %v1230 = vld [vmem:[%s1183 + $0x170] sm:$0xff]
      %v1231 = vld [vmem:[%s1183 + $0x178] sm:$0xff]
      %v1232 = vld [vmem:[%s1183 + $0x180] sm:$0xff]
      %v1233 = vld [vmem:[%s1183 + $0x188] sm:$0xff]
      %v1234 = vld [vmem:[%s1183 + $0x190] sm:$0xff]
      %v1235 = vld [vmem:[%s1183 + $0x198] sm:$0xff]
      %v1236 = vld [vmem:[%s1183 + $0x1a0] sm:$0xff]
      %v1237 = vld [vmem:[%s1183 + $0x1a8] sm:$0xff]
      %v1238 = vld [vmem:[%s1183 + $0x1b0] sm:$0xff]
      %v1239 = vld [vmem:[%s1183 + $0x1b8] sm:$0xff]
      %v1240 = vld [vmem:[%s1183 + $0x1c0] sm:$0xff]
      %v1241 = vld [vmem:[%s1183 + $0x1c8] sm:$0xff]
      %v1242 = vld [vmem:[%s1183 + $0x1d0] sm:$0xff]
      %v1243 = vld [vmem:[%s1183 + $0x1d8] sm:$0xff]
      %v1244 = vld [vmem:[%s1183 + $0x1e0] sm:$0xff]
      %v1245 = vld [vmem:[%s1183 + $0x1e8] sm:$0xff]
      %v1246 = vld [vmem:[%s1183 + $0x1f0] sm:$0xff]
      %v1247 = vld [vmem:[%s1183 + $0x1f8] sm:$0xff]
      %vm1248 = vsmask.f32 7424
      %v1250 = vshrl.u32 %v680, 16
      %v1252 = vshll.u32 %v680, 16
      %v1254 = vrot.slane %v1252, 1
      %v1255 = vor.u32 %v1250, %v1254
      %v1257 = vshll.u32 %v682, 16
      %v1259 = vrot.slane %v1257, 1
      %v1260 = vsel %vm1248, %v1255, %v1259
      %v1262 = vshrl.u32 %v681, 16
      %v1264 = vshll.u32 %v681, 16
      %v1266 = vrot.slane %v1264, 1
      %v1267 = vor.u32 %v1262, %v1266
      %v1269 = vshll.u32 %v683, 16
      %v1271 = vrot.slane %v1269, 1
      %v1272 = vsel %vm1248, %v1267, %v1271
      %v1339 = vunpack.c.l.b16 %v1184
      %v1340 = vunpack.c.h.b16 %v1184
      %v1341 = vunpack.c.l.b16 %v1185
      %v1342 = vunpack.c.h.b16 %v1185
      %v1343 = vunpack.c.l.b16 %v1186
      %v1344 = vunpack.c.h.b16 %v1186
      %v1345 = vunpack.c.l.b16 %v1187
      %v1346 = vunpack.c.h.b16 %v1187
      %v1347 = vunpack.c.l.b16 %v1188
      %v1348 = vunpack.c.h.b16 %v1188
      %v1349 = vunpack.c.l.b16 %v1189
      %v1350 = vunpack.c.h.b16 %v1189
      %v1351 = vunpack.c.l.b16 %v1190
      %v1352 = vunpack.c.h.b16 %v1190
      %v1353 = vunpack.c.l.b16 %v1191
      %v1354 = vunpack.c.h.b16 %v1191
      %v1355 = vunpack.c.l.b16 %v1192
      %v1356 = vunpack.c.h.b16 %v1192
      %v1357 = vunpack.c.l.b16 %v1193
      %v1358 = vunpack.c.h.b16 %v1193
      %v1359 = vunpack.c.l.b16 %v1194
      %v1360 = vunpack.c.h.b16 %v1194
      %v1361 = vunpack.c.l.b16 %v1195
      %v1362 = vunpack.c.h.b16 %v1195
      %v1363 = vunpack.c.l.b16 %v1196
      %v1364 = vunpack.c.h.b16 %v1196
      %v1365 = vunpack.c.l.b16 %v1197
      %v1366 = vunpack.c.h.b16 %v1197
      %v1367 = vunpack.c.l.b16 %v1198
      %v1368 = vunpack.c.h.b16 %v1198
      %v1369 = vunpack.c.l.b16 %v1199
      %v1370 = vunpack.c.h.b16 %v1199
      %v1371 = vunpack.c.l.b16 %v1200
      %v1372 = vunpack.c.h.b16 %v1200
      %v1373 = vunpack.c.l.b16 %v1201
      %v1374 = vunpack.c.h.b16 %v1201
      %v1375 = vunpack.c.l.b16 %v1202
      %v1376 = vunpack.c.h.b16 %v1202
      %v1377 = vunpack.c.l.b16 %v1203
      %v1378 = vunpack.c.h.b16 %v1203
      %v1379 = vunpack.c.l.b16 %v1204
      %v1380 = vunpack.c.h.b16 %v1204
      %v1381 = vunpack.c.l.b16 %v1205
      %v1382 = vunpack.c.h.b16 %v1205
      %v1383 = vunpack.c.l.b16 %v1206
      %v1384 = vunpack.c.h.b16 %v1206
      %v1385 = vunpack.c.l.b16 %v1207
      %v1386 = vunpack.c.h.b16 %v1207
      %v1387 = vunpack.c.l.b16 %v1208
      %v1388 = vunpack.c.h.b16 %v1208
      %v1389 = vunpack.c.l.b16 %v1209
      %v1390 = vunpack.c.h.b16 %v1209
      %v1391 = vunpack.c.l.b16 %v1210
      %v1392 = vunpack.c.h.b16 %v1210
      %v1393 = vunpack.c.l.b16 %v1211
      %v1394 = vunpack.c.h.b16 %v1211
      %v1395 = vunpack.c.l.b16 %v1212
      %v1396 = vunpack.c.h.b16 %v1212
      %v1397 = vunpack.c.l.b16 %v1213
      %v1398 = vunpack.c.h.b16 %v1213
      %v1399 = vunpack.c.l.b16 %v1214
      %v1400 = vunpack.c.h.b16 %v1214
      %v1401 = vunpack.c.l.b16 %v1215
      %v1402 = vunpack.c.h.b16 %v1215
      %v1403 = vunpack.c.l.b16 %v1216
      %v1404 = vunpack.c.h.b16 %v1216
      %v1405 = vunpack.c.l.b16 %v1217
      %v1406 = vunpack.c.h.b16 %v1217
      %v1407 = vunpack.c.l.b16 %v1218
      %v1408 = vunpack.c.h.b16 %v1218
      %v1409 = vunpack.c.l.b16 %v1219
      %v1410 = vunpack.c.h.b16 %v1219
      %v1411 = vunpack.c.l.b16 %v1220
      %v1412 = vunpack.c.h.b16 %v1220
      %v1413 = vunpack.c.l.b16 %v1221
      %v1414 = vunpack.c.h.b16 %v1221
      %v1415 = vunpack.c.l.b16 %v1222
      %v1416 = vunpack.c.h.b16 %v1222
      %v1417 = vunpack.c.l.b16 %v1223
      %v1418 = vunpack.c.h.b16 %v1223
      %v1419 = vunpack.c.l.b16 %v1224
      %v1420 = vunpack.c.h.b16 %v1224
      %v1421 = vunpack.c.l.b16 %v1225
      %v1422 = vunpack.c.h.b16 %v1225
      %v1423 = vunpack.c.l.b16 %v1226
      %v1424 = vunpack.c.h.b16 %v1226
      %v1425 = vunpack.c.l.b16 %v1227
      %v1426 = vunpack.c.h.b16 %v1227
      %v1427 = vunpack.c.l.b16 %v1228
      %v1428 = vunpack.c.h.b16 %v1228
      %v1429 = vunpack.c.l.b16 %v1229
      %v1430 = vunpack.c.h.b16 %v1229
      %v1431 = vunpack.c.l.b16 %v1230
      %v1432 = vunpack.c.h.b16 %v1230
      %v1433 = vunpack.c.l.b16 %v1231
      %v1434 = vunpack.c.h.b16 %v1231
      %v1435 = vunpack.c.l.b16 %v1232
      %v1436 = vunpack.c.h.b16 %v1232
      %v1437 = vunpack.c.l.b16 %v1233
      %v1438 = vunpack.c.h.b16 %v1233
      %v1439 = vunpack.c.l.b16 %v1234
      %v1440 = vunpack.c.h.b16 %v1234
      %v1441 = vunpack.c.l.b16 %v1235
      %v1442 = vunpack.c.h.b16 %v1235
      %v1443 = vunpack.c.l.b16 %v1236
      %v1444 = vunpack.c.h.b16 %v1236
      %v1445 = vunpack.c.l.b16 %v1237
      %v1446 = vunpack.c.h.b16 %v1237
      %v1447 = vunpack.c.l.b16 %v1238
      %v1448 = vunpack.c.h.b16 %v1238
      %v1449 = vunpack.c.l.b16 %v1239
      %v1450 = vunpack.c.h.b16 %v1239
      %v1451 = vunpack.c.l.b16 %v1240
      %v1452 = vunpack.c.h.b16 %v1240
      %v1453 = vunpack.c.l.b16 %v1241
      %v1454 = vunpack.c.h.b16 %v1241
      %v1455 = vunpack.c.l.b16 %v1242
      %v1456 = vunpack.c.h.b16 %v1242
      %v1457 = vunpack.c.l.b16 %v1243
      %v1458 = vunpack.c.h.b16 %v1243
      %v1459 = vunpack.c.l.b16 %v1244
      %v1460 = vunpack.c.h.b16 %v1244
      %v1461 = vunpack.c.l.b16 %v1245
      %v1462 = vunpack.c.h.b16 %v1245
      %v1463 = vunpack.c.l.b16 %v1246
      %v1464 = vunpack.c.h.b16 %v1246
      %v1465 = vunpack.c.l.b16 %v1247
      %v1466 = vunpack.c.h.b16 %v1247
      %v1467 = vpack.c.b16 %v1343, %v1339
      %v1468 = vpack.c.b16 %v1344, %v1340
      %v1469 = vpack.c.b16 %v1345, %v1341
      %v1470 = vpack.c.b16 %v1346, %v1342
      %v1471 = vpack.c.b16 %v1351, %v1347
      %v1472 = vpack.c.b16 %v1352, %v1348
      %v1473 = vpack.c.b16 %v1353, %v1349
      %v1474 = vpack.c.b16 %v1354, %v1350
      %v1475 = vpack.c.b16 %v1359, %v1355
      %v1476 = vpack.c.b16 %v1360, %v1356
      %v1477 = vpack.c.b16 %v1361, %v1357
      %v1478 = vpack.c.b16 %v1362, %v1358
      %v1479 = vpack.c.b16 %v1367, %v1363
      %v1480 = vpack.c.b16 %v1368, %v1364
      %v1481 = vpack.c.b16 %v1369, %v1365
      %v1482 = vpack.c.b16 %v1370, %v1366
      %v1483 = vpack.c.b16 %v1375, %v1371
      %v1484 = vpack.c.b16 %v1376, %v1372
      %v1485 = vpack.c.b16 %v1377, %v1373
      %v1486 = vpack.c.b16 %v1378, %v1374
      %v1487 = vpack.c.b16 %v1383, %v1379
      %v1488 = vpack.c.b16 %v1384, %v1380
      %v1489 = vpack.c.b16 %v1385, %v1381
      %v1490 = vpack.c.b16 %v1386, %v1382
      %v1491 = vpack.c.b16 %v1391, %v1387
      %v1492 = vpack.c.b16 %v1392, %v1388
      %v1493 = vpack.c.b16 %v1393, %v1389
      %v1494 = vpack.c.b16 %v1394, %v1390
      %v1495 = vpack.c.b16 %v1399, %v1395
      %v1496 = vpack.c.b16 %v1400, %v1396
      %v1497 = vpack.c.b16 %v1401, %v1397
      %v1498 = vpack.c.b16 %v1402, %v1398
      %v1499 = vpack.c.b16 %v1407, %v1403
      %v1500 = vpack.c.b16 %v1408, %v1404
      %v1501 = vpack.c.b16 %v1409, %v1405
      %v1502 = vpack.c.b16 %v1410, %v1406
      %v1503 = vpack.c.b16 %v1415, %v1411
      %v1504 = vpack.c.b16 %v1416, %v1412
      %v1505 = vpack.c.b16 %v1417, %v1413
      %v1506 = vpack.c.b16 %v1418, %v1414
      %v1507 = vpack.c.b16 %v1423, %v1419
      %v1508 = vpack.c.b16 %v1424, %v1420
      %v1509 = vpack.c.b16 %v1425, %v1421
      %v1510 = vpack.c.b16 %v1426, %v1422
      %v1511 = vpack.c.b16 %v1431, %v1427
      %v1512 = vpack.c.b16 %v1432, %v1428
      %v1513 = vpack.c.b16 %v1433, %v1429
      %v1514 = vpack.c.b16 %v1434, %v1430
      %v1515 = vpack.c.b16 %v1439, %v1435
      %v1516 = vpack.c.b16 %v1440, %v1436
      %v1517 = vpack.c.b16 %v1441, %v1437
      %v1518 = vpack.c.b16 %v1442, %v1438
      %v1519 = vpack.c.b16 %v1447, %v1443
      %v1520 = vpack.c.b16 %v1448, %v1444
      %v1521 = vpack.c.b16 %v1449, %v1445
      %v1522 = vpack.c.b16 %v1450, %v1446
      %v1523 = vpack.c.b16 %v1455, %v1451
      %v1524 = vpack.c.b16 %v1456, %v1452
      %v1525 = vpack.c.b16 %v1457, %v1453
      %v1526 = vpack.c.b16 %v1458, %v1454
      %v1527 = vpack.c.b16 %v1463, %v1459
      %v1528 = vpack.c.b16 %v1464, %v1460
      %v1529 = vpack.c.b16 %v1465, %v1461
      %v1530 = vpack.c.b16 %v1466, %v1462
      %1595 = vmatprep.subr.bf16.mxu0 %v1496
      %1596 = vmatpush1.bf16.msra.mxu0 %v1495
      %1597 = vmatprep.subr.bf16.mxu0 %v1492
      %1598 = vmatpush1.bf16.msra.mxu0 %v1491
      %1599 = vmatprep.subr.bf16.mxu0 %v1488
      %1600 = vmatpush1.bf16.msra.mxu0 %v1487
      %1601 = vmatprep.subr.bf16.mxu0 %v1484
      %1602 = vmatpush1.bf16.msra.mxu0 %v1483
      %1603 = vmatprep.subr.bf16.mxu0 %v1480
      %1604 = vmatpush1.bf16.msra.mxu0 %v1479
      %1605 = vmatprep.subr.bf16.mxu0 %v1476
      %1606 = vmatpush1.bf16.msra.mxu0 %v1475
      %1607 = vmatprep.subr.bf16.mxu0 %v1472
      %1608 = vmatpush1.bf16.msra.mxu0 %v1471
      %1609 = vmatprep.subr.bf16.mxu0 %v1468
      %1610 = vmatpush1.bf16.msra.mxu0 %v1467
      %1611 = vmatprep.subr.bf16.mxu0 %v1528
      %1612 = vmatpush2.bf16.msra.mxu0 %v1527
      %1613 = vmatprep.subr.bf16.mxu0 %v1524
      %1614 = vmatpush2.bf16.msra.mxu0 %v1523
      %1615 = vmatprep.subr.bf16.mxu0 %v1520
      %1616 = vmatpush2.bf16.msra.mxu0 %v1519
      %1617 = vmatprep.subr.bf16.mxu0 %v1516
      %1618 = vmatpush2.bf16.msra.mxu0 %v1515
      %1619 = vmatprep.subr.bf16.mxu0 %v1512
      %1620 = vmatpush2.bf16.msra.mxu0 %v1511
      %1621 = vmatprep.subr.bf16.mxu0 %v1508
      %1622 = vmatpush2.bf16.msra.mxu0 %v1507
      %1623 = vmatprep.subr.bf16.mxu0 %v1504
      %1624 = vmatpush2.bf16.msra.mxu0 %v1503
      %1625 = vmatprep.subr.bf16.mxu0 %v1500
      %1626 = vmatpush2.bf16.msra.mxu0 %v1499
      %1627 = vmatprep.mubr.bf16.mxu0 %v1272
      %1628 = vmatmul.mubr.bf16.gmra.mxu0 %v1260
      %v1629 = vpop.f32.mrf.mxu0
      %v1630 = vadd.f32 0.0, %v1629
      %v1631 = vpop.f32.mrf.mxu0
      %v1632 = vadd.f32 0.0, %v1631
      %v1633 = vpop.f32.mrf.mxu0
      %v1634 = vadd.f32 0.0, %v1633
      %v1635 = vpop.f32.mrf.mxu0
      %v1636 = vadd.f32 0.0, %v1635
      %1637 = vdwg.mxu0
      %1638 = vmatprep.subr.bf16.mxu0 %v1498
      %1639 = vmatpush1.bf16.msra.mxu0 %v1497
      %1640 = vmatprep.subr.bf16.mxu0 %v1494
      %1641 = vmatpush1.bf16.msra.mxu0 %v1493
      %1642 = vmatprep.subr.bf16.mxu0 %v1490
      %1643 = vmatpush1.bf16.msra.mxu0 %v1489
      %1644 = vmatprep.subr.bf16.mxu0 %v1486
      %1645 = vmatpush1.bf16.msra.mxu0 %v1485
      %1646 = vmatprep.subr.bf16.mxu0 %v1482
      %1647 = vmatpush1.bf16.msra.mxu0 %v1481
      %1648 = vmatprep.subr.bf16.mxu0 %v1478
      %1649 = vmatpush1.bf16.msra.mxu0 %v1477
      %1650 = vmatprep.subr.bf16.mxu0 %v1474
      %1651 = vmatpush1.bf16.msra.mxu0 %v1473
      %1652 = vmatprep.subr.bf16.mxu0 %v1470
      %1653 = vmatpush1.bf16.msra.mxu0 %v1469
      %1654 = vmatprep.subr.bf16.mxu0 %v1530
      %1655 = vmatpush2.bf16.msra.mxu0 %v1529
      %1656 = vmatprep.subr.bf16.mxu0 %v1526
      %1657 = vmatpush2.bf16.msra.mxu0 %v1525
      %1658 = vmatprep.subr.bf16.mxu0 %v1522
      %1659 = vmatpush2.bf16.msra.mxu0 %v1521
      %1660 = vmatprep.subr.bf16.mxu0 %v1518
      %1661 = vmatpush2.bf16.msra.mxu0 %v1517
      %1662 = vmatprep.subr.bf16.mxu0 %v1514
      %1663 = vmatpush2.bf16.msra.mxu0 %v1513
      %1664 = vmatprep.subr.bf16.mxu0 %v1510
      %1665 = vmatpush2.bf16.msra.mxu0 %v1509
      %1666 = vmatprep.subr.bf16.mxu0 %v1506
      %1667 = vmatpush2.bf16.msra.mxu0 %v1505
      %1668 = vmatprep.subr.bf16.mxu0 %v1502
      %1669 = vmatpush2.bf16.msra.mxu0 %v1501
      %1670 = vmatprep.mubr.bf16.mxu0 %v1272
      %1671 = vmatmul.mubr.bf16.gmra.mxu0 %v1260
      %v1672 = vpop.f32.mrf.mxu0
      %v1673 = vadd.f32 0.0, %v1672
      %v1674 = vpop.f32.mrf.mxu0
      %v1675 = vadd.f32 0.0, %v1674
      %v1676 = vpop.f32.mrf.mxu0
      %v1677 = vadd.f32 0.0, %v1676
      %v1678 = vpop.f32.mrf.mxu0
      %v1679 = vadd.f32 0.0, %v1678
      %1680 = vdwg.mxu0
      %v1681 = vadd.f32 %v1175, %v1630
      %v1682 = vadd.f32 %v1176, %v1632
      %v1683 = vadd.f32 %v1177, %v1673
      %v1684 = vadd.f32 %v1178, %v1675
      %v1685 = vadd.f32 %v1179, %v1634
      %v1686 = vadd.f32 %v1180, %v1636
      %v1687 = vadd.f32 %v1181, %v1677
      %v1688 = vadd.f32 %v1182, %v1679
      %s1689 = scalar_lea.vmem %s1, 1024
      %v1690 = vld [vmem:[%s1689] sm:$0xff]
      %v1691 = vld [vmem:[%s1689 + $0x8] sm:$0xff]
      %v1692 = vld [vmem:[%s1689 + $0x10] sm:$0xff]
      %v1693 = vld [vmem:[%s1689 + $0x18] sm:$0xff]
      %v1694 = vld [vmem:[%s1689 + $0x20] sm:$0xff]
      %v1695 = vld [vmem:[%s1689 + $0x28] sm:$0xff]
      %v1696 = vld [vmem:[%s1689 + $0x30] sm:$0xff]
      %v1697 = vld [vmem:[%s1689 + $0x38] sm:$0xff]
      %v1698 = vld [vmem:[%s1689 + $0x40] sm:$0xff]
      %v1699 = vld [vmem:[%s1689 + $0x48] sm:$0xff]
      %v1700 = vld [vmem:[%s1689 + $0x50] sm:$0xff]
      %v1701 = vld [vmem:[%s1689 + $0x58] sm:$0xff]
      %v1702 = vld [vmem:[%s1689 + $0x60] sm:$0xff]
      %v1703 = vld [vmem:[%s1689 + $0x68] sm:$0xff]
      %v1704 = vld [vmem:[%s1689 + $0x70] sm:$0xff]
      %v1705 = vld [vmem:[%s1689 + $0x78] sm:$0xff]
      %v1706 = vld [vmem:[%s1689 + $0x80] sm:$0xff]
      %v1707 = vld [vmem:[%s1689 + $0x88] sm:$0xff]
      %v1708 = vld [vmem:[%s1689 + $0x90] sm:$0xff]
      %v1709 = vld [vmem:[%s1689 + $0x98] sm:$0xff]
      %v1710 = vld [vmem:[%s1689 + $0xa0] sm:$0xff]
      %v1711 = vld [vmem:[%s1689 + $0xa8] sm:$0xff]
      %v1712 = vld [vmem:[%s1689 + $0xb0] sm:$0xff]
      %v1713 = vld [vmem:[%s1689 + $0xb8] sm:$0xff]
      %v1714 = vld [vmem:[%s1689 + $0xc0] sm:$0xff]
      %v1715 = vld [vmem:[%s1689 + $0xc8] sm:$0xff]
      %v1716 = vld [vmem:[%s1689 + $0xd0] sm:$0xff]
      %v1717 = vld [vmem:[%s1689 + $0xd8] sm:$0xff]
      %v1718 = vld [vmem:[%s1689 + $0xe0] sm:$0xff]
      %v1719 = vld [vmem:[%s1689 + $0xe8] sm:$0xff]
      %v1720 = vld [vmem:[%s1689 + $0xf0] sm:$0xff]
      %v1721 = vld [vmem:[%s1689 + $0xf8] sm:$0xff]
      %v1722 = vld [vmem:[%s1689 + $0x100] sm:$0xff]
      %v1723 = vld [vmem:[%s1689 + $0x108] sm:$0xff]
      %v1724 = vld [vmem:[%s1689 + $0x110] sm:$0xff]
      %v1725 = vld [vmem:[%s1689 + $0x118] sm:$0xff]
      %v1726 = vld [vmem:[%s1689 + $0x120] sm:$0xff]
      %v1727 = vld [vmem:[%s1689 + $0x128] sm:$0xff]
      %v1728 = vld [vmem:[%s1689 + $0x130] sm:$0xff]
      %v1729 = vld [vmem:[%s1689 + $0x138] sm:$0xff]
      %v1730 = vld [vmem:[%s1689 + $0x140] sm:$0xff]
      %v1731 = vld [vmem:[%s1689 + $0x148] sm:$0xff]
      %v1732 = vld [vmem:[%s1689 + $0x150] sm:$0xff]
      %v1733 = vld [vmem:[%s1689 + $0x158] sm:$0xff]
      %v1734 = vld [vmem:[%s1689 + $0x160] sm:$0xff]
      %v1735 = vld [vmem:[%s1689 + $0x168] sm:$0xff]
      %v1736 = vld [vmem:[%s1689 + $0x170] sm:$0xff]
      %v1737 = vld [vmem:[%s1689 + $0x178] sm:$0xff]
      %v1738 = vld [vmem:[%s1689 + $0x180] sm:$0xff]
      %v1739 = vld [vmem:[%s1689 + $0x188] sm:$0xff]
      %v1740 = vld [vmem:[%s1689 + $0x190] sm:$0xff]
      %v1741 = vld [vmem:[%s1689 + $0x198] sm:$0xff]
      %v1742 = vld [vmem:[%s1689 + $0x1a0] sm:$0xff]
      %v1743 = vld [vmem:[%s1689 + $0x1a8] sm:$0xff]
      %v1744 = vld [vmem:[%s1689 + $0x1b0] sm:$0xff]
      %v1745 = vld [vmem:[%s1689 + $0x1b8] sm:$0xff]
      %v1746 = vld [vmem:[%s1689 + $0x1c0] sm:$0xff]
      %v1747 = vld [vmem:[%s1689 + $0x1c8] sm:$0xff]
      %v1748 = vld [vmem:[%s1689 + $0x1d0] sm:$0xff]
      %v1749 = vld [vmem:[%s1689 + $0x1d8] sm:$0xff]
      %v1750 = vld [vmem:[%s1689 + $0x1e0] sm:$0xff]
      %v1751 = vld [vmem:[%s1689 + $0x1e8] sm:$0xff]
      %v1752 = vld [vmem:[%s1689 + $0x1f0] sm:$0xff]
      %v1753 = vld [vmem:[%s1689 + $0x1f8] sm:$0xff]
      %vm1758 = vcmask 1046528
      %v1759 = vrot.slane %v680, 1
      %v1760 = vrot.slane %v682, 1
      %v1761 = vsel %vm1758, %v1759, %v1760
      %v1762 = vrot.slane %v681, 1
      %v1763 = vrot.slane %v683, 1
      %v1764 = vsel %vm1758, %v1762, %v1763
      %v1831 = vunpack.c.l.b16 %v1690
      %v1832 = vunpack.c.h.b16 %v1690
      %v1833 = vunpack.c.l.b16 %v1691
      %v1834 = vunpack.c.h.b16 %v1691
      %v1835 = vunpack.c.l.b16 %v1692
      %v1836 = vunpack.c.h.b16 %v1692
      %v1837 = vunpack.c.l.b16 %v1693
      %v1838 = vunpack.c.h.b16 %v1693
      %v1839 = vunpack.c.l.b16 %v1694
      %v1840 = vunpack.c.h.b16 %v1694
      %v1841 = vunpack.c.l.b16 %v1695
      %v1842 = vunpack.c.h.b16 %v1695
      %v1843 = vunpack.c.l.b16 %v1696
      %v1844 = vunpack.c.h.b16 %v1696
      %v1845 = vunpack.c.l.b16 %v1697
      %v1846 = vunpack.c.h.b16 %v1697
      %v1847 = vunpack.c.l.b16 %v1698
      %v1848 = vunpack.c.h.b16 %v1698
      %v1849 = vunpack.c.l.b16 %v1699
      %v1850 = vunpack.c.h.b16 %v1699
      %v1851 = vunpack.c.l.b16 %v1700
      %v1852 = vunpack.c.h.b16 %v1700
      %v1853 = vunpack.c.l.b16 %v1701
      %v1854 = vunpack.c.h.b16 %v1701
      %v1855 = vunpack.c.l.b16 %v1702
      %v1856 = vunpack.c.h.b16 %v1702
      %v1857 = vunpack.c.l.b16 %v1703
      %v1858 = vunpack.c.h.b16 %v1703
      %v1859 = vunpack.c.l.b16 %v1704
      %v1860 = vunpack.c.h.b16 %v1704
      %v1861 = vunpack.c.l.b16 %v1705
      %v1862 = vunpack.c.h.b16 %v1705
      %v1863 = vunpack.c.l.b16 %v1706
      %v1864 = vunpack.c.h.b16 %v1706
      %v1865 = vunpack.c.l.b16 %v1707
      %v1866 = vunpack.c.h.b16 %v1707
      %v1867 = vunpack.c.l.b16 %v1708
      %v1868 = vunpack.c.h.b16 %v1708
      %v1869 = vunpack.c.l.b16 %v1709
      %v1870 = vunpack.c.h.b16 %v1709
      %v1871 = vunpack.c.l.b16 %v1710
      %v1872 = vunpack.c.h.b16 %v1710
      %v1873 = vunpack.c.l.b16 %v1711
      %v1874 = vunpack.c.h.b16 %v1711
      %v1875 = vunpack.c.l.b16 %v1712
      %v1876 = vunpack.c.h.b16 %v1712
      %v1877 = vunpack.c.l.b16 %v1713
      %v1878 = vunpack.c.h.b16 %v1713
      %v1879 = vunpack.c.l.b16 %v1714
      %v1880 = vunpack.c.h.b16 %v1714
      %v1881 = vunpack.c.l.b16 %v1715
      %v1882 = vunpack.c.h.b16 %v1715
      %v1883 = vunpack.c.l.b16 %v1716
      %v1884 = vunpack.c.h.b16 %v1716
      %v1885 = vunpack.c.l.b16 %v1717
      %v1886 = vunpack.c.h.b16 %v1717
      %v1887 = vunpack.c.l.b16 %v1718
      %v1888 = vunpack.c.h.b16 %v1718
      %v1889 = vunpack.c.l.b16 %v1719
      %v1890 = vunpack.c.h.b16 %v1719
      %v1891 = vunpack.c.l.b16 %v1720
      %v1892 = vunpack.c.h.b16 %v1720
      %v1893 = vunpack.c.l.b16 %v1721
      %v1894 = vunpack.c.h.b16 %v1721
      %v1895 = vunpack.c.l.b16 %v1722
      %v1896 = vunpack.c.h.b16 %v1722
      %v1897 = vunpack.c.l.b16 %v1723
      %v1898 = vunpack.c.h.b16 %v1723
      %v1899 = vunpack.c.l.b16 %v1724
      %v1900 = vunpack.c.h.b16 %v1724
      %v1901 = vunpack.c.l.b16 %v1725
      %v1902 = vunpack.c.h.b16 %v1725
      %v1903 = vunpack.c.l.b16 %v1726
      %v1904 = vunpack.c.h.b16 %v1726
      %v1905 = vunpack.c.l.b16 %v1727
      %v1906 = vunpack.c.h.b16 %v1727
      %v1907 = vunpack.c.l.b16 %v1728
      %v1908 = vunpack.c.h.b16 %v1728
      %v1909 = vunpack.c.l.b16 %v1729
      %v1910 = vunpack.c.h.b16 %v1729
      %v1911 = vunpack.c.l.b16 %v1730
      %v1912 = vunpack.c.h.b16 %v1730
      %v1913 = vunpack.c.l.b16 %v1731
      %v1914 = vunpack.c.h.b16 %v1731
      %v1915 = vunpack.c.l.b16 %v1732
      %v1916 = vunpack.c.h.b16 %v1732
      %v1917 = vunpack.c.l.b16 %v1733
      %v1918 = vunpack.c.h.b16 %v1733
      %v1919 = vunpack.c.l.b16 %v1734
      %v1920 = vunpack.c.h.b16 %v1734
      %v1921 = vunpack.c.l.b16 %v1735
      %v1922 = vunpack.c.h.b16 %v1735
      %v1923 = vunpack.c.l.b16 %v1736
      %v1924 = vunpack.c.h.b16 %v1736
      %v1925 = vunpack.c.l.b16 %v1737
      %v1926 = vunpack.c.h.b16 %v1737
      %v1927 = vunpack.c.l.b16 %v1738
      %v1928 = vunpack.c.h.b16 %v1738
      %v1929 = vunpack.c.l.b16 %v1739
      %v1930 = vunpack.c.h.b16 %v1739
      %v1931 = vunpack.c.l.b16 %v1740
      %v1932 = vunpack.c.h.b16 %v1740
      %v1933 = vunpack.c.l.b16 %v1741
      %v1934 = vunpack.c.h.b16 %v1741
      %v1935 = vunpack.c.l.b16 %v1742
      %v1936 = vunpack.c.h.b16 %v1742
      %v1937 = vunpack.c.l.b16 %v1743
      %v1938 = vunpack.c.h.b16 %v1743
      %v1939 = vunpack.c.l.b16 %v1744
      %v1940 = vunpack.c.h.b16 %v1744
      %v1941 = vunpack.c.l.b16 %v1745
      %v1942 = vunpack.c.h.b16 %v1745
      %v1943 = vunpack.c.l.b16 %v1746
      %v1944 = vunpack.c.h.b16 %v1746
      %v1945 = vunpack.c.l.b16 %v1747
      %v1946 = vunpack.c.h.b16 %v1747
      %v1947 = vunpack.c.l.b16 %v1748
      %v1948 = vunpack.c.h.b16 %v1748
      %v1949 = vunpack.c.l.b16 %v1749
      %v1950 = vunpack.c.h.b16 %v1749
      %v1951 = vunpack.c.l.b16 %v1750
      %v1952 = vunpack.c.h.b16 %v1750
      %v1953 = vunpack.c.l.b16 %v1751
      %v1954 = vunpack.c.h.b16 %v1751
      %v1955 = vunpack.c.l.b16 %v1752
      %v1956 = vunpack.c.h.b16 %v1752
      %v1957 = vunpack.c.l.b16 %v1753
      %v1958 = vunpack.c.h.b16 %v1753
      %v1959 = vpack.c.b16 %v1835, %v1831
      %v1960 = vpack.c.b16 %v1836, %v1832
      %v1961 = vpack.c.b16 %v1837, %v1833
      %v1962 = vpack.c.b16 %v1838, %v1834
      %v1963 = vpack.c.b16 %v1843, %v1839
      %v1964 = vpack.c.b16 %v1844, %v1840
      %v1965 = vpack.c.b16 %v1845, %v1841
      %v1966 = vpack.c.b16 %v1846, %v1842
      %v1967 = vpack.c.b16 %v1851, %v1847
      %v1968 = vpack.c.b16 %v1852, %v1848
      %v1969 = vpack.c.b16 %v1853, %v1849
      %v1970 = vpack.c.b16 %v1854, %v1850
      %v1971 = vpack.c.b16 %v1859, %v1855
      %v1972 = vpack.c.b16 %v1860, %v1856
      %v1973 = vpack.c.b16 %v1861, %v1857
      %v1974 = vpack.c.b16 %v1862, %v1858
      %v1975 = vpack.c.b16 %v1867, %v1863
      %v1976 = vpack.c.b16 %v1868, %v1864
      %v1977 = vpack.c.b16 %v1869, %v1865
      %v1978 = vpack.c.b16 %v1870, %v1866
      %v1979 = vpack.c.b16 %v1875, %v1871
      %v1980 = vpack.c.b16 %v1876, %v1872
      %v1981 = vpack.c.b16 %v1877, %v1873
      %v1982 = vpack.c.b16 %v1878, %v1874
      %v1983 = vpack.c.b16 %v1883, %v1879
      %v1984 = vpack.c.b16 %v1884, %v1880
      %v1985 = vpack.c.b16 %v1885, %v1881
      %v1986 = vpack.c.b16 %v1886, %v1882
      %v1987 = vpack.c.b16 %v1891, %v1887
      %v1988 = vpack.c.b16 %v1892, %v1888
      %v1989 = vpack.c.b16 %v1893, %v1889
      %v1990 = vpack.c.b16 %v1894, %v1890
      %v1991 = vpack.c.b16 %v1899, %v1895
      %v1992 = vpack.c.b16 %v1900, %v1896
      %v1993 = vpack.c.b16 %v1901, %v1897
      %v1994 = vpack.c.b16 %v1902, %v1898
      %v1995 = vpack.c.b16 %v1907, %v1903
      %v1996 = vpack.c.b16 %v1908, %v1904
      %v1997 = vpack.c.b16 %v1909, %v1905
      %v1998 = vpack.c.b16 %v1910, %v1906
      %v1999 = vpack.c.b16 %v1915, %v1911
      %v2000 = vpack.c.b16 %v1916, %v1912
      %v2001 = vpack.c.b16 %v1917, %v1913
      %v2002 = vpack.c.b16 %v1918, %v1914
      %v2003 = vpack.c.b16 %v1923, %v1919
      %v2004 = vpack.c.b16 %v1924, %v1920
      %v2005 = vpack.c.b16 %v1925, %v1921
      %v2006 = vpack.c.b16 %v1926, %v1922
      %v2007 = vpack.c.b16 %v1931, %v1927
      %v2008 = vpack.c.b16 %v1932, %v1928
      %v2009 = vpack.c.b16 %v1933, %v1929
      %v2010 = vpack.c.b16 %v1934, %v1930
      %v2011 = vpack.c.b16 %v1939, %v1935
      %v2012 = vpack.c.b16 %v1940, %v1936
      %v2013 = vpack.c.b16 %v1941, %v1937
      %v2014 = vpack.c.b16 %v1942, %v1938
      %v2015 = vpack.c.b16 %v1947, %v1943
      %v2016 = vpack.c.b16 %v1948, %v1944
      %v2017 = vpack.c.b16 %v1949, %v1945
      %v2018 = vpack.c.b16 %v1950, %v1946
      %v2019 = vpack.c.b16 %v1955, %v1951
      %v2020 = vpack.c.b16 %v1956, %v1952
      %v2021 = vpack.c.b16 %v1957, %v1953
      %v2022 = vpack.c.b16 %v1958, %v1954
      %2087 = vmatprep.subr.bf16.mxu0 %v1988
      %2088 = vmatpush1.bf16.msra.mxu0 %v1987
      %2089 = vmatprep.subr.bf16.mxu0 %v1984
      %2090 = vmatpush1.bf16.msra.mxu0 %v1983
      %2091 = vmatprep.subr.bf16.mxu0 %v1980
      %2092 = vmatpush1.bf16.msra.mxu0 %v1979
      %2093 = vmatprep.subr.bf16.mxu0 %v1976
      %2094 = vmatpush1.bf16.msra.mxu0 %v1975
      %2095 = vmatprep.subr.bf16.mxu0 %v1972
      %2096 = vmatpush1.bf16.msra.mxu0 %v1971
      %2097 = vmatprep.subr.bf16.mxu0 %v1968
      %2098 = vmatpush1.bf16.msra.mxu0 %v1967
      %2099 = vmatprep.subr.bf16.mxu0 %v1964
      %2100 = vmatpush1.bf16.msra.mxu0 %v1963
      %2101 = vmatprep.subr.bf16.mxu0 %v1960
      %2102 = vmatpush1.bf16.msra.mxu0 %v1959
      %2103 = vmatprep.subr.bf16.mxu0 %v2020
      %2104 = vmatpush2.bf16.msra.mxu0 %v2019
      %2105 = vmatprep.subr.bf16.mxu0 %v2016
      %2106 = vmatpush2.bf16.msra.mxu0 %v2015
      %2107 = vmatprep.subr.bf16.mxu0 %v2012
      %2108 = vmatpush2.bf16.msra.mxu0 %v2011
      %2109 = vmatprep.subr.bf16.mxu0 %v2008
      %2110 = vmatpush2.bf16.msra.mxu0 %v2007
      %2111 = vmatprep.subr.bf16.mxu0 %v2004
      %2112 = vmatpush2.bf16.msra.mxu0 %v2003
      %2113 = vmatprep.subr.bf16.mxu0 %v2000
      %2114 = vmatpush2.bf16.msra.mxu0 %v1999
      %2115 = vmatprep.subr.bf16.mxu0 %v1996
      %2116 = vmatpush2.bf16.msra.mxu0 %v1995
      %2117 = vmatprep.subr.bf16.mxu0 %v1992
      %2118 = vmatpush2.bf16.msra.mxu0 %v1991
      %2119 = vmatprep.mubr.bf16.mxu0 %v1764
      %2120 = vmatmul.mubr.bf16.gmra.mxu0 %v1761
      %v2121 = vpop.f32.mrf.mxu0
      %v2122 = vadd.f32 0.0, %v2121
      %v2123 = vpop.f32.mrf.mxu0
      %v2124 = vadd.f32 0.0, %v2123
      %v2125 = vpop.f32.mrf.mxu0
      %v2126 = vadd.f32 0.0, %v2125
      %v2127 = vpop.f32.mrf.mxu0
      %v2128 = vadd.f32 0.0, %v2127
      %2129 = vdwg.mxu0
      %2130 = vmatprep.subr.bf16.mxu0 %v1990
      %2131 = vmatpush1.bf16.msra.mxu0 %v1989
      %2132 = vmatprep.subr.bf16.mxu0 %v1986
      %2133 = vmatpush1.bf16.msra.mxu0 %v1985
      %2134 = vmatprep.subr.bf16.mxu0 %v1982
      %2135 = vmatpush1.bf16.msra.mxu0 %v1981
      %2136 = vmatprep.subr.bf16.mxu0 %v1978
      %2137 = vmatpush1.bf16.msra.mxu0 %v1977
      %2138 = vmatprep.subr.bf16.mxu0 %v1974
      %2139 = vmatpush1.bf16.msra.mxu0 %v1973
      %2140 = vmatprep.subr.bf16.mxu0 %v1970
      %2141 = vmatpush1.bf16.msra.mxu0 %v1969
      %2142 = vmatprep.subr.bf16.mxu0 %v1966
      %2143 = vmatpush1.bf16.msra.mxu0 %v1965
      %2144 = vmatprep.subr.bf16.mxu0 %v1962
      %2145 = vmatpush1.bf16.msra.mxu0 %v1961
      %2146 = vmatprep.subr.bf16.mxu0 %v2022
      %2147 = vmatpush2.bf16.msra.mxu0 %v2021
      %2148 = vmatprep.subr.bf16.mxu0 %v2018
      %2149 = vmatpush2.bf16.msra.mxu0 %v2017
      %2150 = vmatprep.subr.bf16.mxu0 %v2014
      %2151 = vmatpush2.bf16.msra.mxu0 %v2013
      %2152 = vmatprep.subr.bf16.mxu0 %v2010
      %2153 = vmatpush2.bf16.msra.mxu0 %v2009
      %2154 = vmatprep.subr.bf16.mxu0 %v2006
      %2155 = vmatpush2.bf16.msra.mxu0 %v2005
      %2156 = vmatprep.subr.bf16.mxu0 %v2002
      %2157 = vmatpush2.bf16.msra.mxu0 %v2001
      %2158 = vmatprep.subr.bf16.mxu0 %v1998
      %2159 = vmatpush2.bf16.msra.mxu0 %v1997
      %2160 = vmatprep.subr.bf16.mxu0 %v1994
      %2161 = vmatpush2.bf16.msra.mxu0 %v1993
      %2162 = vmatprep.mubr.bf16.mxu0 %v1764
      %2163 = vmatmul.mubr.bf16.gmra.mxu0 %v1761
      %v2164 = vpop.f32.mrf.mxu0
      %v2165 = vadd.f32 0.0, %v2164
      %v2166 = vpop.f32.mrf.mxu0
      %v2167 = vadd.f32 0.0, %v2166
      %v2168 = vpop.f32.mrf.mxu0
      %v2169 = vadd.f32 0.0, %v2168
      %v2170 = vpop.f32.mrf.mxu0
      %v2171 = vadd.f32 0.0, %v2170
      %2172 = vdwg.mxu0
      %v2173 = vadd.f32 %v1681, %v2122
      %v2174 = vadd.f32 %v1682, %v2124
      %v2175 = vadd.f32 %v1683, %v2165
      %v2176 = vadd.f32 %v1684, %v2167
      %v2177 = vadd.f32 %v1685, %v2126
      %v2178 = vadd.f32 %v1686, %v2128
      %v2179 = vadd.f32 %v1687, %v2169
      %v2180 = vadd.f32 %v1688, %v2171
      %v2181 = vmax.f32 %v2173, 0.0
      %v2182 = vmax.f32 %v2174, 0.0
      %v2183 = vmax.f32 %v2175, 0.0
      %v2184 = vmax.f32 %v2176, 0.0
      %v2185 = vmax.f32 %v2177, 0.0
      %v2186 = vmax.f32 %v2178, 0.0
      %v2187 = vmax.f32 %v2179, 0.0
      %v2188 = vmax.f32 %v2180, 0.0
      %v2189 = vpack.c.bf16 %v2185, %v2181
      %v2190 = vpack.c.bf16 %v2186, %v2182
      %v2191 = vpack.c.bf16 %v2187, %v2183
      %v2192 = vpack.c.bf16 %v2188, %v2184
      %v2197 = vunpack.c.l.b16 %v2189
      %v2198 = vunpack.c.l.b16 %v2190
      %v2199 = vunpack.c.l.b16 %v2191
      %v2200 = vunpack.c.l.b16 %v2192
      %v2201 = vunpack.c.h.b16 %v2189
      %v2202 = vunpack.c.h.b16 %v2190
      %v2203 = vunpack.c.h.b16 %v2191
      %v2204 = vunpack.c.h.b16 %v2192
      %v2205 = vpack.c.b16 %v2198, %v2197
      %v2206 = vpack.c.b16 %v2200, %v2199
      %v2207 = vpack.c.b16 %v2202, %v2201
      %v2208 = vpack.c.b16 %v2204, %v2203
      %2213 = vst [vmem:[%s208] sm:$0xff] %v2205
      %2214 = vst [vmem:[%s208 + $0x8] sm:$0xff] %v2206
      %2215 = vst [vmem:[%s208 + $0x10] sm:$0xff] %v2207
      %2216 = vst [vmem:[%s208 + $0x18] sm:$0xff] %v2208
      %s2217 = smul.u32 2, %s19
      %p2218 = scmp.lt.s32.totalorder %s18, 1
      %s2219 = scalar_select %p2218, %s18, 1
      %p2220 = scmp.lt.s32.totalorder %s2217, 1
      %s2221 = scalar_select %p2220, %s2217, 1
      %s2222 = smul.addr %s2221, 4
      %s2223 = smul.addr %s2219, 8
      %s2224 = sadd.s32 %s2222, %s2223
      %s2225 = smul.addr %s2224, 4
      %s2226 = scalar_lea.vmem %s3, %s2225
      // Predicated region
      $region33: #{adaresnet_forward.21} parent=31 // pred_check
        %p2227 = pneg %p116
      $region34: #{adaresnet_forward.21} parent=31 // pred_check_branch
        %2229 = sbr.rel (%p2227) target = $region36
      $region35: #{adaresnet_forward.21} parent=31 // pred_region
        %s2230 = smul.u32 2, %s19
      $region36: #{adaresnet_forward.21} parent=31 // pred_fallthru
        _
    $region32: #{adaresnet_forward.21} parent=5 // pred_fallthru
      _
    %p2231 = scmp.le.s32.totalorder 2, %s9
    // Predicated region
    $region37: #{adaresnet_forward.21} parent=5 // pred_check
      %p2232 = pneg %p2231
    $region38: #{adaresnet_forward.21} parent=5 // pred_check_branch
      %2234 = sbr.rel (%p2232) target = $region40
    $region39: #{adaresnet_forward.21} parent=5 // pred_region
      %s2235 = ssub.s32 %s9, 2
      // Predicated region
      $region41: #{adaresnet_forward.21} parent=39 // pred_check
        %p2236 = pneg %p122
      $region42: #{adaresnet_forward.21} parent=39 // pred_check_branch
        %2238 = sbr.rel (%p2236) target = $region44
      $region43: #{adaresnet_forward.21} parent=39 // pred_region
        %s2239 = smul.u32 2, %s21
        %p2240 = scmp.lt.s32.totalorder %s20, 1
        %s2241 = scalar_select %p2240, %s20, 1
        %p2242 = scmp.lt.s32.totalorder %s2239, 1
        %s2243 = scalar_select %p2242, %s2239, 1
        %s2244 = smul.addr %s2243, 4
        %s2245 = smul.addr %s2241, 8
        %s2246 = sadd.s32 %s2244, %s2245
        %s2247 = smul.addr %s2246, 4
        %s2248 = scalar_lea.vmem %s3, %s2247
      $region44: #{adaresnet_forward.21} parent=39 // pred_fallthru
        _
    $region40: #{adaresnet_forward.21} parent=5 // pred_fallthru
      _
  $region6: #{adaresnet_forward.21} parent=0 // loop_footer
    %s13 = sadd.s32 1, %s9
  $region7: #{adaresnet_forward.21} parent=0 // loop_footer_branch
    %8 = sbr.rel target = $region3
  $region8: #{adaresnet_forward.21} parent=0 // loop_exit
    _

// kernel: adaresnet_forward.22
$region0: #{adaresnet_forward.22}
  #allocation0 [shape = 'u32[]', space=smem, size = 0x4, offset = 0x4, fixed_abs, tag = 'smem constant byte address 0x4 - core index']
  #allocation1 [shape = 'u32[144,128]{1,0:T(1,128)}', space=vmem, size = 0x12000, scoped, tag = 'internal scratch']
  %s0 = inlined_call_operand.vmem [shape: bf16[2,1,18,512], index: 0, kind: input, shape index: {}]
  %s1 = inlined_call_operand.vmem [shape: bf16[3,512,512], index: 1, kind: input, shape index: {}]
  %s2 = inlined_call_operand.vmem [shape: f32[1,512], index: 2, kind: input, shape index: {}]
  %s3 = inlined_call_operand.vmem [shape: bf16[2,16,512], index: 3, kind: output, shape index: {}]
  %s4 = sld [smem:[#allocation0]]
  $region45: #{adaresnet_forward.22} parent=0
    _
  %s6 = ssub.s32 1, %s4
  %s7 = scalar_select 0, %s6, %s4
  loop: start=0, step=1, limit=4
  $region2: #{adaresnet_forward.22} parent=0 // loop_pre_header
    _
  $region3: #{adaresnet_forward.22} parent=0 // loop_header
    %s9 = sphi 0, %s13
    %p10 = scmp.ge.s32.totalorder %s9, 4
    %s16 = sphi 0, %s28
    %s17 = sphi 0, %s24
    %s18 = sphi 0, %s16
    %s19 = sphi 0, %s17
    %s20 = sphi 0, %s18
    %s21 = sphi 0, %s19
    %s33 = sphi 0, %s35
    %s36 = sphi 0, %s33
    %s37 = sphi 0, %s36
    %s53 = sphi 0, %s37
    %s57 = sphi 0, %s57
    %s59 = sphi 0, %s57
    %s60 = sphi 0, %s59
    %s74 = sphi 0, %s60
    %s78 = sphi 0, %s78
    %s80 = sphi 0, %s78
    %s81 = sphi 0, %s80
    %s95 = sphi 0, %s81
    %s103 = sphi 0, %s105
    %s106 = sphi 0, %s103
    %s107 = sphi 0, %s106
    %s123 = sphi 0, %s107
  $region4: #{adaresnet_forward.22} parent=0 // loop_header_branch
    %12 = sbr.rel (%p10) target = $region8
  $region5: #{adaresnet_forward.22} parent=0 // loop_body
    %s14 = ssub.s32 %s9, 1
    %s15 = ssub.s32 %s9, 2
    %s22 = sadd.s32 1, %s17
    %p23 = scmp.ge.s32.totalorder %s22, 1
    %s24 = scalar_select %p23, 0, %s22
    %s25 = sadd.s32 1, %s16
    %s26 = scalar_select %p23, %s25, %s16
    %p27 = scmp.ge.s32.totalorder %s26, 2
    %s28 = scalar_select %p27, 0, %s26
    %s29 = ssub.s32 %s16, %s28
    %s30 = ssub.s32 %s17, %s24
    %s31 = sor.u32 %s29, %s30
    %p32 = scmp.eq.s32.totalorder %s31, 0
    %s34 = sadd.s32 %s33, 1
    %s35 = scalar_select %p32, %s33, %s34
    %p38 = pneg %p32
    %p39 = scmp.eq.s32.totalorder %s9, 1
    %p40 = por %p38, %p39
    %p41 = scmp.ne.s32.totalorder %s33, %s36
    %p42 = scmp.eq.s32.totalorder %s9, 0
    %p43 = por %p41, %p42
    %p44 = scmp.ne.s32.totalorder %s33, %s36
    %p45 = scmp.eq.s32.totalorder %s14, 1
    %p46 = por %p44, %p45
    %p47 = scmp.ne.s32.totalorder %s36, %s37
    %p48 = scmp.eq.s32.totalorder %s14, 0
    %p49 = por %p47, %p48
    %p50 = scmp.ne.s32.totalorder %s36, %s37
    %p51 = scmp.eq.s32.totalorder %s15, 1
    %p52 = por %p50, %p51
    %p54 = scmp.ne.s32.totalorder %s37, %s53
    %p55 = scmp.eq.s32.totalorder %s15, 0
    %p56 = por %p54, %p55
    %s58 = sadd.s32 %s57, 1
    %p61 = scmp.eq.s32.totalorder %s9, 1
    %p62 = scmp.ne.s32.totalorder %s57, %s59
    %p63 = scmp.eq.s32.totalorder %s9, 0
    %p64 = por %p62, %p63
    %p65 = scmp.ne.s32.totalorder %s57, %s59
    %p66 = scmp.eq.s32.totalorder %s14, 1
    %p67 = por %p65, %p66
    %p68 = scmp.ne.s32.totalorder %s59, %s60
    %p69 = scmp.eq.s32.totalorder %s14, 0
    %p70 = por %p68, %p69
    %p71 = scmp.ne.s32.totalorder %s59, %s60
    %p72 = scmp.eq.s32.totalorder %s15, 1
    %p73 = por %p71, %p72
    %p75 = scmp.ne.s32.totalorder %s60, %s74
    %p76 = scmp.eq.s32.totalorder %s15, 0
    %p77 = por %p75, %p76
    %s79 = sadd.s32 %s78, 1
    %p82 = scmp.eq.s32.totalorder %s9, 1
    %p83 = scmp.ne.s32.totalorder %s78, %s80
    %p84 = scmp.eq.s32.totalorder %s9, 0
    %p85 = por %p83, %p84
    %p86 = scmp.ne.s32.totalorder %s78, %s80
    %p87 = scmp.eq.s32.totalorder %s14, 1
    %p88 = por %p86, %p87
    %p89 = scmp.ne.s32.totalorder %s80, %s81
    %p90 = scmp.eq.s32.totalorder %s14, 0
    %p91 = por %p89, %p90
    %p92 = scmp.ne.s32.totalorder %s80, %s81
    %p93 = scmp.eq.s32.totalorder %s15, 1
    %p94 = por %p92, %p93
    %p96 = scmp.ne.s32.totalorder %s81, %s95
    %p97 = scmp.eq.s32.totalorder %s15, 0
    %p98 = por %p96, %p97
    %s99 = ssub.s32 %s16, %s28
    %s100 = ssub.s32 %s17, %s24
    %s101 = sor.u32 %s99, %s100
    %p102 = scmp.eq.s32.totalorder %s101, 0
    %s104 = sadd.s32 %s103, 1
    %s105 = scalar_select %p102, %s103, %s104
    %p108 = pneg %p102
    %p109 = scmp.eq.s32.totalorder %s9, 1
    %p110 = por %p108, %p109
    %p111 = scmp.ne.s32.totalorder %s103, %s106
    %p112 = scmp.eq.s32.totalorder %s9, 0
    %p113 = por %p111, %p112
    %p114 = scmp.ne.s32.totalorder %s103, %s106
    %p115 = scmp.eq.s32.totalorder %s14, 1
    %p116 = por %p114, %p115
    %p117 = scmp.ne.s32.totalorder %s106, %s107
    %p118 = scmp.eq.s32.totalorder %s14, 0
    %p119 = por %p117, %p118
    %p120 = scmp.ne.s32.totalorder %s106, %s107
    %p121 = scmp.eq.s32.totalorder %s15, 1
    %p122 = por %p120, %p121
    %p124 = scmp.ne.s32.totalorder %s107, %s123
    %p125 = scmp.eq.s32.totalorder %s15, 0
    %p126 = por %p124, %p125
    %p127 = scmp.le.s32.totalorder 1, %s9
    %p128 = scmp.lt.s32.totalorder %s9, 3
    %p129 = pnand %p127, %p128
    %p130 = pneg %p129
    // Predicated region
    $region9: #{adaresnet_forward.22} parent=5 // pred_check
      _
    $region10: #{adaresnet_forward.22} parent=5 // pred_check_branch
      %132 = sbr.rel (%p129) target = $region12
    $region11: #{adaresnet_forward.22} parent=5 // pred_region
      %s133 = ssub.s32 %s9, 1
      // Predicated region
      $region13: #{adaresnet_forward.22} parent=11 // pred_check
        %p134 = pneg %p70
      $region14: #{adaresnet_forward.22} parent=11 // pred_check_branch
        %136 = sbr.rel (%p134) target = $region16
      $region15: #{adaresnet_forward.22} parent=11 // pred_region
        _
      $region16: #{adaresnet_forward.22} parent=11 // pred_fallthru
        _
      // Predicated region
      $region17: #{adaresnet_forward.22} parent=11 // pred_check
        %p137 = pneg %p91
      $region18: #{adaresnet_forward.22} parent=11 // pred_check_branch
        %139 = sbr.rel (%p137) target = $region20
      $region19: #{adaresnet_forward.22} parent=11 // pred_region
        _
      $region20: #{adaresnet_forward.22} parent=11 // pred_fallthru
        _
    $region12: #{adaresnet_forward.22} parent=5 // pred_fallthru
      _
    %p140 = scmp.lt.s32.totalorder %s9, 2
    // Predicated region
    $region21: #{adaresnet_forward.22} parent=5 // pred_check
      %p141 = pneg %p140
    $region22: #{adaresnet_forward.22} parent=5 // pred_check_branch
      %143 = sbr.rel (%p141) target = $region24
    $region23: #{adaresnet_forward.22} parent=5 // pred_region
      // Predicated region
      $region25: #{adaresnet_forward.22} parent=23 // pred_check
        %p144 = pneg %p43
      $region26: #{adaresnet_forward.22} parent=23 // pred_check_branch
        %146 = sbr.rel (%p144) target = $region28
      $region27: #{adaresnet_forward.22} parent=23 // pred_region
        %p147 = scmp.lt.s32.totalorder %s16, 1
        %s148 = scalar_select %p147, %s16, 1
        %p149 = scmp.lt.s32.totalorder %s17, 0
        %s150 = scalar_select %p149, %s17, 0
        %s151 = smul.addr %s150, 12
        %s152 = smul.addr %s148, 12
        %s153 = sadd.s32 %s151, %s152
        %s154 = smul.addr %s153, 4
        %s155 = scalar_lea.vmem %s0, %s154
      $region28: #{adaresnet_forward.22} parent=23 // pred_fallthru
        _
    $region24: #{adaresnet_forward.22} parent=5 // pred_fallthru
      _
    %p156 = scmp.le.s32.totalorder 1, %s9
    %p157 = scmp.lt.s32.totalorder %s9, 3
    %p158 = pnand %p156, %p157
    %p159 = pneg %p158
    // Predicated region
    $region29: #{adaresnet_forward.22} parent=5 // pred_check
      _
    $region30: #{adaresnet_forward.22} parent=5 // pred_check_branch
      %161 = sbr.rel (%p158) target = $region32
    $region31: #{adaresnet_forward.22} parent=5 // pred_region
      %s162 = ssub.s32 %s9, 1
      %p163 = scmp.lt.s32.totalorder %s18, 1
      %s164 = scalar_select %p163, %s18, 1
      %p165 = scmp.lt.s32.totalorder %s19, 0
      %s166 = scalar_select %p165, %s19, 0
      %s167 = smul.addr %s166, 12
      %s168 = smul.addr %s164, 12
      %s169 = sadd.s32 %s167, %s168
      %s170 = smul.addr %s169, 4
      %s171 = scalar_lea.vmem %s0, %s170
      %p172 = pneg %p49
      %p173 = pneg %p46
      %p174 = pneg %p70
      %p175 = pneg %p67
      %p176 = pneg %p91
      %p177 = pneg %p88
      %p178 = pneg %p119
      %p179 = pneg %p116
      %s180 = smul.u32 2, %s19
      %p181 = scmp.lt.s32.totalorder %s18, 1
      %s182 = scalar_select %p181, %s18, 1
      %p183 = scmp.lt.s32.totalorder %s180, 1
      %s184 = scalar_select %p183, %s180, 1
      %s185 = smul.addr %s184, 4
      %s186 = smul.addr %s182, 8
      %s187 = sadd.s32 %s185, %s186
      %s188 = smul.addr %s187, 4
      %s189 = scalar_lea.vmem %s3, %s188
      %p190 = scmp.lt.s32.totalorder %s18, 1
      %s191 = scalar_select %p190, %s18, 1
      %p192 = scmp.lt.s32.totalorder %s19, 0
      %s193 = scalar_select %p192, %s19, 0
      %s194 = smul.addr %s193, 12
      %s195 = smul.addr %s191, 12
      %s196 = sadd.s32 %s194, %s195
      %s197 = smul.addr %s196, 4
      %s198 = scalar_lea.vmem %s0, %s197
      %s199 = smul.u32 2, %s19
      %p200 = scmp.lt.s32.totalorder %s18, 1
      %s201 = scalar_select %p200, %s18, 1
      %p202 = scmp.lt.s32.totalorder %s199, 1
      %s203 = scalar_select %p202, %s199, 1
      %s204 = smul.addr %s203, 4
      %s205 = smul.addr %s201, 8
      %s206 = sadd.s32 %s204, %s205
      %s207 = smul.addr %s206, 4
      %s208 = scalar_lea.vmem %s3, %s207
      %s209 = smul.u32 2, %s19
      %v210 = vld [vmem:[%s2] sm:$0xf]
      %v211 = vld [vmem:[%s198] sm:$0xff]
      %v212 = vld [vmem:[%s198 + $0x8] sm:$0xff]
      %v213 = vld [vmem:[%s198 + $0x10] sm:$0xff]
      %v214 = vld [vmem:[%s198 + $0x18] sm:$0xff]
      %v215 = vld [vmem:[%s198 + $0x20] sm:$0x11]
      %v216 = vld [vmem:[%s198 + $0x28] sm:$0x11]
      %v217 = vld [vmem:[%s1] sm:$0xff]
      %v218 = vld [vmem:[%s1 + $0x8] sm:$0xff]
      %v219 = vld [vmem:[%s1 + $0x10] sm:$0xff]
      %v220 = vld [vmem:[%s1 + $0x18] sm:$0xff]
      %v221 = vld [vmem:[%s1 + $0x20] sm:$0xff]
      %v222 = vld [vmem:[%s1 + $0x28] sm:$0xff]
      %v223 = vld [vmem:[%s1 + $0x30] sm:$0xff]
      %v224 = vld [vmem:[%s1 + $0x38] sm:$0xff]
      %v225 = vld [vmem:[%s1 + $0x40] sm:$0xff]
      %v226 = vld [vmem:[%s1 + $0x48] sm:$0xff]
      %v227 = vld [vmem:[%s1 + $0x50] sm:$0xff]
      %v228 = vld [vmem:[%s1 + $0x58] sm:$0xff]
      %v229 = vld [vmem:[%s1 + $0x60] sm:$0xff]
      %v230 = vld [vmem:[%s1 + $0x68] sm:$0xff]
      %v231 = vld [vmem:[%s1 + $0x70] sm:$0xff]
      %v232 = vld [vmem:[%s1 + $0x78] sm:$0xff]
      %v233 = vld [vmem:[%s1 + $0x80] sm:$0xff]
      %v234 = vld [vmem:[%s1 + $0x88] sm:$0xff]
      %v235 = vld [vmem:[%s1 + $0x90] sm:$0xff]
      %v236 = vld [vmem:[%s1 + $0x98] sm:$0xff]
      %v237 = vld [vmem:[%s1 + $0xa0] sm:$0xff]
      %v238 = vld [vmem:[%s1 + $0xa8] sm:$0xff]
      %v239 = vld [vmem:[%s1 + $0xb0] sm:$0xff]
      %v240 = vld [vmem:[%s1 + $0xb8] sm:$0xff]
      %v241 = vld [vmem:[%s1 + $0xc0] sm:$0xff]
      %v242 = vld [vmem:[%s1 + $0xc8] sm:$0xff]
      %v243 = vld [vmem:[%s1 + $0xd0] sm:$0xff]
      %v244 = vld [vmem:[%s1 + $0xd8] sm:$0xff]
      %v245 = vld [vmem:[%s1 + $0xe0] sm:$0xff]
      %v246 = vld [vmem:[%s1 + $0xe8] sm:$0xff]
      %v247 = vld [vmem:[%s1 + $0xf0] sm:$0xff]
      %v248 = vld [vmem:[%s1 + $0xf8] sm:$0xff]
      %v249 = vld [vmem:[%s1 + $0x100] sm:$0xff]
      %v250 = vld [vmem:[%s1 + $0x108] sm:$0xff]
      %v251 = vld [vmem:[%s1 + $0x110] sm:$0xff]
      %v252 = vld [vmem:[%s1 + $0x118] sm:$0xff]
      %v253 = vld [vmem:[%s1 + $0x120] sm:$0xff]
      %v254 = vld [vmem:[%s1 + $0x128] sm:$0xff]
      %v255 = vld [vmem:[%s1 + $0x130] sm:$0xff]
      %v256 = vld [vmem:[%s1 + $0x138] sm:$0xff]
      %v257 = vld [vmem:[%s1 + $0x140] sm:$0xff]
      %v258 = vld [vmem:[%s1 + $0x148] sm:$0xff]
      %v259 = vld [vmem:[%s1 + $0x150] sm:$0xff]
      %v260 = vld [vmem:[%s1 + $0x158] sm:$0xff]
      %v261 = vld [vmem:[%s1 + $0x160] sm:$0xff]
      %v262 = vld [vmem:[%s1 + $0x168] sm:$0xff]
      %v263 = vld [vmem:[%s1 + $0x170] sm:$0xff]
      %v264 = vld [vmem:[%s1 + $0x178] sm:$0xff]
      %v265 = vld [vmem:[%s1 + $0x180] sm:$0xff]
      %v266 = vld [vmem:[%s1 + $0x188] sm:$0xff]
      %v267 = vld [vmem:[%s1 + $0x190] sm:$0xff]
      %v268 = vld [vmem:[%s1 + $0x198] sm:$0xff]
      %v269 = vld [vmem:[%s1 + $0x1a0] sm:$0xff]
      %v270 = vld [vmem:[%s1 + $0x1a8] sm:$0xff]
      %v271 = vld [vmem:[%s1 + $0x1b0] sm:$0xff]
      %v272 = vld [vmem:[%s1 + $0x1b8] sm:$0xff]
      %v273 = vld [vmem:[%s1 + $0x1c0] sm:$0xff]
      %v274 = vld [vmem:[%s1 + $0x1c8] sm:$0xff]
      %v275 = vld [vmem:[%s1 + $0x1d0] sm:$0xff]
      %v276 = vld [vmem:[%s1 + $0x1d8] sm:$0xff]
      %v277 = vld [vmem:[%s1 + $0x1e0] sm:$0xff]
      %v278 = vld [vmem:[%s1 + $0x1e8] sm:$0xff]
      %v279 = vld [vmem:[%s1 + $0x1f0] sm:$0xff]
      %v280 = vld [vmem:[%s1 + $0x1f8] sm:$0xff]
      %v281 = vld [vmem:[%s1 + $0x200] sm:$0xff]
      %v282 = vld [vmem:[%s1 + $0x208] sm:$0xff]
      %v283 = vld [vmem:[%s1 + $0x210] sm:$0xff]
      %v284 = vld [vmem:[%s1 + $0x218] sm:$0xff]
      %v285 = vld [vmem:[%s1 + $0x220] sm:$0xff]
      %v286 = vld [vmem:[%s1 + $0x228] sm:$0xff]
      %v287 = vld [vmem:[%s1 + $0x230] sm:$0xff]
      %v288 = vld [vmem:[%s1 + $0x238] sm:$0xff]
      %v289 = vld [vmem:[%s1 + $0x240] sm:$0xff]
      %v290 = vld [vmem:[%s1 + $0x248] sm:$0xff]
      %v291 = vld [vmem:[%s1 + $0x250] sm:$0xff]
      %v292 = vld [vmem:[%s1 + $0x258] sm:$0xff]
      %v293 = vld [vmem:[%s1 + $0x260] sm:$0xff]
      %v294 = vld [vmem:[%s1 + $0x268] sm:$0xff]
      %v295 = vld [vmem:[%s1 + $0x270] sm:$0xff]
      %v296 = vld [vmem:[%s1 + $0x278] sm:$0xff]
      %v297 = vld [vmem:[%s1 + $0x280] sm:$0xff]
      %v298 = vld [vmem:[%s1 + $0x288] sm:$0xff]
      %v299 = vld [vmem:[%s1 + $0x290] sm:$0xff]
      %v300 = vld [vmem:[%s1 + $0x298] sm:$0xff]
      %v301 = vld [vmem:[%s1 + $0x2a0] sm:$0xff]
      %v302 = vld [vmem:[%s1 + $0x2a8] sm:$0xff]
      %v303 = vld [vmem:[%s1 + $0x2b0] sm:$0xff]
      %v304 = vld [vmem:[%s1 + $0x2b8] sm:$0xff]
      %v305 = vld [vmem:[%s1 + $0x2c0] sm:$0xff]
      %v306 = vld [vmem:[%s1 + $0x2c8] sm:$0xff]
      %v307 = vld [vmem:[%s1 + $0x2d0] sm:$0xff]
      %v308 = vld [vmem:[%s1 + $0x2d8] sm:$0xff]
      %v309 = vld [vmem:[%s1 + $0x2e0] sm:$0xff]
      %v310 = vld [vmem:[%s1 + $0x2e8] sm:$0xff]
      %v311 = vld [vmem:[%s1 + $0x2f0] sm:$0xff]
      %v312 = vld [vmem:[%s1 + $0x2f8] sm:$0xff]
      %v313 = vld [vmem:[%s1 + $0x300] sm:$0xff]
      %v314 = vld [vmem:[%s1 + $0x308] sm:$0xff]
      %v315 = vld [vmem:[%s1 + $0x310] sm:$0xff]
      %v316 = vld [vmem:[%s1 + $0x318] sm:$0xff]
      %v317 = vld [vmem:[%s1 + $0x320] sm:$0xff]
      %v318 = vld [vmem:[%s1 + $0x328] sm:$0xff]
      %v319 = vld [vmem:[%s1 + $0x330] sm:$0xff]
      %v320 = vld [vmem:[%s1 + $0x338] sm:$0xff]
      %v321 = vld [vmem:[%s1 + $0x340] sm:$0xff]
      %v322 = vld [vmem:[%s1 + $0x348] sm:$0xff]
      %v323 = vld [vmem:[%s1 + $0x350] sm:$0xff]
      %v324 = vld [vmem:[%s1 + $0x358] sm:$0xff]
      %v325 = vld [vmem:[%s1 + $0x360] sm:$0xff]
      %v326 = vld [vmem:[%s1 + $0x368] sm:$0xff]
      %v327 = vld [vmem:[%s1 + $0x370] sm:$0xff]
      %v328 = vld [vmem:[%s1 + $0x378] sm:$0xff]
      %v329 = vld [vmem:[%s1 + $0x380] sm:$0xff]
      %v330 = vld [vmem:[%s1 + $0x388] sm:$0xff]
      %v331 = vld [vmem:[%s1 + $0x390] sm:$0xff]
      %v332 = vld [vmem:[%s1 + $0x398] sm:$0xff]
      %v333 = vld [vmem:[%s1 + $0x3a0] sm:$0xff]
      %v334 = vld [vmem:[%s1 + $0x3a8] sm:$0xff]
      %v335 = vld [vmem:[%s1 + $0x3b0] sm:$0xff]
      %v336 = vld [vmem:[%s1 + $0x3b8] sm:$0xff]
      %v337 = vld [vmem:[%s1 + $0x3c0] sm:$0xff]
      %v338 = vld [vmem:[%s1 + $0x3c8] sm:$0xff]
      %v339 = vld [vmem:[%s1 + $0x3d0] sm:$0xff]
      %v340 = vld [vmem:[%s1 + $0x3d8] sm:$0xff]
      %v341 = vld [vmem:[%s1 + $0x3e0] sm:$0xff]
      %v342 = vld [vmem:[%s1 + $0x3e8] sm:$0xff]
      %v343 = vld [vmem:[%s1 + $0x3f0] sm:$0xff]
      %v344 = vld [vmem:[%s1 + $0x3f8] sm:$0xff]
      %v349 = vunpack.c.l.b16 %v211
      %v350 = vunpack.c.h.b16 %v211
      %v351 = vunpack.c.l.b16 %v212
      %v352 = vunpack.c.h.b16 %v212
      %v353 = vunpack.c.l.b16 %v213
      %v354 = vunpack.c.h.b16 %v213
      %v355 = vunpack.c.l.b16 %v214
      %v356 = vunpack.c.h.b16 %v214
      %v357 = vpack.c.b16 %v353, %v349
      %v358 = vpack.c.b16 %v354, %v350
      %v359 = vpack.c.b16 %v355, %v351
      %v360 = vpack.c.b16 %v356, %v352
      %v493 = vunpack.c.l.b16 %v217
      %v494 = vunpack.c.h.b16 %v217
      %v495 = vunpack.c.l.b16 %v218
      %v496 = vunpack.c.h.b16 %v218
      %v497 = vunpack.c.l.b16 %v219
      %v498 = vunpack.c.h.b16 %v219
      %v499 = vunpack.c.l.b16 %v220
      %v500 = vunpack.c.h.b16 %v220
      %v501 = vunpack.c.l.b16 %v221
      %v502 = vunpack.c.h.b16 %v221
      %v503 = vunpack.c.l.b16 %v222
      %v504 = vunpack.c.h.b16 %v222
      %v505 = vunpack.c.l.b16 %v223
      %v506 = vunpack.c.h.b16 %v223
      %v507 = vunpack.c.l.b16 %v224
      %v508 = vunpack.c.h.b16 %v224
      %v509 = vunpack.c.l.b16 %v225
      %v510 = vunpack.c.h.b16 %v225
      %v511 = vunpack.c.l.b16 %v226
      %v512 = vunpack.c.h.b16 %v226
      %v513 = vunpack.c.l.b16 %v227
      %v514 = vunpack.c.h.b16 %v227
      %v515 = vunpack.c.l.b16 %v228
      %v516 = vunpack.c.h.b16 %v228
      %v517 = vunpack.c.l.b16 %v229
      %v518 = vunpack.c.h.b16 %v229
      %v519 = vunpack.c.l.b16 %v230
      %v520 = vunpack.c.h.b16 %v230
      %v521 = vunpack.c.l.b16 %v231
      %v522 = vunpack.c.h.b16 %v231
      %v523 = vunpack.c.l.b16 %v232
      %v524 = vunpack.c.h.b16 %v232
      %v525 = vunpack.c.l.b16 %v233
      %v526 = vunpack.c.h.b16 %v233
      %v527 = vunpack.c.l.b16 %v234
      %v528 = vunpack.c.h.b16 %v234
      %v529 = vunpack.c.l.b16 %v235
      %v530 = vunpack.c.h.b16 %v235
      %v531 = vunpack.c.l.b16 %v236
      %v532 = vunpack.c.h.b16 %v236
      %v533 = vunpack.c.l.b16 %v237
      %v534 = vunpack.c.h.b16 %v237
      %v535 = vunpack.c.l.b16 %v238
      %v536 = vunpack.c.h.b16 %v238
      %v537 = vunpack.c.l.b16 %v239
      %v538 = vunpack.c.h.b16 %v239
      %v539 = vunpack.c.l.b16 %v240
      %v540 = vunpack.c.h.b16 %v240
      %v541 = vunpack.c.l.b16 %v241
      %v542 = vunpack.c.h.b16 %v241
      %v543 = vunpack.c.l.b16 %v242
      %v544 = vunpack.c.h.b16 %v242
      %v545 = vunpack.c.l.b16 %v243
      %v546 = vunpack.c.h.b16 %v243
      %v547 = vunpack.c.l.b16 %v244
      %v548 = vunpack.c.h.b16 %v244
      %v549 = vunpack.c.l.b16 %v245
      %v550 = vunpack.c.h.b16 %v245
      %v551 = vunpack.c.l.b16 %v246
      %v552 = vunpack.c.h.b16 %v246
      %v553 = vunpack.c.l.b16 %v247
      %v554 = vunpack.c.h.b16 %v247
      %v555 = vunpack.c.l.b16 %v248
      %v556 = vunpack.c.h.b16 %v248
      %v557 = vunpack.c.l.b16 %v249
      %v558 = vunpack.c.h.b16 %v249
      %v559 = vunpack.c.l.b16 %v250
      %v560 = vunpack.c.h.b16 %v250
      %v561 = vunpack.c.l.b16 %v251
      %v562 = vunpack.c.h.b16 %v251
      %v563 = vunpack.c.l.b16 %v252
      %v564 = vunpack.c.h.b16 %v252
      %v565 = vunpack.c.l.b16 %v253
      %v566 = vunpack.c.h.b16 %v253
      %v567 = vunpack.c.l.b16 %v254
      %v568 = vunpack.c.h.b16 %v254
      %v569 = vunpack.c.l.b16 %v255
      %v570 = vunpack.c.h.b16 %v255
      %v571 = vunpack.c.l.b16 %v256
      %v572 = vunpack.c.h.b16 %v256
      %v573 = vunpack.c.l.b16 %v257
      %v574 = vunpack.c.h.b16 %v257
      %v575 = vunpack.c.l.b16 %v258
      %v576 = vunpack.c.h.b16 %v258
      %v577 = vunpack.c.l.b16 %v259
      %v578 = vunpack.c.h.b16 %v259
      %v579 = vunpack.c.l.b16 %v260
      %v580 = vunpack.c.h.b16 %v260
      %v581 = vunpack.c.l.b16 %v261
      %v582 = vunpack.c.h.b16 %v261
      %v583 = vunpack.c.l.b16 %v262
      %v584 = vunpack.c.h.b16 %v262
      %v585 = vunpack.c.l.b16 %v263
      %v586 = vunpack.c.h.b16 %v263
      %v587 = vunpack.c.l.b16 %v264
      %v588 = vunpack.c.h.b16 %v264
      %v589 = vunpack.c.l.b16 %v265
      %v590 = vunpack.c.h.b16 %v265
      %v591 = vunpack.c.l.b16 %v266
      %v592 = vunpack.c.h.b16 %v266
      %v593 = vunpack.c.l.b16 %v267
      %v594 = vunpack.c.h.b16 %v267
      %v595 = vunpack.c.l.b16 %v268
      %v596 = vunpack.c.h.b16 %v268
      %v597 = vunpack.c.l.b16 %v269
      %v598 = vunpack.c.h.b16 %v269
      %v599 = vunpack.c.l.b16 %v270
      %v600 = vunpack.c.h.b16 %v270
      %v601 = vunpack.c.l.b16 %v271
      %v602 = vunpack.c.h.b16 %v271
      %v603 = vunpack.c.l.b16 %v272
      %v604 = vunpack.c.h.b16 %v272
      %v605 = vunpack.c.l.b16 %v273
      %v606 = vunpack.c.h.b16 %v273
      %v607 = vunpack.c.l.b16 %v274
      %v608 = vunpack.c.h.b16 %v274
      %v609 = vunpack.c.l.b16 %v275
      %v610 = vunpack.c.h.b16 %v275
      %v611 = vunpack.c.l.b16 %v276
      %v612 = vunpack.c.h.b16 %v276
      %v613 = vunpack.c.l.b16 %v277
      %v614 = vunpack.c.h.b16 %v277
      %v615 = vunpack.c.l.b16 %v278
      %v616 = vunpack.c.h.b16 %v278
      %v617 = vunpack.c.l.b16 %v279
      %v618 = vunpack.c.h.b16 %v279
      %v619 = vunpack.c.l.b16 %v280
      %v620 = vunpack.c.h.b16 %v280
      %v621 = vunpack.c.l.b16 %v281
      %v622 = vunpack.c.h.b16 %v281
      %v623 = vunpack.c.l.b16 %v282
      %v624 = vunpack.c.h.b16 %v282
      %v625 = vunpack.c.l.b16 %v283
      %v626 = vunpack.c.h.b16 %v283
      %v627 = vunpack.c.l.b16 %v284
      %v628 = vunpack.c.h.b16 %v284
      %v629 = vunpack.c.l.b16 %v285
      %v630 = vunpack.c.h.b16 %v285
      %v631 = vunpack.c.l.b16 %v286
      %v632 = vunpack.c.h.b16 %v286
      %v633 = vunpack.c.l.b16 %v287
      %v634 = vunpack.c.h.b16 %v287
      %v635 = vunpack.c.l.b16 %v288
      %v636 = vunpack.c.h.b16 %v288
      %v637 = vunpack.c.l.b16 %v289
      %v638 = vunpack.c.h.b16 %v289
      %v639 = vunpack.c.l.b16 %v290
      %v640 = vunpack.c.h.b16 %v290
      %v641 = vunpack.c.l.b16 %v291
      %v642 = vunpack.c.h.b16 %v291
      %v643 = vunpack.c.l.b16 %v292
      %v644 = vunpack.c.h.b16 %v292
      %v645 = vunpack.c.l.b16 %v293
      %v646 = vunpack.c.h.b16 %v293
      %v647 = vunpack.c.l.b16 %v294
      %v648 = vunpack.c.h.b16 %v294
      %v649 = vunpack.c.l.b16 %v295
      %v650 = vunpack.c.h.b16 %v295
      %v651 = vunpack.c.l.b16 %v296
      %v652 = vunpack.c.h.b16 %v296
      %v653 = vunpack.c.l.b16 %v297
      %v654 = vunpack.c.h.b16 %v297
      %v655 = vunpack.c.l.b16 %v298
      %v656 = vunpack.c.h.b16 %v298
      %v657 = vunpack.c.l.b16 %v299
      %v658 = vunpack.c.h.b16 %v299
      %v659 = vunpack.c.l.b16 %v300
      %v660 = vunpack.c.h.b16 %v300
      %v661 = vunpack.c.l.b16 %v301
      %v662 = vunpack.c.h.b16 %v301
      %v663 = vunpack.c.l.b16 %v302
      %v664 = vunpack.c.h.b16 %v302
      %v665 = vunpack.c.l.b16 %v303
      %v666 = vunpack.c.h.b16 %v303
      %v667 = vunpack.c.l.b16 %v304
      %v668 = vunpack.c.h.b16 %v304
      %v669 = vunpack.c.l.b16 %v305
      %v670 = vunpack.c.h.b16 %v305
      %v671 = vunpack.c.l.b16 %v306
      %v672 = vunpack.c.h.b16 %v306
      %v673 = vunpack.c.l.b16 %v307
      %v674 = vunpack.c.h.b16 %v307
      %v675 = vunpack.c.l.b16 %v308
      %v676 = vunpack.c.h.b16 %v308
      %v677 = vunpack.c.l.b16 %v309
      %v678 = vunpack.c.h.b16 %v309
      %v679 = vunpack.c.l.b16 %v310
      %v680 = vunpack.c.h.b16 %v310
      %v681 = vunpack.c.l.b16 %v311
      %v682 = vunpack.c.h.b16 %v311
      %v683 = vunpack.c.l.b16 %v312
      %v684 = vunpack.c.h.b16 %v312
      %v685 = vunpack.c.l.b16 %v313
      %v686 = vunpack.c.h.b16 %v313
      %v687 = vunpack.c.l.b16 %v314
      %v688 = vunpack.c.h.b16 %v314
      %v689 = vunpack.c.l.b16 %v315
      %v690 = vunpack.c.h.b16 %v315
      %v691 = vunpack.c.l.b16 %v316
      %v692 = vunpack.c.h.b16 %v316
      %v693 = vunpack.c.l.b16 %v317
      %v694 = vunpack.c.h.b16 %v317
      %v695 = vunpack.c.l.b16 %v318
      %v696 = vunpack.c.h.b16 %v318
      %v697 = vunpack.c.l.b16 %v319
      %v698 = vunpack.c.h.b16 %v319
      %v699 = vunpack.c.l.b16 %v320
      %v700 = vunpack.c.h.b16 %v320
      %v701 = vunpack.c.l.b16 %v321
      %v702 = vunpack.c.h.b16 %v321
      %v703 = vunpack.c.l.b16 %v322
      %v704 = vunpack.c.h.b16 %v322
      %v705 = vunpack.c.l.b16 %v323
      %v706 = vunpack.c.h.b16 %v323
      %v707 = vunpack.c.l.b16 %v324
      %v708 = vunpack.c.h.b16 %v324
      %v709 = vunpack.c.l.b16 %v325
      %v710 = vunpack.c.h.b16 %v325
      %v711 = vunpack.c.l.b16 %v326
      %v712 = vunpack.c.h.b16 %v326
      %v713 = vunpack.c.l.b16 %v327
      %v714 = vunpack.c.h.b16 %v327
      %v715 = vunpack.c.l.b16 %v328
      %v716 = vunpack.c.h.b16 %v328
      %v717 = vunpack.c.l.b16 %v329
      %v718 = vunpack.c.h.b16 %v329
      %v719 = vunpack.c.l.b16 %v330
      %v720 = vunpack.c.h.b16 %v330
      %v721 = vunpack.c.l.b16 %v331
      %v722 = vunpack.c.h.b16 %v331
      %v723 = vunpack.c.l.b16 %v332
      %v724 = vunpack.c.h.b16 %v332
      %v725 = vunpack.c.l.b16 %v333
      %v726 = vunpack.c.h.b16 %v333
      %v727 = vunpack.c.l.b16 %v334
      %v728 = vunpack.c.h.b16 %v334
      %v729 = vunpack.c.l.b16 %v335
      %v730 = vunpack.c.h.b16 %v335
      %v731 = vunpack.c.l.b16 %v336
      %v732 = vunpack.c.h.b16 %v336
      %v733 = vunpack.c.l.b16 %v337
      %v734 = vunpack.c.h.b16 %v337
      %v735 = vunpack.c.l.b16 %v338
      %v736 = vunpack.c.h.b16 %v338
      %v737 = vunpack.c.l.b16 %v339
      %v738 = vunpack.c.h.b16 %v339
      %v739 = vunpack.c.l.b16 %v340
      %v740 = vunpack.c.h.b16 %v340
      %v741 = vunpack.c.l.b16 %v341
      %v742 = vunpack.c.h.b16 %v341
      %v743 = vunpack.c.l.b16 %v342
      %v744 = vunpack.c.h.b16 %v342
      %v745 = vunpack.c.l.b16 %v343
      %v746 = vunpack.c.h.b16 %v343
      %v747 = vunpack.c.l.b16 %v344
      %v748 = vunpack.c.h.b16 %v344
      %v749 = vpack.c.b16 %v497, %v493
      %v750 = vpack.c.b16 %v498, %v494
      %v751 = vpack.c.b16 %v499, %v495
      %v752 = vpack.c.b16 %v500, %v496
      %v753 = vpack.c.b16 %v505, %v501
      %v754 = vpack.c.b16 %v506, %v502
      %v755 = vpack.c.b16 %v507, %v503
      %v756 = vpack.c.b16 %v508, %v504
      %v757 = vpack.c.b16 %v513, %v509
      %v758 = vpack.c.b16 %v514, %v510
      %v759 = vpack.c.b16 %v515, %v511
      %v760 = vpack.c.b16 %v516, %v512
      %v761 = vpack.c.b16 %v521, %v517
      %v762 = vpack.c.b16 %v522, %v518
      %v763 = vpack.c.b16 %v523, %v519
      %v764 = vpack.c.b16 %v524, %v520
      %v765 = vpack.c.b16 %v529, %v525
      %v766 = vpack.c.b16 %v530, %v526
      %v767 = vpack.c.b16 %v531, %v527
      %v768 = vpack.c.b16 %v532, %v528
      %v769 = vpack.c.b16 %v537, %v533
      %v770 = vpack.c.b16 %v538, %v534
      %v771 = vpack.c.b16 %v539, %v535
      %v772 = vpack.c.b16 %v540, %v536
      %v773 = vpack.c.b16 %v545, %v541
      %v774 = vpack.c.b16 %v546, %v542
      %v775 = vpack.c.b16 %v547, %v543
      %v776 = vpack.c.b16 %v548, %v544
      %v777 = vpack.c.b16 %v553, %v549
      %v778 = vpack.c.b16 %v554, %v550
      %v779 = vpack.c.b16 %v555, %v551
      %v780 = vpack.c.b16 %v556, %v552
      %v781 = vpack.c.b16 %v561, %v557
      %v782 = vpack.c.b16 %v562, %v558
      %v783 = vpack.c.b16 %v563, %v559
      %v784 = vpack.c.b16 %v564, %v560
      %v785 = vpack.c.b16 %v569, %v565
      %v786 = vpack.c.b16 %v570, %v566
      %v787 = vpack.c.b16 %v571, %v567
      %v788 = vpack.c.b16 %v572, %v568
      %v789 = vpack.c.b16 %v577, %v573
      %v790 = vpack.c.b16 %v578, %v574
      %v791 = vpack.c.b16 %v579, %v575
      %v792 = vpack.c.b16 %v580, %v576
      %v793 = vpack.c.b16 %v585, %v581
      %v794 = vpack.c.b16 %v586, %v582
      %v795 = vpack.c.b16 %v587, %v583
      %v796 = vpack.c.b16 %v588, %v584
      %v797 = vpack.c.b16 %v593, %v589
      %v798 = vpack.c.b16 %v594, %v590
      %v799 = vpack.c.b16 %v595, %v591
      %v800 = vpack.c.b16 %v596, %v592
      %v801 = vpack.c.b16 %v601, %v597
      %v802 = vpack.c.b16 %v602, %v598
      %v803 = vpack.c.b16 %v603, %v599
      %v804 = vpack.c.b16 %v604, %v600
      %v805 = vpack.c.b16 %v609, %v605
      %v806 = vpack.c.b16 %v610, %v606
      %v807 = vpack.c.b16 %v611, %v607
      %v808 = vpack.c.b16 %v612, %v608
      %v809 = vpack.c.b16 %v617, %v613
      %v810 = vpack.c.b16 %v618, %v614
      %v811 = vpack.c.b16 %v619, %v615
      %v812 = vpack.c.b16 %v620, %v616
      %v813 = vpack.c.b16 %v625, %v621
      %v814 = vpack.c.b16 %v626, %v622
      %v815 = vpack.c.b16 %v627, %v623
      %v816 = vpack.c.b16 %v628, %v624
      %v817 = vpack.c.b16 %v633, %v629
      %v818 = vpack.c.b16 %v634, %v630
      %v819 = vpack.c.b16 %v635, %v631
      %v820 = vpack.c.b16 %v636, %v632
      %v821 = vpack.c.b16 %v641, %v637
      %v822 = vpack.c.b16 %v642, %v638
      %v823 = vpack.c.b16 %v643, %v639
      %v824 = vpack.c.b16 %v644, %v640
      %v825 = vpack.c.b16 %v649, %v645
      %v826 = vpack.c.b16 %v650, %v646
      %v827 = vpack.c.b16 %v651, %v647
      %v828 = vpack.c.b16 %v652, %v648
      %v829 = vpack.c.b16 %v657, %v653
      %v830 = vpack.c.b16 %v658, %v654
      %v831 = vpack.c.b16 %v659, %v655
      %v832 = vpack.c.b16 %v660, %v656
      %v833 = vpack.c.b16 %v665, %v661
      %v834 = vpack.c.b16 %v666, %v662
      %v835 = vpack.c.b16 %v667, %v663
      %v836 = vpack.c.b16 %v668, %v664
      %v837 = vpack.c.b16 %v673, %v669
      %v838 = vpack.c.b16 %v674, %v670
      %v839 = vpack.c.b16 %v675, %v671
      %v840 = vpack.c.b16 %v676, %v672
      %v841 = vpack.c.b16 %v681, %v677
      %v842 = vpack.c.b16 %v682, %v678
      %v843 = vpack.c.b16 %v683, %v679
      %v844 = vpack.c.b16 %v684, %v680
      %v845 = vpack.c.b16 %v689, %v685
      %v846 = vpack.c.b16 %v690, %v686
      %v847 = vpack.c.b16 %v691, %v687
      %v848 = vpack.c.b16 %v692, %v688
      %v849 = vpack.c.b16 %v697, %v693
      %v850 = vpack.c.b16 %v698, %v694
      %v851 = vpack.c.b16 %v699, %v695
      %v852 = vpack.c.b16 %v700, %v696
      %v853 = vpack.c.b16 %v705, %v701
      %v854 = vpack.c.b16 %v706, %v702
      %v855 = vpack.c.b16 %v707, %v703
      %v856 = vpack.c.b16 %v708, %v704
      %v857 = vpack.c.b16 %v713, %v709
      %v858 = vpack.c.b16 %v714, %v710
      %v859 = vpack.c.b16 %v715, %v711
      %v860 = vpack.c.b16 %v716, %v712
      %v861 = vpack.c.b16 %v721, %v717
      %v862 = vpack.c.b16 %v722, %v718
      %v863 = vpack.c.b16 %v723, %v719
      %v864 = vpack.c.b16 %v724, %v720
      %v865 = vpack.c.b16 %v729, %v725
      %v866 = vpack.c.b16 %v730, %v726
      %v867 = vpack.c.b16 %v731, %v727
      %v868 = vpack.c.b16 %v732, %v728
      %v869 = vpack.c.b16 %v737, %v733
      %v870 = vpack.c.b16 %v738, %v734
      %v871 = vpack.c.b16 %v739, %v735
      %v872 = vpack.c.b16 %v740, %v736
      %v873 = vpack.c.b16 %v745, %v741
      %v874 = vpack.c.b16 %v746, %v742
      %v875 = vpack.c.b16 %v747, %v743
      %v876 = vpack.c.b16 %v748, %v744
      %1005 = vmatprep.subr.bf16.mxu0 %v778
      %1006 = vmatpush1.bf16.msra.mxu0 %v777
      %1007 = vmatprep.subr.bf16.mxu0 %v774
      %1008 = vmatpush1.bf16.msra.mxu0 %v773
      %1009 = vmatprep.subr.bf16.mxu0 %v770
      %1010 = vmatpush1.bf16.msra.mxu0 %v769
      %1011 = vmatprep.subr.bf16.mxu0 %v766
      %1012 = vmatpush1.bf16.msra.mxu0 %v765
      %1013 = vmatprep.subr.bf16.mxu0 %v762
      %1014 = vmatpush1.bf16.msra.mxu0 %v761
      %1015 = vmatprep.subr.bf16.mxu0 %v758
      %1016 = vmatpush1.bf16.msra.mxu0 %v757
      %1017 = vmatprep.subr.bf16.mxu0 %v754
      %1018 = vmatpush1.bf16.msra.mxu0 %v753
      %1019 = vmatprep.subr.bf16.mxu0 %v750
      %1020 = vmatpush1.bf16.msra.mxu0 %v749
      %1021 = vmatprep.subr.bf16.mxu0 %v810
      %1022 = vmatpush2.bf16.msra.mxu0 %v809
      %1023 = vmatprep.subr.bf16.mxu0 %v806
      %1024 = vmatpush2.bf16.msra.mxu0 %v805
      %1025 = vmatprep.subr.bf16.mxu0 %v802
      %1026 = vmatpush2.bf16.msra.mxu0 %v801
      %1027 = vmatprep.subr.bf16.mxu0 %v798
      %1028 = vmatpush2.bf16.msra.mxu0 %v797
      %1029 = vmatprep.subr.bf16.mxu0 %v794
      %1030 = vmatpush2.bf16.msra.mxu0 %v793
      %1031 = vmatprep.subr.bf16.mxu0 %v790
      %1032 = vmatpush2.bf16.msra.mxu0 %v789
      %1033 = vmatprep.subr.bf16.mxu0 %v786
      %1034 = vmatpush2.bf16.msra.mxu0 %v785
      %1035 = vmatprep.subr.bf16.mxu0 %v782
      %1036 = vmatpush2.bf16.msra.mxu0 %v781
      %1037 = vmatprep.mubr.bf16.mxu0 %v358
      %1038 = vmatmul.mubr.bf16.gmra.mxu0 %v357
      %v1039 = vpop.f32.mrf.mxu0
      %v1040 = vadd.f32 0.0, %v1039
      %v1041 = vpop.f32.mrf.mxu0
      %v1042 = vadd.f32 0.0, %v1041
      %v1043 = vpop.f32.mrf.mxu0
      %v1044 = vadd.f32 0.0, %v1043
      %v1045 = vpop.f32.mrf.mxu0
      %v1046 = vadd.f32 0.0, %v1045
      %1047 = vdwg.mxu0
      %1048 = vmatprep.subr.bf16.mxu0 %v842
      %1049 = vmatpush1.bf16.msra.mxu0 %v841
      %1050 = vmatprep.subr.bf16.mxu0 %v838
      %1051 = vmatpush1.bf16.msra.mxu0 %v837
      %1052 = vmatprep.subr.bf16.mxu0 %v834
      %1053 = vmatpush1.bf16.msra.mxu0 %v833
      %1054 = vmatprep.subr.bf16.mxu0 %v830
      %1055 = vmatpush1.bf16.msra.mxu0 %v829
      %1056 = vmatprep.subr.bf16.mxu0 %v826
      %1057 = vmatpush1.bf16.msra.mxu0 %v825
      %1058 = vmatprep.subr.bf16.mxu0 %v822
      %1059 = vmatpush1.bf16.msra.mxu0 %v821
      %1060 = vmatprep.subr.bf16.mxu0 %v818
      %1061 = vmatpush1.bf16.msra.mxu0 %v817
      %1062 = vmatprep.subr.bf16.mxu0 %v814
      %1063 = vmatpush1.bf16.msra.mxu0 %v813
      %1064 = vmatprep.subr.bf16.mxu0 %v874
      %1065 = vmatpush2.bf16.msra.mxu0 %v873
      %1066 = vmatprep.subr.bf16.mxu0 %v870
      %1067 = vmatpush2.bf16.msra.mxu0 %v869
      %1068 = vmatprep.subr.bf16.mxu0 %v866
      %1069 = vmatpush2.bf16.msra.mxu0 %v865
      %1070 = vmatprep.subr.bf16.mxu0 %v862
      %1071 = vmatpush2.bf16.msra.mxu0 %v861
      %1072 = vmatprep.subr.bf16.mxu0 %v858
      %1073 = vmatpush2.bf16.msra.mxu0 %v857
      %1074 = vmatprep.subr.bf16.mxu0 %v854
      %1075 = vmatpush2.bf16.msra.mxu0 %v853
      %1076 = vmatprep.subr.bf16.mxu0 %v850
      %1077 = vmatpush2.bf16.msra.mxu0 %v849
      %1078 = vmatprep.subr.bf16.mxu0 %v846
      %1079 = vmatpush2.bf16.msra.mxu0 %v845
      %1080 = vmatprep.mubr.bf16.mxu0 %v360
      %1081 = vmatmul.mubr.bf16.gmra.mxu0 %v359
      %v1082 = vpop.f32.mrf.mxu0
      %v1083 = vadd.f32 %v1040, %v1082
      %v1084 = vpop.f32.mrf.mxu0
      %v1085 = vadd.f32 %v1042, %v1084
      %v1086 = vpop.f32.mrf.mxu0
      %v1087 = vadd.f32 %v1044, %v1086
      %v1088 = vpop.f32.mrf.mxu0
      %v1089 = vadd.f32 %v1046, %v1088
      %1090 = vdwg.mxu0
      %1091 = vmatprep.subr.bf16.mxu0 %v780
      %1092 = vmatpush1.bf16.msra.mxu0 %v779
      %1093 = vmatprep.subr.bf16.mxu0 %v776
      %1094 = vmatpush1.bf16.msra.mxu0 %v775
      %1095 = vmatprep.subr.bf16.mxu0 %v772
      %1096 = vmatpush1.bf16.msra.mxu0 %v771
      %1097 = vmatprep.subr.bf16.mxu0 %v768
      %1098 = vmatpush1.bf16.msra.mxu0 %v767
      %1099 = vmatprep.subr.bf16.mxu0 %v764
      %1100 = vmatpush1.bf16.msra.mxu0 %v763
      %1101 = vmatprep.subr.bf16.mxu0 %v760
      %1102 = vmatpush1.bf16.msra.mxu0 %v759
      %1103 = vmatprep.subr.bf16.mxu0 %v756
      %1104 = vmatpush1.bf16.msra.mxu0 %v755
      %1105 = vmatprep.subr.bf16.mxu0 %v752
      %1106 = vmatpush1.bf16.msra.mxu0 %v751
      %1107 = vmatprep.subr.bf16.mxu0 %v812
      %1108 = vmatpush2.bf16.msra.mxu0 %v811
      %1109 = vmatprep.subr.bf16.mxu0 %v808
      %1110 = vmatpush2.bf16.msra.mxu0 %v807
      %1111 = vmatprep.subr.bf16.mxu0 %v804
      %1112 = vmatpush2.bf16.msra.mxu0 %v803
      %1113 = vmatprep.subr.bf16.mxu0 %v800
      %1114 = vmatpush2.bf16.msra.mxu0 %v799
      %1115 = vmatprep.subr.bf16.mxu0 %v796
      %1116 = vmatpush2.bf16.msra.mxu0 %v795
      %1117 = vmatprep.subr.bf16.mxu0 %v792
      %1118 = vmatpush2.bf16.msra.mxu0 %v791
      %1119 = vmatprep.subr.bf16.mxu0 %v788
      %1120 = vmatpush2.bf16.msra.mxu0 %v787
      %1121 = vmatprep.subr.bf16.mxu0 %v784
      %1122 = vmatpush2.bf16.msra.mxu0 %v783
      %1123 = vmatprep.mubr.bf16.mxu0 %v358
      %1124 = vmatmul.mubr.bf16.gmra.mxu0 %v357
      %v1125 = vpop.f32.mrf.mxu0
      %v1126 = vadd.f32 0.0, %v1125
      %v1127 = vpop.f32.mrf.mxu0
      %v1128 = vadd.f32 0.0, %v1127
      %v1129 = vpop.f32.mrf.mxu0
      %v1130 = vadd.f32 0.0, %v1129
      %v1131 = vpop.f32.mrf.mxu0
      %v1132 = vadd.f32 0.0, %v1131
      %1133 = vdwg.mxu0
      %1134 = vmatprep.subr.bf16.mxu0 %v844
      %1135 = vmatpush1.bf16.msra.mxu0 %v843
      %1136 = vmatprep.subr.bf16.mxu0 %v840
      %1137 = vmatpush1.bf16.msra.mxu0 %v839
      %1138 = vmatprep.subr.bf16.mxu0 %v836
      %1139 = vmatpush1.bf16.msra.mxu0 %v835
      %1140 = vmatprep.subr.bf16.mxu0 %v832
      %1141 = vmatpush1.bf16.msra.mxu0 %v831
      %1142 = vmatprep.subr.bf16.mxu0 %v828
      %1143 = vmatpush1.bf16.msra.mxu0 %v827
      %1144 = vmatprep.subr.bf16.mxu0 %v824
      %1145 = vmatpush1.bf16.msra.mxu0 %v823
      %1146 = vmatprep.subr.bf16.mxu0 %v820
      %1147 = vmatpush1.bf16.msra.mxu0 %v819
      %1148 = vmatprep.subr.bf16.mxu0 %v816
      %1149 = vmatpush1.bf16.msra.mxu0 %v815
      %1150 = vmatprep.subr.bf16.mxu0 %v876
      %1151 = vmatpush2.bf16.msra.mxu0 %v875
      %1152 = vmatprep.subr.bf16.mxu0 %v872
      %1153 = vmatpush2.bf16.msra.mxu0 %v871
      %1154 = vmatprep.subr.bf16.mxu0 %v868
      %1155 = vmatpush2.bf16.msra.mxu0 %v867
      %1156 = vmatprep.subr.bf16.mxu0 %v864
      %1157 = vmatpush2.bf16.msra.mxu0 %v863
      %1158 = vmatprep.subr.bf16.mxu0 %v860
      %1159 = vmatpush2.bf16.msra.mxu0 %v859
      %1160 = vmatprep.subr.bf16.mxu0 %v856
      %1161 = vmatpush2.bf16.msra.mxu0 %v855
      %1162 = vmatprep.subr.bf16.mxu0 %v852
      %1163 = vmatpush2.bf16.msra.mxu0 %v851
      %1164 = vmatprep.subr.bf16.mxu0 %v848
      %1165 = vmatpush2.bf16.msra.mxu0 %v847
      %1166 = vmatprep.mubr.bf16.mxu0 %v360
      %1167 = vmatmul.mubr.bf16.gmra.mxu0 %v359
      %v1168 = vpop.f32.mrf.mxu0
      %v1169 = vadd.f32 %v1126, %v1168
      %v1170 = vpop.f32.mrf.mxu0
      %v1171 = vadd.f32 %v1128, %v1170
      %v1172 = vpop.f32.mrf.mxu0
      %v1173 = vadd.f32 %v1130, %v1172
      %v1174 = vpop.f32.mrf.mxu0
      %v1175 = vadd.f32 %v1132, %v1174
      %1176 = vdwg.mxu0
      %v1178 = vlaneseq
      %v1179 = vshrl.u32 %v1178, 7
      %v1180 = vsub.s32 0, %v1179
      %v1181 = vrot.slane %v210, %v1180
      %v1182 = vlaneseq
      %v1183 = vshrl.u32 %v1182, 7
      %v1184 = vsub.s32 1, %v1183
      %v1185 = vrot.slane %v210, %v1184
      %v1186 = vlaneseq
      %v1187 = vshrl.u32 %v1186, 7
      %v1188 = vsub.s32 2, %v1187
      %v1189 = vrot.slane %v210, %v1188
      %v1190 = vlaneseq
      %v1191 = vshrl.u32 %v1190, 7
      %v1192 = vsub.s32 3, %v1191
      %v1193 = vrot.slane %v210, %v1192
      %v1198 = vadd.f32 %v1181, %v1083
      %v1199 = vadd.f32 %v1185, %v1085
      %v1200 = vadd.f32 %v1189, %v1169
      %v1201 = vadd.f32 %v1193, %v1171
      %v1202 = vadd.f32 %v1181, %v1087
      %v1203 = vadd.f32 %v1185, %v1089
      %v1204 = vadd.f32 %v1189, %v1173
      %v1205 = vadd.f32 %v1193, %v1175
      %s1206 = scalar_lea.vmem %s1, 1024
      %v1207 = vld [vmem:[%s1206] sm:$0xff]
      %v1208 = vld [vmem:[%s1206 + $0x8] sm:$0xff]
      %v1209 = vld [vmem:[%s1206 + $0x10] sm:$0xff]
      %v1210 = vld [vmem:[%s1206 + $0x18] sm:$0xff]
      %v1211 = vld [vmem:[%s1206 + $0x20] sm:$0xff]
      %v1212 = vld [vmem:[%s1206 + $0x28] sm:$0xff]
      %v1213 = vld [vmem:[%s1206 + $0x30] sm:$0xff]
      %v1214 = vld [vmem:[%s1206 + $0x38] sm:$0xff]
      %v1215 = vld [vmem:[%s1206 + $0x40] sm:$0xff]
      %v1216 = vld [vmem:[%s1206 + $0x48] sm:$0xff]
      %v1217 = vld [vmem:[%s1206 + $0x50] sm:$0xff]
      %v1218 = vld [vmem:[%s1206 + $0x58] sm:$0xff]
      %v1219 = vld [vmem:[%s1206 + $0x60] sm:$0xff]
      %v1220 = vld [vmem:[%s1206 + $0x68] sm:$0xff]
      %v1221 = vld [vmem:[%s1206 + $0x70] sm:$0xff]
      %v1222 = vld [vmem:[%s1206 + $0x78] sm:$0xff]
      %v1223 = vld [vmem:[%s1206 + $0x80] sm:$0xff]
      %v1224 = vld [vmem:[%s1206 + $0x88] sm:$0xff]
      %v1225 = vld [vmem:[%s1206 + $0x90] sm:$0xff]
      %v1226 = vld [vmem:[%s1206 + $0x98] sm:$0xff]
      %v1227 = vld [vmem:[%s1206 + $0xa0] sm:$0xff]
      %v1228 = vld [vmem:[%s1206 + $0xa8] sm:$0xff]
      %v1229 = vld [vmem:[%s1206 + $0xb0] sm:$0xff]
      %v1230 = vld [vmem:[%s1206 + $0xb8] sm:$0xff]
      %v1231 = vld [vmem:[%s1206 + $0xc0] sm:$0xff]
      %v1232 = vld [vmem:[%s1206 + $0xc8] sm:$0xff]
      %v1233 = vld [vmem:[%s1206 + $0xd0] sm:$0xff]
      %v1234 = vld [vmem:[%s1206 + $0xd8] sm:$0xff]
      %v1235 = vld [vmem:[%s1206 + $0xe0] sm:$0xff]
      %v1236 = vld [vmem:[%s1206 + $0xe8] sm:$0xff]
      %v1237 = vld [vmem:[%s1206 + $0xf0] sm:$0xff]
      %v1238 = vld [vmem:[%s1206 + $0xf8] sm:$0xff]
      %v1239 = vld [vmem:[%s1206 + $0x100] sm:$0xff]
      %v1240 = vld [vmem:[%s1206 + $0x108] sm:$0xff]
      %v1241 = vld [vmem:[%s1206 + $0x110] sm:$0xff]
      %v1242 = vld [vmem:[%s1206 + $0x118] sm:$0xff]
      %v1243 = vld [vmem:[%s1206 + $0x120] sm:$0xff]
      %v1244 = vld [vmem:[%s1206 + $0x128] sm:$0xff]
      %v1245 = vld [vmem:[%s1206 + $0x130] sm:$0xff]
      %v1246 = vld [vmem:[%s1206 + $0x138] sm:$0xff]
      %v1247 = vld [vmem:[%s1206 + $0x140] sm:$0xff]
      %v1248 = vld [vmem:[%s1206 + $0x148] sm:$0xff]
      %v1249 = vld [vmem:[%s1206 + $0x150] sm:$0xff]
      %v1250 = vld [vmem:[%s1206 + $0x158] sm:$0xff]
      %v1251 = vld [vmem:[%s1206 + $0x160] sm:$0xff]
      %v1252 = vld [vmem:[%s1206 + $0x168] sm:$0xff]
      %v1253 = vld [vmem:[%s1206 + $0x170] sm:$0xff]
      %v1254 = vld [vmem:[%s1206 + $0x178] sm:$0xff]
      %v1255 = vld [vmem:[%s1206 + $0x180] sm:$0xff]
      %v1256 = vld [vmem:[%s1206 + $0x188] sm:$0xff]
      %v1257 = vld [vmem:[%s1206 + $0x190] sm:$0xff]
      %v1258 = vld [vmem:[%s1206 + $0x198] sm:$0xff]
      %v1259 = vld [vmem:[%s1206 + $0x1a0] sm:$0xff]
      %v1260 = vld [vmem:[%s1206 + $0x1a8] sm:$0xff]
      %v1261 = vld [vmem:[%s1206 + $0x1b0] sm:$0xff]
      %v1262 = vld [vmem:[%s1206 + $0x1b8] sm:$0xff]
      %v1263 = vld [vmem:[%s1206 + $0x1c0] sm:$0xff]
      %v1264 = vld [vmem:[%s1206 + $0x1c8] sm:$0xff]
      %v1265 = vld [vmem:[%s1206 + $0x1d0] sm:$0xff]
      %v1266 = vld [vmem:[%s1206 + $0x1d8] sm:$0xff]
      %v1267 = vld [vmem:[%s1206 + $0x1e0] sm:$0xff]
      %v1268 = vld [vmem:[%s1206 + $0x1e8] sm:$0xff]
      %v1269 = vld [vmem:[%s1206 + $0x1f0] sm:$0xff]
      %v1270 = vld [vmem:[%s1206 + $0x1f8] sm:$0xff]
      %v1271 = vld [vmem:[%s1206 + $0x200] sm:$0xff]
      %v1272 = vld [vmem:[%s1206 + $0x208] sm:$0xff]
      %v1273 = vld [vmem:[%s1206 + $0x210] sm:$0xff]
      %v1274 = vld [vmem:[%s1206 + $0x218] sm:$0xff]
      %v1275 = vld [vmem:[%s1206 + $0x220] sm:$0xff]
      %v1276 = vld [vmem:[%s1206 + $0x228] sm:$0xff]
      %v1277 = vld [vmem:[%s1206 + $0x230] sm:$0xff]
      %v1278 = vld [vmem:[%s1206 + $0x238] sm:$0xff]
      %v1279 = vld [vmem:[%s1206 + $0x240] sm:$0xff]
      %v1280 = vld [vmem:[%s1206 + $0x248] sm:$0xff]
      %v1281 = vld [vmem:[%s1206 + $0x250] sm:$0xff]
      %v1282 = vld [vmem:[%s1206 + $0x258] sm:$0xff]
      %v1283 = vld [vmem:[%s1206 + $0x260] sm:$0xff]
      %v1284 = vld [vmem:[%s1206 + $0x268] sm:$0xff]
      %v1285 = vld [vmem:[%s1206 + $0x270] sm:$0xff]
      %v1286 = vld [vmem:[%s1206 + $0x278] sm:$0xff]
      %v1287 = vld [vmem:[%s1206 + $0x280] sm:$0xff]
      %v1288 = vld [vmem:[%s1206 + $0x288] sm:$0xff]
      %v1289 = vld [vmem:[%s1206 + $0x290] sm:$0xff]
      %v1290 = vld [vmem:[%s1206 + $0x298] sm:$0xff]
      %v1291 = vld [vmem:[%s1206 + $0x2a0] sm:$0xff]
      %v1292 = vld [vmem:[%s1206 + $0x2a8] sm:$0xff]
      %v1293 = vld [vmem:[%s1206 + $0x2b0] sm:$0xff]
      %v1294 = vld [vmem:[%s1206 + $0x2b8] sm:$0xff]
      %v1295 = vld [vmem:[%s1206 + $0x2c0] sm:$0xff]
      %v1296 = vld [vmem:[%s1206 + $0x2c8] sm:$0xff]
      %v1297 = vld [vmem:[%s1206 + $0x2d0] sm:$0xff]
      %v1298 = vld [vmem:[%s1206 + $0x2d8] sm:$0xff]
      %v1299 = vld [vmem:[%s1206 + $0x2e0] sm:$0xff]
      %v1300 = vld [vmem:[%s1206 + $0x2e8] sm:$0xff]
      %v1301 = vld [vmem:[%s1206 + $0x2f0] sm:$0xff]
      %v1302 = vld [vmem:[%s1206 + $0x2f8] sm:$0xff]
      %v1303 = vld [vmem:[%s1206 + $0x300] sm:$0xff]
      %v1304 = vld [vmem:[%s1206 + $0x308] sm:$0xff]
      %v1305 = vld [vmem:[%s1206 + $0x310] sm:$0xff]
      %v1306 = vld [vmem:[%s1206 + $0x318] sm:$0xff]
      %v1307 = vld [vmem:[%s1206 + $0x320] sm:$0xff]
      %v1308 = vld [vmem:[%s1206 + $0x328] sm:$0xff]
      %v1309 = vld [vmem:[%s1206 + $0x330] sm:$0xff]
      %v1310 = vld [vmem:[%s1206 + $0x338] sm:$0xff]
      %v1311 = vld [vmem:[%s1206 + $0x340] sm:$0xff]
      %v1312 = vld [vmem:[%s1206 + $0x348] sm:$0xff]
      %v1313 = vld [vmem:[%s1206 + $0x350] sm:$0xff]
      %v1314 = vld [vmem:[%s1206 + $0x358] sm:$0xff]
      %v1315 = vld [vmem:[%s1206 + $0x360] sm:$0xff]
      %v1316 = vld [vmem:[%s1206 + $0x368] sm:$0xff]
      %v1317 = vld [vmem:[%s1206 + $0x370] sm:$0xff]
      %v1318 = vld [vmem:[%s1206 + $0x378] sm:$0xff]
      %v1319 = vld [vmem:[%s1206 + $0x380] sm:$0xff]
      %v1320 = vld [vmem:[%s1206 + $0x388] sm:$0xff]
      %v1321 = vld [vmem:[%s1206 + $0x390] sm:$0xff]
      %v1322 = vld [vmem:[%s1206 + $0x398] sm:$0xff]
      %v1323 = vld [vmem:[%s1206 + $0x3a0] sm:$0xff]
      %v1324 = vld [vmem:[%s1206 + $0x3a8] sm:$0xff]
      %v1325 = vld [vmem:[%s1206 + $0x3b0] sm:$0xff]
      %v1326 = vld [vmem:[%s1206 + $0x3b8] sm:$0xff]
      %v1327 = vld [vmem:[%s1206 + $0x3c0] sm:$0xff]
      %v1328 = vld [vmem:[%s1206 + $0x3c8] sm:$0xff]
      %v1329 = vld [vmem:[%s1206 + $0x3d0] sm:$0xff]
      %v1330 = vld [vmem:[%s1206 + $0x3d8] sm:$0xff]
      %v1331 = vld [vmem:[%s1206 + $0x3e0] sm:$0xff]
      %v1332 = vld [vmem:[%s1206 + $0x3e8] sm:$0xff]
      %v1333 = vld [vmem:[%s1206 + $0x3f0] sm:$0xff]
      %v1334 = vld [vmem:[%s1206 + $0x3f8] sm:$0xff]
      %v1337 = vunpack.c.l.b16 %v215
      %v1338 = vunpack.c.h.b16 %v215
      %v1339 = vunpack.c.l.b16 %v216
      %v1340 = vunpack.c.h.b16 %v216
      %v1341 = vpack.c.b16 %v1337, %v1337
      %v1342 = vpack.c.b16 %v1338, %v1338
      %v1343 = vpack.c.b16 %v1339, %v1339
      %v1344 = vpack.c.b16 %v1340, %v1340
      %vm1345 = vsmask.f32 7424
      %v1347 = vshrl.u32 %v357, 16
      %v1349 = vshll.u32 %v357, 16
      %v1351 = vrot.slane %v1349, 1
      %v1352 = vor.u32 %v1347, %v1351
      %v1354 = vshll.u32 %v1341, 16
      %v1356 = vrot.slane %v1354, 1
      %v1357 = vsel %vm1345, %v1352, %v1356
      %v1359 = vshrl.u32 %v358, 16
      %v1361 = vshll.u32 %v358, 16
      %v1363 = vrot.slane %v1361, 1
      %v1364 = vor.u32 %v1359, %v1363
      %v1366 = vshll.u32 %v1342, 16
      %v1368 = vrot.slane %v1366, 1
      %v1369 = vsel %vm1345, %v1364, %v1368
      %v1371 = vshrl.u32 %v359, 16
      %v1373 = vshll.u32 %v359, 16
      %v1375 = vrot.slane %v1373, 1
      %v1376 = vor.u32 %v1371, %v1375
      %v1378 = vshll.u32 %v1343, 16
      %v1380 = vrot.slane %v1378, 1
      %v1381 = vsel %vm1345, %v1376, %v1380
      %v1383 = vshrl.u32 %v360, 16
      %v1385 = vshll.u32 %v360, 16
      %v1387 = vrot.slane %v1385, 1
      %v1388 = vor.u32 %v1383, %v1387
      %v1390 = vshll.u32 %v1344, 16
      %v1392 = vrot.slane %v1390, 1
      %v1393 = vsel %vm1345, %v1388, %v1392
      %v1526 = vunpack.c.l.b16 %v1207
      %v1527 = vunpack.c.h.b16 %v1207
      %v1528 = vunpack.c.l.b16 %v1208
      %v1529 = vunpack.c.h.b16 %v1208
      %v1530 = vunpack.c.l.b16 %v1209
      %v1531 = vunpack.c.h.b16 %v1209
      %v1532 = vunpack.c.l.b16 %v1210
      %v1533 = vunpack.c.h.b16 %v1210
      %v1534 = vunpack.c.l.b16 %v1211
      %v1535 = vunpack.c.h.b16 %v1211
      %v1536 = vunpack.c.l.b16 %v1212
      %v1537 = vunpack.c.h.b16 %v1212
      %v1538 = vunpack.c.l.b16 %v1213
      %v1539 = vunpack.c.h.b16 %v1213
      %v1540 = vunpack.c.l.b16 %v1214
      %v1541 = vunpack.c.h.b16 %v1214
      %v1542 = vunpack.c.l.b16 %v1215
      %v1543 = vunpack.c.h.b16 %v1215
      %v1544 = vunpack.c.l.b16 %v1216
      %v1545 = vunpack.c.h.b16 %v1216
      %v1546 = vunpack.c.l.b16 %v1217
      %v1547 = vunpack.c.h.b16 %v1217
      %v1548 = vunpack.c.l.b16 %v1218
      %v1549 = vunpack.c.h.b16 %v1218
      %v1550 = vunpack.c.l.b16 %v1219
      %v1551 = vunpack.c.h.b16 %v1219
      %v1552 = vunpack.c.l.b16 %v1220
      %v1553 = vunpack.c.h.b16 %v1220
      %v1554 = vunpack.c.l.b16 %v1221
      %v1555 = vunpack.c.h.b16 %v1221
      %v1556 = vunpack.c.l.b16 %v1222
      %v1557 = vunpack.c.h.b16 %v1222
      %v1558 = vunpack.c.l.b16 %v1223
      %v1559 = vunpack.c.h.b16 %v1223
      %v1560 = vunpack.c.l.b16 %v1224
      %v1561 = vunpack.c.h.b16 %v1224
      %v1562 = vunpack.c.l.b16 %v1225
      %v1563 = vunpack.c.h.b16 %v1225
      %v1564 = vunpack.c.l.b16 %v1226
      %v1565 = vunpack.c.h.b16 %v1226
      %v1566 = vunpack.c.l.b16 %v1227
      %v1567 = vunpack.c.h.b16 %v1227
      %v1568 = vunpack.c.l.b16 %v1228
      %v1569 = vunpack.c.h.b16 %v1228
      %v1570 = vunpack.c.l.b16 %v1229
      %v1571 = vunpack.c.h.b16 %v1229
      %v1572 = vunpack.c.l.b16 %v1230
      %v1573 = vunpack.c.h.b16 %v1230
      %v1574 = vunpack.c.l.b16 %v1231
      %v1575 = vunpack.c.h.b16 %v1231
      %v1576 = vunpack.c.l.b16 %v1232
      %v1577 = vunpack.c.h.b16 %v1232
      %v1578 = vunpack.c.l.b16 %v1233
      %v1579 = vunpack.c.h.b16 %v1233
      %v1580 = vunpack.c.l.b16 %v1234
      %v1581 = vunpack.c.h.b16 %v1234
      %v1582 = vunpack.c.l.b16 %v1235
      %v1583 = vunpack.c.h.b16 %v1235
      %v1584 = vunpack.c.l.b16 %v1236
      %v1585 = vunpack.c.h.b16 %v1236
      %v1586 = vunpack.c.l.b16 %v1237
      %v1587 = vunpack.c.h.b16 %v1237
      %v1588 = vunpack.c.l.b16 %v1238
      %v1589 = vunpack.c.h.b16 %v1238
      %v1590 = vunpack.c.l.b16 %v1239
      %v1591 = vunpack.c.h.b16 %v1239
      %v1592 = vunpack.c.l.b16 %v1240
      %v1593 = vunpack.c.h.b16 %v1240
      %v1594 = vunpack.c.l.b16 %v1241
      %v1595 = vunpack.c.h.b16 %v1241
      %v1596 = vunpack.c.l.b16 %v1242
      %v1597 = vunpack.c.h.b16 %v1242
      %v1598 = vunpack.c.l.b16 %v1243
      %v1599 = vunpack.c.h.b16 %v1243
      %v1600 = vunpack.c.l.b16 %v1244
      %v1601 = vunpack.c.h.b16 %v1244
      %v1602 = vunpack.c.l.b16 %v1245
      %v1603 = vunpack.c.h.b16 %v1245
      %v1604 = vunpack.c.l.b16 %v1246
      %v1605 = vunpack.c.h.b16 %v1246
      %v1606 = vunpack.c.l.b16 %v1247
      %v1607 = vunpack.c.h.b16 %v1247
      %v1608 = vunpack.c.l.b16 %v1248
      %v1609 = vunpack.c.h.b16 %v1248
      %v1610 = vunpack.c.l.b16 %v1249
      %v1611 = vunpack.c.h.b16 %v1249
      %v1612 = vunpack.c.l.b16 %v1250
      %v1613 = vunpack.c.h.b16 %v1250
      %v1614 = vunpack.c.l.b16 %v1251
      %v1615 = vunpack.c.h.b16 %v1251
      %v1616 = vunpack.c.l.b16 %v1252
      %v1617 = vunpack.c.h.b16 %v1252
      %v1618 = vunpack.c.l.b16 %v1253
      %v1619 = vunpack.c.h.b16 %v1253
      %v1620 = vunpack.c.l.b16 %v1254
      %v1621 = vunpack.c.h.b16 %v1254
      %v1622 = vunpack.c.l.b16 %v1255
      %v1623 = vunpack.c.h.b16 %v1255
      %v1624 = vunpack.c.l.b16 %v1256
      %v1625 = vunpack.c.h.b16 %v1256
      %v1626 = vunpack.c.l.b16 %v1257
      %v1627 = vunpack.c.h.b16 %v1257
      %v1628 = vunpack.c.l.b16 %v1258
      %v1629 = vunpack.c.h.b16 %v1258
      %v1630 = vunpack.c.l.b16 %v1259
      %v1631 = vunpack.c.h.b16 %v1259
      %v1632 = vunpack.c.l.b16 %v1260
      %v1633 = vunpack.c.h.b16 %v1260
      %v1634 = vunpack.c.l.b16 %v1261
      %v1635 = vunpack.c.h.b16 %v1261
      %v1636 = vunpack.c.l.b16 %v1262
      %v1637 = vunpack.c.h.b16 %v1262
      %v1638 = vunpack.c.l.b16 %v1263
      %v1639 = vunpack.c.h.b16 %v1263
      %v1640 = vunpack.c.l.b16 %v1264
      %v1641 = vunpack.c.h.b16 %v1264
      %v1642 = vunpack.c.l.b16 %v1265
      %v1643 = vunpack.c.h.b16 %v1265
      %v1644 = vunpack.c.l.b16 %v1266
      %v1645 = vunpack.c.h.b16 %v1266
      %v1646 = vunpack.c.l.b16 %v1267
      %v1647 = vunpack.c.h.b16 %v1267
      %v1648 = vunpack.c.l.b16 %v1268
      %v1649 = vunpack.c.h.b16 %v1268
      %v1650 = vunpack.c.l.b16 %v1269
      %v1651 = vunpack.c.h.b16 %v1269
      %v1652 = vunpack.c.l.b16 %v1270
      %v1653 = vunpack.c.h.b16 %v1270
      %v1654 = vunpack.c.l.b16 %v1271
      %v1655 = vunpack.c.h.b16 %v1271
      %v1656 = vunpack.c.l.b16 %v1272
      %v1657 = vunpack.c.h.b16 %v1272
      %v1658 = vunpack.c.l.b16 %v1273
      %v1659 = vunpack.c.h.b16 %v1273
      %v1660 = vunpack.c.l.b16 %v1274
      %v1661 = vunpack.c.h.b16 %v1274
      %v1662 = vunpack.c.l.b16 %v1275
      %v1663 = vunpack.c.h.b16 %v1275
      %v1664 = vunpack.c.l.b16 %v1276
      %v1665 = vunpack.c.h.b16 %v1276
      %v1666 = vunpack.c.l.b16 %v1277
      %v1667 = vunpack.c.h.b16 %v1277
      %v1668 = vunpack.c.l.b16 %v1278
      %v1669 = vunpack.c.h.b16 %v1278
      %v1670 = vunpack.c.l.b16 %v1279
      %v1671 = vunpack.c.h.b16 %v1279
      %v1672 = vunpack.c.l.b16 %v1280
      %v1673 = vunpack.c.h.b16 %v1280
      %v1674 = vunpack.c.l.b16 %v1281
      %v1675 = vunpack.c.h.b16 %v1281
      %v1676 = vunpack.c.l.b16 %v1282
      %v1677 = vunpack.c.h.b16 %v1282
      %v1678 = vunpack.c.l.b16 %v1283
      %v1679 = vunpack.c.h.b16 %v1283
      %v1680 = vunpack.c.l.b16 %v1284
      %v1681 = vunpack.c.h.b16 %v1284
      %v1682 = vunpack.c.l.b16 %v1285
      %v1683 = vunpack.c.h.b16 %v1285
      %v1684 = vunpack.c.l.b16 %v1286
      %v1685 = vunpack.c.h.b16 %v1286
      %v1686 = vunpack.c.l.b16 %v1287
      %v1687 = vunpack.c.h.b16 %v1287
      %v1688 = vunpack.c.l.b16 %v1288
      %v1689 = vunpack.c.h.b16 %v1288
      %v1690 = vunpack.c.l.b16 %v1289
      %v1691 = vunpack.c.h.b16 %v1289
      %v1692 = vunpack.c.l.b16 %v1290
      %v1693 = vunpack.c.h.b16 %v1290
      %v1694 = vunpack.c.l.b16 %v1291
      %v1695 = vunpack.c.h.b16 %v1291
      %v1696 = vunpack.c.l.b16 %v1292
      %v1697 = vunpack.c.h.b16 %v1292
      %v1698 = vunpack.c.l.b16 %v1293
      %v1699 = vunpack.c.h.b16 %v1293
      %v1700 = vunpack.c.l.b16 %v1294
      %v1701 = vunpack.c.h.b16 %v1294
      %v1702 = vunpack.c.l.b16 %v1295
      %v1703 = vunpack.c.h.b16 %v1295
      %v1704 = vunpack.c.l.b16 %v1296
      %v1705 = vunpack.c.h.b16 %v1296
      %v1706 = vunpack.c.l.b16 %v1297
      %v1707 = vunpack.c.h.b16 %v1297
      %v1708 = vunpack.c.l.b16 %v1298
      %v1709 = vunpack.c.h.b16 %v1298
      %v1710 = vunpack.c.l.b16 %v1299
      %v1711 = vunpack.c.h.b16 %v1299
      %v1712 = vunpack.c.l.b16 %v1300
      %v1713 = vunpack.c.h.b16 %v1300
      %v1714 = vunpack.c.l.b16 %v1301
      %v1715 = vunpack.c.h.b16 %v1301
      %v1716 = vunpack.c.l.b16 %v1302
      %v1717 = vunpack.c.h.b16 %v1302
      %v1718 = vunpack.c.l.b16 %v1303
      %v1719 = vunpack.c.h.b16 %v1303
      %v1720 = vunpack.c.l.b16 %v1304
      %v1721 = vunpack.c.h.b16 %v1304
      %v1722 = vunpack.c.l.b16 %v1305
      %v1723 = vunpack.c.h.b16 %v1305
      %v1724 = vunpack.c.l.b16 %v1306
      %v1725 = vunpack.c.h.b16 %v1306
      %v1726 = vunpack.c.l.b16 %v1307
      %v1727 = vunpack.c.h.b16 %v1307
      %v1728 = vunpack.c.l.b16 %v1308
      %v1729 = vunpack.c.h.b16 %v1308
      %v1730 = vunpack.c.l.b16 %v1309
      %v1731 = vunpack.c.h.b16 %v1309
      %v1732 = vunpack.c.l.b16 %v1310
      %v1733 = vunpack.c.h.b16 %v1310
      %v1734 = vunpack.c.l.b16 %v1311
      %v1735 = vunpack.c.h.b16 %v1311
      %v1736 = vunpack.c.l.b16 %v1312
      %v1737 = vunpack.c.h.b16 %v1312
      %v1738 = vunpack.c.l.b16 %v1313
      %v1739 = vunpack.c.h.b16 %v1313
      %v1740 = vunpack.c.l.b16 %v1314
      %v1741 = vunpack.c.h.b16 %v1314
      %v1742 = vunpack.c.l.b16 %v1315
      %v1743 = vunpack.c.h.b16 %v1315
      %v1744 = vunpack.c.l.b16 %v1316
      %v1745 = vunpack.c.h.b16 %v1316
      %v1746 = vunpack.c.l.b16 %v1317
      %v1747 = vunpack.c.h.b16 %v1317
      %v1748 = vunpack.c.l.b16 %v1318
      %v1749 = vunpack.c.h.b16 %v1318
      %v1750 = vunpack.c.l.b16 %v1319
      %v1751 = vunpack.c.h.b16 %v1319
      %v1752 = vunpack.c.l.b16 %v1320
      %v1753 = vunpack.c.h.b16 %v1320
      %v1754 = vunpack.c.l.b16 %v1321
      %v1755 = vunpack.c.h.b16 %v1321
      %v1756 = vunpack.c.l.b16 %v1322
      %v1757 = vunpack.c.h.b16 %v1322
      %v1758 = vunpack.c.l.b16 %v1323
      %v1759 = vunpack.c.h.b16 %v1323
      %v1760 = vunpack.c.l.b16 %v1324
      %v1761 = vunpack.c.h.b16 %v1324
      %v1762 = vunpack.c.l.b16 %v1325
      %v1763 = vunpack.c.h.b16 %v1325
      %v1764 = vunpack.c.l.b16 %v1326
      %v1765 = vunpack.c.h.b16 %v1326
      %v1766 = vunpack.c.l.b16 %v1327
      %v1767 = vunpack.c.h.b16 %v1327
      %v1768 = vunpack.c.l.b16 %v1328
      %v1769 = vunpack.c.h.b16 %v1328
      %v1770 = vunpack.c.l.b16 %v1329
      %v1771 = vunpack.c.h.b16 %v1329
      %v1772 = vunpack.c.l.b16 %v1330
      %v1773 = vunpack.c.h.b16 %v1330
      %v1774 = vunpack.c.l.b16 %v1331
      %v1775 = vunpack.c.h.b16 %v1331
      %v1776 = vunpack.c.l.b16 %v1332
      %v1777 = vunpack.c.h.b16 %v1332
      %v1778 = vunpack.c.l.b16 %v1333
      %v1779 = vunpack.c.h.b16 %v1333
      %v1780 = vunpack.c.l.b16 %v1334
      %v1781 = vunpack.c.h.b16 %v1334
      %v1782 = vpack.c.b16 %v1530, %v1526
      %v1783 = vpack.c.b16 %v1531, %v1527
      %v1784 = vpack.c.b16 %v1532, %v1528
      %v1785 = vpack.c.b16 %v1533, %v1529
      %v1786 = vpack.c.b16 %v1538, %v1534
      %v1787 = vpack.c.b16 %v1539, %v1535
      %v1788 = vpack.c.b16 %v1540, %v1536
      %v1789 = vpack.c.b16 %v1541, %v1537
      %v1790 = vpack.c.b16 %v1546, %v1542
      %v1791 = vpack.c.b16 %v1547, %v1543
      %v1792 = vpack.c.b16 %v1548, %v1544
      %v1793 = vpack.c.b16 %v1549, %v1545
      %v1794 = vpack.c.b16 %v1554, %v1550
      %v1795 = vpack.c.b16 %v1555, %v1551
      %v1796 = vpack.c.b16 %v1556, %v1552
      %v1797 = vpack.c.b16 %v1557, %v1553
      %v1798 = vpack.c.b16 %v1562, %v1558
      %v1799 = vpack.c.b16 %v1563, %v1559
      %v1800 = vpack.c.b16 %v1564, %v1560
      %v1801 = vpack.c.b16 %v1565, %v1561
      %v1802 = vpack.c.b16 %v1570, %v1566
      %v1803 = vpack.c.b16 %v1571, %v1567
      %v1804 = vpack.c.b16 %v1572, %v1568
      %v1805 = vpack.c.b16 %v1573, %v1569
      %v1806 = vpack.c.b16 %v1578, %v1574
      %v1807 = vpack.c.b16 %v1579, %v1575
      %v1808 = vpack.c.b16 %v1580, %v1576
      %v1809 = vpack.c.b16 %v1581, %v1577
      %v1810 = vpack.c.b16 %v1586, %v1582
      %v1811 = vpack.c.b16 %v1587, %v1583
      %v1812 = vpack.c.b16 %v1588, %v1584
      %v1813 = vpack.c.b16 %v1589, %v1585
      %v1814 = vpack.c.b16 %v1594, %v1590
      %v1815 = vpack.c.b16 %v1595, %v1591
      %v1816 = vpack.c.b16 %v1596, %v1592
      %v1817 = vpack.c.b16 %v1597, %v1593
      %v1818 = vpack.c.b16 %v1602, %v1598
      %v1819 = vpack.c.b16 %v1603, %v1599
      %v1820 = vpack.c.b16 %v1604, %v1600
      %v1821 = vpack.c.b16 %v1605, %v1601
      %v1822 = vpack.c.b16 %v1610, %v1606
      %v1823 = vpack.c.b16 %v1611, %v1607
      %v1824 = vpack.c.b16 %v1612, %v1608
      %v1825 = vpack.c.b16 %v1613, %v1609
      %v1826 = vpack.c.b16 %v1618, %v1614
      %v1827 = vpack.c.b16 %v1619, %v1615
      %v1828 = vpack.c.b16 %v1620, %v1616
      %v1829 = vpack.c.b16 %v1621, %v1617
      %v1830 = vpack.c.b16 %v1626, %v1622
      %v1831 = vpack.c.b16 %v1627, %v1623
      %v1832 = vpack.c.b16 %v1628, %v1624
      %v1833 = vpack.c.b16 %v1629, %v1625
      %v1834 = vpack.c.b16 %v1634, %v1630
      %v1835 = vpack.c.b16 %v1635, %v1631
      %v1836 = vpack.c.b16 %v1636, %v1632
      %v1837 = vpack.c.b16 %v1637, %v1633
      %v1838 = vpack.c.b16 %v1642, %v1638
      %v1839 = vpack.c.b16 %v1643, %v1639
      %v1840 = vpack.c.b16 %v1644, %v1640
      %v1841 = vpack.c.b16 %v1645, %v1641
      %v1842 = vpack.c.b16 %v1650, %v1646
      %v1843 = vpack.c.b16 %v1651, %v1647
      %v1844 = vpack.c.b16 %v1652, %v1648
      %v1845 = vpack.c.b16 %v1653, %v1649
      %v1846 = vpack.c.b16 %v1658, %v1654
      %v1847 = vpack.c.b16 %v1659, %v1655
      %v1848 = vpack.c.b16 %v1660, %v1656
      %v1849 = vpack.c.b16 %v1661, %v1657
      %v1850 = vpack.c.b16 %v1666, %v1662
      %v1851 = vpack.c.b16 %v1667, %v1663
      %v1852 = vpack.c.b16 %v1668, %v1664
      %v1853 = vpack.c.b16 %v1669, %v1665
      %v1854 = vpack.c.b16 %v1674, %v1670
      %v1855 = vpack.c.b16 %v1675, %v1671
      %v1856 = vpack.c.b16 %v1676, %v1672
      %v1857 = vpack.c.b16 %v1677, %v1673
      %v1858 = vpack.c.b16 %v1682, %v1678
      %v1859 = vpack.c.b16 %v1683, %v1679
      %v1860 = vpack.c.b16 %v1684, %v1680
      %v1861 = vpack.c.b16 %v1685, %v1681
      %v1862 = vpack.c.b16 %v1690, %v1686
      %v1863 = vpack.c.b16 %v1691, %v1687
      %v1864 = vpack.c.b16 %v1692, %v1688
      %v1865 = vpack.c.b16 %v1693, %v1689
      %v1866 = vpack.c.b16 %v1698, %v1694
      %v1867 = vpack.c.b16 %v1699, %v1695
      %v1868 = vpack.c.b16 %v1700, %v1696
      %v1869 = vpack.c.b16 %v1701, %v1697
      %v1870 = vpack.c.b16 %v1706, %v1702
      %v1871 = vpack.c.b16 %v1707, %v1703
      %v1872 = vpack.c.b16 %v1708, %v1704
      %v1873 = vpack.c.b16 %v1709, %v1705
      %v1874 = vpack.c.b16 %v1714, %v1710
      %v1875 = vpack.c.b16 %v1715, %v1711
      %v1876 = vpack.c.b16 %v1716, %v1712
      %v1877 = vpack.c.b16 %v1717, %v1713
      %v1878 = vpack.c.b16 %v1722, %v1718
      %v1879 = vpack.c.b16 %v1723, %v1719
      %v1880 = vpack.c.b16 %v1724, %v1720
      %v1881 = vpack.c.b16 %v1725, %v1721
      %v1882 = vpack.c.b16 %v1730, %v1726
      %v1883 = vpack.c.b16 %v1731, %v1727
      %v1884 = vpack.c.b16 %v1732, %v1728
      %v1885 = vpack.c.b16 %v1733, %v1729
      %v1886 = vpack.c.b16 %v1738, %v1734
      %v1887 = vpack.c.b16 %v1739, %v1735
      %v1888 = vpack.c.b16 %v1740, %v1736
      %v1889 = vpack.c.b16 %v1741, %v1737
      %v1890 = vpack.c.b16 %v1746, %v1742
      %v1891 = vpack.c.b16 %v1747, %v1743
      %v1892 = vpack.c.b16 %v1748, %v1744
      %v1893 = vpack.c.b16 %v1749, %v1745
      %v1894 = vpack.c.b16 %v1754, %v1750
      %v1895 = vpack.c.b16 %v1755, %v1751
      %v1896 = vpack.c.b16 %v1756, %v1752
      %v1897 = vpack.c.b16 %v1757, %v1753
      %v1898 = vpack.c.b16 %v1762, %v1758
      %v1899 = vpack.c.b16 %v1763, %v1759
      %v1900 = vpack.c.b16 %v1764, %v1760
      %v1901 = vpack.c.b16 %v1765, %v1761
      %v1902 = vpack.c.b16 %v1770, %v1766
      %v1903 = vpack.c.b16 %v1771, %v1767
      %v1904 = vpack.c.b16 %v1772, %v1768
      %v1905 = vpack.c.b16 %v1773, %v1769
      %v1906 = vpack.c.b16 %v1778, %v1774
      %v1907 = vpack.c.b16 %v1779, %v1775
      %v1908 = vpack.c.b16 %v1780, %v1776
      %v1909 = vpack.c.b16 %v1781, %v1777
      %2038 = vmatprep.subr.bf16.mxu0 %v1811
      %2039 = vmatpush1.bf16.msra.mxu0 %v1810
      %2040 = vmatprep.subr.bf16.mxu0 %v1807
      %2041 = vmatpush1.bf16.msra.mxu0 %v1806
      %2042 = vmatprep.subr.bf16.mxu0 %v1803
      %2043 = vmatpush1.bf16.msra.mxu0 %v1802
      %2044 = vmatprep.subr.bf16.mxu0 %v1799
      %2045 = vmatpush1.bf16.msra.mxu0 %v1798
      %2046 = vmatprep.subr.bf16.mxu0 %v1795
      %2047 = vmatpush1.bf16.msra.mxu0 %v1794
      %2048 = vmatprep.subr.bf16.mxu0 %v1791
      %2049 = vmatpush1.bf16.msra.mxu0 %v1790
      %2050 = vmatprep.subr.bf16.mxu0 %v1787
      %2051 = vmatpush1.bf16.msra.mxu0 %v1786
      %2052 = vmatprep.subr.bf16.mxu0 %v1783
      %2053 = vmatpush1.bf16.msra.mxu0 %v1782
      %2054 = vmatprep.subr.bf16.mxu0 %v1843
      %2055 = vmatpush2.bf16.msra.mxu0 %v1842
      %2056 = vmatprep.subr.bf16.mxu0 %v1839
      %2057 = vmatpush2.bf16.msra.mxu0 %v1838
      %2058 = vmatprep.subr.bf16.mxu0 %v1835
      %2059 = vmatpush2.bf16.msra.mxu0 %v1834
      %2060 = vmatprep.subr.bf16.mxu0 %v1831
      %2061 = vmatpush2.bf16.msra.mxu0 %v1830
      %2062 = vmatprep.subr.bf16.mxu0 %v1827
      %2063 = vmatpush2.bf16.msra.mxu0 %v1826
      %2064 = vmatprep.subr.bf16.mxu0 %v1823
      %2065 = vmatpush2.bf16.msra.mxu0 %v1822
      %2066 = vmatprep.subr.bf16.mxu0 %v1819
      %2067 = vmatpush2.bf16.msra.mxu0 %v1818
      %2068 = vmatprep.subr.bf16.mxu0 %v1815
      %2069 = vmatpush2.bf16.msra.mxu0 %v1814
      %2070 = vmatprep.mubr.bf16.mxu0 %v1369
      %2071 = vmatmul.mubr.bf16.gmra.mxu0 %v1357
      %v2072 = vpop.f32.mrf.mxu0
      %v2073 = vadd.f32 0.0, %v2072
      %v2074 = vpop.f32.mrf.mxu0
      %v2075 = vadd.f32 0.0, %v2074
      %v2076 = vpop.f32.mrf.mxu0
      %v2077 = vadd.f32 0.0, %v2076
      %v2078 = vpop.f32.mrf.mxu0
      %v2079 = vadd.f32 0.0, %v2078
      %2080 = vdwg.mxu0
      %2081 = vmatprep.subr.bf16.mxu0 %v1875
      %2082 = vmatpush1.bf16.msra.mxu0 %v1874
      %2083 = vmatprep.subr.bf16.mxu0 %v1871
      %2084 = vmatpush1.bf16.msra.mxu0 %v1870
      %2085 = vmatprep.subr.bf16.mxu0 %v1867
      %2086 = vmatpush1.bf16.msra.mxu0 %v1866
      %2087 = vmatprep.subr.bf16.mxu0 %v1863
      %2088 = vmatpush1.bf16.msra.mxu0 %v1862
      %2089 = vmatprep.subr.bf16.mxu0 %v1859
      %2090 = vmatpush1.bf16.msra.mxu0 %v1858
      %2091 = vmatprep.subr.bf16.mxu0 %v1855
      %2092 = vmatpush1.bf16.msra.mxu0 %v1854
      %2093 = vmatprep.subr.bf16.mxu0 %v1851
      %2094 = vmatpush1.bf16.msra.mxu0 %v1850
      %2095 = vmatprep.subr.bf16.mxu0 %v1847
      %2096 = vmatpush1.bf16.msra.mxu0 %v1846
      %2097 = vmatprep.subr.bf16.mxu0 %v1907
      %2098 = vmatpush2.bf16.msra.mxu0 %v1906
      %2099 = vmatprep.subr.bf16.mxu0 %v1903
      %2100 = vmatpush2.bf16.msra.mxu0 %v1902
      %2101 = vmatprep.subr.bf16.mxu0 %v1899
      %2102 = vmatpush2.bf16.msra.mxu0 %v1898
      %2103 = vmatprep.subr.bf16.mxu0 %v1895
      %2104 = vmatpush2.bf16.msra.mxu0 %v1894
      %2105 = vmatprep.subr.bf16.mxu0 %v1891
      %2106 = vmatpush2.bf16.msra.mxu0 %v1890
      %2107 = vmatprep.subr.bf16.mxu0 %v1887
      %2108 = vmatpush2.bf16.msra.mxu0 %v1886
      %2109 = vmatprep.subr.bf16.mxu0 %v1883
      %2110 = vmatpush2.bf16.msra.mxu0 %v1882
      %2111 = vmatprep.subr.bf16.mxu0 %v1879
      %2112 = vmatpush2.bf16.msra.mxu0 %v1878
      %2113 = vmatprep.mubr.bf16.mxu0 %v1393
      %2114 = vmatmul.mubr.bf16.gmra.mxu0 %v1381
      %v2115 = vpop.f32.mrf.mxu0
      %v2116 = vadd.f32 %v2073, %v2115
      %v2117 = vpop.f32.mrf.mxu0
      %v2118 = vadd.f32 %v2075, %v2117
      %v2119 = vpop.f32.mrf.mxu0
      %v2120 = vadd.f32 %v2077, %v2119
      %v2121 = vpop.f32.mrf.mxu0
      %v2122 = vadd.f32 %v2079, %v2121
      %2123 = vdwg.mxu0
      %2124 = vmatprep.subr.bf16.mxu0 %v1813
      %2125 = vmatpush1.bf16.msra.mxu0 %v1812
      %2126 = vmatprep.subr.bf16.mxu0 %v1809
      %2127 = vmatpush1.bf16.msra.mxu0 %v1808
      %2128 = vmatprep.subr.bf16.mxu0 %v1805
      %2129 = vmatpush1.bf16.msra.mxu0 %v1804
      %2130 = vmatprep.subr.bf16.mxu0 %v1801
      %2131 = vmatpush1.bf16.msra.mxu0 %v1800
      %2132 = vmatprep.subr.bf16.mxu0 %v1797
      %2133 = vmatpush1.bf16.msra.mxu0 %v1796
      %2134 = vmatprep.subr.bf16.mxu0 %v1793
      %2135 = vmatpush1.bf16.msra.mxu0 %v1792
      %2136 = vmatprep.subr.bf16.mxu0 %v1789
      %2137 = vmatpush1.bf16.msra.mxu0 %v1788
      %2138 = vmatprep.subr.bf16.mxu0 %v1785
      %2139 = vmatpush1.bf16.msra.mxu0 %v1784
      %2140 = vmatprep.subr.bf16.mxu0 %v1845
      %2141 = vmatpush2.bf16.msra.mxu0 %v1844
      %2142 = vmatprep.subr.bf16.mxu0 %v1841
      %2143 = vmatpush2.bf16.msra.mxu0 %v1840
      %2144 = vmatprep.subr.bf16.mxu0 %v1837
      %2145 = vmatpush2.bf16.msra.mxu0 %v1836
      %2146 = vmatprep.subr.bf16.mxu0 %v1833
      %2147 = vmatpush2.bf16.msra.mxu0 %v1832
      %2148 = vmatprep.subr.bf16.mxu0 %v1829
      %2149 = vmatpush2.bf16.msra.mxu0 %v1828
      %2150 = vmatprep.subr.bf16.mxu0 %v1825
      %2151 = vmatpush2.bf16.msra.mxu0 %v1824
      %2152 = vmatprep.subr.bf16.mxu0 %v1821
      %2153 = vmatpush2.bf16.msra.mxu0 %v1820
      %2154 = vmatprep.subr.bf16.mxu0 %v1817
      %2155 = vmatpush2.bf16.msra.mxu0 %v1816
      %2156 = vmatprep.mubr.bf16.mxu0 %v1369
      %2157 = vmatmul.mubr.bf16.gmra.mxu0 %v1357
      %v2158 = vpop.f32.mrf.mxu0
      %v2159 = vadd.f32 0.0, %v2158
      %v2160 = vpop.f32.mrf.mxu0
      %v2161 = vadd.f32 0.0, %v2160
      %v2162 = vpop.f32.mrf.mxu0
      %v2163 = vadd.f32 0.0, %v2162
      %v2164 = vpop.f32.mrf.mxu0
      %v2165 = vadd.f32 0.0, %v2164
      %2166 = vdwg.mxu0
      %2167 = vmatprep.subr.bf16.mxu0 %v1877
      %2168 = vmatpush1.bf16.msra.mxu0 %v1876
      %2169 = vmatprep.subr.bf16.mxu0 %v1873
      %2170 = vmatpush1.bf16.msra.mxu0 %v1872
      %2171 = vmatprep.subr.bf16.mxu0 %v1869
      %2172 = vmatpush1.bf16.msra.mxu0 %v1868
      %2173 = vmatprep.subr.bf16.mxu0 %v1865
      %2174 = vmatpush1.bf16.msra.mxu0 %v1864
      %2175 = vmatprep.subr.bf16.mxu0 %v1861
      %2176 = vmatpush1.bf16.msra.mxu0 %v1860
      %2177 = vmatprep.subr.bf16.mxu0 %v1857
      %2178 = vmatpush1.bf16.msra.mxu0 %v1856
      %2179 = vmatprep.subr.bf16.mxu0 %v1853
      %2180 = vmatpush1.bf16.msra.mxu0 %v1852
      %2181 = vmatprep.subr.bf16.mxu0 %v1849
      %2182 = vmatpush1.bf16.msra.mxu0 %v1848
      %2183 = vmatprep.subr.bf16.mxu0 %v1909
      %2184 = vmatpush2.bf16.msra.mxu0 %v1908
      %2185 = vmatprep.subr.bf16.mxu0 %v1905
      %2186 = vmatpush2.bf16.msra.mxu0 %v1904
      %2187 = vmatprep.subr.bf16.mxu0 %v1901
      %2188 = vmatpush2.bf16.msra.mxu0 %v1900
      %2189 = vmatprep.subr.bf16.mxu0 %v1897
      %2190 = vmatpush2.bf16.msra.mxu0 %v1896
      %2191 = vmatprep.subr.bf16.mxu0 %v1893
      %2192 = vmatpush2.bf16.msra.mxu0 %v1892
      %2193 = vmatprep.subr.bf16.mxu0 %v1889
      %2194 = vmatpush2.bf16.msra.mxu0 %v1888
      %2195 = vmatprep.subr.bf16.mxu0 %v1885
      %2196 = vmatpush2.bf16.msra.mxu0 %v1884
      %2197 = vmatprep.subr.bf16.mxu0 %v1881
      %2198 = vmatpush2.bf16.msra.mxu0 %v1880
      %2199 = vmatprep.mubr.bf16.mxu0 %v1393
      %2200 = vmatmul.mubr.bf16.gmra.mxu0 %v1381
      %v2201 = vpop.f32.mrf.mxu0
      %v2202 = vadd.f32 %v2159, %v2201
      %v2203 = vpop.f32.mrf.mxu0
      %v2204 = vadd.f32 %v2161, %v2203
      %v2205 = vpop.f32.mrf.mxu0
      %v2206 = vadd.f32 %v2163, %v2205
      %v2207 = vpop.f32.mrf.mxu0
      %v2208 = vadd.f32 %v2165, %v2207
      %2209 = vdwg.mxu0
      %v2210 = vadd.f32 %v1198, %v2116
      %v2211 = vadd.f32 %v1199, %v2118
      %v2212 = vadd.f32 %v1200, %v2202
      %v2213 = vadd.f32 %v1201, %v2204
      %v2214 = vadd.f32 %v1202, %v2120
      %v2215 = vadd.f32 %v1203, %v2122
      %v2216 = vadd.f32 %v1204, %v2206
      %v2217 = vadd.f32 %v1205, %v2208
      %s2218 = scalar_lea.vmem %s1, 2048
      %v2219 = vld [vmem:[%s2218] sm:$0xff]
      %v2220 = vld [vmem:[%s2218 + $0x8] sm:$0xff]
      %v2221 = vld [vmem:[%s2218 + $0x10] sm:$0xff]
      %v2222 = vld [vmem:[%s2218 + $0x18] sm:$0xff]
      %v2223 = vld [vmem:[%s2218 + $0x20] sm:$0xff]
      %v2224 = vld [vmem:[%s2218 + $0x28] sm:$0xff]
      %v2225 = vld [vmem:[%s2218 + $0x30] sm:$0xff]
      %v2226 = vld [vmem:[%s2218 + $0x38] sm:$0xff]
      %v2227 = vld [vmem:[%s2218 + $0x40] sm:$0xff]
      %v2228 = vld [vmem:[%s2218 + $0x48] sm:$0xff]
      %v2229 = vld [vmem:[%s2218 + $0x50] sm:$0xff]
      %v2230 = vld [vmem:[%s2218 + $0x58] sm:$0xff]
      %v2231 = vld [vmem:[%s2218 + $0x60] sm:$0xff]
      %v2232 = vld [vmem:[%s2218 + $0x68] sm:$0xff]
      %v2233 = vld [vmem:[%s2218 + $0x70] sm:$0xff]
      %v2234 = vld [vmem:[%s2218 + $0x78] sm:$0xff]
      %v2235 = vld [vmem:[%s2218 + $0x80] sm:$0xff]
      %v2236 = vld [vmem:[%s2218 + $0x88] sm:$0xff]
      %v2237 = vld [vmem:[%s2218 + $0x90] sm:$0xff]
      %v2238 = vld [vmem:[%s2218 + $0x98] sm:$0xff]
      %v2239 = vld [vmem:[%s2218 + $0xa0] sm:$0xff]
      %v2240 = vld [vmem:[%s2218 + $0xa8] sm:$0xff]
      %v2241 = vld [vmem:[%s2218 + $0xb0] sm:$0xff]
      %v2242 = vld [vmem:[%s2218 + $0xb8] sm:$0xff]
      %v2243 = vld [vmem:[%s2218 + $0xc0] sm:$0xff]
      %v2244 = vld [vmem:[%s2218 + $0xc8] sm:$0xff]
      %v2245 = vld [vmem:[%s2218 + $0xd0] sm:$0xff]
      %v2246 = vld [vmem:[%s2218 + $0xd8] sm:$0xff]
      %v2247 = vld [vmem:[%s2218 + $0xe0] sm:$0xff]
      %v2248 = vld [vmem:[%s2218 + $0xe8] sm:$0xff]
      %v2249 = vld [vmem:[%s2218 + $0xf0] sm:$0xff]
      %v2250 = vld [vmem:[%s2218 + $0xf8] sm:$0xff]
      %v2251 = vld [vmem:[%s2218 + $0x100] sm:$0xff]
      %v2252 = vld [vmem:[%s2218 + $0x108] sm:$0xff]
      %v2253 = vld [vmem:[%s2218 + $0x110] sm:$0xff]
      %v2254 = vld [vmem:[%s2218 + $0x118] sm:$0xff]
      %v2255 = vld [vmem:[%s2218 + $0x120] sm:$0xff]
      %v2256 = vld [vmem:[%s2218 + $0x128] sm:$0xff]
      %v2257 = vld [vmem:[%s2218 + $0x130] sm:$0xff]
      %v2258 = vld [vmem:[%s2218 + $0x138] sm:$0xff]
      %v2259 = vld [vmem:[%s2218 + $0x140] sm:$0xff]
      %v2260 = vld [vmem:[%s2218 + $0x148] sm:$0xff]
      %v2261 = vld [vmem:[%s2218 + $0x150] sm:$0xff]
      %v2262 = vld [vmem:[%s2218 + $0x158] sm:$0xff]
      %v2263 = vld [vmem:[%s2218 + $0x160] sm:$0xff]
      %v2264 = vld [vmem:[%s2218 + $0x168] sm:$0xff]
      %v2265 = vld [vmem:[%s2218 + $0x170] sm:$0xff]
      %v2266 = vld [vmem:[%s2218 + $0x178] sm:$0xff]
      %v2267 = vld [vmem:[%s2218 + $0x180] sm:$0xff]
      %v2268 = vld [vmem:[%s2218 + $0x188] sm:$0xff]
      %v2269 = vld [vmem:[%s2218 + $0x190] sm:$0xff]
      %v2270 = vld [vmem:[%s2218 + $0x198] sm:$0xff]
      %v2271 = vld [vmem:[%s2218 + $0x1a0] sm:$0xff]
      %v2272 = vld [vmem:[%s2218 + $0x1a8] sm:$0xff]
      %v2273 = vld [vmem:[%s2218 + $0x1b0] sm:$0xff]
      %v2274 = vld [vmem:[%s2218 + $0x1b8] sm:$0xff]
      %v2275 = vld [vmem:[%s2218 + $0x1c0] sm:$0xff]
      %v2276 = vld [vmem:[%s2218 + $0x1c8] sm:$0xff]
      %v2277 = vld [vmem:[%s2218 + $0x1d0] sm:$0xff]
      %v2278 = vld [vmem:[%s2218 + $0x1d8] sm:$0xff]
      %v2279 = vld [vmem:[%s2218 + $0x1e0] sm:$0xff]
      %v2280 = vld [vmem:[%s2218 + $0x1e8] sm:$0xff]
      %v2281 = vld [vmem:[%s2218 + $0x1f0] sm:$0xff]
      %v2282 = vld [vmem:[%s2218 + $0x1f8] sm:$0xff]
      %v2283 = vld [vmem:[%s2218 + $0x200] sm:$0xff]
      %v2284 = vld [vmem:[%s2218 + $0x208] sm:$0xff]
      %v2285 = vld [vmem:[%s2218 + $0x210] sm:$0xff]
      %v2286 = vld [vmem:[%s2218 + $0x218] sm:$0xff]
      %v2287 = vld [vmem:[%s2218 + $0x220] sm:$0xff]
      %v2288 = vld [vmem:[%s2218 + $0x228] sm:$0xff]
      %v2289 = vld [vmem:[%s2218 + $0x230] sm:$0xff]
      %v2290 = vld [vmem:[%s2218 + $0x238] sm:$0xff]
      %v2291 = vld [vmem:[%s2218 + $0x240] sm:$0xff]
      %v2292 = vld [vmem:[%s2218 + $0x248] sm:$0xff]
      %v2293 = vld [vmem:[%s2218 + $0x250] sm:$0xff]
      %v2294 = vld [vmem:[%s2218 + $0x258] sm:$0xff]
      %v2295 = vld [vmem:[%s2218 + $0x260] sm:$0xff]
      %v2296 = vld [vmem:[%s2218 + $0x268] sm:$0xff]
      %v2297 = vld [vmem:[%s2218 + $0x270] sm:$0xff]
      %v2298 = vld [vmem:[%s2218 + $0x278] sm:$0xff]
      %v2299 = vld [vmem:[%s2218 + $0x280] sm:$0xff]
      %v2300 = vld [vmem:[%s2218 + $0x288] sm:$0xff]
      %v2301 = vld [vmem:[%s2218 + $0x290] sm:$0xff]
      %v2302 = vld [vmem:[%s2218 + $0x298] sm:$0xff]
      %v2303 = vld [vmem:[%s2218 + $0x2a0] sm:$0xff]
      %v2304 = vld [vmem:[%s2218 + $0x2a8] sm:$0xff]
      %v2305 = vld [vmem:[%s2218 + $0x2b0] sm:$0xff]
      %v2306 = vld [vmem:[%s2218 + $0x2b8] sm:$0xff]
      %v2307 = vld [vmem:[%s2218 + $0x2c0] sm:$0xff]
      %v2308 = vld [vmem:[%s2218 + $0x2c8] sm:$0xff]
      %v2309 = vld [vmem:[%s2218 + $0x2d0] sm:$0xff]
      %v2310 = vld [vmem:[%s2218 + $0x2d8] sm:$0xff]
      %v2311 = vld [vmem:[%s2218 + $0x2e0] sm:$0xff]
      %v2312 = vld [vmem:[%s2218 + $0x2e8] sm:$0xff]
      %v2313 = vld [vmem:[%s2218 + $0x2f0] sm:$0xff]
      %v2314 = vld [vmem:[%s2218 + $0x2f8] sm:$0xff]
      %v2315 = vld [vmem:[%s2218 + $0x300] sm:$0xff]
      %v2316 = vld [vmem:[%s2218 + $0x308] sm:$0xff]
      %v2317 = vld [vmem:[%s2218 + $0x310] sm:$0xff]
      %v2318 = vld [vmem:[%s2218 + $0x318] sm:$0xff]
      %v2319 = vld [vmem:[%s2218 + $0x320] sm:$0xff]
      %v2320 = vld [vmem:[%s2218 + $0x328] sm:$0xff]
      %v2321 = vld [vmem:[%s2218 + $0x330] sm:$0xff]
      %v2322 = vld [vmem:[%s2218 + $0x338] sm:$0xff]
      %v2323 = vld [vmem:[%s2218 + $0x340] sm:$0xff]
      %v2324 = vld [vmem:[%s2218 + $0x348] sm:$0xff]
      %v2325 = vld [vmem:[%s2218 + $0x350] sm:$0xff]
      %v2326 = vld [vmem:[%s2218 + $0x358] sm:$0xff]
      %v2327 = vld [vmem:[%s2218 + $0x360] sm:$0xff]
      %v2328 = vld [vmem:[%s2218 + $0x368] sm:$0xff]
      %v2329 = vld [vmem:[%s2218 + $0x370] sm:$0xff]
      %v2330 = vld [vmem:[%s2218 + $0x378] sm:$0xff]
      %v2331 = vld [vmem:[%s2218 + $0x380] sm:$0xff]
      %v2332 = vld [vmem:[%s2218 + $0x388] sm:$0xff]
      %v2333 = vld [vmem:[%s2218 + $0x390] sm:$0xff]
      %v2334 = vld [vmem:[%s2218 + $0x398] sm:$0xff]
      %v2335 = vld [vmem:[%s2218 + $0x3a0] sm:$0xff]
      %v2336 = vld [vmem:[%s2218 + $0x3a8] sm:$0xff]
      %v2337 = vld [vmem:[%s2218 + $0x3b0] sm:$0xff]
      %v2338 = vld [vmem:[%s2218 + $0x3b8] sm:$0xff]
      %v2339 = vld [vmem:[%s2218 + $0x3c0] sm:$0xff]
      %v2340 = vld [vmem:[%s2218 + $0x3c8] sm:$0xff]
      %v2341 = vld [vmem:[%s2218 + $0x3d0] sm:$0xff]
      %v2342 = vld [vmem:[%s2218 + $0x3d8] sm:$0xff]
      %v2343 = vld [vmem:[%s2218 + $0x3e0] sm:$0xff]
      %v2344 = vld [vmem:[%s2218 + $0x3e8] sm:$0xff]
      %v2345 = vld [vmem:[%s2218 + $0x3f0] sm:$0xff]
      %v2346 = vld [vmem:[%s2218 + $0x3f8] sm:$0xff]
      %vm2347 = vcmask 1046528
      %v2348 = vrot.slane %v357, 1
      %v2349 = vrot.slane %v1341, 1
      %v2350 = vsel %vm2347, %v2348, %v2349
      %v2351 = vrot.slane %v358, 1
      %v2352 = vrot.slane %v1342, 1
      %v2353 = vsel %vm2347, %v2351, %v2352
      %v2354 = vrot.slane %v359, 1
      %v2355 = vrot.slane %v1343, 1
      %v2356 = vsel %vm2347, %v2354, %v2355
      %v2357 = vrot.slane %v360, 1
      %v2358 = vrot.slane %v1344, 1
      %v2359 = vsel %vm2347, %v2357, %v2358
      %v2492 = vunpack.c.l.b16 %v2219
      %v2493 = vunpack.c.h.b16 %v2219
      %v2494 = vunpack.c.l.b16 %v2220
      %v2495 = vunpack.c.h.b16 %v2220
      %v2496 = vunpack.c.l.b16 %v2221
      %v2497 = vunpack.c.h.b16 %v2221
      %v2498 = vunpack.c.l.b16 %v2222
      %v2499 = vunpack.c.h.b16 %v2222
      %v2500 = vunpack.c.l.b16 %v2223
      %v2501 = vunpack.c.h.b16 %v2223
      %v2502 = vunpack.c.l.b16 %v2224
      %v2503 = vunpack.c.h.b16 %v2224
      %v2504 = vunpack.c.l.b16 %v2225
      %v2505 = vunpack.c.h.b16 %v2225
      %v2506 = vunpack.c.l.b16 %v2226
      %v2507 = vunpack.c.h.b16 %v2226
      %v2508 = vunpack.c.l.b16 %v2227
      %v2509 = vunpack.c.h.b16 %v2227
      %v2510 = vunpack.c.l.b16 %v2228
      %v2511 = vunpack.c.h.b16 %v2228
      %v2512 = vunpack.c.l.b16 %v2229
      %v2513 = vunpack.c.h.b16 %v2229
      %v2514 = vunpack.c.l.b16 %v2230
      %v2515 = vunpack.c.h.b16 %v2230
      %v2516 = vunpack.c.l.b16 %v2231
      %v2517 = vunpack.c.h.b16 %v2231
      %v2518 = vunpack.c.l.b16 %v2232
      %v2519 = vunpack.c.h.b16 %v2232
      %v2520 = vunpack.c.l.b16 %v2233
      %v2521 = vunpack.c.h.b16 %v2233
      %v2522 = vunpack.c.l.b16 %v2234
      %v2523 = vunpack.c.h.b16 %v2234
      %v2524 = vunpack.c.l.b16 %v2235
      %v2525 = vunpack.c.h.b16 %v2235
      %v2526 = vunpack.c.l.b16 %v2236
      %v2527 = vunpack.c.h.b16 %v2236
      %v2528 = vunpack.c.l.b16 %v2237
      %v2529 = vunpack.c.h.b16 %v2237
      %v2530 = vunpack.c.l.b16 %v2238
      %v2531 = vunpack.c.h.b16 %v2238
      %v2532 = vunpack.c.l.b16 %v2239
      %v2533 = vunpack.c.h.b16 %v2239
      %v2534 = vunpack.c.l.b16 %v2240
      %v2535 = vunpack.c.h.b16 %v2240
      %v2536 = vunpack.c.l.b16 %v2241
      %v2537 = vunpack.c.h.b16 %v2241
      %v2538 = vunpack.c.l.b16 %v2242
      %v2539 = vunpack.c.h.b16 %v2242
      %v2540 = vunpack.c.l.b16 %v2243
      %v2541 = vunpack.c.h.b16 %v2243
      %v2542 = vunpack.c.l.b16 %v2244
      %v2543 = vunpack.c.h.b16 %v2244
      %v2544 = vunpack.c.l.b16 %v2245
      %v2545 = vunpack.c.h.b16 %v2245
      %v2546 = vunpack.c.l.b16 %v2246
      %v2547 = vunpack.c.h.b16 %v2246
      %v2548 = vunpack.c.l.b16 %v2247
      %v2549 = vunpack.c.h.b16 %v2247
      %v2550 = vunpack.c.l.b16 %v2248
      %v2551 = vunpack.c.h.b16 %v2248
      %v2552 = vunpack.c.l.b16 %v2249
      %v2553 = vunpack.c.h.b16 %v2249
      %v2554 = vunpack.c.l.b16 %v2250
      %v2555 = vunpack.c.h.b16 %v2250
      %v2556 = vunpack.c.l.b16 %v2251
      %v2557 = vunpack.c.h.b16 %v2251
      %v2558 = vunpack.c.l.b16 %v2252
      %v2559 = vunpack.c.h.b16 %v2252
      %v2560 = vunpack.c.l.b16 %v2253
      %v2561 = vunpack.c.h.b16 %v2253
      %v2562 = vunpack.c.l.b16 %v2254
      %v2563 = vunpack.c.h.b16 %v2254
      %v2564 = vunpack.c.l.b16 %v2255
      %v2565 = vunpack.c.h.b16 %v2255
      %v2566 = vunpack.c.l.b16 %v2256
      %v2567 = vunpack.c.h.b16 %v2256
      %v2568 = vunpack.c.l.b16 %v2257
      %v2569 = vunpack.c.h.b16 %v2257
      %v2570 = vunpack.c.l.b16 %v2258
      %v2571 = vunpack.c.h.b16 %v2258
      %v2572 = vunpack.c.l.b16 %v2259
      %v2573 = vunpack.c.h.b16 %v2259
      %v2574 = vunpack.c.l.b16 %v2260
      %v2575 = vunpack.c.h.b16 %v2260
      %v2576 = vunpack.c.l.b16 %v2261
      %v2577 = vunpack.c.h.b16 %v2261
      %v2578 = vunpack.c.l.b16 %v2262
      %v2579 = vunpack.c.h.b16 %v2262
      %v2580 = vunpack.c.l.b16 %v2263
      %v2581 = vunpack.c.h.b16 %v2263
      %v2582 = vunpack.c.l.b16 %v2264
      %v2583 = vunpack.c.h.b16 %v2264
      %v2584 = vunpack.c.l.b16 %v2265
      %v2585 = vunpack.c.h.b16 %v2265
      %v2586 = vunpack.c.l.b16 %v2266
      %v2587 = vunpack.c.h.b16 %v2266
      %v2588 = vunpack.c.l.b16 %v2267
      %v2589 = vunpack.c.h.b16 %v2267
      %v2590 = vunpack.c.l.b16 %v2268
      %v2591 = vunpack.c.h.b16 %v2268
      %v2592 = vunpack.c.l.b16 %v2269
      %v2593 = vunpack.c.h.b16 %v2269
      %v2594 = vunpack.c.l.b16 %v2270
      %v2595 = vunpack.c.h.b16 %v2270
      %v2596 = vunpack.c.l.b16 %v2271
      %v2597 = vunpack.c.h.b16 %v2271
      %v2598 = vunpack.c.l.b16 %v2272
      %v2599 = vunpack.c.h.b16 %v2272
      %v2600 = vunpack.c.l.b16 %v2273
      %v2601 = vunpack.c.h.b16 %v2273
      %v2602 = vunpack.c.l.b16 %v2274
      %v2603 = vunpack.c.h.b16 %v2274
      %v2604 = vunpack.c.l.b16 %v2275
      %v2605 = vunpack.c.h.b16 %v2275
      %v2606 = vunpack.c.l.b16 %v2276
      %v2607 = vunpack.c.h.b16 %v2276
      %v2608 = vunpack.c.l.b16 %v2277
      %v2609 = vunpack.c.h.b16 %v2277
      %v2610 = vunpack.c.l.b16 %v2278
      %v2611 = vunpack.c.h.b16 %v2278
      %v2612 = vunpack.c.l.b16 %v2279
      %v2613 = vunpack.c.h.b16 %v2279
      %v2614 = vunpack.c.l.b16 %v2280
      %v2615 = vunpack.c.h.b16 %v2280
      %v2616 = vunpack.c.l.b16 %v2281
      %v2617 = vunpack.c.h.b16 %v2281
      %v2618 = vunpack.c.l.b16 %v2282
      %v2619 = vunpack.c.h.b16 %v2282
      %v2620 = vunpack.c.l.b16 %v2283
      %v2621 = vunpack.c.h.b16 %v2283
      %v2622 = vunpack.c.l.b16 %v2284
      %v2623 = vunpack.c.h.b16 %v2284
      %v2624 = vunpack.c.l.b16 %v2285
      %v2625 = vunpack.c.h.b16 %v2285
      %v2626 = vunpack.c.l.b16 %v2286
      %v2627 = vunpack.c.h.b16 %v2286
      %v2628 = vunpack.c.l.b16 %v2287
      %v2629 = vunpack.c.h.b16 %v2287
      %v2630 = vunpack.c.l.b16 %v2288
      %v2631 = vunpack.c.h.b16 %v2288
      %v2632 = vunpack.c.l.b16 %v2289
      %v2633 = vunpack.c.h.b16 %v2289
      %v2634 = vunpack.c.l.b16 %v2290
      %v2635 = vunpack.c.h.b16 %v2290
      %v2636 = vunpack.c.l.b16 %v2291
      %v2637 = vunpack.c.h.b16 %v2291
      %v2638 = vunpack.c.l.b16 %v2292
      %v2639 = vunpack.c.h.b16 %v2292
      %v2640 = vunpack.c.l.b16 %v2293
      %v2641 = vunpack.c.h.b16 %v2293
      %v2642 = vunpack.c.l.b16 %v2294
      %v2643 = vunpack.c.h.b16 %v2294
      %v2644 = vunpack.c.l.b16 %v2295
      %v2645 = vunpack.c.h.b16 %v2295
      %v2646 = vunpack.c.l.b16 %v2296
      %v2647 = vunpack.c.h.b16 %v2296
      %v2648 = vunpack.c.l.b16 %v2297
      %v2649 = vunpack.c.h.b16 %v2297
      %v2650 = vunpack.c.l.b16 %v2298
      %v2651 = vunpack.c.h.b16 %v2298
      %v2652 = vunpack.c.l.b16 %v2299
      %v2653 = vunpack.c.h.b16 %v2299
      %v2654 = vunpack.c.l.b16 %v2300
      %v2655 = vunpack.c.h.b16 %v2300
      %v2656 = vunpack.c.l.b16 %v2301
      %v2657 = vunpack.c.h.b16 %v2301
      %v2658 = vunpack.c.l.b16 %v2302
      %v2659 = vunpack.c.h.b16 %v2302
      %v2660 = vunpack.c.l.b16 %v2303
      %v2661 = vunpack.c.h.b16 %v2303
      %v2662 = vunpack.c.l.b16 %v2304
      %v2663 = vunpack.c.h.b16 %v2304
      %v2664 = vunpack.c.l.b16 %v2305
      %v2665 = vunpack.c.h.b16 %v2305
      %v2666 = vunpack.c.l.b16 %v2306
      %v2667 = vunpack.c.h.b16 %v2306
      %v2668 = vunpack.c.l.b16 %v2307
      %v2669 = vunpack.c.h.b16 %v2307
      %v2670 = vunpack.c.l.b16 %v2308
      %v2671 = vunpack.c.h.b16 %v2308
      %v2672 = vunpack.c.l.b16 %v2309
      %v2673 = vunpack.c.h.b16 %v2309
      %v2674 = vunpack.c.l.b16 %v2310
      %v2675 = vunpack.c.h.b16 %v2310
      %v2676 = vunpack.c.l.b16 %v2311
      %v2677 = vunpack.c.h.b16 %v2311
      %v2678 = vunpack.c.l.b16 %v2312
      %v2679 = vunpack.c.h.b16 %v2312
      %v2680 = vunpack.c.l.b16 %v2313
      %v2681 = vunpack.c.h.b16 %v2313
      %v2682 = vunpack.c.l.b16 %v2314
      %v2683 = vunpack.c.h.b16 %v2314
      %v2684 = vunpack.c.l.b16 %v2315
      %v2685 = vunpack.c.h.b16 %v2315
      %v2686 = vunpack.c.l.b16 %v2316
      %v2687 = vunpack.c.h.b16 %v2316
      %v2688 = vunpack.c.l.b16 %v2317
      %v2689 = vunpack.c.h.b16 %v2317
      %v2690 = vunpack.c.l.b16 %v2318
      %v2691 = vunpack.c.h.b16 %v2318
      %v2692 = vunpack.c.l.b16 %v2319
      %v2693 = vunpack.c.h.b16 %v2319
      %v2694 = vunpack.c.l.b16 %v2320
      %v2695 = vunpack.c.h.b16 %v2320
      %v2696 = vunpack.c.l.b16 %v2321
      %v2697 = vunpack.c.h.b16 %v2321
      %v2698 = vunpack.c.l.b16 %v2322
      %v2699 = vunpack.c.h.b16 %v2322
      %v2700 = vunpack.c.l.b16 %v2323
      %v2701 = vunpack.c.h.b16 %v2323
      %v2702 = vunpack.c.l.b16 %v2324
      %v2703 = vunpack.c.h.b16 %v2324
      %v2704 = vunpack.c.l.b16 %v2325
      %v2705 = vunpack.c.h.b16 %v2325
      %v2706 = vunpack.c.l.b16 %v2326
      %v2707 = vunpack.c.h.b16 %v2326
      %v2708 = vunpack.c.l.b16 %v2327
      %v2709 = vunpack.c.h.b16 %v2327
      %v2710 = vunpack.c.l.b16 %v2328
      %v2711 = vunpack.c.h.b16 %v2328
      %v2712 = vunpack.c.l.b16 %v2329
      %v2713 = vunpack.c.h.b16 %v2329
      %v2714 = vunpack.c.l.b16 %v2330
      %v2715 = vunpack.c.h.b16 %v2330
      %v2716 = vunpack.c.l.b16 %v2331
      %v2717 = vunpack.c.h.b16 %v2331
      %v2718 = vunpack.c.l.b16 %v2332
      %v2719 = vunpack.c.h.b16 %v2332
      %v2720 = vunpack.c.l.b16 %v2333
      %v2721 = vunpack.c.h.b16 %v2333
      %v2722 = vunpack.c.l.b16 %v2334
      %v2723 = vunpack.c.h.b16 %v2334
      %v2724 = vunpack.c.l.b16 %v2335
      %v2725 = vunpack.c.h.b16 %v2335
      %v2726 = vunpack.c.l.b16 %v2336
      %v2727 = vunpack.c.h.b16 %v2336
      %v2728 = vunpack.c.l.b16 %v2337
      %v2729 = vunpack.c.h.b16 %v2337
      %v2730 = vunpack.c.l.b16 %v2338
      %v2731 = vunpack.c.h.b16 %v2338
      %v2732 = vunpack.c.l.b16 %v2339
      %v2733 = vunpack.c.h.b16 %v2339
      %v2734 = vunpack.c.l.b16 %v2340
      %v2735 = vunpack.c.h.b16 %v2340
      %v2736 = vunpack.c.l.b16 %v2341
      %v2737 = vunpack.c.h.b16 %v2341
      %v2738 = vunpack.c.l.b16 %v2342
      %v2739 = vunpack.c.h.b16 %v2342
      %v2740 = vunpack.c.l.b16 %v2343
      %v2741 = vunpack.c.h.b16 %v2343
      %v2742 = vunpack.c.l.b16 %v2344
      %v2743 = vunpack.c.h.b16 %v2344
      %v2744 = vunpack.c.l.b16 %v2345
      %v2745 = vunpack.c.h.b16 %v2345
      %v2746 = vunpack.c.l.b16 %v2346
      %v2747 = vunpack.c.h.b16 %v2346
      %v2748 = vpack.c.b16 %v2496, %v2492
      %v2749 = vpack.c.b16 %v2497, %v2493
      %v2750 = vpack.c.b16 %v2498, %v2494
      %v2751 = vpack.c.b16 %v2499, %v2495
      %v2752 = vpack.c.b16 %v2504, %v2500
      %v2753 = vpack.c.b16 %v2505, %v2501
      %v2754 = vpack.c.b16 %v2506, %v2502
      %v2755 = vpack.c.b16 %v2507, %v2503
      %v2756 = vpack.c.b16 %v2512, %v2508
      %v2757 = vpack.c.b16 %v2513, %v2509
      %v2758 = vpack.c.b16 %v2514, %v2510
      %v2759 = vpack.c.b16 %v2515, %v2511
      %v2760 = vpack.c.b16 %v2520, %v2516
      %v2761 = vpack.c.b16 %v2521, %v2517
      %v2762 = vpack.c.b16 %v2522, %v2518
      %v2763 = vpack.c.b16 %v2523, %v2519
      %v2764 = vpack.c.b16 %v2528, %v2524
      %v2765 = vpack.c.b16 %v2529, %v2525
      %v2766 = vpack.c.b16 %v2530, %v2526
      %v2767 = vpack.c.b16 %v2531, %v2527
      %v2768 = vpack.c.b16 %v2536, %v2532
      %v2769 = vpack.c.b16 %v2537, %v2533
      %v2770 = vpack.c.b16 %v2538, %v2534
      %v2771 = vpack.c.b16 %v2539, %v2535
      %v2772 = vpack.c.b16 %v2544, %v2540
      %v2773 = vpack.c.b16 %v2545, %v2541
      %v2774 = vpack.c.b16 %v2546, %v2542
      %v2775 = vpack.c.b16 %v2547, %v2543
      %v2776 = vpack.c.b16 %v2552, %v2548
      %v2777 = vpack.c.b16 %v2553, %v2549
      %v2778 = vpack.c.b16 %v2554, %v2550
      %v2779 = vpack.c.b16 %v2555, %v2551
      %v2780 = vpack.c.b16 %v2560, %v2556
      %v2781 = vpack.c.b16 %v2561, %v2557
      %v2782 = vpack.c.b16 %v2562, %v2558
      %v2783 = vpack.c.b16 %v2563, %v2559
      %v2784 = vpack.c.b16 %v2568, %v2564
      %v2785 = vpack.c.b16 %v2569, %v2565
      %v2786 = vpack.c.b16 %v2570, %v2566
      %v2787 = vpack.c.b16 %v2571, %v2567
      %v2788 = vpack.c.b16 %v2576, %v2572
      %v2789 = vpack.c.b16 %v2577, %v2573
      %v2790 = vpack.c.b16 %v2578, %v2574
      %v2791 = vpack.c.b16 %v2579, %v2575
      %v2792 = vpack.c.b16 %v2584, %v2580
      %v2793 = vpack.c.b16 %v2585, %v2581
      %v2794 = vpack.c.b16 %v2586, %v2582
      %v2795 = vpack.c.b16 %v2587, %v2583
      %v2796 = vpack.c.b16 %v2592, %v2588
      %v2797 = vpack.c.b16 %v2593, %v2589
      %v2798 = vpack.c.b16 %v2594, %v2590
      %v2799 = vpack.c.b16 %v2595, %v2591
      %v2800 = vpack.c.b16 %v2600, %v2596
      %v2801 = vpack.c.b16 %v2601, %v2597
      %v2802 = vpack.c.b16 %v2602, %v2598
      %v2803 = vpack.c.b16 %v2603, %v2599
      %v2804 = vpack.c.b16 %v2608, %v2604
      %v2805 = vpack.c.b16 %v2609, %v2605
      %v2806 = vpack.c.b16 %v2610, %v2606
      %v2807 = vpack.c.b16 %v2611, %v2607
      %v2808 = vpack.c.b16 %v2616, %v2612
      %v2809 = vpack.c.b16 %v2617, %v2613
      %v2810 = vpack.c.b16 %v2618, %v2614
      %v2811 = vpack.c.b16 %v2619, %v2615
      %v2812 = vpack.c.b16 %v2624, %v2620
      %v2813 = vpack.c.b16 %v2625, %v2621
      %v2814 = vpack.c.b16 %v2626, %v2622
      %v2815 = vpack.c.b16 %v2627, %v2623
      %v2816 = vpack.c.b16 %v2632, %v2628
      %v2817 = vpack.c.b16 %v2633, %v2629
      %v2818 = vpack.c.b16 %v2634, %v2630
      %v2819 = vpack.c.b16 %v2635, %v2631
      %v2820 = vpack.c.b16 %v2640, %v2636
      %v2821 = vpack.c.b16 %v2641, %v2637
      %v2822 = vpack.c.b16 %v2642, %v2638
      %v2823 = vpack.c.b16 %v2643, %v2639
      %v2824 = vpack.c.b16 %v2648, %v2644
      %v2825 = vpack.c.b16 %v2649, %v2645
      %v2826 = vpack.c.b16 %v2650, %v2646
      %v2827 = vpack.c.b16 %v2651, %v2647
      %v2828 = vpack.c.b16 %v2656, %v2652
      %v2829 = vpack.c.b16 %v2657, %v2653
      %v2830 = vpack.c.b16 %v2658, %v2654
      %v2831 = vpack.c.b16 %v2659, %v2655
      %v2832 = vpack.c.b16 %v2664, %v2660
      %v2833 = vpack.c.b16 %v2665, %v2661
      %v2834 = vpack.c.b16 %v2666, %v2662
      %v2835 = vpack.c.b16 %v2667, %v2663
      %v2836 = vpack.c.b16 %v2672, %v2668
      %v2837 = vpack.c.b16 %v2673, %v2669
      %v2838 = vpack.c.b16 %v2674, %v2670
      %v2839 = vpack.c.b16 %v2675, %v2671
      %v2840 = vpack.c.b16 %v2680, %v2676
      %v2841 = vpack.c.b16 %v2681, %v2677
      %v2842 = vpack.c.b16 %v2682, %v2678
      %v2843 = vpack.c.b16 %v2683, %v2679
      %v2844 = vpack.c.b16 %v2688, %v2684
      %v2845 = vpack.c.b16 %v2689, %v2685
      %v2846 = vpack.c.b16 %v2690, %v2686
      %v2847 = vpack.c.b16 %v2691, %v2687
      %v2848 = vpack.c.b16 %v2696, %v2692
      %v2849 = vpack.c.b16 %v2697, %v2693
      %v2850 = vpack.c.b16 %v2698, %v2694
      %v2851 = vpack.c.b16 %v2699, %v2695
      %v2852 = vpack.c.b16 %v2704, %v2700
      %v2853 = vpack.c.b16 %v2705, %v2701
      %v2854 = vpack.c.b16 %v2706, %v2702
      %v2855 = vpack.c.b16 %v2707, %v2703
      %v2856 = vpack.c.b16 %v2712, %v2708
      %v2857 = vpack.c.b16 %v2713, %v2709
      %v2858 = vpack.c.b16 %v2714, %v2710
      %v2859 = vpack.c.b16 %v2715, %v2711
      %v2860 = vpack.c.b16 %v2720, %v2716
      %v2861 = vpack.c.b16 %v2721, %v2717
      %v2862 = vpack.c.b16 %v2722, %v2718
      %v2863 = vpack.c.b16 %v2723, %v2719
      %v2864 = vpack.c.b16 %v2728, %v2724
      %v2865 = vpack.c.b16 %v2729, %v2725
      %v2866 = vpack.c.b16 %v2730, %v2726
      %v2867 = vpack.c.b16 %v2731, %v2727
      %v2868 = vpack.c.b16 %v2736, %v2732
      %v2869 = vpack.c.b16 %v2737, %v2733
      %v2870 = vpack.c.b16 %v2738, %v2734
      %v2871 = vpack.c.b16 %v2739, %v2735
      %v2872 = vpack.c.b16 %v2744, %v2740
      %v2873 = vpack.c.b16 %v2745, %v2741
      %v2874 = vpack.c.b16 %v2746, %v2742
      %v2875 = vpack.c.b16 %v2747, %v2743
      %3004 = vmatprep.subr.bf16.mxu0 %v2777
      %3005 = vmatpush1.bf16.msra.mxu0 %v2776
      %3006 = vmatprep.subr.bf16.mxu0 %v2773
      %3007 = vmatpush1.bf16.msra.mxu0 %v2772
      %3008 = vmatprep.subr.bf16.mxu0 %v2769
      %3009 = vmatpush1.bf16.msra.mxu0 %v2768
      %3010 = vmatprep.subr.bf16.mxu0 %v2765
      %3011 = vmatpush1.bf16.msra.mxu0 %v2764
      %3012 = vmatprep.subr.bf16.mxu0 %v2761
      %3013 = vmatpush1.bf16.msra.mxu0 %v2760
      %3014 = vmatprep.subr.bf16.mxu0 %v2757
      %3015 = vmatpush1.bf16.msra.mxu0 %v2756
      %3016 = vmatprep.subr.bf16.mxu0 %v2753
      %3017 = vmatpush1.bf16.msra.mxu0 %v2752
      %3018 = vmatprep.subr.bf16.mxu0 %v2749
      %3019 = vmatpush1.bf16.msra.mxu0 %v2748
      %3020 = vmatprep.subr.bf16.mxu0 %v2809
      %3021 = vmatpush2.bf16.msra.mxu0 %v2808
      %3022 = vmatprep.subr.bf16.mxu0 %v2805
      %3023 = vmatpush2.bf16.msra.mxu0 %v2804
      %3024 = vmatprep.subr.bf16.mxu0 %v2801
      %3025 = vmatpush2.bf16.msra.mxu0 %v2800
      %3026 = vmatprep.subr.bf16.mxu0 %v2797
      %3027 = vmatpush2.bf16.msra.mxu0 %v2796
      %3028 = vmatprep.subr.bf16.mxu0 %v2793
      %3029 = vmatpush2.bf16.msra.mxu0 %v2792
      %3030 = vmatprep.subr.bf16.mxu0 %v2789
      %3031 = vmatpush2.bf16.msra.mxu0 %v2788
      %3032 = vmatprep.subr.bf16.mxu0 %v2785
      %3033 = vmatpush2.bf16.msra.mxu0 %v2784
      %3034 = vmatprep.subr.bf16.mxu0 %v2781
      %3035 = vmatpush2.bf16.msra.mxu0 %v2780
      %3036 = vmatprep.mubr.bf16.mxu0 %v2353
      %3037 = vmatmul.mubr.bf16.gmra.mxu0 %v2350
      %v3038 = vpop.f32.mrf.mxu0
      %v3039 = vadd.f32 0.0, %v3038
      %v3040 = vpop.f32.mrf.mxu0
      %v3041 = vadd.f32 0.0, %v3040
      %v3042 = vpop.f32.mrf.mxu0
      %v3043 = vadd.f32 0.0, %v3042
      %v3044 = vpop.f32.mrf.mxu0
      %v3045 = vadd.f32 0.0, %v3044
      %3046 = vdwg.mxu0
      %3047 = vmatprep.subr.bf16.mxu0 %v2841
      %3048 = vmatpush1.bf16.msra.mxu0 %v2840
      %3049 = vmatprep.subr.bf16.mxu0 %v2837
      %3050 = vmatpush1.bf16.msra.mxu0 %v2836
      %3051 = vmatprep.subr.bf16.mxu0 %v2833
      %3052 = vmatpush1.bf16.msra.mxu0 %v2832
      %3053 = vmatprep.subr.bf16.mxu0 %v2829
      %3054 = vmatpush1.bf16.msra.mxu0 %v2828
      %3055 = vmatprep.subr.bf16.mxu0 %v2825
      %3056 = vmatpush1.bf16.msra.mxu0 %v2824
      %3057 = vmatprep.subr.bf16.mxu0 %v2821
      %3058 = vmatpush1.bf16.msra.mxu0 %v2820
      %3059 = vmatprep.subr.bf16.mxu0 %v2817
      %3060 = vmatpush1.bf16.msra.mxu0 %v2816
      %3061 = vmatprep.subr.bf16.mxu0 %v2813
      %3062 = vmatpush1.bf16.msra.mxu0 %v2812
      %3063 = vmatprep.subr.bf16.mxu0 %v2873
      %3064 = vmatpush2.bf16.msra.mxu0 %v2872
      %3065 = vmatprep.subr.bf16.mxu0 %v2869
      %3066 = vmatpush2.bf16.msra.mxu0 %v2868
      %3067 = vmatprep.subr.bf16.mxu0 %v2865
      %3068 = vmatpush2.bf16.msra.mxu0 %v2864
      %3069 = vmatprep.subr.bf16.mxu0 %v2861
      %3070 = vmatpush2.bf16.msra.mxu0 %v2860
      %3071 = vmatprep.subr.bf16.mxu0 %v2857
      %3072 = vmatpush2.bf16.msra.mxu0 %v2856
      %3073 = vmatprep.subr.bf16.mxu0 %v2853
      %3074 = vmatpush2.bf16.msra.mxu0 %v2852
      %3075 = vmatprep.subr.bf16.mxu0 %v2849
      %3076 = vmatpush2.bf16.msra.mxu0 %v2848
      %3077 = vmatprep.subr.bf16.mxu0 %v2845
      %3078 = vmatpush2.bf16.msra.mxu0 %v2844
      %3079 = vmatprep.mubr.bf16.mxu0 %v2359
      %3080 = vmatmul.mubr.bf16.gmra.mxu0 %v2356
      %v3081 = vpop.f32.mrf.mxu0
      %v3082 = vadd.f32 %v3039, %v3081
      %v3083 = vpop.f32.mrf.mxu0
      %v3084 = vadd.f32 %v3041, %v3083
      %v3085 = vpop.f32.mrf.mxu0
      %v3086 = vadd.f32 %v3043, %v3085
      %v3087 = vpop.f32.mrf.mxu0
      %v3088 = vadd.f32 %v3045, %v3087
      %3089 = vdwg.mxu0
      %3090 = vmatprep.subr.bf16.mxu0 %v2779
      %3091 = vmatpush1.bf16.msra.mxu0 %v2778
      %3092 = vmatprep.subr.bf16.mxu0 %v2775
      %3093 = vmatpush1.bf16.msra.mxu0 %v2774
      %3094 = vmatprep.subr.bf16.mxu0 %v2771
      %3095 = vmatpush1.bf16.msra.mxu0 %v2770
      %3096 = vmatprep.subr.bf16.mxu0 %v2767
      %3097 = vmatpush1.bf16.msra.mxu0 %v2766
      %3098 = vmatprep.subr.bf16.mxu0 %v2763
      %3099 = vmatpush1.bf16.msra.mxu0 %v2762
      %3100 = vmatprep.subr.bf16.mxu0 %v2759
      %3101 = vmatpush1.bf16.msra.mxu0 %v2758
      %3102 = vmatprep.subr.bf16.mxu0 %v2755
      %3103 = vmatpush1.bf16.msra.mxu0 %v2754
      %3104 = vmatprep.subr.bf16.mxu0 %v2751
      %3105 = vmatpush1.bf16.msra.mxu0 %v2750
      %3106 = vmatprep.subr.bf16.mxu0 %v2811
      %3107 = vmatpush2.bf16.msra.mxu0 %v2810
      %3108 = vmatprep.subr.bf16.mxu0 %v2807
      %3109 = vmatpush2.bf16.msra.mxu0 %v2806
      %3110 = vmatprep.subr.bf16.mxu0 %v2803
      %3111 = vmatpush2.bf16.msra.mxu0 %v2802
      %3112 = vmatprep.subr.bf16.mxu0 %v2799
      %3113 = vmatpush2.bf16.msra.mxu0 %v2798
      %3114 = vmatprep.subr.bf16.mxu0 %v2795
      %3115 = vmatpush2.bf16.msra.mxu0 %v2794
      %3116 = vmatprep.subr.bf16.mxu0 %v2791
      %3117 = vmatpush2.bf16.msra.mxu0 %v2790
      %3118 = vmatprep.subr.bf16.mxu0 %v2787
      %3119 = vmatpush2.bf16.msra.mxu0 %v2786
      %3120 = vmatprep.subr.bf16.mxu0 %v2783
      %3121 = vmatpush2.bf16.msra.mxu0 %v2782
      %3122 = vmatprep.mubr.bf16.mxu0 %v2353
      %3123 = vmatmul.mubr.bf16.gmra.mxu0 %v2350
      %v3124 = vpop.f32.mrf.mxu0
      %v3125 = vadd.f32 0.0, %v3124
      %v3126 = vpop.f32.mrf.mxu0
      %v3127 = vadd.f32 0.0, %v3126
      %v3128 = vpop.f32.mrf.mxu0
      %v3129 = vadd.f32 0.0, %v3128
      %v3130 = vpop.f32.mrf.mxu0
      %v3131 = vadd.f32 0.0, %v3130
      %3132 = vdwg.mxu0
      %3133 = vmatprep.subr.bf16.mxu0 %v2843
      %3134 = vmatpush1.bf16.msra.mxu0 %v2842
      %3135 = vmatprep.subr.bf16.mxu0 %v2839
      %3136 = vmatpush1.bf16.msra.mxu0 %v2838
      %3137 = vmatprep.subr.bf16.mxu0 %v2835
      %3138 = vmatpush1.bf16.msra.mxu0 %v2834
      %3139 = vmatprep.subr.bf16.mxu0 %v2831
      %3140 = vmatpush1.bf16.msra.mxu0 %v2830
      %3141 = vmatprep.subr.bf16.mxu0 %v2827
      %3142 = vmatpush1.bf16.msra.mxu0 %v2826
      %3143 = vmatprep.subr.bf16.mxu0 %v2823
      %3144 = vmatpush1.bf16.msra.mxu0 %v2822
      %3145 = vmatprep.subr.bf16.mxu0 %v2819
      %3146 = vmatpush1.bf16.msra.mxu0 %v2818
      %3147 = vmatprep.subr.bf16.mxu0 %v2815
      %3148 = vmatpush1.bf16.msra.mxu0 %v2814
      %3149 = vmatprep.subr.bf16.mxu0 %v2875
      %3150 = vmatpush2.bf16.msra.mxu0 %v2874
      %3151 = vmatprep.subr.bf16.mxu0 %v2871
      %3152 = vmatpush2.bf16.msra.mxu0 %v2870
      %3153 = vmatprep.subr.bf16.mxu0 %v2867
      %3154 = vmatpush2.bf16.msra.mxu0 %v2866
      %3155 = vmatprep.subr.bf16.mxu0 %v2863
      %3156 = vmatpush2.bf16.msra.mxu0 %v2862
      %3157 = vmatprep.subr.bf16.mxu0 %v2859
      %3158 = vmatpush2.bf16.msra.mxu0 %v2858
      %3159 = vmatprep.subr.bf16.mxu0 %v2855
      %3160 = vmatpush2.bf16.msra.mxu0 %v2854
      %3161 = vmatprep.subr.bf16.mxu0 %v2851
      %3162 = vmatpush2.bf16.msra.mxu0 %v2850
      %3163 = vmatprep.subr.bf16.mxu0 %v2847
      %3164 = vmatpush2.bf16.msra.mxu0 %v2846
      %3165 = vmatprep.mubr.bf16.mxu0 %v2359
      %3166 = vmatmul.mubr.bf16.gmra.mxu0 %v2356
      %v3167 = vpop.f32.mrf.mxu0
      %v3168 = vadd.f32 %v3125, %v3167
      %v3169 = vpop.f32.mrf.mxu0
      %v3170 = vadd.f32 %v3127, %v3169
      %v3171 = vpop.f32.mrf.mxu0
      %v3172 = vadd.f32 %v3129, %v3171
      %v3173 = vpop.f32.mrf.mxu0
      %v3174 = vadd.f32 %v3131, %v3173
      %3175 = vdwg.mxu0
      %v3176 = vadd.f32 %v2210, %v3082
      %v3177 = vadd.f32 %v2211, %v3084
      %v3178 = vadd.f32 %v2212, %v3168
      %v3179 = vadd.f32 %v2213, %v3170
      %v3180 = vadd.f32 %v2214, %v3086
      %v3181 = vadd.f32 %v2215, %v3088
      %v3182 = vadd.f32 %v2216, %v3172
      %v3183 = vadd.f32 %v2217, %v3174
      %v3184 = vmax.f32 %v3176, 0.0
      %v3185 = vmax.f32 %v3177, 0.0
      %v3186 = vmax.f32 %v3178, 0.0
      %v3187 = vmax.f32 %v3179, 0.0
      %v3188 = vmax.f32 %v3180, 0.0
      %v3189 = vmax.f32 %v3181, 0.0
      %v3190 = vmax.f32 %v3182, 0.0
      %v3191 = vmax.f32 %v3183, 0.0
      %v3192 = vpack.c.bf16 %v3188, %v3184
      %v3193 = vpack.c.bf16 %v3189, %v3185
      %v3194 = vpack.c.bf16 %v3190, %v3186
      %v3195 = vpack.c.bf16 %v3191, %v3187
      %v3200 = vunpack.c.l.b16 %v3192
      %v3201 = vunpack.c.l.b16 %v3193
      %v3202 = vunpack.c.l.b16 %v3194
      %v3203 = vunpack.c.l.b16 %v3195
      %v3204 = vunpack.c.h.b16 %v3192
      %v3205 = vunpack.c.h.b16 %v3193
      %v3206 = vunpack.c.h.b16 %v3194
      %v3207 = vunpack.c.h.b16 %v3195
      %v3208 = vpack.c.b16 %v3201, %v3200
      %v3209 = vpack.c.b16 %v3203, %v3202
      %v3210 = vpack.c.b16 %v3205, %v3204
      %v3211 = vpack.c.b16 %v3207, %v3206
      %3216 = vst [vmem:[%s208] sm:$0xff] %v3208
      %3217 = vst [vmem:[%s208 + $0x8] sm:$0xff] %v3209
      %3218 = vst [vmem:[%s208 + $0x10] sm:$0xff] %v3210
      %3219 = vst [vmem:[%s208 + $0x18] sm:$0xff] %v3211
      %s3220 = smul.u32 2, %s19
      %p3221 = scmp.lt.s32.totalorder %s18, 1
      %s3222 = scalar_select %p3221, %s18, 1
      %p3223 = scmp.lt.s32.totalorder %s3220, 1
      %s3224 = scalar_select %p3223, %s3220, 1
      %s3225 = smul.addr %s3224, 4
      %s3226 = smul.addr %s3222, 8
      %s3227 = sadd.s32 %s3225, %s3226
      %s3228 = smul.addr %s3227, 4
      %s3229 = scalar_lea.vmem %s3, %s3228
      // Predicated region
      $region33: #{adaresnet_forward.22} parent=31 // pred_check
        %p3230 = pneg %p116
      $region34: #{adaresnet_forward.22} parent=31 // pred_check_branch
        %3232 = sbr.rel (%p3230) target = $region36
      $region35: #{adaresnet_forward.22} parent=31 // pred_region
        %s3233 = smul.u32 2, %s19
      $region36: #{adaresnet_forward.22} parent=31 // pred_fallthru
        _
    $region32: #{adaresnet_forward.22} parent=5 // pred_fallthru
      _
    %p3234 = scmp.le.s32.totalorder 2, %s9
    // Predicated region
    $region37: #{adaresnet_forward.22} parent=5 // pred_check
      %p3235 = pneg %p3234
    $region38: #{adaresnet_forward.22} parent=5 // pred_check_branch
      %3237 = sbr.rel (%p3235) target = $region40
    $region39: #{adaresnet_forward.22} parent=5 // pred_region
      %s3238 = ssub.s32 %s9, 2
      // Predicated region
      $region41: #{adaresnet_forward.22} parent=39 // pred_check
        %p3239 = pneg %p122
      $region42: #{adaresnet_forward.22} parent=39 // pred_check_branch
        %3241 = sbr.rel (%p3239) target = $region44
      $region43: #{adaresnet_forward.22} parent=39 // pred_region
        %s3242 = smul.u32 2, %s21
        %p3243 = scmp.lt.s32.totalorder %s20, 1
        %s3244 = scalar_select %p3243, %s20, 1
        %p3245 = scmp.lt.s32.totalorder %s3242, 1
        %s3246 = scalar_select %p3245, %s3242, 1
        %s3247 = smul.addr %s3246, 4
        %s3248 = smul.addr %s3244, 8
        %s3249 = sadd.s32 %s3247, %s3248
        %s3250 = smul.addr %s3249, 4
        %s3251 = scalar_lea.vmem %s3, %s3250
      $region44: #{adaresnet_forward.22} parent=39 // pred_fallthru
        _
    $region40: #{adaresnet_forward.22} parent=5 // pred_fallthru
      _
  $region6: #{adaresnet_forward.22} parent=0 // loop_footer
    %s13 = sadd.s32 1, %s9
  $region7: #{adaresnet_forward.22} parent=0 // loop_footer_branch
    %8 = sbr.rel target = $region3
  $region8: #{adaresnet_forward.22} parent=0 // loop_exit
    _

// kernel: tile.188
$region0: #{tile.188}
  #allocation0 [shape = 's32[1]{0}', space=sflag, size = 0x4, scoped, tag = 'scoped memory for tile.188']
  %s0 = inlined_call_operand.vmem [shape: f32[3], index: 0, kind: input, shape index: {}]
  %s1 = inlined_call_operand.vmem [shape: f32[16,3], index: 1, kind: output, shape index: {}]
  // Predicated region
  $region2: #{tile.188} parent=0 // pred_check
    _
  $region3: #{tile.188} parent=0 // pred_check_branch
    %3 = sbr.rel (0) target = $region5
  $region4: #{tile.188} parent=0 // pred_region
    _
  $region5: #{tile.188} parent=0 // pred_fallthru
    _
  %v4 = vld [vmem:[%s0] ss:$0 sm:$0xff]
  %5 = vst [vmem:[%s1] sm:$0xff] %v4
  %s6 = scalar_lea.vmem %s1, 8
  %7 = vst [vmem:[%s6] sm:$0xff] %v4

// kernel: tile.189
$region0: #{tile.189}
  %s0 = inlined_call_operand.vmem [shape: f32[16,3], index: 0, kind: input, shape index: {}]
  %s1 = inlined_call_operand.vmem [shape: f32[1,48], index: 1, kind: output, shape index: {}]
  $region1: #{tile.189} parent=0
    #allocation0 [shape = 'u8[4096]{0}', space=vmem, size = 0x1000, scoped, tag = 'scoped mem for output reshape']
    %v2 = vld [vmem:[%s0] sm:$0x1]
    %vm3 = vcmask 23552
    %4 = vst.msk [vmem:[#allocation0] sm:$0x1] %vm3, %v2
    %s5 = scalar_lea.vmem %s0, 15
    %v6 = vld [vmem:[%s5] sm:$0x1]
    %7 = vrot.lane.b32.xlu0 %v6, 45
    %v8 = vpop.permute.xlu0 %7
    %vm9 = vcmask 392552
    %10 = vst.msk [vmem:[#allocation0] sm:$0x1] %vm9, %v8
    %s11 = scalar_lea.vmem %s0, 14
    %v12 = vld [vmem:[%s11] sm:$0x1]
    %13 = vrot.lane.b32.xlu0 %v12, 42
    %v14 = vpop.permute.xlu0 %13
    %vm15 = vcmask 367952
    %16 = vst.msk [vmem:[#allocation0] sm:$0x1] %vm15, %v14
    %s17 = scalar_lea.vmem %s0, 13
    %v18 = vld [vmem:[%s17] sm:$0x1]
    %19 = vrot.lane.b32.xlu0 %v18, 39
    %v20 = vpop.permute.xlu0 %19
    %vm21 = vcmask 343352
    %22 = vst.msk [vmem:[#allocation0] sm:$0x1] %vm21, %v20
    %s23 = scalar_lea.vmem %s0, 12
    %v24 = vld [vmem:[%s23] sm:$0x1]
    %25 = vrot.lane.b32.xlu0 %v24, 36
    %v26 = vpop.permute.xlu0 %25
    %vm27 = vcmask 318752
    %28 = vst.msk [vmem:[#allocation0] sm:$0x1] %vm27, %v26
    %s29 = scalar_lea.vmem %s0, 11
    %v30 = vld [vmem:[%s29] sm:$0x1]
    %31 = vrot.lane.b32.xlu0 %v30, 33
    %v32 = vpop.permute.xlu0 %31
    %vm33 = vcmask 294152
    %34 = vst.msk [vmem:[#allocation0] sm:$0x1] %vm33, %v32
    %s35 = scalar_lea.vmem %s0, 10
    %v36 = vld [vmem:[%s35] sm:$0x1]
    %37 = vrot.lane.b32.xlu0 %v36, 30
    %v38 = vpop.permute.xlu0 %37
    %vm39 = vcmask 269552
    %40 = vst.msk [vmem:[#allocation0] sm:$0x1] %vm39, %v38
    %s41 = scalar_lea.vmem %s0, 9
    %v42 = vld [vmem:[%s41] sm:$0x1]
    %43 = vrot.lane.b32.xlu0 %v42, 27
    %v44 = vpop.permute.xlu0 %43
    %vm45 = vcmask 244952
    %46 = vst.msk [vmem:[#allocation0] sm:$0x1] %vm45, %v44
    %s47 = scalar_lea.vmem %s0, 8
    %v48 = vld [vmem:[%s47] sm:$0x1]
    %49 = vrot.lane.b32.xlu0 %v48, 24
    %v50 = vpop.permute.xlu0 %49
    %vm51 = vcmask 220352
    %52 = vst.msk [vmem:[#allocation0] sm:$0x1] %vm51, %v50
    %s53 = scalar_lea.vmem %s0, 7
    %v54 = vld [vmem:[%s53] sm:$0x1]
    %55 = vrot.lane.b32.xlu0 %v54, 21
    %v56 = vpop.permute.xlu0 %55
    %vm57 = vcmask 195752
    %58 = vst.msk [vmem:[#allocation0] sm:$0x1] %vm57, %v56
    %s59 = scalar_lea.vmem %s0, 6
    %v60 = vld [vmem:[%s59] sm:$0x1]
    %61 = vrot.lane.b32.xlu0 %v60, 18
    %v62 = vpop.permute.xlu0 %61
    %vm63 = vcmask 171152
    %64 = vst.msk [vmem:[#allocation0] sm:$0x1] %vm63, %v62
    %s65 = scalar_lea.vmem %s0, 5
    %v66 = vld [vmem:[%s65] sm:$0x1]
    %67 = vrot.lane.b32.xlu0 %v66, 15
    %v68 = vpop.permute.xlu0 %67
    %vm69 = vcmask 146552
    %70 = vst.msk [vmem:[#allocation0] sm:$0x1] %vm69, %v68
    %s71 = scalar_lea.vmem %s0, 4
    %v72 = vld [vmem:[%s71] sm:$0x1]
    %73 = vrot.lane.b32.xlu0 %v72, 12
    %v74 = vpop.permute.xlu0 %73
    %vm75 = vcmask 121952
    %76 = vst.msk [vmem:[#allocation0] sm:$0x1] %vm75, %v74
    %s77 = scalar_lea.vmem %s0, 3
    %v78 = vld [vmem:[%s77] sm:$0x1]
    %79 = vrot.lane.b32.xlu0 %v78, 9
    %v80 = vpop.permute.xlu0 %79
    %vm81 = vcmask 97352
    %82 = vst.msk [vmem:[#allocation0] sm:$0x1] %vm81, %v80
    %s83 = scalar_lea.vmem %s0, 2
    %v84 = vld [vmem:[%s83] sm:$0x1]
    %85 = vrot.lane.b32.xlu0 %v84, 6
    %v86 = vpop.permute.xlu0 %85
    %vm87 = vcmask 72752
    %88 = vst.msk [vmem:[#allocation0] sm:$0x1] %vm87, %v86
    %s89 = scalar_lea.vmem %s0, 1
    %v90 = vld [vmem:[%s89] sm:$0x1]
    %91 = vrot.lane.b32.xlu0 %v90, 3
    %v92 = vpop.permute.xlu0 %91
    %vm93 = vcmask 48152
    %94 = vst.msk [vmem:[#allocation0] sm:$0x1] %vm93, %v92
    %s96 = sshll.u32 1, 1
    %s97 = ssub.s32 %s96, 1
    %v99 = vld [vmem:[#allocation0] sm:%s97]
    %s100 = sshll.u32 1, 1
    %s101 = ssub.s32 %s100, 1
    %102 = vst [vmem:[%s1] sm:%s101] %v99

// kernel: adaresnet_forward.23
$region0: #{adaresnet_forward.23}
  #allocation0 [shape = 'u32[]', space=smem, size = 0x4, offset = 0x4, fixed_abs, tag = 'smem constant byte address 0x4 - core index']
  #allocation1 [shape = 'u32[144,128]{1,0:T(1,128)}', space=vmem, size = 0x12000, scoped, tag = 'internal scratch']
  %s0 = inlined_call_operand.vmem [shape: bf16[2,1,18,512], index: 0, kind: input, shape index: {}]
  %s1 = inlined_call_operand.vmem [shape: bf16[3,512,48], index: 1, kind: input, shape index: {}]
  %s2 = inlined_call_operand.vmem [shape: f32[1,48], index: 2, kind: input, shape index: {}]
  %s3 = inlined_call_operand.vmem [shape: bf16[2,16,48], index: 3, kind: output, shape index: {}]
  %s4 = sld [smem:[#allocation0]]
  $region45: #{adaresnet_forward.23} parent=0
    _
  %s6 = ssub.s32 1, %s4
  %s7 = scalar_select 0, %s6, %s4
  loop: start=0, step=1, limit=4
  $region2: #{adaresnet_forward.23} parent=0 // loop_pre_header
    _
  $region3: #{adaresnet_forward.23} parent=0 // loop_header
    %s9 = sphi 0, %s13
    %p10 = scmp.ge.s32.totalorder %s9, 4
    %s16 = sphi 0, %s28
    %s17 = sphi 0, %s24
    %s18 = sphi 0, %s16
    %s19 = sphi 0, %s17
    %s20 = sphi 0, %s18
    %s21 = sphi 0, %s19
    %s33 = sphi 0, %s35
    %s36 = sphi 0, %s33
    %s37 = sphi 0, %s36
    %s53 = sphi 0, %s37
    %s57 = sphi 0, %s57
    %s59 = sphi 0, %s57
    %s60 = sphi 0, %s59
    %s74 = sphi 0, %s60
    %s78 = sphi 0, %s78
    %s80 = sphi 0, %s78
    %s81 = sphi 0, %s80
    %s95 = sphi 0, %s81
    %s103 = sphi 0, %s105
    %s106 = sphi 0, %s103
    %s107 = sphi 0, %s106
    %s123 = sphi 0, %s107
  $region4: #{adaresnet_forward.23} parent=0 // loop_header_branch
    %12 = sbr.rel (%p10) target = $region8
  $region5: #{adaresnet_forward.23} parent=0 // loop_body
    %s14 = ssub.s32 %s9, 1
    %s15 = ssub.s32 %s9, 2
    %s22 = sadd.s32 1, %s17
    %p23 = scmp.ge.s32.totalorder %s22, 1
    %s24 = scalar_select %p23, 0, %s22
    %s25 = sadd.s32 1, %s16
    %s26 = scalar_select %p23, %s25, %s16
    %p27 = scmp.ge.s32.totalorder %s26, 2
    %s28 = scalar_select %p27, 0, %s26
    %s29 = ssub.s32 %s16, %s28
    %s30 = ssub.s32 %s17, %s24
    %s31 = sor.u32 %s29, %s30
    %p32 = scmp.eq.s32.totalorder %s31, 0
    %s34 = sadd.s32 %s33, 1
    %s35 = scalar_select %p32, %s33, %s34
    %p38 = pneg %p32
    %p39 = scmp.eq.s32.totalorder %s9, 1
    %p40 = por %p38, %p39
    %p41 = scmp.ne.s32.totalorder %s33, %s36
    %p42 = scmp.eq.s32.totalorder %s9, 0
    %p43 = por %p41, %p42
    %p44 = scmp.ne.s32.totalorder %s33, %s36
    %p45 = scmp.eq.s32.totalorder %s14, 1
    %p46 = por %p44, %p45
    %p47 = scmp.ne.s32.totalorder %s36, %s37
    %p48 = scmp.eq.s32.totalorder %s14, 0
    %p49 = por %p47, %p48
    %p50 = scmp.ne.s32.totalorder %s36, %s37
    %p51 = scmp.eq.s32.totalorder %s15, 1
    %p52 = por %p50, %p51
    %p54 = scmp.ne.s32.totalorder %s37, %s53
    %p55 = scmp.eq.s32.totalorder %s15, 0
    %p56 = por %p54, %p55
    %s58 = sadd.s32 %s57, 1
    %p61 = scmp.eq.s32.totalorder %s9, 1
    %p62 = scmp.ne.s32.totalorder %s57, %s59
    %p63 = scmp.eq.s32.totalorder %s9, 0
    %p64 = por %p62, %p63
    %p65 = scmp.ne.s32.totalorder %s57, %s59
    %p66 = scmp.eq.s32.totalorder %s14, 1
    %p67 = por %p65, %p66
    %p68 = scmp.ne.s32.totalorder %s59, %s60
    %p69 = scmp.eq.s32.totalorder %s14, 0
    %p70 = por %p68, %p69
    %p71 = scmp.ne.s32.totalorder %s59, %s60
    %p72 = scmp.eq.s32.totalorder %s15, 1
    %p73 = por %p71, %p72
    %p75 = scmp.ne.s32.totalorder %s60, %s74
    %p76 = scmp.eq.s32.totalorder %s15, 0
    %p77 = por %p75, %p76
    %s79 = sadd.s32 %s78, 1
    %p82 = scmp.eq.s32.totalorder %s9, 1
    %p83 = scmp.ne.s32.totalorder %s78, %s80
    %p84 = scmp.eq.s32.totalorder %s9, 0
    %p85 = por %p83, %p84
    %p86 = scmp.ne.s32.totalorder %s78, %s80
    %p87 = scmp.eq.s32.totalorder %s14, 1
    %p88 = por %p86, %p87
    %p89 = scmp.ne.s32.totalorder %s80, %s81
    %p90 = scmp.eq.s32.totalorder %s14, 0
    %p91 = por %p89, %p90
    %p92 = scmp.ne.s32.totalorder %s80, %s81
    %p93 = scmp.eq.s32.totalorder %s15, 1
    %p94 = por %p92, %p93
    %p96 = scmp.ne.s32.totalorder %s81, %s95
    %p97 = scmp.eq.s32.totalorder %s15, 0
    %p98 = por %p96, %p97
    %s99 = ssub.s32 %s16, %s28
    %s100 = ssub.s32 %s17, %s24
    %s101 = sor.u32 %s99, %s100
    %p102 = scmp.eq.s32.totalorder %s101, 0
    %s104 = sadd.s32 %s103, 1
    %s105 = scalar_select %p102, %s103, %s104
    %p108 = pneg %p102
    %p109 = scmp.eq.s32.totalorder %s9, 1
    %p110 = por %p108, %p109
    %p111 = scmp.ne.s32.totalorder %s103, %s106
    %p112 = scmp.eq.s32.totalorder %s9, 0
    %p113 = por %p111, %p112
    %p114 = scmp.ne.s32.totalorder %s103, %s106
    %p115 = scmp.eq.s32.totalorder %s14, 1
    %p116 = por %p114, %p115
    %p117 = scmp.ne.s32.totalorder %s106, %s107
    %p118 = scmp.eq.s32.totalorder %s14, 0
    %p119 = por %p117, %p118
    %p120 = scmp.ne.s32.totalorder %s106, %s107
    %p121 = scmp.eq.s32.totalorder %s15, 1
    %p122 = por %p120, %p121
    %p124 = scmp.ne.s32.totalorder %s107, %s123
    %p125 = scmp.eq.s32.totalorder %s15, 0
    %p126 = por %p124, %p125
    %p127 = scmp.le.s32.totalorder 1, %s9
    %p128 = scmp.lt.s32.totalorder %s9, 3
    %p129 = pnand %p127, %p128
    %p130 = pneg %p129
    // Predicated region
    $region9: #{adaresnet_forward.23} parent=5 // pred_check
      _
    $region10: #{adaresnet_forward.23} parent=5 // pred_check_branch
      %132 = sbr.rel (%p129) target = $region12
    $region11: #{adaresnet_forward.23} parent=5 // pred_region
      %s133 = ssub.s32 %s9, 1
      // Predicated region
      $region13: #{adaresnet_forward.23} parent=11 // pred_check
        %p134 = pneg %p70
      $region14: #{adaresnet_forward.23} parent=11 // pred_check_branch
        %136 = sbr.rel (%p134) target = $region16
      $region15: #{adaresnet_forward.23} parent=11 // pred_region
        _
      $region16: #{adaresnet_forward.23} parent=11 // pred_fallthru
        _
      // Predicated region
      $region17: #{adaresnet_forward.23} parent=11 // pred_check
        %p137 = pneg %p91
      $region18: #{adaresnet_forward.23} parent=11 // pred_check_branch
        %139 = sbr.rel (%p137) target = $region20
      $region19: #{adaresnet_forward.23} parent=11 // pred_region
        _
      $region20: #{adaresnet_forward.23} parent=11 // pred_fallthru
        _
    $region12: #{adaresnet_forward.23} parent=5 // pred_fallthru
      _
    %p140 = scmp.lt.s32.totalorder %s9, 2
    // Predicated region
    $region21: #{adaresnet_forward.23} parent=5 // pred_check
      %p141 = pneg %p140
    $region22: #{adaresnet_forward.23} parent=5 // pred_check_branch
      %143 = sbr.rel (%p141) target = $region24
    $region23: #{adaresnet_forward.23} parent=5 // pred_region
      // Predicated region
      $region25: #{adaresnet_forward.23} parent=23 // pred_check
        %p144 = pneg %p43
      $region26: #{adaresnet_forward.23} parent=23 // pred_check_branch
        %146 = sbr.rel (%p144) target = $region28
      $region27: #{adaresnet_forward.23} parent=23 // pred_region
        %p147 = scmp.lt.s32.totalorder %s16, 1
        %s148 = scalar_select %p147, %s16, 1
        %p149 = scmp.lt.s32.totalorder %s17, 0
        %s150 = scalar_select %p149, %s17, 0
        %s151 = smul.addr %s150, 12
        %s152 = smul.addr %s148, 12
        %s153 = sadd.s32 %s151, %s152
        %s154 = smul.addr %s153, 4
        %s155 = scalar_lea.vmem %s0, %s154
      $region28: #{adaresnet_forward.23} parent=23 // pred_fallthru
        _
    $region24: #{adaresnet_forward.23} parent=5 // pred_fallthru
      _
    %p156 = scmp.le.s32.totalorder 1, %s9
    %p157 = scmp.lt.s32.totalorder %s9, 3
    %p158 = pnand %p156, %p157
    %p159 = pneg %p158
    // Predicated region
    $region29: #{adaresnet_forward.23} parent=5 // pred_check
      _
    $region30: #{adaresnet_forward.23} parent=5 // pred_check_branch
      %161 = sbr.rel (%p158) target = $region32
    $region31: #{adaresnet_forward.23} parent=5 // pred_region
      %s162 = ssub.s32 %s9, 1
      %p163 = scmp.lt.s32.totalorder %s18, 1
      %s164 = scalar_select %p163, %s18, 1
      %p165 = scmp.lt.s32.totalorder %s19, 0
      %s166 = scalar_select %p165, %s19, 0
      %s167 = smul.addr %s166, 12
      %s168 = smul.addr %s164, 12
      %s169 = sadd.s32 %s167, %s168
      %s170 = smul.addr %s169, 4
      %s171 = scalar_lea.vmem %s0, %s170
      %p172 = pneg %p49
      %p173 = pneg %p46
      %p174 = pneg %p70
      %p175 = pneg %p67
      %p176 = pneg %p91
      %p177 = pneg %p88
      %p178 = pneg %p119
      %p179 = pneg %p116
      %s180 = smul.u32 2, %s19
      %p181 = scmp.lt.s32.totalorder %s18, 1
      %s182 = scalar_select %p181, %s18, 1
      %p183 = scmp.lt.s32.totalorder %s180, 1
      %s184 = scalar_select %p183, %s180, 1
      %s185 = smul.addr %s182, 2
      %s186 = sadd.s32 %s184, %s185
      %s187 = smul.addr %s186, 4
      %s188 = scalar_lea.vmem %s3, %s187
      %p189 = scmp.lt.s32.totalorder %s18, 1
      %s190 = scalar_select %p189, %s18, 1
      %p191 = scmp.lt.s32.totalorder %s19, 0
      %s192 = scalar_select %p191, %s19, 0
      %s193 = smul.addr %s192, 12
      %s194 = smul.addr %s190, 12
      %s195 = sadd.s32 %s193, %s194
      %s196 = smul.addr %s195, 4
      %s197 = scalar_lea.vmem %s0, %s196
      %s198 = smul.u32 2, %s19
      %p199 = scmp.lt.s32.totalorder %s18, 1
      %s200 = scalar_select %p199, %s18, 1
      %p201 = scmp.lt.s32.totalorder %s198, 1
      %s202 = scalar_select %p201, %s198, 1
      %s203 = smul.addr %s200, 2
      %s204 = sadd.s32 %s202, %s203
      %s205 = smul.addr %s204, 4
      %s206 = scalar_lea.vmem %s3, %s205
      %s207 = smul.u32 2, %s19
      %v209 = vld [vmem:[%s2] sm:$0x1]
      %v210 = vld [vmem:[%s197] sm:$0xff]
      %v211 = vld [vmem:[%s197 + $0x8] sm:$0xff]
      %v212 = vld [vmem:[%s197 + $0x10] sm:$0xff]
      %v213 = vld [vmem:[%s197 + $0x18] sm:$0xff]
      %v214 = vld [vmem:[%s197 + $0x20] sm:$0x11]
      %v215 = vld [vmem:[%s197 + $0x28] sm:$0x11]
      %v216 = vld [vmem:[%s1] sm:$0xf]
      %v217 = vld [vmem:[%s1 + $0x4] sm:$0xf]
      %v218 = vld [vmem:[%s1 + $0x8] sm:$0xf]
      %v219 = vld [vmem:[%s1 + $0xc] sm:$0xf]
      %v220 = vld [vmem:[%s1 + $0x10] sm:$0xf]
      %v221 = vld [vmem:[%s1 + $0x14] sm:$0xf]
      %v222 = vld [vmem:[%s1 + $0x18] sm:$0xf]
      %v223 = vld [vmem:[%s1 + $0x1c] sm:$0xf]
      %v224 = vld [vmem:[%s1 + $0x20] sm:$0xf]
      %v225 = vld [vmem:[%s1 + $0x24] sm:$0xf]
      %v226 = vld [vmem:[%s1 + $0x28] sm:$0xf]
      %v227 = vld [vmem:[%s1 + $0x2c] sm:$0xf]
      %v228 = vld [vmem:[%s1 + $0x30] sm:$0xf]
      %v229 = vld [vmem:[%s1 + $0x34] sm:$0xf]
      %v230 = vld [vmem:[%s1 + $0x38] sm:$0xf]
      %v231 = vld [vmem:[%s1 + $0x3c] sm:$0xf]
      %v232 = vld [vmem:[%s1 + $0x40] sm:$0xf]
      %v233 = vld [vmem:[%s1 + $0x44] sm:$0xf]
      %v234 = vld [vmem:[%s1 + $0x48] sm:$0xf]
      %v235 = vld [vmem:[%s1 + $0x4c] sm:$0xf]
      %v236 = vld [vmem:[%s1 + $0x50] sm:$0xf]
      %v237 = vld [vmem:[%s1 + $0x54] sm:$0xf]
      %v238 = vld [vmem:[%s1 + $0x58] sm:$0xf]
      %v239 = vld [vmem:[%s1 + $0x5c] sm:$0xf]
      %v240 = vld [vmem:[%s1 + $0x60] sm:$0xf]
      %v241 = vld [vmem:[%s1 + $0x64] sm:$0xf]
      %v242 = vld [vmem:[%s1 + $0x68] sm:$0xf]
      %v243 = vld [vmem:[%s1 + $0x6c] sm:$0xf]
      %v244 = vld [vmem:[%s1 + $0x70] sm:$0xf]
      %v245 = vld [vmem:[%s1 + $0x74] sm:$0xf]
      %v246 = vld [vmem:[%s1 + $0x78] sm:$0xf]
      %v247 = vld [vmem:[%s1 + $0x7c] sm:$0xf]
      %v248 = vld [vmem:[%s1 + $0x80] sm:$0xf]
      %v249 = vld [vmem:[%s1 + $0x84] sm:$0xf]
      %v250 = vld [vmem:[%s1 + $0x88] sm:$0xf]
      %v251 = vld [vmem:[%s1 + $0x8c] sm:$0xf]
      %v252 = vld [vmem:[%s1 + $0x90] sm:$0xf]
      %v253 = vld [vmem:[%s1 + $0x94] sm:$0xf]
      %v254 = vld [vmem:[%s1 + $0x98] sm:$0xf]
      %v255 = vld [vmem:[%s1 + $0x9c] sm:$0xf]
      %v256 = vld [vmem:[%s1 + $0xa0] sm:$0xf]
      %v257 = vld [vmem:[%s1 + $0xa4] sm:$0xf]
      %v258 = vld [vmem:[%s1 + $0xa8] sm:$0xf]
      %v259 = vld [vmem:[%s1 + $0xac] sm:$0xf]
      %v260 = vld [vmem:[%s1 + $0xb0] sm:$0xf]
      %v261 = vld [vmem:[%s1 + $0xb4] sm:$0xf]
      %v262 = vld [vmem:[%s1 + $0xb8] sm:$0xf]
      %v263 = vld [vmem:[%s1 + $0xbc] sm:$0xf]
      %v264 = vld [vmem:[%s1 + $0xc0] sm:$0xf]
      %v265 = vld [vmem:[%s1 + $0xc4] sm:$0xf]
      %v266 = vld [vmem:[%s1 + $0xc8] sm:$0xf]
      %v267 = vld [vmem:[%s1 + $0xcc] sm:$0xf]
      %v268 = vld [vmem:[%s1 + $0xd0] sm:$0xf]
      %v269 = vld [vmem:[%s1 + $0xd4] sm:$0xf]
      %v270 = vld [vmem:[%s1 + $0xd8] sm:$0xf]
      %v271 = vld [vmem:[%s1 + $0xdc] sm:$0xf]
      %v272 = vld [vmem:[%s1 + $0xe0] sm:$0xf]
      %v273 = vld [vmem:[%s1 + $0xe4] sm:$0xf]
      %v274 = vld [vmem:[%s1 + $0xe8] sm:$0xf]
      %v275 = vld [vmem:[%s1 + $0xec] sm:$0xf]
      %v276 = vld [vmem:[%s1 + $0xf0] sm:$0xf]
      %v277 = vld [vmem:[%s1 + $0xf4] sm:$0xf]
      %v278 = vld [vmem:[%s1 + $0xf8] sm:$0xf]
      %v279 = vld [vmem:[%s1 + $0xfc] sm:$0xf]
      %v284 = vunpack.c.l.b16 %v210
      %v285 = vunpack.c.h.b16 %v210
      %v286 = vunpack.c.l.b16 %v211
      %v287 = vunpack.c.h.b16 %v211
      %v288 = vunpack.c.l.b16 %v212
      %v289 = vunpack.c.h.b16 %v212
      %v290 = vunpack.c.l.b16 %v213
      %v291 = vunpack.c.h.b16 %v213
      %v292 = vpack.c.b16 %v288, %v284
      %v293 = vpack.c.b16 %v289, %v285
      %v294 = vpack.c.b16 %v290, %v286
      %v295 = vpack.c.b16 %v291, %v287
      %v364 = vunpack.c.l.b16 %v216
      %v365 = vunpack.c.l.b16 %v217
      %v366 = vunpack.c.l.b16 %v218
      %v367 = vunpack.c.l.b16 %v219
      %v368 = vunpack.c.l.b16 %v220
      %v369 = vunpack.c.l.b16 %v221
      %v370 = vunpack.c.l.b16 %v222
      %v371 = vunpack.c.l.b16 %v223
      %v372 = vunpack.c.l.b16 %v224
      %v373 = vunpack.c.l.b16 %v225
      %v374 = vunpack.c.l.b16 %v226
      %v375 = vunpack.c.l.b16 %v227
      %v376 = vunpack.c.l.b16 %v228
      %v377 = vunpack.c.l.b16 %v229
      %v378 = vunpack.c.l.b16 %v230
      %v379 = vunpack.c.l.b16 %v231
      %v380 = vunpack.c.l.b16 %v232
      %v381 = vunpack.c.l.b16 %v233
      %v382 = vunpack.c.l.b16 %v234
      %v383 = vunpack.c.l.b16 %v235
      %v384 = vunpack.c.l.b16 %v236
      %v385 = vunpack.c.l.b16 %v237
      %v386 = vunpack.c.l.b16 %v238
      %v387 = vunpack.c.l.b16 %v239
      %v388 = vunpack.c.l.b16 %v240
      %v389 = vunpack.c.l.b16 %v241
      %v390 = vunpack.c.l.b16 %v242
      %v391 = vunpack.c.l.b16 %v243
      %v392 = vunpack.c.l.b16 %v244
      %v393 = vunpack.c.l.b16 %v245
      %v394 = vunpack.c.l.b16 %v246
      %v395 = vunpack.c.l.b16 %v247
      %v396 = vunpack.c.l.b16 %v248
      %v397 = vunpack.c.l.b16 %v249
      %v398 = vunpack.c.l.b16 %v250
      %v399 = vunpack.c.l.b16 %v251
      %v400 = vunpack.c.l.b16 %v252
      %v401 = vunpack.c.l.b16 %v253
      %v402 = vunpack.c.l.b16 %v254
      %v403 = vunpack.c.l.b16 %v255
      %v404 = vunpack.c.l.b16 %v256
      %v405 = vunpack.c.l.b16 %v257
      %v406 = vunpack.c.l.b16 %v258
      %v407 = vunpack.c.l.b16 %v259
      %v408 = vunpack.c.l.b16 %v260
      %v409 = vunpack.c.l.b16 %v261
      %v410 = vunpack.c.l.b16 %v262
      %v411 = vunpack.c.l.b16 %v263
      %v412 = vunpack.c.l.b16 %v264
      %v413 = vunpack.c.l.b16 %v265
      %v414 = vunpack.c.l.b16 %v266
      %v415 = vunpack.c.l.b16 %v267
      %v416 = vunpack.c.l.b16 %v268
      %v417 = vunpack.c.l.b16 %v269
      %v418 = vunpack.c.l.b16 %v270
      %v419 = vunpack.c.l.b16 %v271
      %v420 = vunpack.c.l.b16 %v272
      %v421 = vunpack.c.l.b16 %v273
      %v422 = vunpack.c.l.b16 %v274
      %v423 = vunpack.c.l.b16 %v275
      %v424 = vunpack.c.l.b16 %v276
      %v425 = vunpack.c.l.b16 %v277
      %v426 = vunpack.c.l.b16 %v278
      %v427 = vunpack.c.l.b16 %v279
      %v428 = vpack.c.b16 %v365, %v364
      %v429 = vpack.c.b16 %v367, %v366
      %v430 = vpack.c.b16 %v369, %v368
      %v431 = vpack.c.b16 %v371, %v370
      %v432 = vpack.c.b16 %v373, %v372
      %v433 = vpack.c.b16 %v375, %v374
      %v434 = vpack.c.b16 %v377, %v376
      %v435 = vpack.c.b16 %v379, %v378
      %v436 = vpack.c.b16 %v381, %v380
      %v437 = vpack.c.b16 %v383, %v382
      %v438 = vpack.c.b16 %v385, %v384
      %v439 = vpack.c.b16 %v387, %v386
      %v440 = vpack.c.b16 %v389, %v388
      %v441 = vpack.c.b16 %v391, %v390
      %v442 = vpack.c.b16 %v393, %v392
      %v443 = vpack.c.b16 %v395, %v394
      %v444 = vpack.c.b16 %v397, %v396
      %v445 = vpack.c.b16 %v399, %v398
      %v446 = vpack.c.b16 %v401, %v400
      %v447 = vpack.c.b16 %v403, %v402
      %v448 = vpack.c.b16 %v405, %v404
      %v449 = vpack.c.b16 %v407, %v406
      %v450 = vpack.c.b16 %v409, %v408
      %v451 = vpack.c.b16 %v411, %v410
      %v452 = vpack.c.b16 %v413, %v412
      %v453 = vpack.c.b16 %v415, %v414
      %v454 = vpack.c.b16 %v417, %v416
      %v455 = vpack.c.b16 %v419, %v418
      %v456 = vpack.c.b16 %v421, %v420
      %v457 = vpack.c.b16 %v423, %v422
      %v458 = vpack.c.b16 %v425, %v424
      %v459 = vpack.c.b16 %v427, %v426
      %492 = vmatprep.subr.bf16.mxu0 0
      %493 = vmatpush1.bf16.msra.mxu0 %v435
      %494 = vmatprep.subr.bf16.mxu0 0
      %495 = vmatpush1.bf16.msra.mxu0 %v434
      %496 = vmatprep.subr.bf16.mxu0 0
      %497 = vmatpush1.bf16.msra.mxu0 %v433
      %498 = vmatprep.subr.bf16.mxu0 0
      %499 = vmatpush1.bf16.msra.mxu0 %v432
      %500 = vmatprep.subr.bf16.mxu0 0
      %501 = vmatpush1.bf16.msra.mxu0 %v431
      %502 = vmatprep.subr.bf16.mxu0 0
      %503 = vmatpush1.bf16.msra.mxu0 %v430
      %504 = vmatprep.subr.bf16.mxu0 0
      %505 = vmatpush1.bf16.msra.mxu0 %v429
      %506 = vmatprep.subr.bf16.mxu0 0
      %507 = vmatpush1.bf16.msra.mxu0 %v428
      %508 = vmatprep.subr.bf16.mxu0 0
      %509 = vmatpush2.bf16.msra.mxu0 %v443
      %510 = vmatprep.subr.bf16.mxu0 0
      %511 = vmatpush2.bf16.msra.mxu0 %v442
      %512 = vmatprep.subr.bf16.mxu0 0
      %513 = vmatpush2.bf16.msra.mxu0 %v441
      %514 = vmatprep.subr.bf16.mxu0 0
      %515 = vmatpush2.bf16.msra.mxu0 %v440
      %516 = vmatprep.subr.bf16.mxu0 0
      %517 = vmatpush2.bf16.msra.mxu0 %v439
      %518 = vmatprep.subr.bf16.mxu0 0
      %519 = vmatpush2.bf16.msra.mxu0 %v438
      %520 = vmatprep.subr.bf16.mxu0 0
      %521 = vmatpush2.bf16.msra.mxu0 %v437
      %522 = vmatprep.subr.bf16.mxu0 0
      %523 = vmatpush2.bf16.msra.mxu0 %v436
      %524 = vmatprep.mubr.bf16.mxu0 %v293
      %525 = vmatmul.mubr.bf16.gmra.mxu0 %v292
      %v526 = vpop.f32.mrf.mxu0
      %v527 = vadd.f32 0.0, %v526
      %v528 = vpop.f32.mrf.mxu0
      %v529 = vpop.f32.mrf.mxu0
      %v530 = vadd.f32 0.0, %v529
      %v531 = vpop.f32.mrf.mxu0
      %532 = vdwg.mxu0
      %533 = vmatprep.subr.bf16.mxu0 0
      %534 = vmatpush1.bf16.msra.mxu0 %v451
      %535 = vmatprep.subr.bf16.mxu0 0
      %536 = vmatpush1.bf16.msra.mxu0 %v450
      %537 = vmatprep.subr.bf16.mxu0 0
      %538 = vmatpush1.bf16.msra.mxu0 %v449
      %539 = vmatprep.subr.bf16.mxu0 0
      %540 = vmatpush1.bf16.msra.mxu0 %v448
      %541 = vmatprep.subr.bf16.mxu0 0
      %542 = vmatpush1.bf16.msra.mxu0 %v447
      %543 = vmatprep.subr.bf16.mxu0 0
      %544 = vmatpush1.bf16.msra.mxu0 %v446
      %545 = vmatprep.subr.bf16.mxu0 0
      %546 = vmatpush1.bf16.msra.mxu0 %v445
      %547 = vmatprep.subr.bf16.mxu0 0
      %548 = vmatpush1.bf16.msra.mxu0 %v444
      %549 = vmatprep.subr.bf16.mxu0 0
      %550 = vmatpush2.bf16.msra.mxu0 %v459
      %551 = vmatprep.subr.bf16.mxu0 0
      %552 = vmatpush2.bf16.msra.mxu0 %v458
      %553 = vmatprep.subr.bf16.mxu0 0
      %554 = vmatpush2.bf16.msra.mxu0 %v457
      %555 = vmatprep.subr.bf16.mxu0 0
      %556 = vmatpush2.bf16.msra.mxu0 %v456
      %557 = vmatprep.subr.bf16.mxu0 0
      %558 = vmatpush2.bf16.msra.mxu0 %v455
      %559 = vmatprep.subr.bf16.mxu0 0
      %560 = vmatpush2.bf16.msra.mxu0 %v454
      %561 = vmatprep.subr.bf16.mxu0 0
      %562 = vmatpush2.bf16.msra.mxu0 %v453
      %563 = vmatprep.subr.bf16.mxu0 0
      %564 = vmatpush2.bf16.msra.mxu0 %v452
      %565 = vmatprep.mubr.bf16.mxu0 %v295
      %566 = vmatmul.mubr.bf16.gmra.mxu0 %v294
      %v567 = vpop.f32.mrf.mxu0
      %v568 = vadd.f32 %v527, %v567
      %v569 = vpop.f32.mrf.mxu0
      %v570 = vpop.f32.mrf.mxu0
      %v571 = vadd.f32 %v530, %v570
      %v572 = vpop.f32.mrf.mxu0
      %573 = vdwg.mxu0
      %v575 = vlaneseq
      %v576 = vshrl.u32 %v575, 7
      %v577 = vsub.s32 0, %v576
      %v578 = vrot.slane %v209, %v577
      %v580 = vadd.f32 %v578, %v568
      %v581 = vadd.f32 %v578, %v571
      %s582 = scalar_lea.vmem %s1, 256
      %v583 = vld [vmem:[%s582] sm:$0xf]
      %v584 = vld [vmem:[%s582 + $0x4] sm:$0xf]
      %v585 = vld [vmem:[%s582 + $0x8] sm:$0xf]
      %v586 = vld [vmem:[%s582 + $0xc] sm:$0xf]
      %v587 = vld [vmem:[%s582 + $0x10] sm:$0xf]
      %v588 = vld [vmem:[%s582 + $0x14] sm:$0xf]
      %v589 = vld [vmem:[%s582 + $0x18] sm:$0xf]
      %v590 = vld [vmem:[%s582 + $0x1c] sm:$0xf]
      %v591 = vld [vmem:[%s582 + $0x20] sm:$0xf]
      %v592 = vld [vmem:[%s582 + $0x24] sm:$0xf]
      %v593 = vld [vmem:[%s582 + $0x28] sm:$0xf]
      %v594 = vld [vmem:[%s582 + $0x2c] sm:$0xf]
      %v595 = vld [vmem:[%s582 + $0x30] sm:$0xf]
      %v596 = vld [vmem:[%s582 + $0x34] sm:$0xf]
      %v597 = vld [vmem:[%s582 + $0x38] sm:$0xf]
      %v598 = vld [vmem:[%s582 + $0x3c] sm:$0xf]
      %v599 = vld [vmem:[%s582 + $0x40] sm:$0xf]
      %v600 = vld [vmem:[%s582 + $0x44] sm:$0xf]
      %v601 = vld [vmem:[%s582 + $0x48] sm:$0xf]
      %v602 = vld [vmem:[%s582 + $0x4c] sm:$0xf]
      %v603 = vld [vmem:[%s582 + $0x50] sm:$0xf]
      %v604 = vld [vmem:[%s582 + $0x54] sm:$0xf]
      %v605 = vld [vmem:[%s582 + $0x58] sm:$0xf]
      %v606 = vld [vmem:[%s582 + $0x5c] sm:$0xf]
      %v607 = vld [vmem:[%s582 + $0x60] sm:$0xf]
      %v608 = vld [vmem:[%s582 + $0x64] sm:$0xf]
      %v609 = vld [vmem:[%s582 + $0x68] sm:$0xf]
      %v610 = vld [vmem:[%s582 + $0x6c] sm:$0xf]
      %v611 = vld [vmem:[%s582 + $0x70] sm:$0xf]
      %v612 = vld [vmem:[%s582 + $0x74] sm:$0xf]
      %v613 = vld [vmem:[%s582 + $0x78] sm:$0xf]
      %v614 = vld [vmem:[%s582 + $0x7c] sm:$0xf]
      %v615 = vld [vmem:[%s582 + $0x80] sm:$0xf]
      %v616 = vld [vmem:[%s582 + $0x84] sm:$0xf]
      %v617 = vld [vmem:[%s582 + $0x88] sm:$0xf]
      %v618 = vld [vmem:[%s582 + $0x8c] sm:$0xf]
      %v619 = vld [vmem:[%s582 + $0x90] sm:$0xf]
      %v620 = vld [vmem:[%s582 + $0x94] sm:$0xf]
      %v621 = vld [vmem:[%s582 + $0x98] sm:$0xf]
      %v622 = vld [vmem:[%s582 + $0x9c] sm:$0xf]
      %v623 = vld [vmem:[%s582 + $0xa0] sm:$0xf]
      %v624 = vld [vmem:[%s582 + $0xa4] sm:$0xf]
      %v625 = vld [vmem:[%s582 + $0xa8] sm:$0xf]
      %v626 = vld [vmem:[%s582 + $0xac] sm:$0xf]
      %v627 = vld [vmem:[%s582 + $0xb0] sm:$0xf]
      %v628 = vld [vmem:[%s582 + $0xb4] sm:$0xf]
      %v629 = vld [vmem:[%s582 + $0xb8] sm:$0xf]
      %v630 = vld [vmem:[%s582 + $0xbc] sm:$0xf]
      %v631 = vld [vmem:[%s582 + $0xc0] sm:$0xf]
      %v632 = vld [vmem:[%s582 + $0xc4] sm:$0xf]
      %v633 = vld [vmem:[%s582 + $0xc8] sm:$0xf]
      %v634 = vld [vmem:[%s582 + $0xcc] sm:$0xf]
      %v635 = vld [vmem:[%s582 + $0xd0] sm:$0xf]
      %v636 = vld [vmem:[%s582 + $0xd4] sm:$0xf]
      %v637 = vld [vmem:[%s582 + $0xd8] sm:$0xf]
      %v638 = vld [vmem:[%s582 + $0xdc] sm:$0xf]
      %v639 = vld [vmem:[%s582 + $0xe0] sm:$0xf]
      %v640 = vld [vmem:[%s582 + $0xe4] sm:$0xf]
      %v641 = vld [vmem:[%s582 + $0xe8] sm:$0xf]
      %v642 = vld [vmem:[%s582 + $0xec] sm:$0xf]
      %v643 = vld [vmem:[%s582 + $0xf0] sm:$0xf]
      %v644 = vld [vmem:[%s582 + $0xf4] sm:$0xf]
      %v645 = vld [vmem:[%s582 + $0xf8] sm:$0xf]
      %v646 = vld [vmem:[%s582 + $0xfc] sm:$0xf]
      %v649 = vunpack.c.l.b16 %v214
      %v650 = vunpack.c.h.b16 %v214
      %v651 = vunpack.c.l.b16 %v215
      %v652 = vunpack.c.h.b16 %v215
      %v653 = vpack.c.b16 %v649, %v649
      %v654 = vpack.c.b16 %v650, %v650
      %v655 = vpack.c.b16 %v651, %v651
      %v656 = vpack.c.b16 %v652, %v652
      %vm657 = vsmask.f32 7424
      %v659 = vshrl.u32 %v292, 16
      %v661 = vshll.u32 %v292, 16
      %v663 = vrot.slane %v661, 1
      %v664 = vor.u32 %v659, %v663
      %v666 = vshll.u32 %v653, 16
      %v668 = vrot.slane %v666, 1
      %v669 = vsel %vm657, %v664, %v668
      %v671 = vshrl.u32 %v293, 16
      %v673 = vshll.u32 %v293, 16
      %v675 = vrot.slane %v673, 1
      %v676 = vor.u32 %v671, %v675
      %v678 = vshll.u32 %v654, 16
      %v680 = vrot.slane %v678, 1
      %v681 = vsel %vm657, %v676, %v680
      %v683 = vshrl.u32 %v294, 16
      %v685 = vshll.u32 %v294, 16
      %v687 = vrot.slane %v685, 1
      %v688 = vor.u32 %v683, %v687
      %v690 = vshll.u32 %v655, 16
      %v692 = vrot.slane %v690, 1
      %v693 = vsel %vm657, %v688, %v692
      %v695 = vshrl.u32 %v295, 16
      %v697 = vshll.u32 %v295, 16
      %v699 = vrot.slane %v697, 1
      %v700 = vor.u32 %v695, %v699
      %v702 = vshll.u32 %v656, 16
      %v704 = vrot.slane %v702, 1
      %v705 = vsel %vm657, %v700, %v704
      %v774 = vunpack.c.l.b16 %v583
      %v775 = vunpack.c.l.b16 %v584
      %v776 = vunpack.c.l.b16 %v585
      %v777 = vunpack.c.l.b16 %v586
      %v778 = vunpack.c.l.b16 %v587
      %v779 = vunpack.c.l.b16 %v588
      %v780 = vunpack.c.l.b16 %v589
      %v781 = vunpack.c.l.b16 %v590
      %v782 = vunpack.c.l.b16 %v591
      %v783 = vunpack.c.l.b16 %v592
      %v784 = vunpack.c.l.b16 %v593
      %v785 = vunpack.c.l.b16 %v594
      %v786 = vunpack.c.l.b16 %v595
      %v787 = vunpack.c.l.b16 %v596
      %v788 = vunpack.c.l.b16 %v597
      %v789 = vunpack.c.l.b16 %v598
      %v790 = vunpack.c.l.b16 %v599
      %v791 = vunpack.c.l.b16 %v600
      %v792 = vunpack.c.l.b16 %v601
      %v793 = vunpack.c.l.b16 %v602
      %v794 = vunpack.c.l.b16 %v603
      %v795 = vunpack.c.l.b16 %v604
      %v796 = vunpack.c.l.b16 %v605
      %v797 = vunpack.c.l.b16 %v606
      %v798 = vunpack.c.l.b16 %v607
      %v799 = vunpack.c.l.b16 %v608
      %v800 = vunpack.c.l.b16 %v609
      %v801 = vunpack.c.l.b16 %v610
      %v802 = vunpack.c.l.b16 %v611
      %v803 = vunpack.c.l.b16 %v612
      %v804 = vunpack.c.l.b16 %v613
      %v805 = vunpack.c.l.b16 %v614
      %v806 = vunpack.c.l.b16 %v615
      %v807 = vunpack.c.l.b16 %v616
      %v808 = vunpack.c.l.b16 %v617
      %v809 = vunpack.c.l.b16 %v618
      %v810 = vunpack.c.l.b16 %v619
      %v811 = vunpack.c.l.b16 %v620
      %v812 = vunpack.c.l.b16 %v621
      %v813 = vunpack.c.l.b16 %v622
      %v814 = vunpack.c.l.b16 %v623
      %v815 = vunpack.c.l.b16 %v624
      %v816 = vunpack.c.l.b16 %v625
      %v817 = vunpack.c.l.b16 %v626
      %v818 = vunpack.c.l.b16 %v627
      %v819 = vunpack.c.l.b16 %v628
      %v820 = vunpack.c.l.b16 %v629
      %v821 = vunpack.c.l.b16 %v630
      %v822 = vunpack.c.l.b16 %v631
      %v823 = vunpack.c.l.b16 %v632
      %v824 = vunpack.c.l.b16 %v633
      %v825 = vunpack.c.l.b16 %v634
      %v826 = vunpack.c.l.b16 %v635
      %v827 = vunpack.c.l.b16 %v636
      %v828 = vunpack.c.l.b16 %v637
      %v829 = vunpack.c.l.b16 %v638
      %v830 = vunpack.c.l.b16 %v639
      %v831 = vunpack.c.l.b16 %v640
      %v832 = vunpack.c.l.b16 %v641
      %v833 = vunpack.c.l.b16 %v642
      %v834 = vunpack.c.l.b16 %v643
      %v835 = vunpack.c.l.b16 %v644
      %v836 = vunpack.c.l.b16 %v645
      %v837 = vunpack.c.l.b16 %v646
      %v838 = vpack.c.b16 %v775, %v774
      %v839 = vpack.c.b16 %v777, %v776
      %v840 = vpack.c.b16 %v779, %v778
      %v841 = vpack.c.b16 %v781, %v780
      %v842 = vpack.c.b16 %v783, %v782
      %v843 = vpack.c.b16 %v785, %v784
      %v844 = vpack.c.b16 %v787, %v786
      %v845 = vpack.c.b16 %v789, %v788
      %v846 = vpack.c.b16 %v791, %v790
      %v847 = vpack.c.b16 %v793, %v792
      %v848 = vpack.c.b16 %v795, %v794
      %v849 = vpack.c.b16 %v797, %v796
      %v850 = vpack.c.b16 %v799, %v798
      %v851 = vpack.c.b16 %v801, %v800
      %v852 = vpack.c.b16 %v803, %v802
      %v853 = vpack.c.b16 %v805, %v804
      %v854 = vpack.c.b16 %v807, %v806
      %v855 = vpack.c.b16 %v809, %v808
      %v856 = vpack.c.b16 %v811, %v810
      %v857 = vpack.c.b16 %v813, %v812
      %v858 = vpack.c.b16 %v815, %v814
      %v859 = vpack.c.b16 %v817, %v816
      %v860 = vpack.c.b16 %v819, %v818
      %v861 = vpack.c.b16 %v821, %v820
      %v862 = vpack.c.b16 %v823, %v822
      %v863 = vpack.c.b16 %v825, %v824
      %v864 = vpack.c.b16 %v827, %v826
      %v865 = vpack.c.b16 %v829, %v828
      %v866 = vpack.c.b16 %v831, %v830
      %v867 = vpack.c.b16 %v833, %v832
      %v868 = vpack.c.b16 %v835, %v834
      %v869 = vpack.c.b16 %v837, %v836
      %902 = vmatprep.subr.bf16.mxu0 0
      %903 = vmatpush1.bf16.msra.mxu0 %v845
      %904 = vmatprep.subr.bf16.mxu0 0
      %905 = vmatpush1.bf16.msra.mxu0 %v844
      %906 = vmatprep.subr.bf16.mxu0 0
      %907 = vmatpush1.bf16.msra.mxu0 %v843
      %908 = vmatprep.subr.bf16.mxu0 0
      %909 = vmatpush1.bf16.msra.mxu0 %v842
      %910 = vmatprep.subr.bf16.mxu0 0
      %911 = vmatpush1.bf16.msra.mxu0 %v841
      %912 = vmatprep.subr.bf16.mxu0 0
      %913 = vmatpush1.bf16.msra.mxu0 %v840
      %914 = vmatprep.subr.bf16.mxu0 0
      %915 = vmatpush1.bf16.msra.mxu0 %v839
      %916 = vmatprep.subr.bf16.mxu0 0
      %917 = vmatpush1.bf16.msra.mxu0 %v838
      %918 = vmatprep.subr.bf16.mxu0 0
      %919 = vmatpush2.bf16.msra.mxu0 %v853
      %920 = vmatprep.subr.bf16.mxu0 0
      %921 = vmatpush2.bf16.msra.mxu0 %v852
      %922 = vmatprep.subr.bf16.mxu0 0
      %923 = vmatpush2.bf16.msra.mxu0 %v851
      %924 = vmatprep.subr.bf16.mxu0 0
      %925 = vmatpush2.bf16.msra.mxu0 %v850
      %926 = vmatprep.subr.bf16.mxu0 0
      %927 = vmatpush2.bf16.msra.mxu0 %v849
      %928 = vmatprep.subr.bf16.mxu0 0
      %929 = vmatpush2.bf16.msra.mxu0 %v848
      %930 = vmatprep.subr.bf16.mxu0 0
      %931 = vmatpush2.bf16.msra.mxu0 %v847
      %932 = vmatprep.subr.bf16.mxu0 0
      %933 = vmatpush2.bf16.msra.mxu0 %v846
      %934 = vmatprep.mubr.bf16.mxu0 %v681
      %935 = vmatmul.mubr.bf16.gmra.mxu0 %v669
      %v936 = vpop.f32.mrf.mxu0
      %v937 = vadd.f32 0.0, %v936
      %v938 = vpop.f32.mrf.mxu0
      %v939 = vpop.f32.mrf.mxu0
      %v940 = vadd.f32 0.0, %v939
      %v941 = vpop.f32.mrf.mxu0
      %942 = vdwg.mxu0
      %943 = vmatprep.subr.bf16.mxu0 0
      %944 = vmatpush1.bf16.msra.mxu0 %v861
      %945 = vmatprep.subr.bf16.mxu0 0
      %946 = vmatpush1.bf16.msra.mxu0 %v860
      %947 = vmatprep.subr.bf16.mxu0 0
      %948 = vmatpush1.bf16.msra.mxu0 %v859
      %949 = vmatprep.subr.bf16.mxu0 0
      %950 = vmatpush1.bf16.msra.mxu0 %v858
      %951 = vmatprep.subr.bf16.mxu0 0
      %952 = vmatpush1.bf16.msra.mxu0 %v857
      %953 = vmatprep.subr.bf16.mxu0 0
      %954 = vmatpush1.bf16.msra.mxu0 %v856
      %955 = vmatprep.subr.bf16.mxu0 0
      %956 = vmatpush1.bf16.msra.mxu0 %v855
      %957 = vmatprep.subr.bf16.mxu0 0
      %958 = vmatpush1.bf16.msra.mxu0 %v854
      %959 = vmatprep.subr.bf16.mxu0 0
      %960 = vmatpush2.bf16.msra.mxu0 %v869
      %961 = vmatprep.subr.bf16.mxu0 0
      %962 = vmatpush2.bf16.msra.mxu0 %v868
      %963 = vmatprep.subr.bf16.mxu0 0
      %964 = vmatpush2.bf16.msra.mxu0 %v867
      %965 = vmatprep.subr.bf16.mxu0 0
      %966 = vmatpush2.bf16.msra.mxu0 %v866
      %967 = vmatprep.subr.bf16.mxu0 0
      %968 = vmatpush2.bf16.msra.mxu0 %v865
      %969 = vmatprep.subr.bf16.mxu0 0
      %970 = vmatpush2.bf16.msra.mxu0 %v864
      %971 = vmatprep.subr.bf16.mxu0 0
      %972 = vmatpush2.bf16.msra.mxu0 %v863
      %973 = vmatprep.subr.bf16.mxu0 0
      %974 = vmatpush2.bf16.msra.mxu0 %v862
      %975 = vmatprep.mubr.bf16.mxu0 %v705
      %976 = vmatmul.mubr.bf16.gmra.mxu0 %v693
      %v977 = vpop.f32.mrf.mxu0
      %v978 = vadd.f32 %v937, %v977
      %v979 = vpop.f32.mrf.mxu0
      %v980 = vpop.f32.mrf.mxu0
      %v981 = vadd.f32 %v940, %v980
      %v982 = vpop.f32.mrf.mxu0
      %983 = vdwg.mxu0
      %v984 = vadd.f32 %v580, %v978
      %v985 = vadd.f32 %v581, %v981
      %s986 = scalar_lea.vmem %s1, 512
      %v987 = vld [vmem:[%s986] sm:$0xf]
      %v988 = vld [vmem:[%s986 + $0x4] sm:$0xf]
      %v989 = vld [vmem:[%s986 + $0x8] sm:$0xf]
      %v990 = vld [vmem:[%s986 + $0xc] sm:$0xf]
      %v991 = vld [vmem:[%s986 + $0x10] sm:$0xf]
      %v992 = vld [vmem:[%s986 + $0x14] sm:$0xf]
      %v993 = vld [vmem:[%s986 + $0x18] sm:$0xf]
      %v994 = vld [vmem:[%s986 + $0x1c] sm:$0xf]
      %v995 = vld [vmem:[%s986 + $0x20] sm:$0xf]
      %v996 = vld [vmem:[%s986 + $0x24] sm:$0xf]
      %v997 = vld [vmem:[%s986 + $0x28] sm:$0xf]
      %v998 = vld [vmem:[%s986 + $0x2c] sm:$0xf]
      %v999 = vld [vmem:[%s986 + $0x30] sm:$0xf]
      %v1000 = vld [vmem:[%s986 + $0x34] sm:$0xf]
      %v1001 = vld [vmem:[%s986 + $0x38] sm:$0xf]
      %v1002 = vld [vmem:[%s986 + $0x3c] sm:$0xf]
      %v1003 = vld [vmem:[%s986 + $0x40] sm:$0xf]
      %v1004 = vld [vmem:[%s986 + $0x44] sm:$0xf]
      %v1005 = vld [vmem:[%s986 + $0x48] sm:$0xf]
      %v1006 = vld [vmem:[%s986 + $0x4c] sm:$0xf]
      %v1007 = vld [vmem:[%s986 + $0x50] sm:$0xf]
      %v1008 = vld [vmem:[%s986 + $0x54] sm:$0xf]
      %v1009 = vld [vmem:[%s986 + $0x58] sm:$0xf]
      %v1010 = vld [vmem:[%s986 + $0x5c] sm:$0xf]
      %v1011 = vld [vmem:[%s986 + $0x60] sm:$0xf]
      %v1012 = vld [vmem:[%s986 + $0x64] sm:$0xf]
      %v1013 = vld [vmem:[%s986 + $0x68] sm:$0xf]
      %v1014 = vld [vmem:[%s986 + $0x6c] sm:$0xf]
      %v1015 = vld [vmem:[%s986 + $0x70] sm:$0xf]
      %v1016 = vld [vmem:[%s986 + $0x74] sm:$0xf]
      %v1017 = vld [vmem:[%s986 + $0x78] sm:$0xf]
      %v1018 = vld [vmem:[%s986 + $0x7c] sm:$0xf]
      %v1019 = vld [vmem:[%s986 + $0x80] sm:$0xf]
      %v1020 = vld [vmem:[%s986 + $0x84] sm:$0xf]
      %v1021 = vld [vmem:[%s986 + $0x88] sm:$0xf]
      %v1022 = vld [vmem:[%s986 + $0x8c] sm:$0xf]
      %v1023 = vld [vmem:[%s986 + $0x90] sm:$0xf]
      %v1024 = vld [vmem:[%s986 + $0x94] sm:$0xf]
      %v1025 = vld [vmem:[%s986 + $0x98] sm:$0xf]
      %v1026 = vld [vmem:[%s986 + $0x9c] sm:$0xf]
      %v1027 = vld [vmem:[%s986 + $0xa0] sm:$0xf]
      %v1028 = vld [vmem:[%s986 + $0xa4] sm:$0xf]
      %v1029 = vld [vmem:[%s986 + $0xa8] sm:$0xf]
      %v1030 = vld [vmem:[%s986 + $0xac] sm:$0xf]
      %v1031 = vld [vmem:[%s986 + $0xb0] sm:$0xf]
      %v1032 = vld [vmem:[%s986 + $0xb4] sm:$0xf]
      %v1033 = vld [vmem:[%s986 + $0xb8] sm:$0xf]
      %v1034 = vld [vmem:[%s986 + $0xbc] sm:$0xf]
      %v1035 = vld [vmem:[%s986 + $0xc0] sm:$0xf]
      %v1036 = vld [vmem:[%s986 + $0xc4] sm:$0xf]
      %v1037 = vld [vmem:[%s986 + $0xc8] sm:$0xf]
      %v1038 = vld [vmem:[%s986 + $0xcc] sm:$0xf]
      %v1039 = vld [vmem:[%s986 + $0xd0] sm:$0xf]
      %v1040 = vld [vmem:[%s986 + $0xd4] sm:$0xf]
      %v1041 = vld [vmem:[%s986 + $0xd8] sm:$0xf]
      %v1042 = vld [vmem:[%s986 + $0xdc] sm:$0xf]
      %v1043 = vld [vmem:[%s986 + $0xe0] sm:$0xf]
      %v1044 = vld [vmem:[%s986 + $0xe4] sm:$0xf]
      %v1045 = vld [vmem:[%s986 + $0xe8] sm:$0xf]
      %v1046 = vld [vmem:[%s986 + $0xec] sm:$0xf]
      %v1047 = vld [vmem:[%s986 + $0xf0] sm:$0xf]
      %v1048 = vld [vmem:[%s986 + $0xf4] sm:$0xf]
      %v1049 = vld [vmem:[%s986 + $0xf8] sm:$0xf]
      %v1050 = vld [vmem:[%s986 + $0xfc] sm:$0xf]
      %vm1051 = vcmask 1046528
      %v1052 = vrot.slane %v292, 1
      %v1053 = vrot.slane %v653, 1
      %v1054 = vsel %vm1051, %v1052, %v1053
      %v1055 = vrot.slane %v293, 1
      %v1056 = vrot.slane %v654, 1
      %v1057 = vsel %vm1051, %v1055, %v1056
      %v1058 = vrot.slane %v294, 1
      %v1059 = vrot.slane %v655, 1
      %v1060 = vsel %vm1051, %v1058, %v1059
      %v1061 = vrot.slane %v295, 1
      %v1062 = vrot.slane %v656, 1
      %v1063 = vsel %vm1051, %v1061, %v1062
      %v1132 = vunpack.c.l.b16 %v987
      %v1133 = vunpack.c.l.b16 %v988
      %v1134 = vunpack.c.l.b16 %v989
      %v1135 = vunpack.c.l.b16 %v990
      %v1136 = vunpack.c.l.b16 %v991
      %v1137 = vunpack.c.l.b16 %v992
      %v1138 = vunpack.c.l.b16 %v993
      %v1139 = vunpack.c.l.b16 %v994
      %v1140 = vunpack.c.l.b16 %v995
      %v1141 = vunpack.c.l.b16 %v996
      %v1142 = vunpack.c.l.b16 %v997
      %v1143 = vunpack.c.l.b16 %v998
      %v1144 = vunpack.c.l.b16 %v999
      %v1145 = vunpack.c.l.b16 %v1000
      %v1146 = vunpack.c.l.b16 %v1001
      %v1147 = vunpack.c.l.b16 %v1002
      %v1148 = vunpack.c.l.b16 %v1003
      %v1149 = vunpack.c.l.b16 %v1004
      %v1150 = vunpack.c.l.b16 %v1005
      %v1151 = vunpack.c.l.b16 %v1006
      %v1152 = vunpack.c.l.b16 %v1007
      %v1153 = vunpack.c.l.b16 %v1008
      %v1154 = vunpack.c.l.b16 %v1009
      %v1155 = vunpack.c.l.b16 %v1010
      %v1156 = vunpack.c.l.b16 %v1011
      %v1157 = vunpack.c.l.b16 %v1012
      %v1158 = vunpack.c.l.b16 %v1013
      %v1159 = vunpack.c.l.b16 %v1014
      %v1160 = vunpack.c.l.b16 %v1015
      %v1161 = vunpack.c.l.b16 %v1016
      %v1162 = vunpack.c.l.b16 %v1017
      %v1163 = vunpack.c.l.b16 %v1018
      %v1164 = vunpack.c.l.b16 %v1019
      %v1165 = vunpack.c.l.b16 %v1020
      %v1166 = vunpack.c.l.b16 %v1021
      %v1167 = vunpack.c.l.b16 %v1022
      %v1168 = vunpack.c.l.b16 %v1023
      %v1169 = vunpack.c.l.b16 %v1024
      %v1170 = vunpack.c.l.b16 %v1025
      %v1171 = vunpack.c.l.b16 %v1026
      %v1172 = vunpack.c.l.b16 %v1027
      %v1173 = vunpack.c.l.b16 %v1028
      %v1174 = vunpack.c.l.b16 %v1029
      %v1175 = vunpack.c.l.b16 %v1030
      %v1176 = vunpack.c.l.b16 %v1031
      %v1177 = vunpack.c.l.b16 %v1032
      %v1178 = vunpack.c.l.b16 %v1033
      %v1179 = vunpack.c.l.b16 %v1034
      %v1180 = vunpack.c.l.b16 %v1035
      %v1181 = vunpack.c.l.b16 %v1036
      %v1182 = vunpack.c.l.b16 %v1037
      %v1183 = vunpack.c.l.b16 %v1038
      %v1184 = vunpack.c.l.b16 %v1039
      %v1185 = vunpack.c.l.b16 %v1040
      %v1186 = vunpack.c.l.b16 %v1041
      %v1187 = vunpack.c.l.b16 %v1042
      %v1188 = vunpack.c.l.b16 %v1043
      %v1189 = vunpack.c.l.b16 %v1044
      %v1190 = vunpack.c.l.b16 %v1045
      %v1191 = vunpack.c.l.b16 %v1046
      %v1192 = vunpack.c.l.b16 %v1047
      %v1193 = vunpack.c.l.b16 %v1048
      %v1194 = vunpack.c.l.b16 %v1049
      %v1195 = vunpack.c.l.b16 %v1050
      %v1196 = vpack.c.b16 %v1133, %v1132
      %v1197 = vpack.c.b16 %v1135, %v1134
      %v1198 = vpack.c.b16 %v1137, %v1136
      %v1199 = vpack.c.b16 %v1139, %v1138
      %v1200 = vpack.c.b16 %v1141, %v1140
      %v1201 = vpack.c.b16 %v1143, %v1142
      %v1202 = vpack.c.b16 %v1145, %v1144
      %v1203 = vpack.c.b16 %v1147, %v1146
      %v1204 = vpack.c.b16 %v1149, %v1148
      %v1205 = vpack.c.b16 %v1151, %v1150
      %v1206 = vpack.c.b16 %v1153, %v1152
      %v1207 = vpack.c.b16 %v1155, %v1154
      %v1208 = vpack.c.b16 %v1157, %v1156
      %v1209 = vpack.c.b16 %v1159, %v1158
      %v1210 = vpack.c.b16 %v1161, %v1160
      %v1211 = vpack.c.b16 %v1163, %v1162
      %v1212 = vpack.c.b16 %v1165, %v1164
      %v1213 = vpack.c.b16 %v1167, %v1166
      %v1214 = vpack.c.b16 %v1169, %v1168
      %v1215 = vpack.c.b16 %v1171, %v1170
      %v1216 = vpack.c.b16 %v1173, %v1172
      %v1217 = vpack.c.b16 %v1175, %v1174
      %v1218 = vpack.c.b16 %v1177, %v1176
      %v1219 = vpack.c.b16 %v1179, %v1178
      %v1220 = vpack.c.b16 %v1181, %v1180
      %v1221 = vpack.c.b16 %v1183, %v1182
      %v1222 = vpack.c.b16 %v1185, %v1184
      %v1223 = vpack.c.b16 %v1187, %v1186
      %v1224 = vpack.c.b16 %v1189, %v1188
      %v1225 = vpack.c.b16 %v1191, %v1190
      %v1226 = vpack.c.b16 %v1193, %v1192
      %v1227 = vpack.c.b16 %v1195, %v1194
      %1260 = vmatprep.subr.bf16.mxu0 0
      %1261 = vmatpush1.bf16.msra.mxu0 %v1203
      %1262 = vmatprep.subr.bf16.mxu0 0
      %1263 = vmatpush1.bf16.msra.mxu0 %v1202
      %1264 = vmatprep.subr.bf16.mxu0 0
      %1265 = vmatpush1.bf16.msra.mxu0 %v1201
      %1266 = vmatprep.subr.bf16.mxu0 0
      %1267 = vmatpush1.bf16.msra.mxu0 %v1200
      %1268 = vmatprep.subr.bf16.mxu0 0
      %1269 = vmatpush1.bf16.msra.mxu0 %v1199
      %1270 = vmatprep.subr.bf16.mxu0 0
      %1271 = vmatpush1.bf16.msra.mxu0 %v1198
      %1272 = vmatprep.subr.bf16.mxu0 0
      %1273 = vmatpush1.bf16.msra.mxu0 %v1197
      %1274 = vmatprep.subr.bf16.mxu0 0
      %1275 = vmatpush1.bf16.msra.mxu0 %v1196
      %1276 = vmatprep.subr.bf16.mxu0 0
      %1277 = vmatpush2.bf16.msra.mxu0 %v1211
      %1278 = vmatprep.subr.bf16.mxu0 0
      %1279 = vmatpush2.bf16.msra.mxu0 %v1210
      %1280 = vmatprep.subr.bf16.mxu0 0
      %1281 = vmatpush2.bf16.msra.mxu0 %v1209
      %1282 = vmatprep.subr.bf16.mxu0 0
      %1283 = vmatpush2.bf16.msra.mxu0 %v1208
      %1284 = vmatprep.subr.bf16.mxu0 0
      %1285 = vmatpush2.bf16.msra.mxu0 %v1207
      %1286 = vmatprep.subr.bf16.mxu0 0
      %1287 = vmatpush2.bf16.msra.mxu0 %v1206
      %1288 = vmatprep.subr.bf16.mxu0 0
      %1289 = vmatpush2.bf16.msra.mxu0 %v1205
      %1290 = vmatprep.subr.bf16.mxu0 0
      %1291 = vmatpush2.bf16.msra.mxu0 %v1204
      %1292 = vmatprep.mubr.bf16.mxu0 %v1057
      %1293 = vmatmul.mubr.bf16.gmra.mxu0 %v1054
      %v1294 = vpop.f32.mrf.mxu0
      %v1295 = vadd.f32 0.0, %v1294
      %v1296 = vpop.f32.mrf.mxu0
      %v1297 = vpop.f32.mrf.mxu0
      %v1298 = vadd.f32 0.0, %v1297
      %v1299 = vpop.f32.mrf.mxu0
      %1300 = vdwg.mxu0
      %1301 = vmatprep.subr.bf16.mxu0 0
      %1302 = vmatpush1.bf16.msra.mxu0 %v1219
      %1303 = vmatprep.subr.bf16.mxu0 0
      %1304 = vmatpush1.bf16.msra.mxu0 %v1218
      %1305 = vmatprep.subr.bf16.mxu0 0
      %1306 = vmatpush1.bf16.msra.mxu0 %v1217
      %1307 = vmatprep.subr.bf16.mxu0 0
      %1308 = vmatpush1.bf16.msra.mxu0 %v1216
      %1309 = vmatprep.subr.bf16.mxu0 0
      %1310 = vmatpush1.bf16.msra.mxu0 %v1215
      %1311 = vmatprep.subr.bf16.mxu0 0
      %1312 = vmatpush1.bf16.msra.mxu0 %v1214
      %1313 = vmatprep.subr.bf16.mxu0 0
      %1314 = vmatpush1.bf16.msra.mxu0 %v1213
      %1315 = vmatprep.subr.bf16.mxu0 0
      %1316 = vmatpush1.bf16.msra.mxu0 %v1212
      %1317 = vmatprep.subr.bf16.mxu0 0
      %1318 = vmatpush2.bf16.msra.mxu0 %v1227
      %1319 = vmatprep.subr.bf16.mxu0 0
      %1320 = vmatpush2.bf16.msra.mxu0 %v1226
      %1321 = vmatprep.subr.bf16.mxu0 0
      %1322 = vmatpush2.bf16.msra.mxu0 %v1225
      %1323 = vmatprep.subr.bf16.mxu0 0
      %1324 = vmatpush2.bf16.msra.mxu0 %v1224
      %1325 = vmatprep.subr.bf16.mxu0 0
      %1326 = vmatpush2.bf16.msra.mxu0 %v1223
      %1327 = vmatprep.subr.bf16.mxu0 0
      %1328 = vmatpush2.bf16.msra.mxu0 %v1222
      %1329 = vmatprep.subr.bf16.mxu0 0
      %1330 = vmatpush2.bf16.msra.mxu0 %v1221
      %1331 = vmatprep.subr.bf16.mxu0 0
      %1332 = vmatpush2.bf16.msra.mxu0 %v1220
      %1333 = vmatprep.mubr.bf16.mxu0 %v1063
      %1334 = vmatmul.mubr.bf16.gmra.mxu0 %v1060
      %v1335 = vpop.f32.mrf.mxu0
      %v1336 = vadd.f32 %v1295, %v1335
      %v1337 = vpop.f32.mrf.mxu0
      %v1338 = vpop.f32.mrf.mxu0
      %v1339 = vadd.f32 %v1298, %v1338
      %v1340 = vpop.f32.mrf.mxu0
      %1341 = vdwg.mxu0
      %v1342 = vadd.f32 %v984, %v1336
      %v1343 = vadd.f32 %v985, %v1339
      %v1344 = vpack.c.bf16 %v1343, %v1342
      %v1346 = vunpack.c.l.b16 %v1344
      %v1347 = vunpack.c.h.b16 %v1344
      %v1348 = vpack.c.b16 %v1346, %v1346
      %v1349 = vpack.c.b16 %v1347, %v1347
      %vm1352 = vcmask 388096
      %1353 = vst.msk [vmem:[%s206] sm:$0xf] %vm1352, %v1348
      %1354 = vst.msk [vmem:[%s206 + $0x4] sm:$0xf] %vm1352, %v1349
      %s1355 = smul.u32 2, %s19
      %p1356 = scmp.lt.s32.totalorder %s18, 1
      %s1357 = scalar_select %p1356, %s18, 1
      %p1358 = scmp.lt.s32.totalorder %s1355, 1
      %s1359 = scalar_select %p1358, %s1355, 1
      %s1360 = smul.addr %s1357, 2
      %s1361 = sadd.s32 %s1359, %s1360
      %s1362 = smul.addr %s1361, 4
      %s1363 = scalar_lea.vmem %s3, %s1362
      // Predicated region
      $region33: #{adaresnet_forward.23} parent=31 // pred_check
        %p1364 = pneg %p116
      $region34: #{adaresnet_forward.23} parent=31 // pred_check_branch
        %1366 = sbr.rel (%p1364) target = $region36
      $region35: #{adaresnet_forward.23} parent=31 // pred_region
        %s1367 = smul.u32 2, %s19
      $region36: #{adaresnet_forward.23} parent=31 // pred_fallthru
        _
    $region32: #{adaresnet_forward.23} parent=5 // pred_fallthru
      _
    %p1368 = scmp.le.s32.totalorder 2, %s9
    // Predicated region
    $region37: #{adaresnet_forward.23} parent=5 // pred_check
      %p1369 = pneg %p1368
    $region38: #{adaresnet_forward.23} parent=5 // pred_check_branch
      %1371 = sbr.rel (%p1369) target = $region40
    $region39: #{adaresnet_forward.23} parent=5 // pred_region
      %s1372 = ssub.s32 %s9, 2
      // Predicated region
      $region41: #{adaresnet_forward.23} parent=39 // pred_check
        %p1373 = pneg %p122
      $region42: #{adaresnet_forward.23} parent=39 // pred_check_branch
        %1375 = sbr.rel (%p1373) target = $region44
      $region43: #{adaresnet_forward.23} parent=39 // pred_region
        %s1376 = smul.u32 2, %s21
        %p1377 = scmp.lt.s32.totalorder %s20, 1
        %s1378 = scalar_select %p1377, %s20, 1
        %p1379 = scmp.lt.s32.totalorder %s1376, 1
        %s1380 = scalar_select %p1379, %s1376, 1
        %s1381 = smul.addr %s1378, 2
        %s1382 = sadd.s32 %s1380, %s1381
        %s1383 = smul.addr %s1382, 4
        %s1384 = scalar_lea.vmem %s3, %s1383
      $region44: #{adaresnet_forward.23} parent=39 // pred_fallthru
        _
    $region40: #{adaresnet_forward.23} parent=5 // pred_fallthru
      _
  $region6: #{adaresnet_forward.23} parent=0 // loop_footer
    %s13 = sadd.s32 1, %s9
  $region7: #{adaresnet_forward.23} parent=0 // loop_footer_branch
    %8 = sbr.rel target = $region3
  $region8: #{adaresnet_forward.23} parent=0 // loop_exit
    _

</llo_original>
